<compile_context>
chip_gen: v6e
topology: v6e:2x2x1
jax: 0.10.0
libtpu: 0.0.40
codegen_flags: <defaults>
</compile_context>

<pallas_src>
import jax
import jax.numpy as jnp
from jax import lax
from jax.experimental import pallas as pl
from jax.experimental.pallas import tpu as pltpu

EPS = 1e-5
CMID = 64  # conv1/conv2 output channels (fixed by the module)


def first_block_kernel(
    x_ref,      # (N*H*W, Cin_p)   bf16
    wfi_ref,    # (Cin_p, Cpad+64) bf16 = [identity 1x1 padded to Cpad | conv1 1x1]
    w2_ref,     # (9, 64, 64)      bf16  per-tap 3x3 conv weights (tap k = dy*3+dx)
    w3_ref,     # (64, Cpad)       bf16  conv3 1x1, zero-padded to Cpad
    bn_ref,     # (8, Cpad)        f32   rows: g1,be1,g2,be2,g3,be3,gi,bei (zero-padded)
    o_ref,      # (N*H*W, Cpad)    f32   lane-dense output
    pad_ref,    # scratch (N, H+2, W+2, 64) bf16  halo-padded activation
):
    N, Hp, Wp, _ = pad_ref.shape
    H, W = Hp - 2, Wp - 2
    NHW = N * H * W
    Cpad = o_ref.shape[-1]
    inv_m = 1.0 / NHW

    def bn_stats(y):
        # single fused pass: sum and sum-of-squares; var = E[y^2]-E[y]^2 (no
        # centered second pass over the slab), rsqrt on the EUP.
        s1 = jnp.sum(y, axis=0, keepdims=True)
        s2 = jnp.sum(y * y, axis=0, keepdims=True)
        mean = s1 * inv_m
        var = s2 * inv_m - mean * mean
        return mean, lax.rsqrt(var + EPS)

    def bn_apply(y, mean, rstd, gamma, beta):
        scale = gamma * rstd
        return y * scale + (beta - mean * scale)

    # ---- fused identity-conv + conv1 (both 1x1, shared K=Cin input, no biases) ----
    xw = jnp.dot(x_ref[...], wfi_ref[...], preferred_element_type=jnp.float32)
    mean_f, rstd_f = bn_stats(xw)          # ONE stats pass over the fused slab
    # identity branch + its BN, parked in o_ref (reuses the output VMEM buffer)
    o_ref[...] = bn_apply(xw[:, :Cpad], mean_f[:, :Cpad], rstd_f[:, :Cpad],
                          bn_ref[6:7, :], bn_ref[7:8, :])
    h1 = jnp.maximum(
        bn_apply(xw[:, Cpad:], mean_f[:, Cpad:], rstd_f[:, Cpad:],
                 bn_ref[0:1, :CMID], bn_ref[1:2, :CMID]), 0.0)

    # ---- conv2: 3x3 pad=1 as 9 accumulating matmuls over halo-padded windows ----
    # zero only the halo (interior overwritten next); bf16 buffer.
    zrow = jnp.zeros((N, 1, Wp, CMID), pad_ref.dtype)
    zcol = jnp.zeros((N, Hp, 1, CMID), pad_ref.dtype)
    pad_ref[:, 0:1, :, :] = zrow
    pad_ref[:, Hp - 1:Hp, :, :] = zrow
    pad_ref[:, :, 0:1, :] = zcol
    pad_ref[:, :, Wp - 1:Wp, :] = zcol
    pad_ref[:, 1:H + 1, 1:W + 1, :] = h1.reshape(N, H, W, CMID).astype(pad_ref.dtype)

    def tap(k):
        dy, dx = k // 3, k % 3
        win = pad_ref[:, dy:dy + H, dx:dx + W, :].reshape(NHW, CMID)
        return jnp.dot(win, w2_ref[k], preferred_element_type=jnp.float32)

    acc = tap(0)
    for k in range(1, 9):
        acc = acc + tap(k)

    mean2, rstd2 = bn_stats(acc)
    h2 = jnp.maximum(
        bn_apply(acc, mean2, rstd2, bn_ref[2:3, :CMID], bn_ref[3:4, :CMID]), 0.0)

    # ---- conv3 (1x1, output padded to Cpad lanes) + bn3 ----
    y3 = jnp.dot(h2.astype(w3_ref.dtype), w3_ref[...],
                 preferred_element_type=jnp.float32)
    mean3, rstd3 = bn_stats(y3)
    h3 = bn_apply(y3, mean3, rstd3, bn_ref[4:5, :], bn_ref[5:6, :])

    # ---- residual add + ReLU, fully lane-dense store ----
    o_ref[...] = jnp.maximum(h3 + o_ref[...], 0.0)


def first_block(x_nchw, p):
    N, Cin, H, W = x_nchw.shape
    Cout = p["w3"].shape[0]
    Cpad = ((Cout + 127) // 128) * 128
    NHW = N * H * W
    Cin_p = ((max(Cin, 8) + 7) // 8) * 8   # pad the tiny K of the 1x1 convs

    x2d = jnp.transpose(x_nchw, (0, 2, 3, 1)).reshape(NHW, Cin).astype(jnp.float32)
    x2d = jnp.pad(x2d, ((0, 0), (0, Cin_p - Cin))).astype(jnp.bfloat16)

    # PyTorch conv weights are (Cout, Cin, kH, kW) -> matmul layouts, bf16 operands.
    # Conv biases are intentionally dropped: training-mode BN's mean subtraction
    # cancels them exactly.
    w1m = jnp.transpose(p["w1"][:, :, 0, 0], (1, 0)).astype(jnp.float32)   # (Cin, 64)
    wim = jnp.transpose(p["wi"][:, :, 0, 0], (1, 0)).astype(jnp.float32)   # (Cin, Cout)
    w_fused = jnp.zeros((Cin_p, Cpad + CMID), jnp.float32)
    w_fused = w_fused.at[:Cin, :Cout].set(wim).at[:Cin, Cpad:].set(w1m)
    w_fused = w_fused.astype(jnp.bfloat16)                                 # (Cin_p, Cpad+64)

    w2m = jnp.transpose(p["w2"], (2, 3, 1, 0)).reshape(9, CMID, CMID)
    w2m = w2m.astype(jnp.bfloat16)                                         # (9, 64, 64)

    w3m = jnp.transpose(p["w3"][:, :, 0, 0], (1, 0)).astype(jnp.float32)   # (64, Cout)
    w3p = jnp.zeros((CMID, Cpad), jnp.float32).at[:, :Cout].set(w3m)
    w3p = w3p.astype(jnp.bfloat16)                                         # (64, Cpad)

    def padc(v):
        return jnp.zeros((Cpad,), jnp.float32).at[:v.shape[0]].set(v.astype(jnp.float32))

    bn = jnp.stack([padc(p["g1"]), padc(p["be1"]),
                    padc(p["g2"]), padc(p["be2"]),
                    padc(p["g3"]), padc(p["be3"]),
                    padc(p["gi"]), padc(p["bei"])], axis=0)                # (8, Cpad)

    # Per-generation VMEM budget (128 MiB v5e/v6e, 64 MiB v7x), with headroom for
    # Mosaic-internal scratch.  At production shapes the same number also sets the
    # row-band tile size (see TODO at top of file).
    try:
        vmem_cap = int(pltpu.get_tpu_info().vmem_capacity_bytes)
    except Exception:
        vmem_cap = 64 * 1024 * 1024
    vmem_limit = max(32 * 1024 * 1024,
                     min(vmem_cap - 16 * 1024 * 1024, 112 * 1024 * 1024))

    vmem = pl.BlockSpec(memory_space=pltpu.MemorySpace.VMEM)
    out2d = pl.pallas_call(
        first_block_kernel,
        out_shape=jax.ShapeDtypeStruct((NHW, Cpad), jnp.float32),
        in_specs=[vmem] * 5,
        out_specs=vmem,
        scratch_shapes=[pltpu.VMEM((N, H + 2, W + 2, CMID), jnp.bfloat16)],
        compiler_params=pltpu.CompilerParams(vmem_limit_bytes=vmem_limit),
    )(x2d, w_fused, w2m, w3p, bn)

    out = out2d[:, :Cout].reshape(N, H, W, Cout)
    return jnp.transpose(out, (0, 3, 1, 2))   # back to NCHW (interface fixed by spec)


def init_params(key, in_channel, out_channel):
    ks = jax.random.split(key, 16)

    def conv_w(k, co, ci, kh, kw):
        bound = 1.0 / (ci * kh * kw) ** 0.5
        return jax.random.uniform(k, (co, ci, kh, kw), jnp.float32, -bound, bound)

    def vec(k, c, lo, hi):
        return jax.random.uniform(k, (c,), jnp.float32, lo, hi)

    return {
        "w1": conv_w(ks[0], CMID, in_channel, 1, 1), "b1": vec(ks[1], CMID, -0.1, 0.1),
        "g1": vec(ks[2], CMID, 0.8, 1.2), "be1": vec(ks[3], CMID, -0.1, 0.1),
        "w2": conv_w(ks[4], CMID, CMID, 3, 3), "b2": vec(ks[5], CMID, -0.1, 0.1),
        "g2": vec(ks[6], CMID, 0.8, 1.2), "be2": vec(ks[7], CMID, -0.1, 0.1),
        "w3": conv_w(ks[8], out_channel, CMID, 1, 1), "b3": vec(ks[9], out_channel, -0.1, 0.1),
        "g3": vec(ks[10], out_channel, 0.8, 1.2), "be3": vec(ks[11], out_channel, -0.1, 0.1),
        # identity_conv = Conv2d(in, out, 1) + BatchNorm2d(out)  (HRNet usage when in != out)
        "wi": conv_w(ks[12], out_channel, in_channel, 1, 1), "bi": vec(ks[13], out_channel, -0.1, 0.1),
        "gi": vec(ks[14], out_channel, 0.8, 1.2), "bei": vec(ks[15], out_channel, -0.1, 0.1),
    }


def reference_nchw(x, p, bf16_matmul_operands=False):
    """Pure-JAX reference mirroring the PyTorch forward (training-mode BN, WITH biases).

    With bf16_matmul_operands=True the conv operands are rounded to bf16 exactly
    where the kernel rounds them (activations/weights), with f32 accumulation:
    this isolates the kernel's structural correctness (bias cancellation by BN,
    zero-padded lanes, fused stats) from the documented bf16 MXU quantization.
    """
    if bf16_matmul_operands:
        rnd = lambda a: a.astype(jnp.bfloat16).astype(jnp.float32)
    else:
        rnd = lambda a: a

    def conv(h, w, b, pad):
        y = lax.conv_general_dilated(h, w, (1, 1), [(pad, pad), (pad, pad)],
                                     dimension_numbers=("NCHW", "OIHW", "NCHW"),
                                     precision=lax.Precision.HIGHEST)
        return y + b.reshape(1, -1, 1, 1)

    def bn(h, g, be):
        mean = jnp.mean(h, axis=(0, 2, 3), keepdims=True)
        var = jnp.mean((h - mean) ** 2, axis=(0, 2, 3), keepdims=True)
        return (h - mean) / jnp.sqrt(var + EPS) * g.reshape(1, -1, 1, 1) + be.reshape(1, -1, 1, 1)

    h = jnp.maximum(bn(conv(rnd(x), rnd(p["w1"]), p["b1"], 0), p["g1"], p["be1"]), 0.0)
    h = jnp.maximum(bn(conv(rnd(h), rnd(p["w2"]), p["b2"], 1), p["g2"], p["be2"]), 0.0)
    h = bn(conv(rnd(h), rnd(p["w3"]), p["b3"], 0), p["g3"], p["be3"])
    ident = bn(conv(rnd(x), rnd(p["wi"]), p["bi"], 0), p["gi"], p["bei"])
    return jnp.maximum(h + ident, 0.0)


if __name__ == "__main__":
    key = jax.random.PRNGKey(0)
    k_x, k_p = jax.random.split(key)

    N, Cin, H, W = 2, 4, 16, 16
    Cout = 16
    x = jax.random.normal(k_x, (N, Cin, H, W), jnp.float32)
    params = init_params(k_p, Cin, Cout)

    out = jax.block_until_ready(first_block(x, params))
    assert out.shape == (N, Cout, H, W), out.shape

    # 1) TIGHT structural check: pure-JAX model with the SAME bf16 operand rounding
    #    points as the kernel (f32 accumulation).  Verifies bias-cancellation,
    #    padding, fused single-pass BN stats, residual/ReLU wiring.
    ref_bf16 = jax.block_until_ready(reference_nchw(x, params, bf16_matmul_operands=True))
    err_tight = float(jnp.max(jnp.abs(out - ref_bf16)))
    assert jnp.allclose(out, ref_bf16, atol=5e-3, rtol=5e-3), err_tight

    # 2) Spec check vs the exact-f32 PyTorch-equivalent forward.  The only
    #    deviation is bf16 MXU-operand quantization (~0.4% per operand), which BN's
    #    renormalization turns into a few 1e-2 absolute on O(1) outputs.
    ref_f32 = jax.block_until_ready(reference_nchw(x, params, bf16_matmul_operands=False))
    err_spec = float(jnp.max(jnp.abs(out - ref_f32)))
    assert jnp.allclose(out, ref_f32, atol=8e-2, rtol=2e-2), err_spec

    print("KERNEL_OK")
</pallas_src>

<mosaic_0001>
module attributes {stable_mosaic.version = 11 : i64} {
  func.func @first_block_kernel(%arg0: memref<512x8xbf16, #tpu.memory_space<vmem>>, %arg1: memref<8x192xbf16, #tpu.memory_space<vmem>>, %arg2: memref<9x64x64xbf16, #tpu.memory_space<vmem>>, %arg3: memref<64x128xbf16, #tpu.memory_space<vmem>>, %arg4: memref<8x128xf32, #tpu.memory_space<vmem>>, %arg5: memref<512x128xf32, #tpu.memory_space<vmem>>, %arg6: memref<2x18x18x64xbf16, #tpu.memory_space<vmem>>) attributes {dimension_semantics = [], scalar_prefetch = 0 : i64, scratch_operands = 1 : i64, tpu.core_type = #tpu.core_type<tc>} {
    %c0 = arith.constant 0 : index
    %c0_0 = arith.constant 0 : index
    %0 = vector.load %arg0[%c0, %c0_0] : memref<512x8xbf16, #tpu.memory_space<vmem>>, vector<512x8xbf16>
    %c0_1 = arith.constant 0 : index
    %c0_2 = arith.constant 0 : index
    %1 = vector.load %arg1[%c0_1, %c0_2] : memref<8x192xbf16, #tpu.memory_space<vmem>>, vector<8x192xbf16>
    %cst = arith.constant dense<0.000000e+00> : vector<512x192xf32>
    %2 = tpu.matmul %0, %1, %cst {dimension_numbers = #tpu.dot_dimension_numbers<[1], [0], [0], [1], [0, 0, 1, 1], [], []>} : vector<512x8xbf16>, vector<8x192xbf16>, vector<512x192xf32> -> vector<512x192xf32>
    %cst_3 = arith.constant dense<0.000000e+00> : vector<192xf32>
    %3 = vector.multi_reduction <add>, %2, %cst_3 [0] : vector<512x192xf32> to vector<192xf32>
    %4 = vector.shape_cast %3 : vector<192xf32> to vector<1x192xf32>
    %5 = arith.mulf %2, %2 : vector<512x192xf32>
    %cst_4 = arith.constant dense<0.000000e+00> : vector<192xf32>
    %6 = vector.multi_reduction <add>, %5, %cst_4 [0] : vector<512x192xf32> to vector<192xf32>
    %7 = vector.shape_cast %6 : vector<192xf32> to vector<1x192xf32>
    %cst_5 = arith.constant 0.001953125 : f32
    %8 = vector.broadcast %cst_5 : f32 to vector<1x192xf32>
    %9 = arith.mulf %4, %8 : vector<1x192xf32>
    %cst_6 = arith.constant 0.001953125 : f32
    %10 = vector.broadcast %cst_6 : f32 to vector<1x192xf32>
    %11 = arith.mulf %7, %10 : vector<1x192xf32>
    %12 = arith.mulf %9, %9 : vector<1x192xf32>
    %13 = arith.subf %11, %12 : vector<1x192xf32>
    %cst_7 = arith.constant 9.99999974E-6 : f32
    %14 = vector.broadcast %cst_7 : f32 to vector<1x192xf32>
    %15 = arith.addf %13, %14 : vector<1x192xf32>
    %16 = math.rsqrt %15 : vector<1x192xf32>
    %17 = vector.extract_strided_slice %2 {offsets = [0, 0], sizes = [512, 128], strides = [1, 1]} : vector<512x192xf32> to vector<512x128xf32>
    %18 = vector.extract_strided_slice %9 {offsets = [0, 0], sizes = [1, 128], strides = [1, 1]} : vector<1x192xf32> to vector<1x128xf32>
    %19 = vector.extract_strided_slice %16 {offsets = [0, 0], sizes = [1, 128], strides = [1, 1]} : vector<1x192xf32> to vector<1x128xf32>
    %c6 = arith.constant 6 : index
    %c0_8 = arith.constant 0 : index
    %20 = vector.load %arg4[%c6, %c0_8] : memref<8x128xf32, #tpu.memory_space<vmem>>, vector<1x128xf32>
    %c7 = arith.constant 7 : index
    %c0_9 = arith.constant 0 : index
    %21 = vector.load %arg4[%c7, %c0_9] : memref<8x128xf32, #tpu.memory_space<vmem>>, vector<1x128xf32>
    %22 = arith.mulf %20, %19 : vector<1x128xf32>
    %23 = vector.broadcast %22 : vector<1x128xf32> to vector<512x128xf32>
    %24 = arith.mulf %17, %23 : vector<512x128xf32>
    %25 = arith.mulf %18, %22 : vector<1x128xf32>
    %26 = arith.subf %21, %25 : vector<1x128xf32>
    %27 = vector.broadcast %26 : vector<1x128xf32> to vector<512x128xf32>
    %28 = arith.addf %24, %27 : vector<512x128xf32>
    %c0_10 = arith.constant 0 : index
    %c0_11 = arith.constant 0 : index
    %29 = vector.load %arg5[%c0_10, %c0_11] : memref<512x128xf32, #tpu.memory_space<vmem>>, vector<512x128xf32>
    tpu.vector_store %arg5[%c0_10, %c0_11], %28 {strides = array<i32>} : memref<512x128xf32, #tpu.memory_space<vmem>>, vector<512x128xf32>,
    %30 = vector.extract_strided_slice %2 {offsets = [0, 128], sizes = [512, 64], strides = [1, 1]} : vector<512x192xf32> to vector<512x64xf32>
    %31 = vector.extract_strided_slice %9 {offsets = [0, 128], sizes = [1, 64], strides = [1, 1]} : vector<1x192xf32> to vector<1x64xf32>
    %32 = vector.extract_strided_slice %16 {offsets = [0, 128], sizes = [1, 64], strides = [1, 1]} : vector<1x192xf32> to vector<1x64xf32>
    %c0_12 = arith.constant 0 : index
    %c0_13 = arith.constant 0 : index
    %33 = vector.load %arg4[%c0_12, %c0_13] : memref<8x128xf32, #tpu.memory_space<vmem>>, vector<1x64xf32>
    %c1 = arith.constant 1 : index
    %c0_14 = arith.constant 0 : index
    %34 = vector.load %arg4[%c1, %c0_14] : memref<8x128xf32, #tpu.memory_space<vmem>>, vector<1x64xf32>
    %35 = arith.mulf %33, %32 : vector<1x64xf32>
    %36 = vector.broadcast %35 : vector<1x64xf32> to vector<512x64xf32>
    %37 = arith.mulf %30, %36 : vector<512x64xf32>
    %38 = arith.mulf %31, %35 : vector<1x64xf32>
    %39 = arith.subf %34, %38 : vector<1x64xf32>
    %40 = vector.broadcast %39 : vector<1x64xf32> to vector<512x64xf32>
    %41 = arith.addf %37, %40 : vector<512x64xf32>
    %cst_15 = arith.constant 0.000000e+00 : f32
    %42 = vector.broadcast %cst_15 : f32 to vector<512x64xf32>
    %43 = arith.maximumf %41, %42 : vector<512x64xf32>
    %cst_16 = arith.constant 0.000000e+00 : bf16
    %44 = vector.broadcast %cst_16 : bf16 to vector<2x1x18x64xbf16>
    %cst_17 = arith.constant 0.000000e+00 : bf16
    %45 = vector.broadcast %cst_17 : bf16 to vector<2x18x1x64xbf16>
    %c0_18 = arith.constant 0 : index
    %c0_19 = arith.constant 0 : index
    %c0_20 = arith.constant 0 : index
    %c0_21 = arith.constant 0 : index
    %46 = vector.load %arg6[%c0_18, %c0_19, %c0_20, %c0_21] : memref<2x18x18x64xbf16, #tpu.memory_space<vmem>>, vector<2x1x18x64xbf16>
    tpu.vector_store %arg6[%c0_18, %c0_19, %c0_20, %c0_21], %44 {strides = array<i32>} : memref<2x18x18x64xbf16, #tpu.memory_space<vmem>>, vector<2x1x18x64xbf16>,
    %c0_22 = arith.constant 0 : index
    %c17 = arith.constant 17 : index
    %c0_23 = arith.constant 0 : index
    %c0_24 = arith.constant 0 : index
    %47 = vector.load %arg6[%c0_22, %c17, %c0_23, %c0_24] : memref<2x18x18x64xbf16, #tpu.memory_space<vmem>>, vector<2x1x18x64xbf16>
    tpu.vector_store %arg6[%c0_22, %c17, %c0_23, %c0_24], %44 {strides = array<i32>} : memref<2x18x18x64xbf16, #tpu.memory_space<vmem>>, vector<2x1x18x64xbf16>,
    %c0_25 = arith.constant 0 : index
    %c0_26 = arith.constant 0 : index
    %c0_27 = arith.constant 0 : index
    %c0_28 = arith.constant 0 : index
    %48 = vector.load %arg6[%c0_25, %c0_26, %c0_27, %c0_28] : memref<2x18x18x64xbf16, #tpu.memory_space<vmem>>, vector<2x18x1x64xbf16>
    tpu.vector_store %arg6[%c0_25, %c0_26, %c0_27, %c0_28], %45 {strides = array<i32>} : memref<2x18x18x64xbf16, #tpu.memory_space<vmem>>, vector<2x18x1x64xbf16>,
    %c0_29 = arith.constant 0 : index
    %c0_30 = arith.constant 0 : index
    %c17_31 = arith.constant 17 : index
    %c0_32 = arith.constant 0 : index
    %49 = vector.load %arg6[%c0_29, %c0_30, %c17_31, %c0_32] : memref<2x18x18x64xbf16, #tpu.memory_space<vmem>>, vector<2x18x1x64xbf16>
    tpu.vector_store %arg6[%c0_29, %c0_30, %c17_31, %c0_32], %45 {strides = array<i32>} : memref<2x18x18x64xbf16, #tpu.memory_space<vmem>>, vector<2x18x1x64xbf16>,
    %50 = vector.shape_cast %43 : vector<512x64xf32> to vector<2x16x16x64xf32>
    %51 = arith.truncf %50 : vector<2x16x16x64xf32> to vector<2x16x16x64xbf16>
    %c0_33 = arith.constant 0 : index
    %c1_34 = arith.constant 1 : index
    %c1_35 = arith.constant 1 : index
    %c0_36 = arith.constant 0 : index
    %52 = vector.load %arg6[%c0_33, %c1_34, %c1_35, %c0_36] : memref<2x18x18x64xbf16, #tpu.memory_space<vmem>>, vector<2x16x16x64xbf16>
    tpu.vector_store %arg6[%c0_33, %c1_34, %c1_35, %c0_36], %51 {strides = array<i32>} : memref<2x18x18x64xbf16, #tpu.memory_space<vmem>>, vector<2x16x16x64xbf16>,
    %c0_37 = arith.constant 0 : index
    %c0_38 = arith.constant 0 : index
    %c0_39 = arith.constant 0 : index
    %c0_40 = arith.constant 0 : index
    %53 = vector.load %arg6[%c0_37, %c0_38, %c0_39, %c0_40] : memref<2x18x18x64xbf16, #tpu.memory_space<vmem>>, vector<2x16x16x64xbf16>
    %54 = vector.shape_cast %53 : vector<2x16x16x64xbf16> to vector<512x64xbf16>
    %c0_41 = arith.constant 0 : index
    %c0_42 = arith.constant 0 : index
    %c0_43 = arith.constant 0 : index
    %55 = vector.load %arg2[%c0_41, %c0_42, %c0_43] : memref<9x64x64xbf16, #tpu.memory_space<vmem>>, vector<1x64x64xbf16>
    %56 = vector.shape_cast %55 : vector<1x64x64xbf16> to vector<64x64xbf16>
    %cst_44 = arith.constant dense<0.000000e+00> : vector<512x64xf32>
    %57 = tpu.matmul %54, %56, %cst_44 {dimension_numbers = #tpu.dot_dimension_numbers<[1], [0], [0], [1], [0, 0, 1, 1], [], []>} : vector<512x64xbf16>, vector<64x64xbf16>, vector<512x64xf32> -> vector<512x64xf32>
    %c0_45 = arith.constant 0 : index
    %c0_46 = arith.constant 0 : index
    %c1_47 = arith.constant 1 : index
    %c0_48 = arith.constant 0 : index
    %58 = vector.load %arg6[%c0_45, %c0_46, %c1_47, %c0_48] : memref<2x18x18x64xbf16, #tpu.memory_space<vmem>>, vector<2x16x16x64xbf16>
    %59 = vector.shape_cast %58 : vector<2x16x16x64xbf16> to vector<512x64xbf16>
    %c1_49 = arith.constant 1 : index
    %c0_50 = arith.constant 0 : index
    %c0_51 = arith.constant 0 : index
    %60 = vector.load %arg2[%c1_49, %c0_50, %c0_51] : memref<9x64x64xbf16, #tpu.memory_space<vmem>>, vector<1x64x64xbf16>
    %61 = vector.shape_cast %60 : vector<1x64x64xbf16> to vector<64x64xbf16>
    %cst_52 = arith.constant dense<0.000000e+00> : vector<512x64xf32>
    %62 = tpu.matmul %59, %61, %cst_52 {dimension_numbers = #tpu.dot_dimension_numbers<[1], [0], [0], [1], [0, 0, 1, 1], [], []>} : vector<512x64xbf16>, vector<64x64xbf16>, vector<512x64xf32> -> vector<512x64xf32>
    %63 = arith.addf %57, %62 : vector<512x64xf32>
    %c0_53 = arith.constant 0 : index
    %c0_54 = arith.constant 0 : index
    %c2 = arith.constant 2 : index
    %c0_55 = arith.constant 0 : index
    %64 = vector.load %arg6[%c0_53, %c0_54, %c2, %c0_55] : memref<2x18x18x64xbf16, #tpu.memory_space<vmem>>, vector<2x16x16x64xbf16>
    %65 = vector.shape_cast %64 : vector<2x16x16x64xbf16> to vector<512x64xbf16>
    %c2_56 = arith.constant 2 : index
    %c0_57 = arith.constant 0 : index
    %c0_58 = arith.constant 0 : index
    %66 = vector.load %arg2[%c2_56, %c0_57, %c0_58] : memref<9x64x64xbf16, #tpu.memory_space<vmem>>, vector<1x64x64xbf16>
    %67 = vector.shape_cast %66 : vector<1x64x64xbf16> to vector<64x64xbf16>
    %cst_59 = arith.constant dense<0.000000e+00> : vector<512x64xf32>
    %68 = tpu.matmul %65, %67, %cst_59 {dimension_numbers = #tpu.dot_dimension_numbers<[1], [0], [0], [1], [0, 0, 1, 1], [], []>} : vector<512x64xbf16>, vector<64x64xbf16>, vector<512x64xf32> -> vector<512x64xf32>
    %69 = arith.addf %63, %68 : vector<512x64xf32>
    %c0_60 = arith.constant 0 : index
    %c1_61 = arith.constant 1 : index
    %c0_62 = arith.constant 0 : index
    %c0_63 = arith.constant 0 : index
    %70 = vector.load %arg6[%c0_60, %c1_61, %c0_62, %c0_63] : memref<2x18x18x64xbf16, #tpu.memory_space<vmem>>, vector<2x16x16x64xbf16>
    %71 = vector.shape_cast %70 : vector<2x16x16x64xbf16> to vector<512x64xbf16>
    %c3 = arith.constant 3 : index
    %c0_64 = arith.constant 0 : index
    %c0_65 = arith.constant 0 : index
    %72 = vector.load %arg2[%c3, %c0_64, %c0_65] : memref<9x64x64xbf16, #tpu.memory_space<vmem>>, vector<1x64x64xbf16>
    %73 = vector.shape_cast %72 : vector<1x64x64xbf16> to vector<64x64xbf16>
    %cst_66 = arith.constant dense<0.000000e+00> : vector<512x64xf32>
    %74 = tpu.matmul %71, %73, %cst_66 {dimension_numbers = #tpu.dot_dimension_numbers<[1], [0], [0], [1], [0, 0, 1, 1], [], []>} : vector<512x64xbf16>, vector<64x64xbf16>, vector<512x64xf32> -> vector<512x64xf32>
    %75 = arith.addf %69, %74 : vector<512x64xf32>
    %c0_67 = arith.constant 0 : index
    %c1_68 = arith.constant 1 : index
    %c1_69 = arith.constant 1 : index
    %c0_70 = arith.constant 0 : index
    %76 = vector.load %arg6[%c0_67, %c1_68, %c1_69, %c0_70] : memref<2x18x18x64xbf16, #tpu.memory_space<vmem>>, vector<2x16x16x64xbf16>
    %77 = vector.shape_cast %76 : vector<2x16x16x64xbf16> to vector<512x64xbf16>
    %c4 = arith.constant 4 : index
    %c0_71 = arith.constant 0 : index
    %c0_72 = arith.constant 0 : index
    %78 = vector.load %arg2[%c4, %c0_71, %c0_72] : memref<9x64x64xbf16, #tpu.memory_space<vmem>>, vector<1x64x64xbf16>
    %79 = vector.shape_cast %78 : vector<1x64x64xbf16> to vector<64x64xbf16>
    %cst_73 = arith.constant dense<0.000000e+00> : vector<512x64xf32>
    %80 = tpu.matmul %77, %79, %cst_73 {dimension_numbers = #tpu.dot_dimension_numbers<[1], [0], [0], [1], [0, 0, 1, 1], [], []>} : vector<512x64xbf16>, vector<64x64xbf16>, vector<512x64xf32> -> vector<512x64xf32>
    %81 = arith.addf %75, %80 : vector<512x64xf32>
    %c0_74 = arith.constant 0 : index
    %c1_75 = arith.constant 1 : index
    %c2_76 = arith.constant 2 : index
    %c0_77 = arith.constant 0 : index
    %82 = vector.load %arg6[%c0_74, %c1_75, %c2_76, %c0_77] : memref<2x18x18x64xbf16, #tpu.memory_space<vmem>>, vector<2x16x16x64xbf16>
    %83 = vector.shape_cast %82 : vector<2x16x16x64xbf16> to vector<512x64xbf16>
    %c5 = arith.constant 5 : index
    %c0_78 = arith.constant 0 : index
    %c0_79 = arith.constant 0 : index
    %84 = vector.load %arg2[%c5, %c0_78, %c0_79] : memref<9x64x64xbf16, #tpu.memory_space<vmem>>, vector<1x64x64xbf16>
    %85 = vector.shape_cast %84 : vector<1x64x64xbf16> to vector<64x64xbf16>
    %cst_80 = arith.constant dense<0.000000e+00> : vector<512x64xf32>
    %86 = tpu.matmul %83, %85, %cst_80 {dimension_numbers = #tpu.dot_dimension_numbers<[1], [0], [0], [1], [0, 0, 1, 1], [], []>} : vector<512x64xbf16>, vector<64x64xbf16>, vector<512x64xf32> -> vector<512x64xf32>
    %87 = arith.addf %81, %86 : vector<512x64xf32>
    %c0_81 = arith.constant 0 : index
    %c2_82 = arith.constant 2 : index
    %c0_83 = arith.constant 0 : index
    %c0_84 = arith.constant 0 : index
    %88 = vector.load %arg6[%c0_81, %c2_82, %c0_83, %c0_84] : memref<2x18x18x64xbf16, #tpu.memory_space<vmem>>, vector<2x16x16x64xbf16>
    %89 = vector.shape_cast %88 : vector<2x16x16x64xbf16> to vector<512x64xbf16>
    %c6_85 = arith.constant 6 : index
    %c0_86 = arith.constant 0 : index
    %c0_87 = arith.constant 0 : index
    %90 = vector.load %arg2[%c6_85, %c0_86, %c0_87] : memref<9x64x64xbf16, #tpu.memory_space<vmem>>, vector<1x64x64xbf16>
    %91 = vector.shape_cast %90 : vector<1x64x64xbf16> to vector<64x64xbf16>
    %cst_88 = arith.constant dense<0.000000e+00> : vector<512x64xf32>
    %92 = tpu.matmul %89, %91, %cst_88 {dimension_numbers = #tpu.dot_dimension_numbers<[1], [0], [0], [1], [0, 0, 1, 1], [], []>} : vector<512x64xbf16>, vector<64x64xbf16>, vector<512x64xf32> -> vector<512x64xf32>
    %93 = arith.addf %87, %92 : vector<512x64xf32>
    %c0_89 = arith.constant 0 : index
    %c2_90 = arith.constant 2 : index
    %c1_91 = arith.constant 1 : index
    %c0_92 = arith.constant 0 : index
    %94 = vector.load %arg6[%c0_89, %c2_90, %c1_91, %c0_92] : memref<2x18x18x64xbf16, #tpu.memory_space<vmem>>, vector<2x16x16x64xbf16>
    %95 = vector.shape_cast %94 : vector<2x16x16x64xbf16> to vector<512x64xbf16>
    %c7_93 = arith.constant 7 : index
    %c0_94 = arith.constant 0 : index
    %c0_95 = arith.constant 0 : index
    %96 = vector.load %arg2[%c7_93, %c0_94, %c0_95] : memref<9x64x64xbf16, #tpu.memory_space<vmem>>, vector<1x64x64xbf16>
    %97 = vector.shape_cast %96 : vector<1x64x64xbf16> to vector<64x64xbf16>
    %cst_96 = arith.constant dense<0.000000e+00> : vector<512x64xf32>
    %98 = tpu.matmul %95, %97, %cst_96 {dimension_numbers = #tpu.dot_dimension_numbers<[1], [0], [0], [1], [0, 0, 1, 1], [], []>} : vector<512x64xbf16>, vector<64x64xbf16>, vector<512x64xf32> -> vector<512x64xf32>
    %99 = arith.addf %93, %98 : vector<512x64xf32>
    %c0_97 = arith.constant 0 : index
    %c2_98 = arith.constant 2 : index
    %c2_99 = arith.constant 2 : index
    %c0_100 = arith.constant 0 : index
    %100 = vector.load %arg6[%c0_97, %c2_98, %c2_99, %c0_100] : memref<2x18x18x64xbf16, #tpu.memory_space<vmem>>, vector<2x16x16x64xbf16>
    %101 = vector.shape_cast %100 : vector<2x16x16x64xbf16> to vector<512x64xbf16>
    %c8 = arith.constant 8 : index
    %c0_101 = arith.constant 0 : index
    %c0_102 = arith.constant 0 : index
    %102 = vector.load %arg2[%c8, %c0_101, %c0_102] : memref<9x64x64xbf16, #tpu.memory_space<vmem>>, vector<1x64x64xbf16>
    %103 = vector.shape_cast %102 : vector<1x64x64xbf16> to vector<64x64xbf16>
    %cst_103 = arith.constant dense<0.000000e+00> : vector<512x64xf32>
    %104 = tpu.matmul %101, %103, %cst_103 {dimension_numbers = #tpu.dot_dimension_numbers<[1], [0], [0], [1], [0, 0, 1, 1], [], []>} : vector<512x64xbf16>, vector<64x64xbf16>, vector<512x64xf32> -> vector<512x64xf32>
    %105 = arith.addf %99, %104 : vector<512x64xf32>
    %cst_104 = arith.constant dense<0.000000e+00> : vector<64xf32>
    %106 = vector.multi_reduction <add>, %105, %cst_104 [0] : vector<512x64xf32> to vector<64xf32>
    %107 = vector.shape_cast %106 : vector<64xf32> to vector<1x64xf32>
    %108 = arith.mulf %105, %105 : vector<512x64xf32>
    %cst_105 = arith.constant dense<0.000000e+00> : vector<64xf32>
    %109 = vector.multi_reduction <add>, %108, %cst_105 [0] : vector<512x64xf32> to vector<64xf32>
    %110 = vector.shape_cast %109 : vector<64xf32> to vector<1x64xf32>
    %cst_106 = arith.constant 0.001953125 : f32
    %111 = vector.broadcast %cst_106 : f32 to vector<1x64xf32>
    %112 = arith.mulf %107, %111 : vector<1x64xf32>
    %cst_107 = arith.constant 0.001953125 : f32
    %113 = vector.broadcast %cst_107 : f32 to vector<1x64xf32>
    %114 = arith.mulf %110, %113 : vector<1x64xf32>
    %115 = arith.mulf %112, %112 : vector<1x64xf32>
    %116 = arith.subf %114, %115 : vector<1x64xf32>
    %cst_108 = arith.constant 9.99999974E-6 : f32
    %117 = vector.broadcast %cst_108 : f32 to vector<1x64xf32>
    %118 = arith.addf %116, %117 : vector<1x64xf32>
    %119 = math.rsqrt %118 : vector<1x64xf32>
    %c2_109 = arith.constant 2 : index
    %c0_110 = arith.constant 0 : index
    %120 = vector.load %arg4[%c2_109, %c0_110] : memref<8x128xf32, #tpu.memory_space<vmem>>, vector<1x64xf32>
    %c3_111 = arith.constant 3 : index
    %c0_112 = arith.constant 0 : index
    %121 = vector.load %arg4[%c3_111, %c0_112] : memref<8x128xf32, #tpu.memory_space<vmem>>, vector<1x64xf32>
    %122 = arith.mulf %120, %119 : vector<1x64xf32>
    %123 = vector.broadcast %122 : vector<1x64xf32> to vector<512x64xf32>
    %124 = arith.mulf %105, %123 : vector<512x64xf32>
    %125 = arith.mulf %112, %122 : vector<1x64xf32>
    %126 = arith.subf %121, %125 : vector<1x64xf32>
    %127 = vector.broadcast %126 : vector<1x64xf32> to vector<512x64xf32>
    %128 = arith.addf %124, %127 : vector<512x64xf32>
    %cst_113 = arith.constant 0.000000e+00 : f32
    %129 = vector.broadcast %cst_113 : f32 to vector<512x64xf32>
    %130 = arith.maximumf %128, %129 : vector<512x64xf32>
    %131 = arith.truncf %130 : vector<512x64xf32> to vector<512x64xbf16>
    %c0_114 = arith.constant 0 : index
    %c0_115 = arith.constant 0 : index
    %132 = vector.load %arg3[%c0_114, %c0_115] : memref<64x128xbf16, #tpu.memory_space<vmem>>, vector<64x128xbf16>
    %cst_116 = arith.constant dense<0.000000e+00> : vector<512x128xf32>
    %133 = tpu.matmul %131, %132, %cst_116 {dimension_numbers = #tpu.dot_dimension_numbers<[1], [0], [0], [1], [0, 0, 1, 1], [], []>} : vector<512x64xbf16>, vector<64x128xbf16>, vector<512x128xf32> -> vector<512x128xf32>
    %cst_117 = arith.constant dense<0.000000e+00> : vector<128xf32>
    %134 = vector.multi_reduction <add>, %133, %cst_117 [0] : vector<512x128xf32> to vector<128xf32>
    %135 = vector.shape_cast %134 : vector<128xf32> to vector<1x128xf32>
    %136 = arith.mulf %133, %133 : vector<512x128xf32>
    %cst_118 = arith.constant dense<0.000000e+00> : vector<128xf32>
    %137 = vector.multi_reduction <add>, %136, %cst_118 [0] : vector<512x128xf32> to vector<128xf32>
    %138 = vector.shape_cast %137 : vector<128xf32> to vector<1x128xf32>
    %cst_119 = arith.constant 0.001953125 : f32
    %139 = vector.broadcast %cst_119 : f32 to vector<1x128xf32>
    %140 = arith.mulf %135, %139 : vector<1x128xf32>
    %cst_120 = arith.constant 0.001953125 : f32
    %141 = vector.broadcast %cst_120 : f32 to vector<1x128xf32>
    %142 = arith.mulf %138, %141 : vector<1x128xf32>
    %143 = arith.mulf %140, %140 : vector<1x128xf32>
    %144 = arith.subf %142, %143 : vector<1x128xf32>
    %cst_121 = arith.constant 9.99999974E-6 : f32
    %145 = vector.broadcast %cst_121 : f32 to vector<1x128xf32>
    %146 = arith.addf %144, %145 : vector<1x128xf32>
    %147 = math.rsqrt %146 : vector<1x128xf32>
    %c4_122 = arith.constant 4 : index
    %c0_123 = arith.constant 0 : index
    %148 = vector.load %arg4[%c4_122, %c0_123] : memref<8x128xf32, #tpu.memory_space<vmem>>, vector<1x128xf32>
    %c5_124 = arith.constant 5 : index
    %c0_125 = arith.constant 0 : index
    %149 = vector.load %arg4[%c5_124, %c0_125] : memref<8x128xf32, #tpu.memory_space<vmem>>, vector<1x128xf32>
    %150 = arith.mulf %148, %147 : vector<1x128xf32>
    %151 = vector.broadcast %150 : vector<1x128xf32> to vector<512x128xf32>
    %152 = arith.mulf %133, %151 : vector<512x128xf32>
    %153 = arith.mulf %140, %150 : vector<1x128xf32>
    %154 = arith.subf %149, %153 : vector<1x128xf32>
    %155 = vector.broadcast %154 : vector<1x128xf32> to vector<512x128xf32>
    %156 = arith.addf %152, %155 : vector<512x128xf32>
    %c0_126 = arith.constant 0 : index
    %c0_127 = arith.constant 0 : index
    %157 = vector.load %arg5[%c0_126, %c0_127] : memref<512x128xf32, #tpu.memory_space<vmem>>, vector<512x128xf32>
    %158 = arith.addf %156, %157 : vector<512x128xf32>
    %cst_128 = arith.constant 0.000000e+00 : f32
    %159 = vector.broadcast %cst_128 : f32 to vector<512x128xf32>
    %160 = arith.maximumf %158, %159 : vector<512x128xf32>
    %c0_129 = arith.constant 0 : index
    %c0_130 = arith.constant 0 : index
    %161 = vector.load %arg5[%c0_129, %c0_130] : memref<512x128xf32, #tpu.memory_space<vmem>>, vector<512x128xf32>
    tpu.vector_store %arg5[%c0_129, %c0_130], %160 {strides = array<i32>} : memref<512x128xf32, #tpu.memory_space<vmem>>, vector<512x128xf32>,
    return
  }
}

</mosaic_0001>

<llo_original>
// kernel: tpu_custom_call.1
$region0: #{tpu_custom_call.1}
  #allocation0 [shape = 'u32[]', space=smem, size = 0x4, offset = 0x4, fixed_abs, tag = 'smem constant byte address 0x4 - core index']
  #allocation1 [shape = 'u32[144,128]{1,0:T(1,128)}', space=vmem, size = 0x12000, scoped, tag = 'internal scratch']
  #allocation2 [shape = 'bf16[2,18,18,64]{3,2,1,0:T(8,128)(2,1)}', space=vmem, size = 0x36000, scoped, tag = 'scratch operand']
  %s0 = inlined_call_operand.vmem [shape: bf16[512,8], index: 0, kind: input, shape index: {}]
  %s1 = inlined_call_operand.vmem [shape: bf16[8,192], index: 1, kind: input, shape index: {}]
  %s2 = inlined_call_operand.hbm [shape: bf16[9,64,64], index: 2, kind: input, shape index: {}]
  %s3 = inlined_call_operand.vmem [shape: bf16[64,128], index: 3, kind: input, shape index: {}]
  %s4 = inlined_call_operand.vmem [shape: f32[8,128], index: 4, kind: input, shape index: {}]
  %s5 = inlined_call_operand.hbm [shape: f32[512,128], index: 5, kind: output, shape index: {}]
  %s6 = sld [smem:[#allocation0]]
  $region34: #{tpu_custom_call.1} parent=0
    _
  %s8 = ssub.s32 1, %s6
  %s9 = scalar_select 0, %s8, %s6
  $region1: #{tpu_custom_call.1} parent=0
    #allocation3 [shape = 'u8[147456]{0}', space=vmem, size = 0x24000, scoped, tag = 'input window, operand 2, single buffered']
    #allocation4 [shape = 's32[1]{0}', space=sflag, size = 0x4, scoped, tag = 'scoped memory for tpu_custom_call.1']
    #allocation5 [shape = 's32[1]{0}', space=sflag, size = 0x4, scoped, tag = 'scoped memory for tpu_custom_call.1']
    #allocation6 [shape = 'u8[262144]{0}', space=vmem, size = 0x40000, scoped, tag = 'output window, operand 0, single buffered']
    %10 = vsyncpa [#allocation4], 0
    %11 = vsyncpa [#allocation5], 0
    // Predicated region
    $region2: #{tpu_custom_call.1} parent=1 // pred_check
      _
    $region3: #{tpu_custom_call.1} parent=1 // pred_check_branch
      %13 = sbr.rel (0) target = $region5
    $region4: #{tpu_custom_call.1} parent=1 // pred_region
      _
    $region5: #{tpu_custom_call.1} parent=1 // pred_fallthru
      _
    // Predicated region
    $region6: #{tpu_custom_call.1} parent=1 // pred_check
      _
    $region7: #{tpu_custom_call.1} parent=1 // pred_check_branch
      %15 = sbr.rel (0) target = $region9
    $region8: #{tpu_custom_call.1} parent=1 // pred_region
      _
    $region9: #{tpu_custom_call.1} parent=1 // pred_fallthru
      _
    // Predicated region
    $region10: #{tpu_custom_call.1} parent=1 // pred_check
      _
    $region11: #{tpu_custom_call.1} parent=1 // pred_check_branch
      %17 = sbr.rel (0) target = $region13
    $region12: #{tpu_custom_call.1} parent=1 // pred_region
      %s19 = ssub.s32 4608, 4608
      %20 = vsyncadd [#allocation4], %s19
      %s21 = sshll.u32 [#allocation3], 4
      %s22 = int_to_ptr.vmem [resolvable:$true] %s21
      %27 = dma.hbm_to_vmem [thread:$0]  %s2, 4608, %s22, [#allocation4], 64, 64, 4
    $region13: #{tpu_custom_call.1} parent=1 // pred_fallthru
      _
    // Predicated region
    $region14: #{tpu_custom_call.1} parent=1 // pred_check
      _
    $region15: #{tpu_custom_call.1} parent=1 // pred_check_branch
      %29 = sbr.rel (0) target = $region17
    $region16: #{tpu_custom_call.1} parent=1 // pred_region
      _
    $region17: #{tpu_custom_call.1} parent=1 // pred_fallthru
      _
    // Predicated region
    $region18: #{tpu_custom_call.1} parent=1 // pred_check
      _
    $region19: #{tpu_custom_call.1} parent=1 // pred_check_branch
      %31 = sbr.rel (0) target = $region21
    $region20: #{tpu_custom_call.1} parent=1 // pred_region
      _
    $region21: #{tpu_custom_call.1} parent=1 // pred_fallthru
      _
    // Predicated region
    $region22: #{tpu_custom_call.1} parent=1 // pred_check
      _
    $region23: #{tpu_custom_call.1} parent=1 // pred_check_branch
      %33 = sbr.rel (0) target = $region25
    $region24: #{tpu_custom_call.1} parent=1 // pred_region
      %34 = dma.done [#allocation4], 4608
    $region25: #{tpu_custom_call.1} parent=1 // pred_fallthru
      _
    %v36 = vld [vmem:[%s0] sm:$0xf]
    %v37 = vld [vmem:[%s0 + $0x4] sm:$0xf]
    %v38 = vld [vmem:[%s0 + $0x8] sm:$0xf]
    %v39 = vld [vmem:[%s0 + $0xc] sm:$0xf]
    %v40 = vld [vmem:[%s0 + $0x10] sm:$0xf]
    %v41 = vld [vmem:[%s0 + $0x14] sm:$0xf]
    %v42 = vld [vmem:[%s0 + $0x18] sm:$0xf]
    %v43 = vld [vmem:[%s0 + $0x1c] sm:$0xf]
    %v44 = vld [vmem:[%s0 + $0x20] sm:$0xf]
    %v45 = vld [vmem:[%s0 + $0x24] sm:$0xf]
    %v46 = vld [vmem:[%s0 + $0x28] sm:$0xf]
    %v47 = vld [vmem:[%s0 + $0x2c] sm:$0xf]
    %v48 = vld [vmem:[%s0 + $0x30] sm:$0xf]
    %v49 = vld [vmem:[%s0 + $0x34] sm:$0xf]
    %v50 = vld [vmem:[%s0 + $0x38] sm:$0xf]
    %v51 = vld [vmem:[%s0 + $0x3c] sm:$0xf]
    %v52 = vld [vmem:[%s0 + $0x40] sm:$0xf]
    %v53 = vld [vmem:[%s0 + $0x44] sm:$0xf]
    %v54 = vld [vmem:[%s0 + $0x48] sm:$0xf]
    %v55 = vld [vmem:[%s0 + $0x4c] sm:$0xf]
    %v56 = vld [vmem:[%s0 + $0x50] sm:$0xf]
    %v57 = vld [vmem:[%s0 + $0x54] sm:$0xf]
    %v58 = vld [vmem:[%s0 + $0x58] sm:$0xf]
    %v59 = vld [vmem:[%s0 + $0x5c] sm:$0xf]
    %v60 = vld [vmem:[%s0 + $0x60] sm:$0xf]
    %v61 = vld [vmem:[%s0 + $0x64] sm:$0xf]
    %v62 = vld [vmem:[%s0 + $0x68] sm:$0xf]
    %v63 = vld [vmem:[%s0 + $0x6c] sm:$0xf]
    %v64 = vld [vmem:[%s0 + $0x70] sm:$0xf]
    %v65 = vld [vmem:[%s0 + $0x74] sm:$0xf]
    %v66 = vld [vmem:[%s0 + $0x78] sm:$0xf]
    %v67 = vld [vmem:[%s0 + $0x7c] sm:$0xf]
    %v68 = vld [vmem:[%s0 + $0x80] sm:$0xf]
    %v69 = vld [vmem:[%s0 + $0x84] sm:$0xf]
    %v70 = vld [vmem:[%s0 + $0x88] sm:$0xf]
    %v71 = vld [vmem:[%s0 + $0x8c] sm:$0xf]
    %v72 = vld [vmem:[%s0 + $0x90] sm:$0xf]
    %v73 = vld [vmem:[%s0 + $0x94] sm:$0xf]
    %v74 = vld [vmem:[%s0 + $0x98] sm:$0xf]
    %v75 = vld [vmem:[%s0 + $0x9c] sm:$0xf]
    %v76 = vld [vmem:[%s0 + $0xa0] sm:$0xf]
    %v77 = vld [vmem:[%s0 + $0xa4] sm:$0xf]
    %v78 = vld [vmem:[%s0 + $0xa8] sm:$0xf]
    %v79 = vld [vmem:[%s0 + $0xac] sm:$0xf]
    %v80 = vld [vmem:[%s0 + $0xb0] sm:$0xf]
    %v81 = vld [vmem:[%s0 + $0xb4] sm:$0xf]
    %v82 = vld [vmem:[%s0 + $0xb8] sm:$0xf]
    %v83 = vld [vmem:[%s0 + $0xbc] sm:$0xf]
    %v84 = vld [vmem:[%s0 + $0xc0] sm:$0xf]
    %v85 = vld [vmem:[%s0 + $0xc4] sm:$0xf]
    %v86 = vld [vmem:[%s0 + $0xc8] sm:$0xf]
    %v87 = vld [vmem:[%s0 + $0xcc] sm:$0xf]
    %v88 = vld [vmem:[%s0 + $0xd0] sm:$0xf]
    %v89 = vld [vmem:[%s0 + $0xd4] sm:$0xf]
    %v90 = vld [vmem:[%s0 + $0xd8] sm:$0xf]
    %v91 = vld [vmem:[%s0 + $0xdc] sm:$0xf]
    %v92 = vld [vmem:[%s0 + $0xe0] sm:$0xf]
    %v93 = vld [vmem:[%s0 + $0xe4] sm:$0xf]
    %v94 = vld [vmem:[%s0 + $0xe8] sm:$0xf]
    %v95 = vld [vmem:[%s0 + $0xec] sm:$0xf]
    %v96 = vld [vmem:[%s0 + $0xf0] sm:$0xf]
    %v97 = vld [vmem:[%s0 + $0xf4] sm:$0xf]
    %v98 = vld [vmem:[%s0 + $0xf8] sm:$0xf]
    %v99 = vld [vmem:[%s0 + $0xfc] sm:$0xf]
    %v100 = vld [vmem:[%s1] sm:$0xff]
    %v165 = vunpack.c.l.b16 %v36
    %v166 = vunpack.c.l.b16 %v37
    %v167 = vunpack.c.l.b16 %v38
    %v168 = vunpack.c.l.b16 %v39
    %v169 = vunpack.c.l.b16 %v40
    %v170 = vunpack.c.l.b16 %v41
    %v171 = vunpack.c.l.b16 %v42
    %v172 = vunpack.c.l.b16 %v43
    %v173 = vunpack.c.l.b16 %v44
    %v174 = vunpack.c.l.b16 %v45
    %v175 = vunpack.c.l.b16 %v46
    %v176 = vunpack.c.l.b16 %v47
    %v177 = vunpack.c.l.b16 %v48
    %v178 = vunpack.c.l.b16 %v49
    %v179 = vunpack.c.l.b16 %v50
    %v180 = vunpack.c.l.b16 %v51
    %v181 = vunpack.c.l.b16 %v52
    %v182 = vunpack.c.l.b16 %v53
    %v183 = vunpack.c.l.b16 %v54
    %v184 = vunpack.c.l.b16 %v55
    %v185 = vunpack.c.l.b16 %v56
    %v186 = vunpack.c.l.b16 %v57
    %v187 = vunpack.c.l.b16 %v58
    %v188 = vunpack.c.l.b16 %v59
    %v189 = vunpack.c.l.b16 %v60
    %v190 = vunpack.c.l.b16 %v61
    %v191 = vunpack.c.l.b16 %v62
    %v192 = vunpack.c.l.b16 %v63
    %v193 = vunpack.c.l.b16 %v64
    %v194 = vunpack.c.l.b16 %v65
    %v195 = vunpack.c.l.b16 %v66
    %v196 = vunpack.c.l.b16 %v67
    %v197 = vunpack.c.l.b16 %v68
    %v198 = vunpack.c.l.b16 %v69
    %v199 = vunpack.c.l.b16 %v70
    %v200 = vunpack.c.l.b16 %v71
    %v201 = vunpack.c.l.b16 %v72
    %v202 = vunpack.c.l.b16 %v73
    %v203 = vunpack.c.l.b16 %v74
    %v204 = vunpack.c.l.b16 %v75
    %v205 = vunpack.c.l.b16 %v76
    %v206 = vunpack.c.l.b16 %v77
    %v207 = vunpack.c.l.b16 %v78
    %v208 = vunpack.c.l.b16 %v79
    %v209 = vunpack.c.l.b16 %v80
    %v210 = vunpack.c.l.b16 %v81
    %v211 = vunpack.c.l.b16 %v82
    %v212 = vunpack.c.l.b16 %v83
    %v213 = vunpack.c.l.b16 %v84
    %v214 = vunpack.c.l.b16 %v85
    %v215 = vunpack.c.l.b16 %v86
    %v216 = vunpack.c.l.b16 %v87
    %v217 = vunpack.c.l.b16 %v88
    %v218 = vunpack.c.l.b16 %v89
    %v219 = vunpack.c.l.b16 %v90
    %v220 = vunpack.c.l.b16 %v91
    %v221 = vunpack.c.l.b16 %v92
    %v222 = vunpack.c.l.b16 %v93
    %v223 = vunpack.c.l.b16 %v94
    %v224 = vunpack.c.l.b16 %v95
    %v225 = vunpack.c.l.b16 %v96
    %v226 = vunpack.c.l.b16 %v97
    %v227 = vunpack.c.l.b16 %v98
    %v228 = vunpack.c.l.b16 %v99
    %v229 = vpack.c.b16 %v166, %v165
    %v230 = vpack.c.b16 %v168, %v167
    %v231 = vpack.c.b16 %v170, %v169
    %v232 = vpack.c.b16 %v172, %v171
    %v233 = vpack.c.b16 %v174, %v173
    %v234 = vpack.c.b16 %v176, %v175
    %v235 = vpack.c.b16 %v178, %v177
    %v236 = vpack.c.b16 %v180, %v179
    %v237 = vpack.c.b16 %v182, %v181
    %v238 = vpack.c.b16 %v184, %v183
    %v239 = vpack.c.b16 %v186, %v185
    %v240 = vpack.c.b16 %v188, %v187
    %v241 = vpack.c.b16 %v190, %v189
    %v242 = vpack.c.b16 %v192, %v191
    %v243 = vpack.c.b16 %v194, %v193
    %v244 = vpack.c.b16 %v196, %v195
    %v245 = vpack.c.b16 %v198, %v197
    %v246 = vpack.c.b16 %v200, %v199
    %v247 = vpack.c.b16 %v202, %v201
    %v248 = vpack.c.b16 %v204, %v203
    %v249 = vpack.c.b16 %v206, %v205
    %v250 = vpack.c.b16 %v208, %v207
    %v251 = vpack.c.b16 %v210, %v209
    %v252 = vpack.c.b16 %v212, %v211
    %v253 = vpack.c.b16 %v214, %v213
    %v254 = vpack.c.b16 %v216, %v215
    %v255 = vpack.c.b16 %v218, %v217
    %v256 = vpack.c.b16 %v220, %v219
    %v257 = vpack.c.b16 %v222, %v221
    %v258 = vpack.c.b16 %v224, %v223
    %v259 = vpack.c.b16 %v226, %v225
    %v260 = vpack.c.b16 %v228, %v227
    %v262 = vunpack.c.l.b16 %v100
    %v263 = vunpack.c.h.b16 %v100
    %v264 = vpack.c.b16 %v262, %v262
    %v265 = vpack.c.b16 %v263, %v263
    %vm266 = vcmask 64512
    %v268 = vsel %vm266, %v229, 0
    %v271 = vsel %vm266, %v230, 0
    %v274 = vsel %vm266, %v231, 0
    %v277 = vsel %vm266, %v232, 0
    %v280 = vsel %vm266, %v233, 0
    %v283 = vsel %vm266, %v234, 0
    %v286 = vsel %vm266, %v235, 0
    %v289 = vsel %vm266, %v236, 0
    %v292 = vsel %vm266, %v237, 0
    %v295 = vsel %vm266, %v238, 0
    %v298 = vsel %vm266, %v239, 0
    %v301 = vsel %vm266, %v240, 0
    %v304 = vsel %vm266, %v241, 0
    %v307 = vsel %vm266, %v242, 0
    %v310 = vsel %vm266, %v243, 0
    %v313 = vsel %vm266, %v244, 0
    %v316 = vsel %vm266, %v245, 0
    %v319 = vsel %vm266, %v246, 0
    %v322 = vsel %vm266, %v247, 0
    %v325 = vsel %vm266, %v248, 0
    %v328 = vsel %vm266, %v249, 0
    %v331 = vsel %vm266, %v250, 0
    %v334 = vsel %vm266, %v251, 0
    %v337 = vsel %vm266, %v252, 0
    %v340 = vsel %vm266, %v253, 0
    %v343 = vsel %vm266, %v254, 0
    %v346 = vsel %vm266, %v255, 0
    %v349 = vsel %vm266, %v256, 0
    %v352 = vsel %vm266, %v257, 0
    %v355 = vsel %vm266, %v258, 0
    %v358 = vsel %vm266, %v259, 0
    %v361 = vsel %vm266, %v260, 0
    %vm363 = vcmask 1043456
    %v365 = vsel %vm363, %v264, 0
    %v368 = vsel %vm363, %v265, 0
    %370 = vmatprep.subr.bf16.mxu0 0
    %371 = vmatpush1.bf16.msra.mxu0 0
    %372 = vmatprep.subr.bf16.mxu0 0
    %373 = vmatpush1.bf16.msra.mxu0 0
    %374 = vmatprep.subr.bf16.mxu0 0
    %375 = vmatpush1.bf16.msra.mxu0 0
    %376 = vmatprep.subr.bf16.mxu0 0
    %377 = vmatpush1.bf16.msra.mxu0 0
    %378 = vmatprep.subr.bf16.mxu0 0
    %379 = vmatpush1.bf16.msra.mxu0 0
    %380 = vmatprep.subr.bf16.mxu0 0
    %381 = vmatpush1.bf16.msra.mxu0 0
    %382 = vmatprep.subr.bf16.mxu0 0
    %383 = vmatpush1.bf16.msra.mxu0 0
    %384 = vmatprep.subr.bf16.mxu0 %v368
    %385 = vmatpush1.bf16.msra.mxu0 %v365
    %386 = vmatprep.subr.bf16.mxu0 0
    %387 = vmatpush2.bf16.msra.mxu0 0
    %388 = vmatprep.subr.bf16.mxu0 0
    %389 = vmatpush2.bf16.msra.mxu0 0
    %390 = vmatprep.subr.bf16.mxu0 0
    %391 = vmatpush2.bf16.msra.mxu0 0
    %392 = vmatprep.subr.bf16.mxu0 0
    %393 = vmatpush2.bf16.msra.mxu0 0
    %394 = vmatprep.subr.bf16.mxu0 0
    %395 = vmatpush2.bf16.msra.mxu0 0
    %396 = vmatprep.subr.bf16.mxu0 0
    %397 = vmatpush2.bf16.msra.mxu0 0
    %398 = vmatprep.subr.bf16.mxu0 0
    %399 = vmatpush2.bf16.msra.mxu0 0
    %400 = vmatprep.subr.bf16.mxu0 0
    %401 = vmatpush2.bf16.msra.mxu0 0
    %402 = vmatprep.mubr.bf16.mxu0 0
    %403 = vmatmul.mubr.bf16.gmra.mxu0 %v268
    %v404 = vpop.f32.mrf.mxu0
    %v405 = vadd.f32 0.0, %v404
    %v406 = vpop.f32.mrf.mxu0
    %v407 = vadd.f32 0.0, %v406
    %v408 = vpop.f32.mrf.mxu0
    %v409 = vadd.f32 0.0, %v408
    %v410 = vpop.f32.mrf.mxu0
    %v411 = vadd.f32 0.0, %v410
    %412 = vmatprep.mubr.bf16.mxu0 0
    %413 = vmatmul.mubr.bf16.gmra.mxu0 %v271
    %v414 = vpop.f32.mrf.mxu0
    %v415 = vadd.f32 0.0, %v414
    %v416 = vpop.f32.mrf.mxu0
    %v417 = vadd.f32 0.0, %v416
    %v418 = vpop.f32.mrf.mxu0
    %v419 = vadd.f32 0.0, %v418
    %v420 = vpop.f32.mrf.mxu0
    %v421 = vadd.f32 0.0, %v420
    %422 = vmatprep.mubr.bf16.mxu0 0
    %423 = vmatmul.mubr.bf16.gmra.mxu0 %v274
    %v424 = vpop.f32.mrf.mxu0
    %v425 = vadd.f32 0.0, %v424
    %v426 = vpop.f32.mrf.mxu0
    %v427 = vadd.f32 0.0, %v426
    %v428 = vpop.f32.mrf.mxu0
    %v429 = vadd.f32 0.0, %v428
    %v430 = vpop.f32.mrf.mxu0
    %v431 = vadd.f32 0.0, %v430
    %432 = vmatprep.mubr.bf16.mxu0 0
    %433 = vmatmul.mubr.bf16.gmra.mxu0 %v277
    %v434 = vpop.f32.mrf.mxu0
    %v435 = vadd.f32 0.0, %v434
    %v436 = vpop.f32.mrf.mxu0
    %v437 = vadd.f32 0.0, %v436
    %v438 = vpop.f32.mrf.mxu0
    %v439 = vadd.f32 0.0, %v438
    %v440 = vpop.f32.mrf.mxu0
    %v441 = vadd.f32 0.0, %v440
    %442 = vmatprep.mubr.bf16.mxu0 0
    %443 = vmatmul.mubr.bf16.gmra.mxu0 %v280
    %v444 = vpop.f32.mrf.mxu0
    %v445 = vadd.f32 0.0, %v444
    %v446 = vpop.f32.mrf.mxu0
    %v447 = vadd.f32 0.0, %v446
    %v448 = vpop.f32.mrf.mxu0
    %v449 = vadd.f32 0.0, %v448
    %v450 = vpop.f32.mrf.mxu0
    %v451 = vadd.f32 0.0, %v450
    %452 = vmatprep.mubr.bf16.mxu0 0
    %453 = vmatmul.mubr.bf16.gmra.mxu0 %v283
    %v454 = vpop.f32.mrf.mxu0
    %v455 = vadd.f32 0.0, %v454
    %v456 = vpop.f32.mrf.mxu0
    %v457 = vadd.f32 0.0, %v456
    %v458 = vpop.f32.mrf.mxu0
    %v459 = vadd.f32 0.0, %v458
    %v460 = vpop.f32.mrf.mxu0
    %v461 = vadd.f32 0.0, %v460
    %462 = vmatprep.mubr.bf16.mxu0 0
    %463 = vmatmul.mubr.bf16.gmra.mxu0 %v286
    %v464 = vpop.f32.mrf.mxu0
    %v465 = vadd.f32 0.0, %v464
    %v466 = vpop.f32.mrf.mxu0
    %v467 = vadd.f32 0.0, %v466
    %v468 = vpop.f32.mrf.mxu0
    %v469 = vadd.f32 0.0, %v468
    %v470 = vpop.f32.mrf.mxu0
    %v471 = vadd.f32 0.0, %v470
    %472 = vmatprep.mubr.bf16.mxu0 0
    %473 = vmatmul.mubr.bf16.gmra.mxu0 %v289
    %v474 = vpop.f32.mrf.mxu0
    %v475 = vadd.f32 0.0, %v474
    %v476 = vpop.f32.mrf.mxu0
    %v477 = vadd.f32 0.0, %v476
    %v478 = vpop.f32.mrf.mxu0
    %v479 = vadd.f32 0.0, %v478
    %v480 = vpop.f32.mrf.mxu0
    %v481 = vadd.f32 0.0, %v480
    %482 = vmatprep.mubr.bf16.mxu0 0
    %483 = vmatmul.mubr.bf16.gmra.mxu0 %v292
    %v484 = vpop.f32.mrf.mxu0
    %v485 = vadd.f32 0.0, %v484
    %v486 = vpop.f32.mrf.mxu0
    %v487 = vadd.f32 0.0, %v486
    %v488 = vpop.f32.mrf.mxu0
    %v489 = vadd.f32 0.0, %v488
    %v490 = vpop.f32.mrf.mxu0
    %v491 = vadd.f32 0.0, %v490
    %492 = vmatprep.mubr.bf16.mxu0 0
    %493 = vmatmul.mubr.bf16.gmra.mxu0 %v295
    %v494 = vpop.f32.mrf.mxu0
    %v495 = vadd.f32 0.0, %v494
    %v496 = vpop.f32.mrf.mxu0
    %v497 = vadd.f32 0.0, %v496
    %v498 = vpop.f32.mrf.mxu0
    %v499 = vadd.f32 0.0, %v498
    %v500 = vpop.f32.mrf.mxu0
    %v501 = vadd.f32 0.0, %v500
    %502 = vmatprep.mubr.bf16.mxu0 0
    %503 = vmatmul.mubr.bf16.gmra.mxu0 %v298
    %v504 = vpop.f32.mrf.mxu0
    %v505 = vadd.f32 0.0, %v504
    %v506 = vpop.f32.mrf.mxu0
    %v507 = vadd.f32 0.0, %v506
    %v508 = vpop.f32.mrf.mxu0
    %v509 = vadd.f32 0.0, %v508
    %v510 = vpop.f32.mrf.mxu0
    %v511 = vadd.f32 0.0, %v510
    %512 = vmatprep.mubr.bf16.mxu0 0
    %513 = vmatmul.mubr.bf16.gmra.mxu0 %v301
    %v514 = vpop.f32.mrf.mxu0
    %v515 = vadd.f32 0.0, %v514
    %v516 = vpop.f32.mrf.mxu0
    %v517 = vadd.f32 0.0, %v516
    %v518 = vpop.f32.mrf.mxu0
    %v519 = vadd.f32 0.0, %v518
    %v520 = vpop.f32.mrf.mxu0
    %v521 = vadd.f32 0.0, %v520
    %522 = vmatprep.mubr.bf16.mxu0 0
    %523 = vmatmul.mubr.bf16.gmra.mxu0 %v304
    %v524 = vpop.f32.mrf.mxu0
    %v525 = vadd.f32 0.0, %v524
    %v526 = vpop.f32.mrf.mxu0
    %v527 = vadd.f32 0.0, %v526
    %v528 = vpop.f32.mrf.mxu0
    %v529 = vadd.f32 0.0, %v528
    %v530 = vpop.f32.mrf.mxu0
    %v531 = vadd.f32 0.0, %v530
    %532 = vmatprep.mubr.bf16.mxu0 0
    %533 = vmatmul.mubr.bf16.gmra.mxu0 %v307
    %v534 = vpop.f32.mrf.mxu0
    %v535 = vadd.f32 0.0, %v534
    %v536 = vpop.f32.mrf.mxu0
    %v537 = vadd.f32 0.0, %v536
    %v538 = vpop.f32.mrf.mxu0
    %v539 = vadd.f32 0.0, %v538
    %v540 = vpop.f32.mrf.mxu0
    %v541 = vadd.f32 0.0, %v540
    %542 = vmatprep.mubr.bf16.mxu0 0
    %543 = vmatmul.mubr.bf16.gmra.mxu0 %v310
    %v544 = vpop.f32.mrf.mxu0
    %v545 = vadd.f32 0.0, %v544
    %v546 = vpop.f32.mrf.mxu0
    %v547 = vadd.f32 0.0, %v546
    %v548 = vpop.f32.mrf.mxu0
    %v549 = vadd.f32 0.0, %v548
    %v550 = vpop.f32.mrf.mxu0
    %v551 = vadd.f32 0.0, %v550
    %552 = vmatprep.mubr.bf16.mxu0 0
    %553 = vmatmul.mubr.bf16.gmra.mxu0 %v313
    %v554 = vpop.f32.mrf.mxu0
    %v555 = vadd.f32 0.0, %v554
    %v556 = vpop.f32.mrf.mxu0
    %v557 = vadd.f32 0.0, %v556
    %v558 = vpop.f32.mrf.mxu0
    %v559 = vadd.f32 0.0, %v558
    %v560 = vpop.f32.mrf.mxu0
    %v561 = vadd.f32 0.0, %v560
    %562 = vmatprep.mubr.bf16.mxu0 0
    %563 = vmatmul.mubr.bf16.gmra.mxu0 %v316
    %v564 = vpop.f32.mrf.mxu0
    %v565 = vadd.f32 0.0, %v564
    %v566 = vpop.f32.mrf.mxu0
    %v567 = vadd.f32 0.0, %v566
    %v568 = vpop.f32.mrf.mxu0
    %v569 = vadd.f32 0.0, %v568
    %v570 = vpop.f32.mrf.mxu0
    %v571 = vadd.f32 0.0, %v570
    %572 = vmatprep.mubr.bf16.mxu0 0
    %573 = vmatmul.mubr.bf16.gmra.mxu0 %v319
    %v574 = vpop.f32.mrf.mxu0
    %v575 = vadd.f32 0.0, %v574
    %v576 = vpop.f32.mrf.mxu0
    %v577 = vadd.f32 0.0, %v576
    %v578 = vpop.f32.mrf.mxu0
    %v579 = vadd.f32 0.0, %v578
    %v580 = vpop.f32.mrf.mxu0
    %v581 = vadd.f32 0.0, %v580
    %582 = vmatprep.mubr.bf16.mxu0 0
    %583 = vmatmul.mubr.bf16.gmra.mxu0 %v322
    %v584 = vpop.f32.mrf.mxu0
    %v585 = vadd.f32 0.0, %v584
    %v586 = vpop.f32.mrf.mxu0
    %v587 = vadd.f32 0.0, %v586
    %v588 = vpop.f32.mrf.mxu0
    %v589 = vadd.f32 0.0, %v588
    %v590 = vpop.f32.mrf.mxu0
    %v591 = vadd.f32 0.0, %v590
    %592 = vmatprep.mubr.bf16.mxu0 0
    %593 = vmatmul.mubr.bf16.gmra.mxu0 %v325
    %v594 = vpop.f32.mrf.mxu0
    %v595 = vadd.f32 0.0, %v594
    %v596 = vpop.f32.mrf.mxu0
    %v597 = vadd.f32 0.0, %v596
    %v598 = vpop.f32.mrf.mxu0
    %v599 = vadd.f32 0.0, %v598
    %v600 = vpop.f32.mrf.mxu0
    %v601 = vadd.f32 0.0, %v600
    %602 = vmatprep.mubr.bf16.mxu0 0
    %603 = vmatmul.mubr.bf16.gmra.mxu0 %v328
    %v604 = vpop.f32.mrf.mxu0
    %v605 = vadd.f32 0.0, %v604
    %v606 = vpop.f32.mrf.mxu0
    %v607 = vadd.f32 0.0, %v606
    %v608 = vpop.f32.mrf.mxu0
    %v609 = vadd.f32 0.0, %v608
    %v610 = vpop.f32.mrf.mxu0
    %v611 = vadd.f32 0.0, %v610
    %612 = vmatprep.mubr.bf16.mxu0 0
    %613 = vmatmul.mubr.bf16.gmra.mxu0 %v331
    %v614 = vpop.f32.mrf.mxu0
    %v615 = vadd.f32 0.0, %v614
    %v616 = vpop.f32.mrf.mxu0
    %v617 = vadd.f32 0.0, %v616
    %v618 = vpop.f32.mrf.mxu0
    %v619 = vadd.f32 0.0, %v618
    %v620 = vpop.f32.mrf.mxu0
    %v621 = vadd.f32 0.0, %v620
    %622 = vmatprep.mubr.bf16.mxu0 0
    %623 = vmatmul.mubr.bf16.gmra.mxu0 %v334
    %v624 = vpop.f32.mrf.mxu0
    %v625 = vadd.f32 0.0, %v624
    %v626 = vpop.f32.mrf.mxu0
    %v627 = vadd.f32 0.0, %v626
    %v628 = vpop.f32.mrf.mxu0
    %v629 = vadd.f32 0.0, %v628
    %v630 = vpop.f32.mrf.mxu0
    %v631 = vadd.f32 0.0, %v630
    %632 = vmatprep.mubr.bf16.mxu0 0
    %633 = vmatmul.mubr.bf16.gmra.mxu0 %v337
    %v634 = vpop.f32.mrf.mxu0
    %v635 = vadd.f32 0.0, %v634
    %v636 = vpop.f32.mrf.mxu0
    %v637 = vadd.f32 0.0, %v636
    %v638 = vpop.f32.mrf.mxu0
    %v639 = vadd.f32 0.0, %v638
    %v640 = vpop.f32.mrf.mxu0
    %v641 = vadd.f32 0.0, %v640
    %642 = vmatprep.mubr.bf16.mxu0 0
    %643 = vmatmul.mubr.bf16.gmra.mxu0 %v340
    %v644 = vpop.f32.mrf.mxu0
    %v645 = vadd.f32 0.0, %v644
    %v646 = vpop.f32.mrf.mxu0
    %v647 = vadd.f32 0.0, %v646
    %v648 = vpop.f32.mrf.mxu0
    %v649 = vadd.f32 0.0, %v648
    %v650 = vpop.f32.mrf.mxu0
    %v651 = vadd.f32 0.0, %v650
    %652 = vmatprep.mubr.bf16.mxu0 0
    %653 = vmatmul.mubr.bf16.gmra.mxu0 %v343
    %v654 = vpop.f32.mrf.mxu0
    %v655 = vadd.f32 0.0, %v654
    %v656 = vpop.f32.mrf.mxu0
    %v657 = vadd.f32 0.0, %v656
    %v658 = vpop.f32.mrf.mxu0
    %v659 = vadd.f32 0.0, %v658
    %v660 = vpop.f32.mrf.mxu0
    %v661 = vadd.f32 0.0, %v660
    %662 = vmatprep.mubr.bf16.mxu0 0
    %663 = vmatmul.mubr.bf16.gmra.mxu0 %v346
    %v664 = vpop.f32.mrf.mxu0
    %v665 = vadd.f32 0.0, %v664
    %v666 = vpop.f32.mrf.mxu0
    %v667 = vadd.f32 0.0, %v666
    %v668 = vpop.f32.mrf.mxu0
    %v669 = vadd.f32 0.0, %v668
    %v670 = vpop.f32.mrf.mxu0
    %v671 = vadd.f32 0.0, %v670
    %672 = vmatprep.mubr.bf16.mxu0 0
    %673 = vmatmul.mubr.bf16.gmra.mxu0 %v349
    %v674 = vpop.f32.mrf.mxu0
    %v675 = vadd.f32 0.0, %v674
    %v676 = vpop.f32.mrf.mxu0
    %v677 = vadd.f32 0.0, %v676
    %v678 = vpop.f32.mrf.mxu0
    %v679 = vadd.f32 0.0, %v678
    %v680 = vpop.f32.mrf.mxu0
    %v681 = vadd.f32 0.0, %v680
    %682 = vmatprep.mubr.bf16.mxu0 0
    %683 = vmatmul.mubr.bf16.gmra.mxu0 %v352
    %v684 = vpop.f32.mrf.mxu0
    %v685 = vadd.f32 0.0, %v684
    %v686 = vpop.f32.mrf.mxu0
    %v687 = vadd.f32 0.0, %v686
    %v688 = vpop.f32.mrf.mxu0
    %v689 = vadd.f32 0.0, %v688
    %v690 = vpop.f32.mrf.mxu0
    %v691 = vadd.f32 0.0, %v690
    %692 = vmatprep.mubr.bf16.mxu0 0
    %693 = vmatmul.mubr.bf16.gmra.mxu0 %v355
    %v694 = vpop.f32.mrf.mxu0
    %v695 = vadd.f32 0.0, %v694
    %v696 = vpop.f32.mrf.mxu0
    %v697 = vadd.f32 0.0, %v696
    %v698 = vpop.f32.mrf.mxu0
    %v699 = vadd.f32 0.0, %v698
    %v700 = vpop.f32.mrf.mxu0
    %v701 = vadd.f32 0.0, %v700
    %702 = vmatprep.mubr.bf16.mxu0 0
    %703 = vmatmul.mubr.bf16.gmra.mxu0 %v358
    %v704 = vpop.f32.mrf.mxu0
    %v705 = vadd.f32 0.0, %v704
    %v706 = vpop.f32.mrf.mxu0
    %v707 = vadd.f32 0.0, %v706
    %v708 = vpop.f32.mrf.mxu0
    %v709 = vadd.f32 0.0, %v708
    %v710 = vpop.f32.mrf.mxu0
    %v711 = vadd.f32 0.0, %v710
    %712 = vmatprep.mubr.bf16.mxu0 0
    %713 = vmatmul.mubr.bf16.gmra.mxu0 %v361
    %v714 = vpop.f32.mrf.mxu0
    %v715 = vadd.f32 0.0, %v714
    %v716 = vpop.f32.mrf.mxu0
    %v717 = vadd.f32 0.0, %v716
    %v718 = vpop.f32.mrf.mxu0
    %v719 = vadd.f32 0.0, %v718
    %v720 = vpop.f32.mrf.mxu0
    %v721 = vadd.f32 0.0, %v720
    %722 = vdwg.mxu0
    %v723 = vadd.f32 %v405, %v409
    %v724 = vadd.f32 %v723, %v415
    %v725 = vadd.f32 %v724, %v419
    %v726 = vadd.f32 %v725, %v425
    %v727 = vadd.f32 %v726, %v429
    %v728 = vadd.f32 %v727, %v435
    %v729 = vadd.f32 %v728, %v439
    %v730 = vadd.f32 %v729, %v445
    %v731 = vadd.f32 %v730, %v449
    %v732 = vadd.f32 %v731, %v455
    %v733 = vadd.f32 %v732, %v459
    %v734 = vadd.f32 %v733, %v465
    %v735 = vadd.f32 %v734, %v469
    %v736 = vadd.f32 %v735, %v475
    %v737 = vadd.f32 %v736, %v479
    %v738 = vadd.f32 %v737, %v485
    %v739 = vadd.f32 %v738, %v489
    %v740 = vadd.f32 %v739, %v495
    %v741 = vadd.f32 %v740, %v499
    %v742 = vadd.f32 %v741, %v505
    %v743 = vadd.f32 %v742, %v509
    %v744 = vadd.f32 %v743, %v515
    %v745 = vadd.f32 %v744, %v519
    %v746 = vadd.f32 %v745, %v525
    %v747 = vadd.f32 %v746, %v529
    %v748 = vadd.f32 %v747, %v535
    %v749 = vadd.f32 %v748, %v539
    %v750 = vadd.f32 %v749, %v545
    %v751 = vadd.f32 %v750, %v549
    %v752 = vadd.f32 %v751, %v555
    %v753 = vadd.f32 %v752, %v559
    %v754 = vadd.f32 %v753, %v565
    %v755 = vadd.f32 %v754, %v569
    %v756 = vadd.f32 %v755, %v575
    %v757 = vadd.f32 %v756, %v579
    %v758 = vadd.f32 %v757, %v585
    %v759 = vadd.f32 %v758, %v589
    %v760 = vadd.f32 %v759, %v595
    %v761 = vadd.f32 %v760, %v599
    %v762 = vadd.f32 %v761, %v605
    %v763 = vadd.f32 %v762, %v609
    %v764 = vadd.f32 %v763, %v615
    %v765 = vadd.f32 %v764, %v619
    %v766 = vadd.f32 %v765, %v625
    %v767 = vadd.f32 %v766, %v629
    %v768 = vadd.f32 %v767, %v635
    %v769 = vadd.f32 %v768, %v639
    %v770 = vadd.f32 %v769, %v645
    %v771 = vadd.f32 %v770, %v649
    %v772 = vadd.f32 %v771, %v655
    %v773 = vadd.f32 %v772, %v659
    %v774 = vadd.f32 %v773, %v665
    %v775 = vadd.f32 %v774, %v669
    %v776 = vadd.f32 %v775, %v675
    %v777 = vadd.f32 %v776, %v679
    %v778 = vadd.f32 %v777, %v685
    %v779 = vadd.f32 %v778, %v689
    %v780 = vadd.f32 %v779, %v695
    %v781 = vadd.f32 %v780, %v699
    %v782 = vadd.f32 %v781, %v705
    %v783 = vadd.f32 %v782, %v709
    %v784 = vadd.f32 %v783, %v715
    %v785 = vadd.f32 %v784, %v719
    %v786 = vrot.slane %v785, 4
    %v787 = vadd.f32 %v785, %v786
    %v788 = vrot.slane %v787, 2
    %v789 = vadd.f32 %v787, %v788
    %v790 = vrot.slane %v789, 1
    %v791 = vadd.f32 %v789, %v790
    %vm792 = vcmask 523264
    %v793 = vsel %vm792, %v407, 0.0
    %v794 = vsel %vm792, %v411, 0.0
    %v795 = vadd.f32 %v793, %v794
    %v796 = vsel %vm792, %v417, 0.0
    %v797 = vadd.f32 %v795, %v796
    %v798 = vsel %vm792, %v421, 0.0
    %v799 = vadd.f32 %v797, %v798
    %v800 = vsel %vm792, %v427, 0.0
    %v801 = vadd.f32 %v799, %v800
    %v802 = vsel %vm792, %v431, 0.0
    %v803 = vadd.f32 %v801, %v802
    %v804 = vsel %vm792, %v437, 0.0
    %v805 = vadd.f32 %v803, %v804
    %v806 = vsel %vm792, %v441, 0.0
    %v807 = vadd.f32 %v805, %v806
    %v808 = vsel %vm792, %v447, 0.0
    %v809 = vadd.f32 %v807, %v808
    %v810 = vsel %vm792, %v451, 0.0
    %v811 = vadd.f32 %v809, %v810
    %v812 = vsel %vm792, %v457, 0.0
    %v813 = vadd.f32 %v811, %v812
    %v814 = vsel %vm792, %v461, 0.0
    %v815 = vadd.f32 %v813, %v814
    %v816 = vsel %vm792, %v467, 0.0
    %v817 = vadd.f32 %v815, %v816
    %v818 = vsel %vm792, %v471, 0.0
    %v819 = vadd.f32 %v817, %v818
    %v820 = vsel %vm792, %v477, 0.0
    %v821 = vadd.f32 %v819, %v820
    %v822 = vsel %vm792, %v481, 0.0
    %v823 = vadd.f32 %v821, %v822
    %v824 = vsel %vm792, %v487, 0.0
    %v825 = vadd.f32 %v823, %v824
    %v826 = vsel %vm792, %v491, 0.0
    %v827 = vadd.f32 %v825, %v826
    %v828 = vsel %vm792, %v497, 0.0
    %v829 = vadd.f32 %v827, %v828
    %v830 = vsel %vm792, %v501, 0.0
    %v831 = vadd.f32 %v829, %v830
    %v832 = vsel %vm792, %v507, 0.0
    %v833 = vadd.f32 %v831, %v832
    %v834 = vsel %vm792, %v511, 0.0
    %v835 = vadd.f32 %v833, %v834
    %v836 = vsel %vm792, %v517, 0.0
    %v837 = vadd.f32 %v835, %v836
    %v838 = vsel %vm792, %v521, 0.0
    %v839 = vadd.f32 %v837, %v838
    %v840 = vsel %vm792, %v527, 0.0
    %v841 = vadd.f32 %v839, %v840
    %v842 = vsel %vm792, %v531, 0.0
    %v843 = vadd.f32 %v841, %v842
    %v844 = vsel %vm792, %v537, 0.0
    %v845 = vadd.f32 %v843, %v844
    %v846 = vsel %vm792, %v541, 0.0
    %v847 = vadd.f32 %v845, %v846
    %v848 = vsel %vm792, %v547, 0.0
    %v849 = vadd.f32 %v847, %v848
    %v850 = vsel %vm792, %v551, 0.0
    %v851 = vadd.f32 %v849, %v850
    %v852 = vsel %vm792, %v557, 0.0
    %v853 = vadd.f32 %v851, %v852
    %v854 = vsel %vm792, %v561, 0.0
    %v855 = vadd.f32 %v853, %v854
    %v856 = vsel %vm792, %v567, 0.0
    %v857 = vadd.f32 %v855, %v856
    %v858 = vsel %vm792, %v571, 0.0
    %v859 = vadd.f32 %v857, %v858
    %v860 = vsel %vm792, %v577, 0.0
    %v861 = vadd.f32 %v859, %v860
    %v862 = vsel %vm792, %v581, 0.0
    %v863 = vadd.f32 %v861, %v862
    %v864 = vsel %vm792, %v587, 0.0
    %v865 = vadd.f32 %v863, %v864
    %v866 = vsel %vm792, %v591, 0.0
    %v867 = vadd.f32 %v865, %v866
    %v868 = vsel %vm792, %v597, 0.0
    %v869 = vadd.f32 %v867, %v868
    %v870 = vsel %vm792, %v601, 0.0
    %v871 = vadd.f32 %v869, %v870
    %v872 = vsel %vm792, %v607, 0.0
    %v873 = vadd.f32 %v871, %v872
    %v874 = vsel %vm792, %v611, 0.0
    %v875 = vadd.f32 %v873, %v874
    %v876 = vsel %vm792, %v617, 0.0
    %v877 = vadd.f32 %v875, %v876
    %v878 = vsel %vm792, %v621, 0.0
    %v879 = vadd.f32 %v877, %v878
    %v880 = vsel %vm792, %v627, 0.0
    %v881 = vadd.f32 %v879, %v880
    %v882 = vsel %vm792, %v631, 0.0
    %v883 = vadd.f32 %v881, %v882
    %v884 = vsel %vm792, %v637, 0.0
    %v885 = vadd.f32 %v883, %v884
    %v886 = vsel %vm792, %v641, 0.0
    %v887 = vadd.f32 %v885, %v886
    %v888 = vsel %vm792, %v647, 0.0
    %v889 = vadd.f32 %v887, %v888
    %v890 = vsel %vm792, %v651, 0.0
    %v891 = vadd.f32 %v889, %v890
    %v892 = vsel %vm792, %v657, 0.0
    %v893 = vadd.f32 %v891, %v892
    %v894 = vsel %vm792, %v661, 0.0
    %v895 = vadd.f32 %v893, %v894
    %v896 = vsel %vm792, %v667, 0.0
    %v897 = vadd.f32 %v895, %v896
    %v898 = vsel %vm792, %v671, 0.0
    %v899 = vadd.f32 %v897, %v898
    %v900 = vsel %vm792, %v677, 0.0
    %v901 = vadd.f32 %v899, %v900
    %v902 = vsel %vm792, %v681, 0.0
    %v903 = vadd.f32 %v901, %v902
    %v904 = vsel %vm792, %v687, 0.0
    %v905 = vadd.f32 %v903, %v904
    %v906 = vsel %vm792, %v691, 0.0
    %v907 = vadd.f32 %v905, %v906
    %v908 = vsel %vm792, %v697, 0.0
    %v909 = vadd.f32 %v907, %v908
    %v910 = vsel %vm792, %v701, 0.0
    %v911 = vadd.f32 %v909, %v910
    %v912 = vsel %vm792, %v707, 0.0
    %v913 = vadd.f32 %v911, %v912
    %v914 = vsel %vm792, %v711, 0.0
    %v915 = vadd.f32 %v913, %v914
    %v916 = vsel %vm792, %v717, 0.0
    %v917 = vadd.f32 %v915, %v916
    %v918 = vsel %vm792, %v721, 0.0
    %v919 = vadd.f32 %v917, %v918
    %v920 = vrot.slane %v919, 4
    %v921 = vadd.f32 %v919, %v920
    %v922 = vrot.slane %v921, 2
    %v923 = vadd.f32 %v921, %v922
    %v924 = vrot.slane %v923, 1
    %v925 = vadd.f32 %v923, %v924
    %v926 = vmul.f32 %v405, %v405
    %v927 = vmul.f32 %v407, %v407
    %v928 = vmul.f32 %v409, %v409
    %v929 = vmul.f32 %v411, %v411
    %v930 = vmul.f32 %v415, %v415
    %v931 = vmul.f32 %v417, %v417
    %v932 = vmul.f32 %v419, %v419
    %v933 = vmul.f32 %v421, %v421
    %v934 = vmul.f32 %v425, %v425
    %v935 = vmul.f32 %v427, %v427
    %v936 = vmul.f32 %v429, %v429
    %v937 = vmul.f32 %v431, %v431
    %v938 = vmul.f32 %v435, %v435
    %v939 = vmul.f32 %v437, %v437
    %v940 = vmul.f32 %v439, %v439
    %v941 = vmul.f32 %v441, %v441
    %v942 = vmul.f32 %v445, %v445
    %v943 = vmul.f32 %v447, %v447
    %v944 = vmul.f32 %v449, %v449
    %v945 = vmul.f32 %v451, %v451
    %v946 = vmul.f32 %v455, %v455
    %v947 = vmul.f32 %v457, %v457
    %v948 = vmul.f32 %v459, %v459
    %v949 = vmul.f32 %v461, %v461
    %v950 = vmul.f32 %v465, %v465
    %v951 = vmul.f32 %v467, %v467
    %v952 = vmul.f32 %v469, %v469
    %v953 = vmul.f32 %v471, %v471
    %v954 = vmul.f32 %v475, %v475
    %v955 = vmul.f32 %v477, %v477
    %v956 = vmul.f32 %v479, %v479
    %v957 = vmul.f32 %v481, %v481
    %v958 = vmul.f32 %v485, %v485
    %v959 = vmul.f32 %v487, %v487
    %v960 = vmul.f32 %v489, %v489
    %v961 = vmul.f32 %v491, %v491
    %v962 = vmul.f32 %v495, %v495
    %v963 = vmul.f32 %v497, %v497
    %v964 = vmul.f32 %v499, %v499
    %v965 = vmul.f32 %v501, %v501
    %v966 = vmul.f32 %v505, %v505
    %v967 = vmul.f32 %v507, %v507
    %v968 = vmul.f32 %v509, %v509
    %v969 = vmul.f32 %v511, %v511
    %v970 = vmul.f32 %v515, %v515
    %v971 = vmul.f32 %v517, %v517
    %v972 = vmul.f32 %v519, %v519
    %v973 = vmul.f32 %v521, %v521
    %v974 = vmul.f32 %v525, %v525
    %v975 = vmul.f32 %v527, %v527
    %v976 = vmul.f32 %v529, %v529
    %v977 = vmul.f32 %v531, %v531
    %v978 = vmul.f32 %v535, %v535
    %v979 = vmul.f32 %v537, %v537
    %v980 = vmul.f32 %v539, %v539
    %v981 = vmul.f32 %v541, %v541
    %v982 = vmul.f32 %v545, %v545
    %v983 = vmul.f32 %v547, %v547
    %v984 = vmul.f32 %v549, %v549
    %v985 = vmul.f32 %v551, %v551
    %v986 = vmul.f32 %v555, %v555
    %v987 = vmul.f32 %v557, %v557
    %v988 = vmul.f32 %v559, %v559
    %v989 = vmul.f32 %v561, %v561
    %v990 = vmul.f32 %v565, %v565
    %v991 = vmul.f32 %v567, %v567
    %v992 = vmul.f32 %v569, %v569
    %v993 = vmul.f32 %v571, %v571
    %v994 = vmul.f32 %v575, %v575
    %v995 = vmul.f32 %v577, %v577
    %v996 = vmul.f32 %v579, %v579
    %v997 = vmul.f32 %v581, %v581
    %v998 = vmul.f32 %v585, %v585
    %v999 = vmul.f32 %v587, %v587
    %v1000 = vmul.f32 %v589, %v589
    %v1001 = vmul.f32 %v591, %v591
    %v1002 = vmul.f32 %v595, %v595
    %v1003 = vmul.f32 %v597, %v597
    %v1004 = vmul.f32 %v599, %v599
    %v1005 = vmul.f32 %v601, %v601
    %v1006 = vmul.f32 %v605, %v605
    %v1007 = vmul.f32 %v607, %v607
    %v1008 = vmul.f32 %v609, %v609
    %v1009 = vmul.f32 %v611, %v611
    %v1010 = vmul.f32 %v615, %v615
    %v1011 = vmul.f32 %v617, %v617
    %v1012 = vmul.f32 %v619, %v619
    %v1013 = vmul.f32 %v621, %v621
    %v1014 = vmul.f32 %v625, %v625
    %v1015 = vmul.f32 %v627, %v627
    %v1016 = vmul.f32 %v629, %v629
    %v1017 = vmul.f32 %v631, %v631
    %v1018 = vmul.f32 %v635, %v635
    %v1019 = vmul.f32 %v637, %v637
    %v1020 = vmul.f32 %v639, %v639
    %v1021 = vmul.f32 %v641, %v641
    %v1022 = vmul.f32 %v645, %v645
    %v1023 = vmul.f32 %v647, %v647
    %v1024 = vmul.f32 %v649, %v649
    %v1025 = vmul.f32 %v651, %v651
    %v1026 = vmul.f32 %v655, %v655
    %v1027 = vmul.f32 %v657, %v657
    %v1028 = vmul.f32 %v659, %v659
    %v1029 = vmul.f32 %v661, %v661
    %v1030 = vmul.f32 %v665, %v665
    %v1031 = vmul.f32 %v667, %v667
    %v1032 = vmul.f32 %v669, %v669
    %v1033 = vmul.f32 %v671, %v671
    %v1034 = vmul.f32 %v675, %v675
    %v1035 = vmul.f32 %v677, %v677
    %v1036 = vmul.f32 %v679, %v679
    %v1037 = vmul.f32 %v681, %v681
    %v1038 = vmul.f32 %v685, %v685
    %v1039 = vmul.f32 %v687, %v687
    %v1040 = vmul.f32 %v689, %v689
    %v1041 = vmul.f32 %v691, %v691
    %v1042 = vmul.f32 %v695, %v695
    %v1043 = vmul.f32 %v697, %v697
    %v1044 = vmul.f32 %v699, %v699
    %v1045 = vmul.f32 %v701, %v701
    %v1046 = vmul.f32 %v705, %v705
    %v1047 = vmul.f32 %v707, %v707
    %v1048 = vmul.f32 %v709, %v709
    %v1049 = vmul.f32 %v711, %v711
    %v1050 = vmul.f32 %v715, %v715
    %v1051 = vmul.f32 %v717, %v717
    %v1052 = vmul.f32 %v719, %v719
    %v1053 = vmul.f32 %v721, %v721
    %v1054 = vadd.f32 %v926, %v928
    %v1055 = vadd.f32 %v1054, %v930
    %v1056 = vadd.f32 %v1055, %v932
    %v1057 = vadd.f32 %v1056, %v934
    %v1058 = vadd.f32 %v1057, %v936
    %v1059 = vadd.f32 %v1058, %v938
    %v1060 = vadd.f32 %v1059, %v940
    %v1061 = vadd.f32 %v1060, %v942
    %v1062 = vadd.f32 %v1061, %v944
    %v1063 = vadd.f32 %v1062, %v946
    %v1064 = vadd.f32 %v1063, %v948
    %v1065 = vadd.f32 %v1064, %v950
    %v1066 = vadd.f32 %v1065, %v952
    %v1067 = vadd.f32 %v1066, %v954
    %v1068 = vadd.f32 %v1067, %v956
    %v1069 = vadd.f32 %v1068, %v958
    %v1070 = vadd.f32 %v1069, %v960
    %v1071 = vadd.f32 %v1070, %v962
    %v1072 = vadd.f32 %v1071, %v964
    %v1073 = vadd.f32 %v1072, %v966
    %v1074 = vadd.f32 %v1073, %v968
    %v1075 = vadd.f32 %v1074, %v970
    %v1076 = vadd.f32 %v1075, %v972
    %v1077 = vadd.f32 %v1076, %v974
    %v1078 = vadd.f32 %v1077, %v976
    %v1079 = vadd.f32 %v1078, %v978
    %v1080 = vadd.f32 %v1079, %v980
    %v1081 = vadd.f32 %v1080, %v982
    %v1082 = vadd.f32 %v1081, %v984
    %v1083 = vadd.f32 %v1082, %v986
    %v1084 = vadd.f32 %v1083, %v988
    %v1085 = vadd.f32 %v1084, %v990
    %v1086 = vadd.f32 %v1085, %v992
    %v1087 = vadd.f32 %v1086, %v994
    %v1088 = vadd.f32 %v1087, %v996
    %v1089 = vadd.f32 %v1088, %v998
    %v1090 = vadd.f32 %v1089, %v1000
    %v1091 = vadd.f32 %v1090, %v1002
    %v1092 = vadd.f32 %v1091, %v1004
    %v1093 = vadd.f32 %v1092, %v1006
    %v1094 = vadd.f32 %v1093, %v1008
    %v1095 = vadd.f32 %v1094, %v1010
    %v1096 = vadd.f32 %v1095, %v1012
    %v1097 = vadd.f32 %v1096, %v1014
    %v1098 = vadd.f32 %v1097, %v1016
    %v1099 = vadd.f32 %v1098, %v1018
    %v1100 = vadd.f32 %v1099, %v1020
    %v1101 = vadd.f32 %v1100, %v1022
    %v1102 = vadd.f32 %v1101, %v1024
    %v1103 = vadd.f32 %v1102, %v1026
    %v1104 = vadd.f32 %v1103, %v1028
    %v1105 = vadd.f32 %v1104, %v1030
    %v1106 = vadd.f32 %v1105, %v1032
    %v1107 = vadd.f32 %v1106, %v1034
    %v1108 = vadd.f32 %v1107, %v1036
    %v1109 = vadd.f32 %v1108, %v1038
    %v1110 = vadd.f32 %v1109, %v1040
    %v1111 = vadd.f32 %v1110, %v1042
    %v1112 = vadd.f32 %v1111, %v1044
    %v1113 = vadd.f32 %v1112, %v1046
    %v1114 = vadd.f32 %v1113, %v1048
    %v1115 = vadd.f32 %v1114, %v1050
    %v1116 = vadd.f32 %v1115, %v1052
    %v1117 = vrot.slane %v1116, 4
    %v1118 = vadd.f32 %v1116, %v1117
    %v1119 = vrot.slane %v1118, 2
    %v1120 = vadd.f32 %v1118, %v1119
    %v1121 = vrot.slane %v1120, 1
    %v1122 = vadd.f32 %v1120, %v1121
    %v1123 = vsel %vm792, %v927, 0.0
    %v1124 = vsel %vm792, %v929, 0.0
    %v1125 = vadd.f32 %v1123, %v1124
    %v1126 = vsel %vm792, %v931, 0.0
    %v1127 = vadd.f32 %v1125, %v1126
    %v1128 = vsel %vm792, %v933, 0.0
    %v1129 = vadd.f32 %v1127, %v1128
    %v1130 = vsel %vm792, %v935, 0.0
    %v1131 = vadd.f32 %v1129, %v1130
    %v1132 = vsel %vm792, %v937, 0.0
    %v1133 = vadd.f32 %v1131, %v1132
    %v1134 = vsel %vm792, %v939, 0.0
    %v1135 = vadd.f32 %v1133, %v1134
    %v1136 = vsel %vm792, %v941, 0.0
    %v1137 = vadd.f32 %v1135, %v1136
    %v1138 = vsel %vm792, %v943, 0.0
    %v1139 = vadd.f32 %v1137, %v1138
    %v1140 = vsel %vm792, %v945, 0.0
    %v1141 = vadd.f32 %v1139, %v1140
    %v1142 = vsel %vm792, %v947, 0.0
    %v1143 = vadd.f32 %v1141, %v1142
    %v1144 = vsel %vm792, %v949, 0.0
    %v1145 = vadd.f32 %v1143, %v1144
    %v1146 = vsel %vm792, %v951, 0.0
    %v1147 = vadd.f32 %v1145, %v1146
    %v1148 = vsel %vm792, %v953, 0.0
    %v1149 = vadd.f32 %v1147, %v1148
    %v1150 = vsel %vm792, %v955, 0.0
    %v1151 = vadd.f32 %v1149, %v1150
    %v1152 = vsel %vm792, %v957, 0.0
    %v1153 = vadd.f32 %v1151, %v1152
    %v1154 = vsel %vm792, %v959, 0.0
    %v1155 = vadd.f32 %v1153, %v1154
    %v1156 = vsel %vm792, %v961, 0.0
    %v1157 = vadd.f32 %v1155, %v1156
    %v1158 = vsel %vm792, %v963, 0.0
    %v1159 = vadd.f32 %v1157, %v1158
    %v1160 = vsel %vm792, %v965, 0.0
    %v1161 = vadd.f32 %v1159, %v1160
    %v1162 = vsel %vm792, %v967, 0.0
    %v1163 = vadd.f32 %v1161, %v1162
    %v1164 = vsel %vm792, %v969, 0.0
    %v1165 = vadd.f32 %v1163, %v1164
    %v1166 = vsel %vm792, %v971, 0.0
    %v1167 = vadd.f32 %v1165, %v1166
    %v1168 = vsel %vm792, %v973, 0.0
    %v1169 = vadd.f32 %v1167, %v1168
    %v1170 = vsel %vm792, %v975, 0.0
    %v1171 = vadd.f32 %v1169, %v1170
    %v1172 = vsel %vm792, %v977, 0.0
    %v1173 = vadd.f32 %v1171, %v1172
    %v1174 = vsel %vm792, %v979, 0.0
    %v1175 = vadd.f32 %v1173, %v1174
    %v1176 = vsel %vm792, %v981, 0.0
    %v1177 = vadd.f32 %v1175, %v1176
    %v1178 = vsel %vm792, %v983, 0.0
    %v1179 = vadd.f32 %v1177, %v1178
    %v1180 = vsel %vm792, %v985, 0.0
    %v1181 = vadd.f32 %v1179, %v1180
    %v1182 = vsel %vm792, %v987, 0.0
    %v1183 = vadd.f32 %v1181, %v1182
    %v1184 = vsel %vm792, %v989, 0.0
    %v1185 = vadd.f32 %v1183, %v1184
    %v1186 = vsel %vm792, %v991, 0.0
    %v1187 = vadd.f32 %v1185, %v1186
    %v1188 = vsel %vm792, %v993, 0.0
    %v1189 = vadd.f32 %v1187, %v1188
    %v1190 = vsel %vm792, %v995, 0.0
    %v1191 = vadd.f32 %v1189, %v1190
    %v1192 = vsel %vm792, %v997, 0.0
    %v1193 = vadd.f32 %v1191, %v1192
    %v1194 = vsel %vm792, %v999, 0.0
    %v1195 = vadd.f32 %v1193, %v1194
    %v1196 = vsel %vm792, %v1001, 0.0
    %v1197 = vadd.f32 %v1195, %v1196
    %v1198 = vsel %vm792, %v1003, 0.0
    %v1199 = vadd.f32 %v1197, %v1198
    %v1200 = vsel %vm792, %v1005, 0.0
    %v1201 = vadd.f32 %v1199, %v1200
    %v1202 = vsel %vm792, %v1007, 0.0
    %v1203 = vadd.f32 %v1201, %v1202
    %v1204 = vsel %vm792, %v1009, 0.0
    %v1205 = vadd.f32 %v1203, %v1204
    %v1206 = vsel %vm792, %v1011, 0.0
    %v1207 = vadd.f32 %v1205, %v1206
    %v1208 = vsel %vm792, %v1013, 0.0
    %v1209 = vadd.f32 %v1207, %v1208
    %v1210 = vsel %vm792, %v1015, 0.0
    %v1211 = vadd.f32 %v1209, %v1210
    %v1212 = vsel %vm792, %v1017, 0.0
    %v1213 = vadd.f32 %v1211, %v1212
    %v1214 = vsel %vm792, %v1019, 0.0
    %v1215 = vadd.f32 %v1213, %v1214
    %v1216 = vsel %vm792, %v1021, 0.0
    %v1217 = vadd.f32 %v1215, %v1216
    %v1218 = vsel %vm792, %v1023, 0.0
    %v1219 = vadd.f32 %v1217, %v1218
    %v1220 = vsel %vm792, %v1025, 0.0
    %v1221 = vadd.f32 %v1219, %v1220
    %v1222 = vsel %vm792, %v1027, 0.0
    %v1223 = vadd.f32 %v1221, %v1222
    %v1224 = vsel %vm792, %v1029, 0.0
    %v1225 = vadd.f32 %v1223, %v1224
    %v1226 = vsel %vm792, %v1031, 0.0
    %v1227 = vadd.f32 %v1225, %v1226
    %v1228 = vsel %vm792, %v1033, 0.0
    %v1229 = vadd.f32 %v1227, %v1228
    %v1230 = vsel %vm792, %v1035, 0.0
    %v1231 = vadd.f32 %v1229, %v1230
    %v1232 = vsel %vm792, %v1037, 0.0
    %v1233 = vadd.f32 %v1231, %v1232
    %v1234 = vsel %vm792, %v1039, 0.0
    %v1235 = vadd.f32 %v1233, %v1234
    %v1236 = vsel %vm792, %v1041, 0.0
    %v1237 = vadd.f32 %v1235, %v1236
    %v1238 = vsel %vm792, %v1043, 0.0
    %v1239 = vadd.f32 %v1237, %v1238
    %v1240 = vsel %vm792, %v1045, 0.0
    %v1241 = vadd.f32 %v1239, %v1240
    %v1242 = vsel %vm792, %v1047, 0.0
    %v1243 = vadd.f32 %v1241, %v1242
    %v1244 = vsel %vm792, %v1049, 0.0
    %v1245 = vadd.f32 %v1243, %v1244
    %v1246 = vsel %vm792, %v1051, 0.0
    %v1247 = vadd.f32 %v1245, %v1246
    %v1248 = vsel %vm792, %v1053, 0.0
    %v1249 = vadd.f32 %v1247, %v1248
    %v1250 = vrot.slane %v1249, 4
    %v1251 = vadd.f32 %v1249, %v1250
    %v1252 = vrot.slane %v1251, 2
    %v1253 = vadd.f32 %v1251, %v1252
    %v1254 = vrot.slane %v1253, 1
    %v1255 = vadd.f32 %v1253, %v1254
    %v1256 = vmul.f32 %v791, 0.001953125
    %v1257 = vmul.f32 %v925, 0.001953125
    %v1258 = vmul.f32 %v1122, 0.001953125
    %v1259 = vmul.f32 %v1255, 0.001953125
    %v1260 = vmul.f32 %v1256, %v1256
    %v1261 = vmul.f32 %v1257, %v1257
    %v1262 = vsub.f32 %v1258, %v1260
    %v1263 = vsub.f32 %v1259, %v1261
    %v1264 = vadd.f32 %v1262, 1e-05
    %v1265 = vadd.f32 %v1263, 1e-05
    %v1266 = vrsqrt.pop %v1264
    %v1267 = vrsqrt.pop %v1265
    %v1268 = vld [vmem:[%s4 + $0x6] sm:$0x1]
    %v1269 = vld [vmem:[%s4 + $0x7] sm:$0x1]
    %v1270 = vmul.f32 %v1268, %v1266
    %v1271 = vlaneseq
    %v1272 = vshrl.u32 %v1271, 7
    %v1273 = vsub.s32 0, %v1272
    %v1274 = vrot.slane %v1270, %v1273
    %v1275 = vmul.f32 %v405, %v1274
    %v1276 = vmul.f32 %v409, %v1274
    %v1277 = vmul.f32 %v415, %v1274
    %v1278 = vmul.f32 %v419, %v1274
    %v1279 = vmul.f32 %v425, %v1274
    %v1280 = vmul.f32 %v429, %v1274
    %v1281 = vmul.f32 %v435, %v1274
    %v1282 = vmul.f32 %v439, %v1274
    %v1283 = vmul.f32 %v445, %v1274
    %v1284 = vmul.f32 %v449, %v1274
    %v1285 = vmul.f32 %v455, %v1274
    %v1286 = vmul.f32 %v459, %v1274
    %v1287 = vmul.f32 %v465, %v1274
    %v1288 = vmul.f32 %v469, %v1274
    %v1289 = vmul.f32 %v475, %v1274
    %v1290 = vmul.f32 %v479, %v1274
    %v1291 = vmul.f32 %v485, %v1274
    %v1292 = vmul.f32 %v489, %v1274
    %v1293 = vmul.f32 %v495, %v1274
    %v1294 = vmul.f32 %v499, %v1274
    %v1295 = vmul.f32 %v505, %v1274
    %v1296 = vmul.f32 %v509, %v1274
    %v1297 = vmul.f32 %v515, %v1274
    %v1298 = vmul.f32 %v519, %v1274
    %v1299 = vmul.f32 %v525, %v1274
    %v1300 = vmul.f32 %v529, %v1274
    %v1301 = vmul.f32 %v535, %v1274
    %v1302 = vmul.f32 %v539, %v1274
    %v1303 = vmul.f32 %v545, %v1274
    %v1304 = vmul.f32 %v549, %v1274
    %v1305 = vmul.f32 %v555, %v1274
    %v1306 = vmul.f32 %v559, %v1274
    %v1307 = vmul.f32 %v565, %v1274
    %v1308 = vmul.f32 %v569, %v1274
    %v1309 = vmul.f32 %v575, %v1274
    %v1310 = vmul.f32 %v579, %v1274
    %v1311 = vmul.f32 %v585, %v1274
    %v1312 = vmul.f32 %v589, %v1274
    %v1313 = vmul.f32 %v595, %v1274
    %v1314 = vmul.f32 %v599, %v1274
    %v1315 = vmul.f32 %v605, %v1274
    %v1316 = vmul.f32 %v609, %v1274
    %v1317 = vmul.f32 %v615, %v1274
    %v1318 = vmul.f32 %v619, %v1274
    %v1319 = vmul.f32 %v625, %v1274
    %v1320 = vmul.f32 %v629, %v1274
    %v1321 = vmul.f32 %v635, %v1274
    %v1322 = vmul.f32 %v639, %v1274
    %v1323 = vmul.f32 %v645, %v1274
    %v1324 = vmul.f32 %v649, %v1274
    %v1325 = vmul.f32 %v655, %v1274
    %v1326 = vmul.f32 %v659, %v1274
    %v1327 = vmul.f32 %v665, %v1274
    %v1328 = vmul.f32 %v669, %v1274
    %v1329 = vmul.f32 %v675, %v1274
    %v1330 = vmul.f32 %v679, %v1274
    %v1331 = vmul.f32 %v685, %v1274
    %v1332 = vmul.f32 %v689, %v1274
    %v1333 = vmul.f32 %v695, %v1274
    %v1334 = vmul.f32 %v699, %v1274
    %v1335 = vmul.f32 %v705, %v1274
    %v1336 = vmul.f32 %v709, %v1274
    %v1337 = vmul.f32 %v715, %v1274
    %v1338 = vmul.f32 %v719, %v1274
    %v1339 = vmul.f32 %v1256, %v1270
    %v1340 = vsub.f32 %v1269, %v1339
    %v1341 = vlaneseq
    %v1342 = vshrl.u32 %v1341, 7
    %v1343 = vsub.s32 0, %v1342
    %v1344 = vrot.slane %v1340, %v1343
    %v1345 = vadd.f32 %v1275, %v1344
    %v1346 = vadd.f32 %v1276, %v1344
    %v1347 = vadd.f32 %v1277, %v1344
    %v1348 = vadd.f32 %v1278, %v1344
    %v1349 = vadd.f32 %v1279, %v1344
    %v1350 = vadd.f32 %v1280, %v1344
    %v1351 = vadd.f32 %v1281, %v1344
    %v1352 = vadd.f32 %v1282, %v1344
    %v1353 = vadd.f32 %v1283, %v1344
    %v1354 = vadd.f32 %v1284, %v1344
    %v1355 = vadd.f32 %v1285, %v1344
    %v1356 = vadd.f32 %v1286, %v1344
    %v1357 = vadd.f32 %v1287, %v1344
    %v1358 = vadd.f32 %v1288, %v1344
    %v1359 = vadd.f32 %v1289, %v1344
    %v1360 = vadd.f32 %v1290, %v1344
    %v1361 = vadd.f32 %v1291, %v1344
    %v1362 = vadd.f32 %v1292, %v1344
    %v1363 = vadd.f32 %v1293, %v1344
    %v1364 = vadd.f32 %v1294, %v1344
    %v1365 = vadd.f32 %v1295, %v1344
    %v1366 = vadd.f32 %v1296, %v1344
    %v1367 = vadd.f32 %v1297, %v1344
    %v1368 = vadd.f32 %v1298, %v1344
    %v1369 = vadd.f32 %v1299, %v1344
    %v1370 = vadd.f32 %v1300, %v1344
    %v1371 = vadd.f32 %v1301, %v1344
    %v1372 = vadd.f32 %v1302, %v1344
    %v1373 = vadd.f32 %v1303, %v1344
    %v1374 = vadd.f32 %v1304, %v1344
    %v1375 = vadd.f32 %v1305, %v1344
    %v1376 = vadd.f32 %v1306, %v1344
    %v1377 = vadd.f32 %v1307, %v1344
    %v1378 = vadd.f32 %v1308, %v1344
    %v1379 = vadd.f32 %v1309, %v1344
    %v1380 = vadd.f32 %v1310, %v1344
    %v1381 = vadd.f32 %v1311, %v1344
    %v1382 = vadd.f32 %v1312, %v1344
    %v1383 = vadd.f32 %v1313, %v1344
    %v1384 = vadd.f32 %v1314, %v1344
    %v1385 = vadd.f32 %v1315, %v1344
    %v1386 = vadd.f32 %v1316, %v1344
    %v1387 = vadd.f32 %v1317, %v1344
    %v1388 = vadd.f32 %v1318, %v1344
    %v1389 = vadd.f32 %v1319, %v1344
    %v1390 = vadd.f32 %v1320, %v1344
    %v1391 = vadd.f32 %v1321, %v1344
    %v1392 = vadd.f32 %v1322, %v1344
    %v1393 = vadd.f32 %v1323, %v1344
    %v1394 = vadd.f32 %v1324, %v1344
    %v1395 = vadd.f32 %v1325, %v1344
    %v1396 = vadd.f32 %v1326, %v1344
    %v1397 = vadd.f32 %v1327, %v1344
    %v1398 = vadd.f32 %v1328, %v1344
    %v1399 = vadd.f32 %v1329, %v1344
    %v1400 = vadd.f32 %v1330, %v1344
    %v1401 = vadd.f32 %v1331, %v1344
    %v1402 = vadd.f32 %v1332, %v1344
    %v1403 = vadd.f32 %v1333, %v1344
    %v1404 = vadd.f32 %v1334, %v1344
    %v1405 = vadd.f32 %v1335, %v1344
    %v1406 = vadd.f32 %v1336, %v1344
    %v1407 = vadd.f32 %v1337, %v1344
    %v1408 = vadd.f32 %v1338, %v1344
    %1409 = vst [vmem:[#allocation6] sm:$0xff] %v1345
    %1410 = vst [vmem:[#allocation6 + $0x8] sm:$0xff] %v1346
    %1411 = vst [vmem:[#allocation6 + $0x10] sm:$0xff] %v1347
    %1412 = vst [vmem:[#allocation6 + $0x18] sm:$0xff] %v1348
    %1413 = vst [vmem:[#allocation6 + $0x20] sm:$0xff] %v1349
    %1414 = vst [vmem:[#allocation6 + $0x28] sm:$0xff] %v1350
    %1415 = vst [vmem:[#allocation6 + $0x30] sm:$0xff] %v1351
    %1416 = vst [vmem:[#allocation6 + $0x38] sm:$0xff] %v1352
    %1417 = vst [vmem:[#allocation6 + $0x40] sm:$0xff] %v1353
    %1418 = vst [vmem:[#allocation6 + $0x48] sm:$0xff] %v1354
    %1419 = vst [vmem:[#allocation6 + $0x50] sm:$0xff] %v1355
    %1420 = vst [vmem:[#allocation6 + $0x58] sm:$0xff] %v1356
    %1421 = vst [vmem:[#allocation6 + $0x60] sm:$0xff] %v1357
    %1422 = vst [vmem:[#allocation6 + $0x68] sm:$0xff] %v1358
    %1423 = vst [vmem:[#allocation6 + $0x70] sm:$0xff] %v1359
    %1424 = vst [vmem:[#allocation6 + $0x78] sm:$0xff] %v1360
    %1425 = vst [vmem:[#allocation6 + $0x80] sm:$0xff] %v1361
    %1426 = vst [vmem:[#allocation6 + $0x88] sm:$0xff] %v1362
    %1427 = vst [vmem:[#allocation6 + $0x90] sm:$0xff] %v1363
    %1428 = vst [vmem:[#allocation6 + $0x98] sm:$0xff] %v1364
    %1429 = vst [vmem:[#allocation6 + $0xa0] sm:$0xff] %v1365
    %1430 = vst [vmem:[#allocation6 + $0xa8] sm:$0xff] %v1366
    %1431 = vst [vmem:[#allocation6 + $0xb0] sm:$0xff] %v1367
    %1432 = vst [vmem:[#allocation6 + $0xb8] sm:$0xff] %v1368
    %1433 = vst [vmem:[#allocation6 + $0xc0] sm:$0xff] %v1369
    %1434 = vst [vmem:[#allocation6 + $0xc8] sm:$0xff] %v1370
    %1435 = vst [vmem:[#allocation6 + $0xd0] sm:$0xff] %v1371
    %1436 = vst [vmem:[#allocation6 + $0xd8] sm:$0xff] %v1372
    %1437 = vst [vmem:[#allocation6 + $0xe0] sm:$0xff] %v1373
    %1438 = vst [vmem:[#allocation6 + $0xe8] sm:$0xff] %v1374
    %1439 = vst [vmem:[#allocation6 + $0xf0] sm:$0xff] %v1375
    %1440 = vst [vmem:[#allocation6 + $0xf8] sm:$0xff] %v1376
    %1441 = vst [vmem:[#allocation6 + $0x100] sm:$0xff] %v1377
    %1442 = vst [vmem:[#allocation6 + $0x108] sm:$0xff] %v1378
    %1443 = vst [vmem:[#allocation6 + $0x110] sm:$0xff] %v1379
    %1444 = vst [vmem:[#allocation6 + $0x118] sm:$0xff] %v1380
    %1445 = vst [vmem:[#allocation6 + $0x120] sm:$0xff] %v1381
    %1446 = vst [vmem:[#allocation6 + $0x128] sm:$0xff] %v1382
    %1447 = vst [vmem:[#allocation6 + $0x130] sm:$0xff] %v1383
    %1448 = vst [vmem:[#allocation6 + $0x138] sm:$0xff] %v1384
    %1449 = vst [vmem:[#allocation6 + $0x140] sm:$0xff] %v1385
    %1450 = vst [vmem:[#allocation6 + $0x148] sm:$0xff] %v1386
    %1451 = vst [vmem:[#allocation6 + $0x150] sm:$0xff] %v1387
    %1452 = vst [vmem:[#allocation6 + $0x158] sm:$0xff] %v1388
    %1453 = vst [vmem:[#allocation6 + $0x160] sm:$0xff] %v1389
    %1454 = vst [vmem:[#allocation6 + $0x168] sm:$0xff] %v1390
    %1455 = vst [vmem:[#allocation6 + $0x170] sm:$0xff] %v1391
    %1456 = vst [vmem:[#allocation6 + $0x178] sm:$0xff] %v1392
    %1457 = vst [vmem:[#allocation6 + $0x180] sm:$0xff] %v1393
    %1458 = vst [vmem:[#allocation6 + $0x188] sm:$0xff] %v1394
    %1459 = vst [vmem:[#allocation6 + $0x190] sm:$0xff] %v1395
    %1460 = vst [vmem:[#allocation6 + $0x198] sm:$0xff] %v1396
    %1461 = vst [vmem:[#allocation6 + $0x1a0] sm:$0xff] %v1397
    %1462 = vst [vmem:[#allocation6 + $0x1a8] sm:$0xff] %v1398
    %1463 = vst [vmem:[#allocation6 + $0x1b0] sm:$0xff] %v1399
    %1464 = vst [vmem:[#allocation6 + $0x1b8] sm:$0xff] %v1400
    %1465 = vst [vmem:[#allocation6 + $0x1c0] sm:$0xff] %v1401
    %1466 = vst [vmem:[#allocation6 + $0x1c8] sm:$0xff] %v1402
    %1467 = vst [vmem:[#allocation6 + $0x1d0] sm:$0xff] %v1403
    %1468 = vst [vmem:[#allocation6 + $0x1d8] sm:$0xff] %v1404
    %1469 = vst [vmem:[#allocation6 + $0x1e0] sm:$0xff] %v1405
    %1470 = vst [vmem:[#allocation6 + $0x1e8] sm:$0xff] %v1406
    %1471 = vst [vmem:[#allocation6 + $0x1f0] sm:$0xff] %v1407
    %1472 = vst [vmem:[#allocation6 + $0x1f8] sm:$0xff] %v1408
    %v1473 = vld [vmem:[%s4] sm:$0x1]
    %v1474 = vld [vmem:[%s4 + $0x1] sm:$0x1]
    %v1475 = vmul.f32 %v1473, %v1267
    %v1476 = vlaneseq
    %v1477 = vshrl.u32 %v1476, 7
    %v1478 = vsub.s32 0, %v1477
    %v1479 = vrot.slane %v1475, %v1478
    %v1480 = vmul.f32 %v407, %v1479
    %v1481 = vmul.f32 %v411, %v1479
    %v1482 = vmul.f32 %v417, %v1479
    %v1483 = vmul.f32 %v421, %v1479
    %v1484 = vmul.f32 %v427, %v1479
    %v1485 = vmul.f32 %v431, %v1479
    %v1486 = vmul.f32 %v437, %v1479
    %v1487 = vmul.f32 %v441, %v1479
    %v1488 = vmul.f32 %v447, %v1479
    %v1489 = vmul.f32 %v451, %v1479
    %v1490 = vmul.f32 %v457, %v1479
    %v1491 = vmul.f32 %v461, %v1479
    %v1492 = vmul.f32 %v467, %v1479
    %v1493 = vmul.f32 %v471, %v1479
    %v1494 = vmul.f32 %v477, %v1479
    %v1495 = vmul.f32 %v481, %v1479
    %v1496 = vmul.f32 %v487, %v1479
    %v1497 = vmul.f32 %v491, %v1479
    %v1498 = vmul.f32 %v497, %v1479
    %v1499 = vmul.f32 %v501, %v1479
    %v1500 = vmul.f32 %v507, %v1479
    %v1501 = vmul.f32 %v511, %v1479
    %v1502 = vmul.f32 %v517, %v1479
    %v1503 = vmul.f32 %v521, %v1479
    %v1504 = vmul.f32 %v527, %v1479
    %v1505 = vmul.f32 %v531, %v1479
    %v1506 = vmul.f32 %v537, %v1479
    %v1507 = vmul.f32 %v541, %v1479
    %v1508 = vmul.f32 %v547, %v1479
    %v1509 = vmul.f32 %v551, %v1479
    %v1510 = vmul.f32 %v557, %v1479
    %v1511 = vmul.f32 %v561, %v1479
    %v1512 = vmul.f32 %v567, %v1479
    %v1513 = vmul.f32 %v571, %v1479
    %v1514 = vmul.f32 %v577, %v1479
    %v1515 = vmul.f32 %v581, %v1479
    %v1516 = vmul.f32 %v587, %v1479
    %v1517 = vmul.f32 %v591, %v1479
    %v1518 = vmul.f32 %v597, %v1479
    %v1519 = vmul.f32 %v601, %v1479
    %v1520 = vmul.f32 %v607, %v1479
    %v1521 = vmul.f32 %v611, %v1479
    %v1522 = vmul.f32 %v617, %v1479
    %v1523 = vmul.f32 %v621, %v1479
    %v1524 = vmul.f32 %v627, %v1479
    %v1525 = vmul.f32 %v631, %v1479
    %v1526 = vmul.f32 %v637, %v1479
    %v1527 = vmul.f32 %v641, %v1479
    %v1528 = vmul.f32 %v647, %v1479
    %v1529 = vmul.f32 %v651, %v1479
    %v1530 = vmul.f32 %v657, %v1479
    %v1531 = vmul.f32 %v661, %v1479
    %v1532 = vmul.f32 %v667, %v1479
    %v1533 = vmul.f32 %v671, %v1479
    %v1534 = vmul.f32 %v677, %v1479
    %v1535 = vmul.f32 %v681, %v1479
    %v1536 = vmul.f32 %v687, %v1479
    %v1537 = vmul.f32 %v691, %v1479
    %v1538 = vmul.f32 %v697, %v1479
    %v1539 = vmul.f32 %v701, %v1479
    %v1540 = vmul.f32 %v707, %v1479
    %v1541 = vmul.f32 %v711, %v1479
    %v1542 = vmul.f32 %v717, %v1479
    %v1543 = vmul.f32 %v721, %v1479
    %v1544 = vmul.f32 %v1257, %v1475
    %v1545 = vsub.f32 %v1474, %v1544
    %v1546 = vlaneseq
    %v1547 = vshrl.u32 %v1546, 7
    %v1548 = vsub.s32 0, %v1547
    %v1549 = vrot.slane %v1545, %v1548
    %v1550 = vadd.f32 %v1480, %v1549
    %v1551 = vadd.f32 %v1481, %v1549
    %v1552 = vadd.f32 %v1482, %v1549
    %v1553 = vadd.f32 %v1483, %v1549
    %v1554 = vadd.f32 %v1484, %v1549
    %v1555 = vadd.f32 %v1485, %v1549
    %v1556 = vadd.f32 %v1486, %v1549
    %v1557 = vadd.f32 %v1487, %v1549
    %v1558 = vadd.f32 %v1488, %v1549
    %v1559 = vadd.f32 %v1489, %v1549
    %v1560 = vadd.f32 %v1490, %v1549
    %v1561 = vadd.f32 %v1491, %v1549
    %v1562 = vadd.f32 %v1492, %v1549
    %v1563 = vadd.f32 %v1493, %v1549
    %v1564 = vadd.f32 %v1494, %v1549
    %v1565 = vadd.f32 %v1495, %v1549
    %v1566 = vadd.f32 %v1496, %v1549
    %v1567 = vadd.f32 %v1497, %v1549
    %v1568 = vadd.f32 %v1498, %v1549
    %v1569 = vadd.f32 %v1499, %v1549
    %v1570 = vadd.f32 %v1500, %v1549
    %v1571 = vadd.f32 %v1501, %v1549
    %v1572 = vadd.f32 %v1502, %v1549
    %v1573 = vadd.f32 %v1503, %v1549
    %v1574 = vadd.f32 %v1504, %v1549
    %v1575 = vadd.f32 %v1505, %v1549
    %v1576 = vadd.f32 %v1506, %v1549
    %v1577 = vadd.f32 %v1507, %v1549
    %v1578 = vadd.f32 %v1508, %v1549
    %v1579 = vadd.f32 %v1509, %v1549
    %v1580 = vadd.f32 %v1510, %v1549
    %v1581 = vadd.f32 %v1511, %v1549
    %v1582 = vadd.f32 %v1512, %v1549
    %v1583 = vadd.f32 %v1513, %v1549
    %v1584 = vadd.f32 %v1514, %v1549
    %v1585 = vadd.f32 %v1515, %v1549
    %v1586 = vadd.f32 %v1516, %v1549
    %v1587 = vadd.f32 %v1517, %v1549
    %v1588 = vadd.f32 %v1518, %v1549
    %v1589 = vadd.f32 %v1519, %v1549
    %v1590 = vadd.f32 %v1520, %v1549
    %v1591 = vadd.f32 %v1521, %v1549
    %v1592 = vadd.f32 %v1522, %v1549
    %v1593 = vadd.f32 %v1523, %v1549
    %v1594 = vadd.f32 %v1524, %v1549
    %v1595 = vadd.f32 %v1525, %v1549
    %v1596 = vadd.f32 %v1526, %v1549
    %v1597 = vadd.f32 %v1527, %v1549
    %v1598 = vadd.f32 %v1528, %v1549
    %v1599 = vadd.f32 %v1529, %v1549
    %v1600 = vadd.f32 %v1530, %v1549
    %v1601 = vadd.f32 %v1531, %v1549
    %v1602 = vadd.f32 %v1532, %v1549
    %v1603 = vadd.f32 %v1533, %v1549
    %v1604 = vadd.f32 %v1534, %v1549
    %v1605 = vadd.f32 %v1535, %v1549
    %v1606 = vadd.f32 %v1536, %v1549
    %v1607 = vadd.f32 %v1537, %v1549
    %v1608 = vadd.f32 %v1538, %v1549
    %v1609 = vadd.f32 %v1539, %v1549
    %v1610 = vadd.f32 %v1540, %v1549
    %v1611 = vadd.f32 %v1541, %v1549
    %v1612 = vadd.f32 %v1542, %v1549
    %v1613 = vadd.f32 %v1543, %v1549
    %v1614 = vmax.f32 %v1550, 0.0
    %v1615 = vmax.f32 %v1551, 0.0
    %v1616 = vmax.f32 %v1552, 0.0
    %v1617 = vmax.f32 %v1553, 0.0
    %v1618 = vmax.f32 %v1554, 0.0
    %v1619 = vmax.f32 %v1555, 0.0
    %v1620 = vmax.f32 %v1556, 0.0
    %v1621 = vmax.f32 %v1557, 0.0
    %v1622 = vmax.f32 %v1558, 0.0
    %v1623 = vmax.f32 %v1559, 0.0
    %v1624 = vmax.f32 %v1560, 0.0
    %v1625 = vmax.f32 %v1561, 0.0
    %v1626 = vmax.f32 %v1562, 0.0
    %v1627 = vmax.f32 %v1563, 0.0
    %v1628 = vmax.f32 %v1564, 0.0
    %v1629 = vmax.f32 %v1565, 0.0
    %v1630 = vmax.f32 %v1566, 0.0
    %v1631 = vmax.f32 %v1567, 0.0
    %v1632 = vmax.f32 %v1568, 0.0
    %v1633 = vmax.f32 %v1569, 0.0
    %v1634 = vmax.f32 %v1570, 0.0
    %v1635 = vmax.f32 %v1571, 0.0
    %v1636 = vmax.f32 %v1572, 0.0
    %v1637 = vmax.f32 %v1573, 0.0
    %v1638 = vmax.f32 %v1574, 0.0
    %v1639 = vmax.f32 %v1575, 0.0
    %v1640 = vmax.f32 %v1576, 0.0
    %v1641 = vmax.f32 %v1577, 0.0
    %v1642 = vmax.f32 %v1578, 0.0
    %v1643 = vmax.f32 %v1579, 0.0
    %v1644 = vmax.f32 %v1580, 0.0
    %v1645 = vmax.f32 %v1581, 0.0
    %v1646 = vmax.f32 %v1582, 0.0
    %v1647 = vmax.f32 %v1583, 0.0
    %v1648 = vmax.f32 %v1584, 0.0
    %v1649 = vmax.f32 %v1585, 0.0
    %v1650 = vmax.f32 %v1586, 0.0
    %v1651 = vmax.f32 %v1587, 0.0
    %v1652 = vmax.f32 %v1588, 0.0
    %v1653 = vmax.f32 %v1589, 0.0
    %v1654 = vmax.f32 %v1590, 0.0
    %v1655 = vmax.f32 %v1591, 0.0
    %v1656 = vmax.f32 %v1592, 0.0
    %v1657 = vmax.f32 %v1593, 0.0
    %v1658 = vmax.f32 %v1594, 0.0
    %v1659 = vmax.f32 %v1595, 0.0
    %v1660 = vmax.f32 %v1596, 0.0
    %v1661 = vmax.f32 %v1597, 0.0
    %v1662 = vmax.f32 %v1598, 0.0
    %v1663 = vmax.f32 %v1599, 0.0
    %v1664 = vmax.f32 %v1600, 0.0
    %v1665 = vmax.f32 %v1601, 0.0
    %v1666 = vmax.f32 %v1602, 0.0
    %v1667 = vmax.f32 %v1603, 0.0
    %v1668 = vmax.f32 %v1604, 0.0
    %v1669 = vmax.f32 %v1605, 0.0
    %v1670 = vmax.f32 %v1606, 0.0
    %v1671 = vmax.f32 %v1607, 0.0
    %v1672 = vmax.f32 %v1608, 0.0
    %v1673 = vmax.f32 %v1609, 0.0
    %v1674 = vmax.f32 %v1610, 0.0
    %v1675 = vmax.f32 %v1611, 0.0
    %v1676 = vmax.f32 %v1612, 0.0
    %v1677 = vmax.f32 %v1613, 0.0
    %vm1678 = vcmask 519168
    %1679 = vst.msk [vmem:[#allocation2] sm:$0xf] %vm1678, 0
    %1680 = vst.msk [vmem:[#allocation2 + $0x4] sm:$0xf] %vm1678, 0
    %vm1681 = vcmask 516096
    %1682 = vst.msk [vmem:[#allocation2 + $0x8] sm:$0x1] %vm1681, 0
    %1683 = vst.msk [vmem:[#allocation2 + $0xd8] sm:$0xf] %vm1678, 0
    %1684 = vst.msk [vmem:[#allocation2 + $0xdc] sm:$0xf] %vm1678, 0
    %1685 = vst.msk [vmem:[#allocation2 + $0xe0] sm:$0x1] %vm1681, 0
    %s1686 = scalar_lea.vmem [#allocation2], 204
    %1687 = vst.msk [vmem:[%s1686] sm:$0xf] %vm1678, 0
    %1688 = vst.msk [vmem:[%s1686 + $0x4] sm:$0xf] %vm1678, 0
    %1689 = vst.msk [vmem:[%s1686 + $0x8] sm:$0x1] %vm1681, 0
    %1690 = vst.msk [vmem:[%s1686 + $0xd8] sm:$0xf] %vm1678, 0
    %1691 = vst.msk [vmem:[%s1686 + $0xdc] sm:$0xf] %vm1678, 0
    %1692 = vst.msk [vmem:[%s1686 + $0xe0] sm:$0x1] %vm1681, 0
    %vm1693 = vcmask 516096
    %vm1694 = vsmask.f32 256
    %vm1695 = vmand %vm1693, %vm1694
    %v1696 = vld [vmem:[#allocation2] sm:$0x1]
    %v1697 = vsel %vm1695, 0, %v1696
    %1698 = vst [vmem:[#allocation2] sm:$0x1] %v1697
    %v1699 = vld [vmem:[#allocation2 + $0xc] sm:$0x1]
    %v1700 = vsel %vm1695, 0, %v1699
    %1701 = vst [vmem:[#allocation2 + $0xc] sm:$0x1] %v1700
    %v1702 = vld [vmem:[#allocation2 + $0x18] sm:$0x1]
    %v1703 = vsel %vm1695, 0, %v1702
    %1704 = vst [vmem:[#allocation2 + $0x18] sm:$0x1] %v1703
    %v1705 = vld [vmem:[#allocation2 + $0x24] sm:$0x1]
    %v1706 = vsel %vm1695, 0, %v1705
    %1707 = vst [vmem:[#allocation2 + $0x24] sm:$0x1] %v1706
    %v1708 = vld [vmem:[#allocation2 + $0x30] sm:$0x1]
    %v1709 = vsel %vm1695, 0, %v1708
    %1710 = vst [vmem:[#allocation2 + $0x30] sm:$0x1] %v1709
    %v1711 = vld [vmem:[#allocation2 + $0x3c] sm:$0x1]
    %v1712 = vsel %vm1695, 0, %v1711
    %1713 = vst [vmem:[#allocation2 + $0x3c] sm:$0x1] %v1712
    %v1714 = vld [vmem:[#allocation2 + $0x48] sm:$0x1]
    %v1715 = vsel %vm1695, 0, %v1714
    %1716 = vst [vmem:[#allocation2 + $0x48] sm:$0x1] %v1715
    %v1717 = vld [vmem:[#allocation2 + $0x54] sm:$0x1]
    %v1718 = vsel %vm1695, 0, %v1717
    %1719 = vst [vmem:[#allocation2 + $0x54] sm:$0x1] %v1718
    %v1720 = vld [vmem:[#allocation2 + $0x60] sm:$0x1]
    %v1721 = vsel %vm1695, 0, %v1720
    %1722 = vst [vmem:[#allocation2 + $0x60] sm:$0x1] %v1721
    %v1723 = vld [vmem:[#allocation2 + $0x6c] sm:$0x1]
    %v1724 = vsel %vm1695, 0, %v1723
    %1725 = vst [vmem:[#allocation2 + $0x6c] sm:$0x1] %v1724
    %v1726 = vld [vmem:[#allocation2 + $0x78] sm:$0x1]
    %v1727 = vsel %vm1695, 0, %v1726
    %1728 = vst [vmem:[#allocation2 + $0x78] sm:$0x1] %v1727
    %v1729 = vld [vmem:[#allocation2 + $0x84] sm:$0x1]
    %v1730 = vsel %vm1695, 0, %v1729
    %1731 = vst [vmem:[#allocation2 + $0x84] sm:$0x1] %v1730
    %v1732 = vld [vmem:[#allocation2 + $0x90] sm:$0x1]
    %v1733 = vsel %vm1695, 0, %v1732
    %1734 = vst [vmem:[#allocation2 + $0x90] sm:$0x1] %v1733
    %v1735 = vld [vmem:[#allocation2 + $0x9c] sm:$0x1]
    %v1736 = vsel %vm1695, 0, %v1735
    %1737 = vst [vmem:[#allocation2 + $0x9c] sm:$0x1] %v1736
    %v1738 = vld [vmem:[#allocation2 + $0xa8] sm:$0x1]
    %v1739 = vsel %vm1695, 0, %v1738
    %1740 = vst [vmem:[#allocation2 + $0xa8] sm:$0x1] %v1739
    %v1741 = vld [vmem:[#allocation2 + $0xb4] sm:$0x1]
    %v1742 = vsel %vm1695, 0, %v1741
    %1743 = vst [vmem:[#allocation2 + $0xb4] sm:$0x1] %v1742
    %v1744 = vld [vmem:[#allocation2 + $0xc0] sm:$0x1]
    %v1745 = vsel %vm1695, 0, %v1744
    %1746 = vst [vmem:[#allocation2 + $0xc0] sm:$0x1] %v1745
    %v1747 = vld [vmem:[#allocation2 + $0xcc] sm:$0x1]
    %v1748 = vsel %vm1695, 0, %v1747
    %1749 = vst [vmem:[#allocation2 + $0xcc] sm:$0x1] %v1748
    %v1750 = vld [vmem:[#allocation2 + $0xd8] sm:$0x1]
    %v1751 = vsel %vm1695, 0, %v1750
    %1752 = vst [vmem:[#allocation2 + $0xd8] sm:$0x1] %v1751
    %v1753 = vld [vmem:[#allocation2 + $0xe4] sm:$0x1]
    %v1754 = vsel %vm1695, 0, %v1753
    %1755 = vst [vmem:[#allocation2 + $0xe4] sm:$0x1] %v1754
    %v1756 = vld [vmem:[#allocation2 + $0xf0] sm:$0x1]
    %v1757 = vsel %vm1695, 0, %v1756
    %1758 = vst [vmem:[#allocation2 + $0xf0] sm:$0x1] %v1757
    %v1759 = vld [vmem:[#allocation2 + $0xfc] sm:$0x1]
    %v1760 = vsel %vm1695, 0, %v1759
    %1761 = vst [vmem:[#allocation2 + $0xfc] sm:$0x1] %v1760
    %v1762 = vld [vmem:[#allocation2 + $0x108] sm:$0x1]
    %v1763 = vsel %vm1695, 0, %v1762
    %1764 = vst [vmem:[#allocation2 + $0x108] sm:$0x1] %v1763
    %v1765 = vld [vmem:[#allocation2 + $0x114] sm:$0x1]
    %v1766 = vsel %vm1695, 0, %v1765
    %1767 = vst [vmem:[#allocation2 + $0x114] sm:$0x1] %v1766
    %v1768 = vld [vmem:[#allocation2 + $0x120] sm:$0x1]
    %v1769 = vsel %vm1695, 0, %v1768
    %1770 = vst [vmem:[#allocation2 + $0x120] sm:$0x1] %v1769
    %v1771 = vld [vmem:[#allocation2 + $0x12c] sm:$0x1]
    %v1772 = vsel %vm1695, 0, %v1771
    %1773 = vst [vmem:[#allocation2 + $0x12c] sm:$0x1] %v1772
    %v1774 = vld [vmem:[#allocation2 + $0x138] sm:$0x1]
    %v1775 = vsel %vm1695, 0, %v1774
    %1776 = vst [vmem:[#allocation2 + $0x138] sm:$0x1] %v1775
    %v1777 = vld [vmem:[#allocation2 + $0x144] sm:$0x1]
    %v1778 = vsel %vm1695, 0, %v1777
    %1779 = vst [vmem:[#allocation2 + $0x144] sm:$0x1] %v1778
    %v1780 = vld [vmem:[#allocation2 + $0x150] sm:$0x1]
    %v1781 = vsel %vm1695, 0, %v1780
    %1782 = vst [vmem:[#allocation2 + $0x150] sm:$0x1] %v1781
    %v1783 = vld [vmem:[#allocation2 + $0x15c] sm:$0x1]
    %v1784 = vsel %vm1695, 0, %v1783
    %1785 = vst [vmem:[#allocation2 + $0x15c] sm:$0x1] %v1784
    %v1786 = vld [vmem:[#allocation2 + $0x168] sm:$0x1]
    %v1787 = vsel %vm1695, 0, %v1786
    %1788 = vst [vmem:[#allocation2 + $0x168] sm:$0x1] %v1787
    %v1789 = vld [vmem:[#allocation2 + $0x174] sm:$0x1]
    %v1790 = vsel %vm1695, 0, %v1789
    %1791 = vst [vmem:[#allocation2 + $0x174] sm:$0x1] %v1790
    %v1792 = vld [vmem:[#allocation2 + $0x180] sm:$0x1]
    %v1793 = vsel %vm1695, 0, %v1792
    %1794 = vst [vmem:[#allocation2 + $0x180] sm:$0x1] %v1793
    %v1795 = vld [vmem:[#allocation2 + $0x18c] sm:$0x1]
    %v1796 = vsel %vm1695, 0, %v1795
    %1797 = vst [vmem:[#allocation2 + $0x18c] sm:$0x1] %v1796
    %v1798 = vld [vmem:[#allocation2 + $0x198] sm:$0x1]
    %v1799 = vsel %vm1695, 0, %v1798
    %1800 = vst [vmem:[#allocation2 + $0x198] sm:$0x1] %v1799
    %v1801 = vld [vmem:[#allocation2 + $0x1a4] sm:$0x1]
    %v1802 = vsel %vm1695, 0, %v1801
    %1803 = vst [vmem:[#allocation2 + $0x1a4] sm:$0x1] %v1802
    %vm1804 = vsmask.f32 7938
    %vm1805 = vmand %vm1693, %vm1804
    %v1806 = vld [vmem:[#allocation2 + $0x8] sm:$0x1]
    %v1807 = vsel %vm1805, 0, %v1806
    %1808 = vst [vmem:[#allocation2 + $0x8] sm:$0x1] %v1807
    %v1809 = vld [vmem:[#allocation2 + $0x14] sm:$0x1]
    %v1810 = vsel %vm1805, 0, %v1809
    %1811 = vst [vmem:[#allocation2 + $0x14] sm:$0x1] %v1810
    %v1812 = vld [vmem:[#allocation2 + $0x20] sm:$0x1]
    %v1813 = vsel %vm1805, 0, %v1812
    %1814 = vst [vmem:[#allocation2 + $0x20] sm:$0x1] %v1813
    %v1815 = vld [vmem:[#allocation2 + $0x2c] sm:$0x1]
    %v1816 = vsel %vm1805, 0, %v1815
    %1817 = vst [vmem:[#allocation2 + $0x2c] sm:$0x1] %v1816
    %v1818 = vld [vmem:[#allocation2 + $0x38] sm:$0x1]
    %v1819 = vsel %vm1805, 0, %v1818
    %1820 = vst [vmem:[#allocation2 + $0x38] sm:$0x1] %v1819
    %v1821 = vld [vmem:[#allocation2 + $0x44] sm:$0x1]
    %v1822 = vsel %vm1805, 0, %v1821
    %1823 = vst [vmem:[#allocation2 + $0x44] sm:$0x1] %v1822
    %v1824 = vld [vmem:[#allocation2 + $0x50] sm:$0x1]
    %v1825 = vsel %vm1805, 0, %v1824
    %1826 = vst [vmem:[#allocation2 + $0x50] sm:$0x1] %v1825
    %v1827 = vld [vmem:[#allocation2 + $0x5c] sm:$0x1]
    %v1828 = vsel %vm1805, 0, %v1827
    %1829 = vst [vmem:[#allocation2 + $0x5c] sm:$0x1] %v1828
    %v1830 = vld [vmem:[#allocation2 + $0x68] sm:$0x1]
    %v1831 = vsel %vm1805, 0, %v1830
    %1832 = vst [vmem:[#allocation2 + $0x68] sm:$0x1] %v1831
    %v1833 = vld [vmem:[#allocation2 + $0x74] sm:$0x1]
    %v1834 = vsel %vm1805, 0, %v1833
    %1835 = vst [vmem:[#allocation2 + $0x74] sm:$0x1] %v1834
    %v1836 = vld [vmem:[#allocation2 + $0x80] sm:$0x1]
    %v1837 = vsel %vm1805, 0, %v1836
    %1838 = vst [vmem:[#allocation2 + $0x80] sm:$0x1] %v1837
    %v1839 = vld [vmem:[#allocation2 + $0x8c] sm:$0x1]
    %v1840 = vsel %vm1805, 0, %v1839
    %1841 = vst [vmem:[#allocation2 + $0x8c] sm:$0x1] %v1840
    %v1842 = vld [vmem:[#allocation2 + $0x98] sm:$0x1]
    %v1843 = vsel %vm1805, 0, %v1842
    %1844 = vst [vmem:[#allocation2 + $0x98] sm:$0x1] %v1843
    %v1845 = vld [vmem:[#allocation2 + $0xa4] sm:$0x1]
    %v1846 = vsel %vm1805, 0, %v1845
    %1847 = vst [vmem:[#allocation2 + $0xa4] sm:$0x1] %v1846
    %v1848 = vld [vmem:[#allocation2 + $0xb0] sm:$0x1]
    %v1849 = vsel %vm1805, 0, %v1848
    %1850 = vst [vmem:[#allocation2 + $0xb0] sm:$0x1] %v1849
    %v1851 = vld [vmem:[#allocation2 + $0xbc] sm:$0x1]
    %v1852 = vsel %vm1805, 0, %v1851
    %1853 = vst [vmem:[#allocation2 + $0xbc] sm:$0x1] %v1852
    %v1854 = vld [vmem:[#allocation2 + $0xc8] sm:$0x1]
    %v1855 = vsel %vm1805, 0, %v1854
    %1856 = vst [vmem:[#allocation2 + $0xc8] sm:$0x1] %v1855
    %v1857 = vld [vmem:[#allocation2 + $0xd4] sm:$0x1]
    %v1858 = vsel %vm1805, 0, %v1857
    %1859 = vst [vmem:[#allocation2 + $0xd4] sm:$0x1] %v1858
    %v1860 = vld [vmem:[#allocation2 + $0xe0] sm:$0x1]
    %v1861 = vsel %vm1805, 0, %v1860
    %1862 = vst [vmem:[#allocation2 + $0xe0] sm:$0x1] %v1861
    %v1863 = vld [vmem:[#allocation2 + $0xec] sm:$0x1]
    %v1864 = vsel %vm1805, 0, %v1863
    %1865 = vst [vmem:[#allocation2 + $0xec] sm:$0x1] %v1864
    %v1866 = vld [vmem:[#allocation2 + $0xf8] sm:$0x1]
    %v1867 = vsel %vm1805, 0, %v1866
    %1868 = vst [vmem:[#allocation2 + $0xf8] sm:$0x1] %v1867
    %v1869 = vld [vmem:[#allocation2 + $0x104] sm:$0x1]
    %v1870 = vsel %vm1805, 0, %v1869
    %1871 = vst [vmem:[#allocation2 + $0x104] sm:$0x1] %v1870
    %v1872 = vld [vmem:[#allocation2 + $0x110] sm:$0x1]
    %v1873 = vsel %vm1805, 0, %v1872
    %1874 = vst [vmem:[#allocation2 + $0x110] sm:$0x1] %v1873
    %v1875 = vld [vmem:[#allocation2 + $0x11c] sm:$0x1]
    %v1876 = vsel %vm1805, 0, %v1875
    %1877 = vst [vmem:[#allocation2 + $0x11c] sm:$0x1] %v1876
    %v1878 = vld [vmem:[#allocation2 + $0x128] sm:$0x1]
    %v1879 = vsel %vm1805, 0, %v1878
    %1880 = vst [vmem:[#allocation2 + $0x128] sm:$0x1] %v1879
    %v1881 = vld [vmem:[#allocation2 + $0x134] sm:$0x1]
    %v1882 = vsel %vm1805, 0, %v1881
    %1883 = vst [vmem:[#allocation2 + $0x134] sm:$0x1] %v1882
    %v1884 = vld [vmem:[#allocation2 + $0x140] sm:$0x1]
    %v1885 = vsel %vm1805, 0, %v1884
    %1886 = vst [vmem:[#allocation2 + $0x140] sm:$0x1] %v1885
    %v1887 = vld [vmem:[#allocation2 + $0x14c] sm:$0x1]
    %v1888 = vsel %vm1805, 0, %v1887
    %1889 = vst [vmem:[#allocation2 + $0x14c] sm:$0x1] %v1888
    %v1890 = vld [vmem:[#allocation2 + $0x158] sm:$0x1]
    %v1891 = vsel %vm1805, 0, %v1890
    %1892 = vst [vmem:[#allocation2 + $0x158] sm:$0x1] %v1891
    %v1893 = vld [vmem:[#allocation2 + $0x164] sm:$0x1]
    %v1894 = vsel %vm1805, 0, %v1893
    %1895 = vst [vmem:[#allocation2 + $0x164] sm:$0x1] %v1894
    %v1896 = vld [vmem:[#allocation2 + $0x170] sm:$0x1]
    %v1897 = vsel %vm1805, 0, %v1896
    %1898 = vst [vmem:[#allocation2 + $0x170] sm:$0x1] %v1897
    %v1899 = vld [vmem:[#allocation2 + $0x17c] sm:$0x1]
    %v1900 = vsel %vm1805, 0, %v1899
    %1901 = vst [vmem:[#allocation2 + $0x17c] sm:$0x1] %v1900
    %v1902 = vld [vmem:[#allocation2 + $0x188] sm:$0x1]
    %v1903 = vsel %vm1805, 0, %v1902
    %1904 = vst [vmem:[#allocation2 + $0x188] sm:$0x1] %v1903
    %v1905 = vld [vmem:[#allocation2 + $0x194] sm:$0x1]
    %v1906 = vsel %vm1805, 0, %v1905
    %1907 = vst [vmem:[#allocation2 + $0x194] sm:$0x1] %v1906
    %v1908 = vld [vmem:[#allocation2 + $0x1a0] sm:$0x1]
    %v1909 = vsel %vm1805, 0, %v1908
    %1910 = vst [vmem:[#allocation2 + $0x1a0] sm:$0x1] %v1909
    %v1911 = vld [vmem:[#allocation2 + $0x1ac] sm:$0x1]
    %v1912 = vsel %vm1805, 0, %v1911
    %1913 = vst [vmem:[#allocation2 + $0x1ac] sm:$0x1] %v1912
    %v1914 = vpack.c.bf16 %v1615, %v1614
    %v1915 = vpack.c.bf16 %v1617, %v1616
    %v1916 = vpack.c.bf16 %v1619, %v1618
    %v1917 = vpack.c.bf16 %v1621, %v1620
    %v1918 = vpack.c.bf16 %v1623, %v1622
    %v1919 = vpack.c.bf16 %v1625, %v1624
    %v1920 = vpack.c.bf16 %v1627, %v1626
    %v1921 = vpack.c.bf16 %v1629, %v1628
    %v1922 = vpack.c.bf16 %v1631, %v1630
    %v1923 = vpack.c.bf16 %v1633, %v1632
    %v1924 = vpack.c.bf16 %v1635, %v1634
    %v1925 = vpack.c.bf16 %v1637, %v1636
    %v1926 = vpack.c.bf16 %v1639, %v1638
    %v1927 = vpack.c.bf16 %v1641, %v1640
    %v1928 = vpack.c.bf16 %v1643, %v1642
    %v1929 = vpack.c.bf16 %v1645, %v1644
    %v1930 = vpack.c.bf16 %v1647, %v1646
    %v1931 = vpack.c.bf16 %v1649, %v1648
    %v1932 = vpack.c.bf16 %v1651, %v1650
    %v1933 = vpack.c.bf16 %v1653, %v1652
    %v1934 = vpack.c.bf16 %v1655, %v1654
    %v1935 = vpack.c.bf16 %v1657, %v1656
    %v1936 = vpack.c.bf16 %v1659, %v1658
    %v1937 = vpack.c.bf16 %v1661, %v1660
    %v1938 = vpack.c.bf16 %v1663, %v1662
    %v1939 = vpack.c.bf16 %v1665, %v1664
    %v1940 = vpack.c.bf16 %v1667, %v1666
    %v1941 = vpack.c.bf16 %v1669, %v1668
    %v1942 = vpack.c.bf16 %v1671, %v1670
    %v1943 = vpack.c.bf16 %v1673, %v1672
    %v1944 = vpack.c.bf16 %v1675, %v1674
    %v1945 = vpack.c.bf16 %v1677, %v1676
    %v1978 = vunpack.c.l.b16 %v1914
    %v1979 = vunpack.c.h.b16 %v1914
    %v1980 = vunpack.c.l.b16 %v1915
    %v1981 = vunpack.c.h.b16 %v1915
    %v1982 = vunpack.c.l.b16 %v1916
    %v1983 = vunpack.c.h.b16 %v1916
    %v1984 = vunpack.c.l.b16 %v1917
    %v1985 = vunpack.c.h.b16 %v1917
    %v1986 = vunpack.c.l.b16 %v1918
    %v1987 = vunpack.c.h.b16 %v1918
    %v1988 = vunpack.c.l.b16 %v1919
    %v1989 = vunpack.c.h.b16 %v1919
    %v1990 = vunpack.c.l.b16 %v1920
    %v1991 = vunpack.c.h.b16 %v1920
    %v1992 = vunpack.c.l.b16 %v1921
    %v1993 = vunpack.c.h.b16 %v1921
    %v1994 = vunpack.c.l.b16 %v1922
    %v1995 = vunpack.c.h.b16 %v1922
    %v1996 = vunpack.c.l.b16 %v1923
    %v1997 = vunpack.c.h.b16 %v1923
    %v1998 = vunpack.c.l.b16 %v1924
    %v1999 = vunpack.c.h.b16 %v1924
    %v2000 = vunpack.c.l.b16 %v1925
    %v2001 = vunpack.c.h.b16 %v1925
    %v2002 = vunpack.c.l.b16 %v1926
    %v2003 = vunpack.c.h.b16 %v1926
    %v2004 = vunpack.c.l.b16 %v1927
    %v2005 = vunpack.c.h.b16 %v1927
    %v2006 = vunpack.c.l.b16 %v1928
    %v2007 = vunpack.c.h.b16 %v1928
    %v2008 = vunpack.c.l.b16 %v1929
    %v2009 = vunpack.c.h.b16 %v1929
    %v2010 = vunpack.c.l.b16 %v1930
    %v2011 = vunpack.c.h.b16 %v1930
    %v2012 = vunpack.c.l.b16 %v1931
    %v2013 = vunpack.c.h.b16 %v1931
    %v2014 = vunpack.c.l.b16 %v1932
    %v2015 = vunpack.c.h.b16 %v1932
    %v2016 = vunpack.c.l.b16 %v1933
    %v2017 = vunpack.c.h.b16 %v1933
    %v2018 = vunpack.c.l.b16 %v1934
    %v2019 = vunpack.c.h.b16 %v1934
    %v2020 = vunpack.c.l.b16 %v1935
    %v2021 = vunpack.c.h.b16 %v1935
    %v2022 = vunpack.c.l.b16 %v1936
    %v2023 = vunpack.c.h.b16 %v1936
    %v2024 = vunpack.c.l.b16 %v1937
    %v2025 = vunpack.c.h.b16 %v1937
    %v2026 = vunpack.c.l.b16 %v1938
    %v2027 = vunpack.c.h.b16 %v1938
    %v2028 = vunpack.c.l.b16 %v1939
    %v2029 = vunpack.c.h.b16 %v1939
    %v2030 = vunpack.c.l.b16 %v1940
    %v2031 = vunpack.c.h.b16 %v1940
    %v2032 = vunpack.c.l.b16 %v1941
    %v2033 = vunpack.c.h.b16 %v1941
    %v2034 = vunpack.c.l.b16 %v1942
    %v2035 = vunpack.c.h.b16 %v1942
    %v2036 = vunpack.c.l.b16 %v1943
    %v2037 = vunpack.c.h.b16 %v1943
    %v2038 = vunpack.c.l.b16 %v1944
    %v2039 = vunpack.c.h.b16 %v1944
    %v2040 = vunpack.c.l.b16 %v1945
    %v2041 = vunpack.c.h.b16 %v1945
    %v2042 = vpack.c.b16 %v1978, %v1978
    %v2043 = vpack.c.b16 %v1979, %v1979
    %v2044 = vpack.c.b16 %v1980, %v1980
    %v2045 = vpack.c.b16 %v1981, %v1981
    %v2046 = vpack.c.b16 %v1982, %v1982
    %v2047 = vpack.c.b16 %v1983, %v1983
    %v2048 = vpack.c.b16 %v1984, %v1984
    %v2049 = vpack.c.b16 %v1985, %v1985
    %v2050 = vpack.c.b16 %v1986, %v1986
    %v2051 = vpack.c.b16 %v1987, %v1987
    %v2052 = vpack.c.b16 %v1988, %v1988
    %v2053 = vpack.c.b16 %v1989, %v1989
    %v2054 = vpack.c.b16 %v1990, %v1990
    %v2055 = vpack.c.b16 %v1991, %v1991
    %v2056 = vpack.c.b16 %v1992, %v1992
    %v2057 = vpack.c.b16 %v1993, %v1993
    %v2058 = vpack.c.b16 %v1994, %v1994
    %v2059 = vpack.c.b16 %v1995, %v1995
    %v2060 = vpack.c.b16 %v1996, %v1996
    %v2061 = vpack.c.b16 %v1997, %v1997
    %v2062 = vpack.c.b16 %v1998, %v1998
    %v2063 = vpack.c.b16 %v1999, %v1999
    %v2064 = vpack.c.b16 %v2000, %v2000
    %v2065 = vpack.c.b16 %v2001, %v2001
    %v2066 = vpack.c.b16 %v2002, %v2002
    %v2067 = vpack.c.b16 %v2003, %v2003
    %v2068 = vpack.c.b16 %v2004, %v2004
    %v2069 = vpack.c.b16 %v2005, %v2005
    %v2070 = vpack.c.b16 %v2006, %v2006
    %v2071 = vpack.c.b16 %v2007, %v2007
    %v2072 = vpack.c.b16 %v2008, %v2008
    %v2073 = vpack.c.b16 %v2009, %v2009
    %v2074 = vpack.c.b16 %v2010, %v2010
    %v2075 = vpack.c.b16 %v2011, %v2011
    %v2076 = vpack.c.b16 %v2012, %v2012
    %v2077 = vpack.c.b16 %v2013, %v2013
    %v2078 = vpack.c.b16 %v2014, %v2014
    %v2079 = vpack.c.b16 %v2015, %v2015
    %v2080 = vpack.c.b16 %v2016, %v2016
    %v2081 = vpack.c.b16 %v2017, %v2017
    %v2082 = vpack.c.b16 %v2018, %v2018
    %v2083 = vpack.c.b16 %v2019, %v2019
    %v2084 = vpack.c.b16 %v2020, %v2020
    %v2085 = vpack.c.b16 %v2021, %v2021
    %v2086 = vpack.c.b16 %v2022, %v2022
    %v2087 = vpack.c.b16 %v2023, %v2023
    %v2088 = vpack.c.b16 %v2024, %v2024
    %v2089 = vpack.c.b16 %v2025, %v2025
    %v2090 = vpack.c.b16 %v2026, %v2026
    %v2091 = vpack.c.b16 %v2027, %v2027
    %v2092 = vpack.c.b16 %v2028, %v2028
    %v2093 = vpack.c.b16 %v2029, %v2029
    %v2094 = vpack.c.b16 %v2030, %v2030
    %v2095 = vpack.c.b16 %v2031, %v2031
    %v2096 = vpack.c.b16 %v2032, %v2032
    %v2097 = vpack.c.b16 %v2033, %v2033
    %v2098 = vpack.c.b16 %v2034, %v2034
    %v2099 = vpack.c.b16 %v2035, %v2035
    %v2100 = vpack.c.b16 %v2036, %v2036
    %v2101 = vpack.c.b16 %v2037, %v2037
    %v2102 = vpack.c.b16 %v2038, %v2038
    %v2103 = vpack.c.b16 %v2039, %v2039
    %v2104 = vpack.c.b16 %v2040, %v2040
    %v2105 = vpack.c.b16 %v2041, %v2041
    %vm2106 = vsmask.f32 4368
    %vm2107 = vmor %vm1694, %vm2106
    %v2109 = vshrl.u32 %v2042, 16
    %v2111 = vrot.slane %v2109, 7
    %v2112 = vshll.u32 %v2042, 16
    %v2114 = vor.u32 %v2111, %v2112
    %v2115 = vrot.slane %v2111, 4
    %v2117 = vshrl.u32 %v2043, 16
    %v2119 = vrot.slane %v2117, 7
    %v2120 = vshll.u32 %v2043, 16
    %v2122 = vor.u32 %v2119, %v2120
    %v2123 = vsel %vm2107, %v2115, %v2122
    %v2124 = vrot.slane %v2119, 4
    %v2126 = vshrl.u32 %v2044, 16
    %v2128 = vrot.slane %v2126, 7
    %v2129 = vshll.u32 %v2044, 16
    %v2131 = vor.u32 %v2128, %v2129
    %v2132 = vrot.slane %v2128, 4
    %v2134 = vshrl.u32 %v2045, 16
    %v2136 = vrot.slane %v2134, 7
    %v2137 = vshll.u32 %v2045, 16
    %v2139 = vor.u32 %v2136, %v2137
    %v2140 = vsel %vm2107, %v2132, %v2139
    %v2141 = vrot.slane %v2136, 4
    %v2143 = vshrl.u32 %v2046, 16
    %v2145 = vrot.slane %v2143, 7
    %v2146 = vshll.u32 %v2046, 16
    %v2148 = vor.u32 %v2145, %v2146
    %v2149 = vrot.slane %v2145, 4
    %v2151 = vshrl.u32 %v2047, 16
    %v2153 = vrot.slane %v2151, 7
    %v2154 = vshll.u32 %v2047, 16
    %v2156 = vor.u32 %v2153, %v2154
    %v2157 = vsel %vm2107, %v2149, %v2156
    %v2158 = vrot.slane %v2153, 4
    %v2160 = vshrl.u32 %v2048, 16
    %v2162 = vrot.slane %v2160, 7
    %v2163 = vshll.u32 %v2048, 16
    %v2165 = vor.u32 %v2162, %v2163
    %v2166 = vrot.slane %v2162, 4
    %v2168 = vshrl.u32 %v2049, 16
    %v2170 = vrot.slane %v2168, 7
    %v2171 = vshll.u32 %v2049, 16
    %v2173 = vor.u32 %v2170, %v2171
    %v2174 = vsel %vm2107, %v2166, %v2173
    %v2175 = vrot.slane %v2170, 4
    %v2177 = vshrl.u32 %v2050, 16
    %v2179 = vrot.slane %v2177, 7
    %v2180 = vshll.u32 %v2050, 16
    %v2182 = vor.u32 %v2179, %v2180
    %v2183 = vrot.slane %v2179, 4
    %v2185 = vshrl.u32 %v2051, 16
    %v2187 = vrot.slane %v2185, 7
    %v2188 = vshll.u32 %v2051, 16
    %v2190 = vor.u32 %v2187, %v2188
    %v2191 = vsel %vm2107, %v2183, %v2190
    %v2192 = vrot.slane %v2187, 4
    %v2194 = vshrl.u32 %v2052, 16
    %v2196 = vrot.slane %v2194, 7
    %v2197 = vshll.u32 %v2052, 16
    %v2199 = vor.u32 %v2196, %v2197
    %v2200 = vrot.slane %v2196, 4
    %v2202 = vshrl.u32 %v2053, 16
    %v2204 = vrot.slane %v2202, 7
    %v2205 = vshll.u32 %v2053, 16
    %v2207 = vor.u32 %v2204, %v2205
    %v2208 = vsel %vm2107, %v2200, %v2207
    %v2209 = vrot.slane %v2204, 4
    %v2211 = vshrl.u32 %v2054, 16
    %v2213 = vrot.slane %v2211, 7
    %v2214 = vshll.u32 %v2054, 16
    %v2216 = vor.u32 %v2213, %v2214
    %v2217 = vrot.slane %v2213, 4
    %v2219 = vshrl.u32 %v2055, 16
    %v2221 = vrot.slane %v2219, 7
    %v2222 = vshll.u32 %v2055, 16
    %v2224 = vor.u32 %v2221, %v2222
    %v2225 = vsel %vm2107, %v2217, %v2224
    %v2226 = vrot.slane %v2221, 4
    %v2228 = vshrl.u32 %v2056, 16
    %v2230 = vrot.slane %v2228, 7
    %v2231 = vshll.u32 %v2056, 16
    %v2233 = vor.u32 %v2230, %v2231
    %v2234 = vrot.slane %v2230, 4
    %v2236 = vshrl.u32 %v2057, 16
    %v2238 = vrot.slane %v2236, 7
    %v2239 = vshll.u32 %v2057, 16
    %v2241 = vor.u32 %v2238, %v2239
    %v2242 = vsel %vm2107, %v2234, %v2241
    %v2243 = vrot.slane %v2238, 4
    %v2245 = vshrl.u32 %v2058, 16
    %v2247 = vrot.slane %v2245, 7
    %v2248 = vshll.u32 %v2058, 16
    %v2250 = vor.u32 %v2247, %v2248
    %v2251 = vrot.slane %v2247, 4
    %v2253 = vshrl.u32 %v2059, 16
    %v2255 = vrot.slane %v2253, 7
    %v2256 = vshll.u32 %v2059, 16
    %v2258 = vor.u32 %v2255, %v2256
    %v2259 = vsel %vm2107, %v2251, %v2258
    %v2260 = vrot.slane %v2255, 4
    %v2262 = vshrl.u32 %v2060, 16
    %v2264 = vrot.slane %v2262, 7
    %v2265 = vshll.u32 %v2060, 16
    %v2267 = vor.u32 %v2264, %v2265
    %v2268 = vrot.slane %v2264, 4
    %v2270 = vshrl.u32 %v2061, 16
    %v2272 = vrot.slane %v2270, 7
    %v2273 = vshll.u32 %v2061, 16
    %v2275 = vor.u32 %v2272, %v2273
    %v2276 = vsel %vm2107, %v2268, %v2275
    %v2277 = vrot.slane %v2272, 4
    %v2279 = vshrl.u32 %v2062, 16
    %v2281 = vrot.slane %v2279, 7
    %v2282 = vshll.u32 %v2062, 16
    %v2284 = vor.u32 %v2281, %v2282
    %v2285 = vrot.slane %v2281, 4
    %v2287 = vshrl.u32 %v2063, 16
    %v2289 = vrot.slane %v2287, 7
    %v2290 = vshll.u32 %v2063, 16
    %v2292 = vor.u32 %v2289, %v2290
    %v2293 = vsel %vm2107, %v2285, %v2292
    %v2294 = vrot.slane %v2289, 4
    %v2296 = vshrl.u32 %v2064, 16
    %v2298 = vrot.slane %v2296, 7
    %v2299 = vshll.u32 %v2064, 16
    %v2301 = vor.u32 %v2298, %v2299
    %v2302 = vrot.slane %v2298, 4
    %v2304 = vshrl.u32 %v2065, 16
    %v2306 = vrot.slane %v2304, 7
    %v2307 = vshll.u32 %v2065, 16
    %v2309 = vor.u32 %v2306, %v2307
    %v2310 = vsel %vm2107, %v2302, %v2309
    %v2311 = vrot.slane %v2306, 4
    %v2313 = vshrl.u32 %v2066, 16
    %v2315 = vrot.slane %v2313, 7
    %v2316 = vshll.u32 %v2066, 16
    %v2318 = vor.u32 %v2315, %v2316
    %v2319 = vrot.slane %v2315, 4
    %v2321 = vshrl.u32 %v2067, 16
    %v2323 = vrot.slane %v2321, 7
    %v2324 = vshll.u32 %v2067, 16
    %v2326 = vor.u32 %v2323, %v2324
    %v2327 = vsel %vm2107, %v2319, %v2326
    %v2328 = vrot.slane %v2323, 4
    %v2330 = vshrl.u32 %v2068, 16
    %v2332 = vrot.slane %v2330, 7
    %v2333 = vshll.u32 %v2068, 16
    %v2335 = vor.u32 %v2332, %v2333
    %v2336 = vrot.slane %v2332, 4
    %v2338 = vshrl.u32 %v2069, 16
    %v2340 = vrot.slane %v2338, 7
    %v2341 = vshll.u32 %v2069, 16
    %v2343 = vor.u32 %v2340, %v2341
    %v2344 = vsel %vm2107, %v2336, %v2343
    %v2345 = vrot.slane %v2340, 4
    %v2347 = vshrl.u32 %v2070, 16
    %v2349 = vrot.slane %v2347, 7
    %v2350 = vshll.u32 %v2070, 16
    %v2352 = vor.u32 %v2349, %v2350
    %v2353 = vrot.slane %v2349, 4
    %v2355 = vshrl.u32 %v2071, 16
    %v2357 = vrot.slane %v2355, 7
    %v2358 = vshll.u32 %v2071, 16
    %v2360 = vor.u32 %v2357, %v2358
    %v2361 = vsel %vm2107, %v2353, %v2360
    %v2362 = vrot.slane %v2357, 4
    %v2364 = vshrl.u32 %v2072, 16
    %v2366 = vrot.slane %v2364, 7
    %v2367 = vshll.u32 %v2072, 16
    %v2369 = vor.u32 %v2366, %v2367
    %v2370 = vrot.slane %v2366, 4
    %v2372 = vshrl.u32 %v2073, 16
    %v2374 = vrot.slane %v2372, 7
    %v2375 = vshll.u32 %v2073, 16
    %v2377 = vor.u32 %v2374, %v2375
    %v2378 = vsel %vm2107, %v2370, %v2377
    %v2379 = vrot.slane %v2374, 4
    %v2381 = vshrl.u32 %v2074, 16
    %v2383 = vrot.slane %v2381, 7
    %v2384 = vshll.u32 %v2074, 16
    %v2386 = vor.u32 %v2383, %v2384
    %v2387 = vrot.slane %v2383, 4
    %v2389 = vshrl.u32 %v2075, 16
    %v2391 = vrot.slane %v2389, 7
    %v2392 = vshll.u32 %v2075, 16
    %v2394 = vor.u32 %v2391, %v2392
    %v2395 = vsel %vm2107, %v2387, %v2394
    %v2396 = vrot.slane %v2391, 4
    %v2398 = vshrl.u32 %v2076, 16
    %v2400 = vrot.slane %v2398, 7
    %v2401 = vshll.u32 %v2076, 16
    %v2403 = vor.u32 %v2400, %v2401
    %v2404 = vrot.slane %v2400, 4
    %v2406 = vshrl.u32 %v2077, 16
    %v2408 = vrot.slane %v2406, 7
    %v2409 = vshll.u32 %v2077, 16
    %v2411 = vor.u32 %v2408, %v2409
    %v2412 = vsel %vm2107, %v2404, %v2411
    %v2413 = vrot.slane %v2408, 4
    %v2415 = vshrl.u32 %v2078, 16
    %v2417 = vrot.slane %v2415, 7
    %v2418 = vshll.u32 %v2078, 16
    %v2420 = vor.u32 %v2417, %v2418
    %v2421 = vrot.slane %v2417, 4
    %v2423 = vshrl.u32 %v2079, 16
    %v2425 = vrot.slane %v2423, 7
    %v2426 = vshll.u32 %v2079, 16
    %v2428 = vor.u32 %v2425, %v2426
    %v2429 = vsel %vm2107, %v2421, %v2428
    %v2430 = vrot.slane %v2425, 4
    %v2432 = vshrl.u32 %v2080, 16
    %v2434 = vrot.slane %v2432, 7
    %v2435 = vshll.u32 %v2080, 16
    %v2437 = vor.u32 %v2434, %v2435
    %v2438 = vrot.slane %v2434, 4
    %v2440 = vshrl.u32 %v2081, 16
    %v2442 = vrot.slane %v2440, 7
    %v2443 = vshll.u32 %v2081, 16
    %v2445 = vor.u32 %v2442, %v2443
    %v2446 = vsel %vm2107, %v2438, %v2445
    %v2447 = vrot.slane %v2442, 4
    %v2449 = vshrl.u32 %v2082, 16
    %v2451 = vrot.slane %v2449, 7
    %v2452 = vshll.u32 %v2082, 16
    %v2454 = vor.u32 %v2451, %v2452
    %v2455 = vrot.slane %v2451, 4
    %v2457 = vshrl.u32 %v2083, 16
    %v2459 = vrot.slane %v2457, 7
    %v2460 = vshll.u32 %v2083, 16
    %v2462 = vor.u32 %v2459, %v2460
    %v2463 = vsel %vm2107, %v2455, %v2462
    %v2464 = vrot.slane %v2459, 4
    %v2466 = vshrl.u32 %v2084, 16
    %v2468 = vrot.slane %v2466, 7
    %v2469 = vshll.u32 %v2084, 16
    %v2471 = vor.u32 %v2468, %v2469
    %v2472 = vrot.slane %v2468, 4
    %v2474 = vshrl.u32 %v2085, 16
    %v2476 = vrot.slane %v2474, 7
    %v2477 = vshll.u32 %v2085, 16
    %v2479 = vor.u32 %v2476, %v2477
    %v2480 = vsel %vm2107, %v2472, %v2479
    %v2481 = vrot.slane %v2476, 4
    %v2483 = vshrl.u32 %v2086, 16
    %v2485 = vrot.slane %v2483, 7
    %v2486 = vshll.u32 %v2086, 16
    %v2488 = vor.u32 %v2485, %v2486
    %v2489 = vrot.slane %v2485, 4
    %v2491 = vshrl.u32 %v2087, 16
    %v2493 = vrot.slane %v2491, 7
    %v2494 = vshll.u32 %v2087, 16
    %v2496 = vor.u32 %v2493, %v2494
    %v2497 = vsel %vm2107, %v2489, %v2496
    %v2498 = vrot.slane %v2493, 4
    %v2500 = vshrl.u32 %v2088, 16
    %v2502 = vrot.slane %v2500, 7
    %v2503 = vshll.u32 %v2088, 16
    %v2505 = vor.u32 %v2502, %v2503
    %v2506 = vrot.slane %v2502, 4
    %v2508 = vshrl.u32 %v2089, 16
    %v2510 = vrot.slane %v2508, 7
    %v2511 = vshll.u32 %v2089, 16
    %v2513 = vor.u32 %v2510, %v2511
    %v2514 = vsel %vm2107, %v2506, %v2513
    %v2515 = vrot.slane %v2510, 4
    %v2517 = vshrl.u32 %v2090, 16
    %v2519 = vrot.slane %v2517, 7
    %v2520 = vshll.u32 %v2090, 16
    %v2522 = vor.u32 %v2519, %v2520
    %v2523 = vrot.slane %v2519, 4
    %v2525 = vshrl.u32 %v2091, 16
    %v2527 = vrot.slane %v2525, 7
    %v2528 = vshll.u32 %v2091, 16
    %v2530 = vor.u32 %v2527, %v2528
    %v2531 = vsel %vm2107, %v2523, %v2530
    %v2532 = vrot.slane %v2527, 4
    %v2534 = vshrl.u32 %v2092, 16
    %v2536 = vrot.slane %v2534, 7
    %v2537 = vshll.u32 %v2092, 16
    %v2539 = vor.u32 %v2536, %v2537
    %v2540 = vrot.slane %v2536, 4
    %v2542 = vshrl.u32 %v2093, 16
    %v2544 = vrot.slane %v2542, 7
    %v2545 = vshll.u32 %v2093, 16
    %v2547 = vor.u32 %v2544, %v2545
    %v2548 = vsel %vm2107, %v2540, %v2547
    %v2549 = vrot.slane %v2544, 4
    %v2551 = vshrl.u32 %v2094, 16
    %v2553 = vrot.slane %v2551, 7
    %v2554 = vshll.u32 %v2094, 16
    %v2556 = vor.u32 %v2553, %v2554
    %v2557 = vrot.slane %v2553, 4
    %v2559 = vshrl.u32 %v2095, 16
    %v2561 = vrot.slane %v2559, 7
    %v2562 = vshll.u32 %v2095, 16
    %v2564 = vor.u32 %v2561, %v2562
    %v2565 = vsel %vm2107, %v2557, %v2564
    %v2566 = vrot.slane %v2561, 4
    %v2568 = vshrl.u32 %v2096, 16
    %v2570 = vrot.slane %v2568, 7
    %v2571 = vshll.u32 %v2096, 16
    %v2573 = vor.u32 %v2570, %v2571
    %v2574 = vrot.slane %v2570, 4
    %v2576 = vshrl.u32 %v2097, 16
    %v2578 = vrot.slane %v2576, 7
    %v2579 = vshll.u32 %v2097, 16
    %v2581 = vor.u32 %v2578, %v2579
    %v2582 = vsel %vm2107, %v2574, %v2581
    %v2583 = vrot.slane %v2578, 4
    %v2585 = vshrl.u32 %v2098, 16
    %v2587 = vrot.slane %v2585, 7
    %v2588 = vshll.u32 %v2098, 16
    %v2590 = vor.u32 %v2587, %v2588
    %v2591 = vrot.slane %v2587, 4
    %v2593 = vshrl.u32 %v2099, 16
    %v2595 = vrot.slane %v2593, 7
    %v2596 = vshll.u32 %v2099, 16
    %v2598 = vor.u32 %v2595, %v2596
    %v2599 = vsel %vm2107, %v2591, %v2598
    %v2600 = vrot.slane %v2595, 4
    %v2602 = vshrl.u32 %v2100, 16
    %v2604 = vrot.slane %v2602, 7
    %v2605 = vshll.u32 %v2100, 16
    %v2607 = vor.u32 %v2604, %v2605
    %v2608 = vrot.slane %v2604, 4
    %v2610 = vshrl.u32 %v2101, 16
    %v2612 = vrot.slane %v2610, 7
    %v2613 = vshll.u32 %v2101, 16
    %v2615 = vor.u32 %v2612, %v2613
    %v2616 = vsel %vm2107, %v2608, %v2615
    %v2617 = vrot.slane %v2612, 4
    %v2619 = vshrl.u32 %v2102, 16
    %v2621 = vrot.slane %v2619, 7
    %v2622 = vshll.u32 %v2102, 16
    %v2624 = vor.u32 %v2621, %v2622
    %v2625 = vrot.slane %v2621, 4
    %v2627 = vshrl.u32 %v2103, 16
    %v2629 = vrot.slane %v2627, 7
    %v2630 = vshll.u32 %v2103, 16
    %v2632 = vor.u32 %v2629, %v2630
    %v2633 = vsel %vm2107, %v2625, %v2632
    %v2634 = vrot.slane %v2629, 4
    %v2636 = vshrl.u32 %v2104, 16
    %v2638 = vrot.slane %v2636, 7
    %v2639 = vshll.u32 %v2104, 16
    %v2641 = vor.u32 %v2638, %v2639
    %v2642 = vrot.slane %v2638, 4
    %v2644 = vshrl.u32 %v2105, 16
    %v2646 = vrot.slane %v2644, 7
    %v2647 = vshll.u32 %v2105, 16
    %v2649 = vor.u32 %v2646, %v2647
    %v2650 = vsel %vm2107, %v2642, %v2649
    %v2651 = vrot.slane %v2646, 4
    %s2748 = scalar_lea.vmem [#allocation2], 12
    %vm2749 = vcmask 519168
    %vm2750 = vmand %vm2749, %vm1804
    %v2751 = vld [vmem:[%s2748] sm:$0xf]
    %v2752 = vsel %vm2750, %v2114, %v2751
    %2753 = vst [vmem:[%s2748] sm:$0xf] %v2752
    %2754 = vst.msk [vmem:[%s2748 + $0x4] sm:$0xf] %vm1678, %v2123
    %v2755 = vld [vmem:[%s2748 + $0x8] sm:$0x1]
    %v2756 = vsel %vm1695, %v2124, %v2755
    %2757 = vst [vmem:[%s2748 + $0x8] sm:$0x1] %v2756
    %v2758 = vld [vmem:[%s2748 + $0xc] sm:$0xf]
    %v2759 = vsel %vm2750, %v2131, %v2758
    %2760 = vst [vmem:[%s2748 + $0xc] sm:$0xf] %v2759
    %2761 = vst.msk [vmem:[%s2748 + $0x10] sm:$0xf] %vm1678, %v2140
    %v2762 = vld [vmem:[%s2748 + $0x14] sm:$0x1]
    %v2763 = vsel %vm1695, %v2141, %v2762
    %2764 = vst [vmem:[%s2748 + $0x14] sm:$0x1] %v2763
    %v2765 = vld [vmem:[%s2748 + $0x18] sm:$0xf]
    %v2766 = vsel %vm2750, %v2148, %v2765
    %2767 = vst [vmem:[%s2748 + $0x18] sm:$0xf] %v2766
    %2768 = vst.msk [vmem:[%s2748 + $0x1c] sm:$0xf] %vm1678, %v2157
    %v2769 = vld [vmem:[%s2748 + $0x20] sm:$0x1]
    %v2770 = vsel %vm1695, %v2158, %v2769
    %2771 = vst [vmem:[%s2748 + $0x20] sm:$0x1] %v2770
    %v2772 = vld [vmem:[%s2748 + $0x24] sm:$0xf]
    %v2773 = vsel %vm2750, %v2165, %v2772
    %2774 = vst [vmem:[%s2748 + $0x24] sm:$0xf] %v2773
    %2775 = vst.msk [vmem:[%s2748 + $0x28] sm:$0xf] %vm1678, %v2174
    %v2776 = vld [vmem:[%s2748 + $0x2c] sm:$0x1]
    %v2777 = vsel %vm1695, %v2175, %v2776
    %2778 = vst [vmem:[%s2748 + $0x2c] sm:$0x1] %v2777
    %v2779 = vld [vmem:[%s2748 + $0x30] sm:$0xf]
    %v2780 = vsel %vm2750, %v2182, %v2779
    %2781 = vst [vmem:[%s2748 + $0x30] sm:$0xf] %v2780
    %2782 = vst.msk [vmem:[%s2748 + $0x34] sm:$0xf] %vm1678, %v2191
    %v2783 = vld [vmem:[%s2748 + $0x38] sm:$0x1]
    %v2784 = vsel %vm1695, %v2192, %v2783
    %2785 = vst [vmem:[%s2748 + $0x38] sm:$0x1] %v2784
    %v2786 = vld [vmem:[%s2748 + $0x3c] sm:$0xf]
    %v2787 = vsel %vm2750, %v2199, %v2786
    %2788 = vst [vmem:[%s2748 + $0x3c] sm:$0xf] %v2787
    %2789 = vst.msk [vmem:[%s2748 + $0x40] sm:$0xf] %vm1678, %v2208
    %v2790 = vld [vmem:[%s2748 + $0x44] sm:$0x1]
    %v2791 = vsel %vm1695, %v2209, %v2790
    %2792 = vst [vmem:[%s2748 + $0x44] sm:$0x1] %v2791
    %v2793 = vld [vmem:[%s2748 + $0x48] sm:$0xf]
    %v2794 = vsel %vm2750, %v2216, %v2793
    %2795 = vst [vmem:[%s2748 + $0x48] sm:$0xf] %v2794
    %2796 = vst.msk [vmem:[%s2748 + $0x4c] sm:$0xf] %vm1678, %v2225
    %v2797 = vld [vmem:[%s2748 + $0x50] sm:$0x1]
    %v2798 = vsel %vm1695, %v2226, %v2797
    %2799 = vst [vmem:[%s2748 + $0x50] sm:$0x1] %v2798
    %v2800 = vld [vmem:[%s2748 + $0x54] sm:$0xf]
    %v2801 = vsel %vm2750, %v2233, %v2800
    %2802 = vst [vmem:[%s2748 + $0x54] sm:$0xf] %v2801
    %2803 = vst.msk [vmem:[%s2748 + $0x58] sm:$0xf] %vm1678, %v2242
    %v2804 = vld [vmem:[%s2748 + $0x5c] sm:$0x1]
    %v2805 = vsel %vm1695, %v2243, %v2804
    %2806 = vst [vmem:[%s2748 + $0x5c] sm:$0x1] %v2805
    %v2807 = vld [vmem:[%s2748 + $0x60] sm:$0xf]
    %v2808 = vsel %vm2750, %v2250, %v2807
    %2809 = vst [vmem:[%s2748 + $0x60] sm:$0xf] %v2808
    %2810 = vst.msk [vmem:[%s2748 + $0x64] sm:$0xf] %vm1678, %v2259
    %v2811 = vld [vmem:[%s2748 + $0x68] sm:$0x1]
    %v2812 = vsel %vm1695, %v2260, %v2811
    %2813 = vst [vmem:[%s2748 + $0x68] sm:$0x1] %v2812
    %v2814 = vld [vmem:[%s2748 + $0x6c] sm:$0xf]
    %v2815 = vsel %vm2750, %v2267, %v2814
    %2816 = vst [vmem:[%s2748 + $0x6c] sm:$0xf] %v2815
    %2817 = vst.msk [vmem:[%s2748 + $0x70] sm:$0xf] %vm1678, %v2276
    %v2818 = vld [vmem:[%s2748 + $0x74] sm:$0x1]
    %v2819 = vsel %vm1695, %v2277, %v2818
    %2820 = vst [vmem:[%s2748 + $0x74] sm:$0x1] %v2819
    %v2821 = vld [vmem:[%s2748 + $0x78] sm:$0xf]
    %v2822 = vsel %vm2750, %v2284, %v2821
    %2823 = vst [vmem:[%s2748 + $0x78] sm:$0xf] %v2822
    %2824 = vst.msk [vmem:[%s2748 + $0x7c] sm:$0xf] %vm1678, %v2293
    %v2825 = vld [vmem:[%s2748 + $0x80] sm:$0x1]
    %v2826 = vsel %vm1695, %v2294, %v2825
    %2827 = vst [vmem:[%s2748 + $0x80] sm:$0x1] %v2826
    %v2828 = vld [vmem:[%s2748 + $0x84] sm:$0xf]
    %v2829 = vsel %vm2750, %v2301, %v2828
    %2830 = vst [vmem:[%s2748 + $0x84] sm:$0xf] %v2829
    %2831 = vst.msk [vmem:[%s2748 + $0x88] sm:$0xf] %vm1678, %v2310
    %v2832 = vld [vmem:[%s2748 + $0x8c] sm:$0x1]
    %v2833 = vsel %vm1695, %v2311, %v2832
    %2834 = vst [vmem:[%s2748 + $0x8c] sm:$0x1] %v2833
    %v2835 = vld [vmem:[%s2748 + $0x90] sm:$0xf]
    %v2836 = vsel %vm2750, %v2318, %v2835
    %2837 = vst [vmem:[%s2748 + $0x90] sm:$0xf] %v2836
    %2838 = vst.msk [vmem:[%s2748 + $0x94] sm:$0xf] %vm1678, %v2327
    %v2839 = vld [vmem:[%s2748 + $0x98] sm:$0x1]
    %v2840 = vsel %vm1695, %v2328, %v2839
    %2841 = vst [vmem:[%s2748 + $0x98] sm:$0x1] %v2840
    %v2842 = vld [vmem:[%s2748 + $0x9c] sm:$0xf]
    %v2843 = vsel %vm2750, %v2335, %v2842
    %2844 = vst [vmem:[%s2748 + $0x9c] sm:$0xf] %v2843
    %2845 = vst.msk [vmem:[%s2748 + $0xa0] sm:$0xf] %vm1678, %v2344
    %v2846 = vld [vmem:[%s2748 + $0xa4] sm:$0x1]
    %v2847 = vsel %vm1695, %v2345, %v2846
    %2848 = vst [vmem:[%s2748 + $0xa4] sm:$0x1] %v2847
    %v2849 = vld [vmem:[%s2748 + $0xa8] sm:$0xf]
    %v2850 = vsel %vm2750, %v2352, %v2849
    %2851 = vst [vmem:[%s2748 + $0xa8] sm:$0xf] %v2850
    %2852 = vst.msk [vmem:[%s2748 + $0xac] sm:$0xf] %vm1678, %v2361
    %v2853 = vld [vmem:[%s2748 + $0xb0] sm:$0x1]
    %v2854 = vsel %vm1695, %v2362, %v2853
    %2855 = vst [vmem:[%s2748 + $0xb0] sm:$0x1] %v2854
    %v2856 = vld [vmem:[%s2748 + $0xb4] sm:$0xf]
    %v2857 = vsel %vm2750, %v2369, %v2856
    %2858 = vst [vmem:[%s2748 + $0xb4] sm:$0xf] %v2857
    %2859 = vst.msk [vmem:[%s2748 + $0xb8] sm:$0xf] %vm1678, %v2378
    %v2860 = vld [vmem:[%s2748 + $0xbc] sm:$0x1]
    %v2861 = vsel %vm1695, %v2379, %v2860
    %2862 = vst [vmem:[%s2748 + $0xbc] sm:$0x1] %v2861
    %v2863 = vld [vmem:[%s2748 + $0xd8] sm:$0xf]
    %v2864 = vsel %vm2750, %v2386, %v2863
    %2865 = vst [vmem:[%s2748 + $0xd8] sm:$0xf] %v2864
    %2866 = vst.msk [vmem:[%s2748 + $0xdc] sm:$0xf] %vm1678, %v2395
    %v2867 = vld [vmem:[%s2748 + $0xe0] sm:$0x1]
    %v2868 = vsel %vm1695, %v2396, %v2867
    %2869 = vst [vmem:[%s2748 + $0xe0] sm:$0x1] %v2868
    %v2870 = vld [vmem:[%s2748 + $0xe4] sm:$0xf]
    %v2871 = vsel %vm2750, %v2403, %v2870
    %2872 = vst [vmem:[%s2748 + $0xe4] sm:$0xf] %v2871
    %2873 = vst.msk [vmem:[%s2748 + $0xe8] sm:$0xf] %vm1678, %v2412
    %v2874 = vld [vmem:[%s2748 + $0xec] sm:$0x1]
    %v2875 = vsel %vm1695, %v2413, %v2874
    %2876 = vst [vmem:[%s2748 + $0xec] sm:$0x1] %v2875
    %v2877 = vld [vmem:[%s2748 + $0xf0] sm:$0xf]
    %v2878 = vsel %vm2750, %v2420, %v2877
    %2879 = vst [vmem:[%s2748 + $0xf0] sm:$0xf] %v2878
    %2880 = vst.msk [vmem:[%s2748 + $0xf4] sm:$0xf] %vm1678, %v2429
    %v2881 = vld [vmem:[%s2748 + $0xf8] sm:$0x1]
    %v2882 = vsel %vm1695, %v2430, %v2881
    %2883 = vst [vmem:[%s2748 + $0xf8] sm:$0x1] %v2882
    %v2884 = vld [vmem:[%s2748 + $0xfc] sm:$0xf]
    %v2885 = vsel %vm2750, %v2437, %v2884
    %2886 = vst [vmem:[%s2748 + $0xfc] sm:$0xf] %v2885
    %2887 = vst.msk [vmem:[%s2748 + $0x100] sm:$0xf] %vm1678, %v2446
    %v2888 = vld [vmem:[%s2748 + $0x104] sm:$0x1]
    %v2889 = vsel %vm1695, %v2447, %v2888
    %2890 = vst [vmem:[%s2748 + $0x104] sm:$0x1] %v2889
    %v2891 = vld [vmem:[%s2748 + $0x108] sm:$0xf]
    %v2892 = vsel %vm2750, %v2454, %v2891
    %2893 = vst [vmem:[%s2748 + $0x108] sm:$0xf] %v2892
    %2894 = vst.msk [vmem:[%s2748 + $0x10c] sm:$0xf] %vm1678, %v2463
    %v2895 = vld [vmem:[%s2748 + $0x110] sm:$0x1]
    %v2896 = vsel %vm1695, %v2464, %v2895
    %2897 = vst [vmem:[%s2748 + $0x110] sm:$0x1] %v2896
    %v2898 = vld [vmem:[%s2748 + $0x114] sm:$0xf]
    %v2899 = vsel %vm2750, %v2471, %v2898
    %2900 = vst [vmem:[%s2748 + $0x114] sm:$0xf] %v2899
    %2901 = vst.msk [vmem:[%s2748 + $0x118] sm:$0xf] %vm1678, %v2480
    %v2902 = vld [vmem:[%s2748 + $0x11c] sm:$0x1]
    %v2903 = vsel %vm1695, %v2481, %v2902
    %2904 = vst [vmem:[%s2748 + $0x11c] sm:$0x1] %v2903
    %v2905 = vld [vmem:[%s2748 + $0x120] sm:$0xf]
    %v2906 = vsel %vm2750, %v2488, %v2905
    %2907 = vst [vmem:[%s2748 + $0x120] sm:$0xf] %v2906
    %2908 = vst.msk [vmem:[%s2748 + $0x124] sm:$0xf] %vm1678, %v2497
    %v2909 = vld [vmem:[%s2748 + $0x128] sm:$0x1]
    %v2910 = vsel %vm1695, %v2498, %v2909
    %2911 = vst [vmem:[%s2748 + $0x128] sm:$0x1] %v2910
    %v2912 = vld [vmem:[%s2748 + $0x12c] sm:$0xf]
    %v2913 = vsel %vm2750, %v2505, %v2912
    %2914 = vst [vmem:[%s2748 + $0x12c] sm:$0xf] %v2913
    %2915 = vst.msk [vmem:[%s2748 + $0x130] sm:$0xf] %vm1678, %v2514
    %v2916 = vld [vmem:[%s2748 + $0x134] sm:$0x1]
    %v2917 = vsel %vm1695, %v2515, %v2916
    %2918 = vst [vmem:[%s2748 + $0x134] sm:$0x1] %v2917
    %v2919 = vld [vmem:[%s2748 + $0x138] sm:$0xf]
    %v2920 = vsel %vm2750, %v2522, %v2919
    %2921 = vst [vmem:[%s2748 + $0x138] sm:$0xf] %v2920
    %2922 = vst.msk [vmem:[%s2748 + $0x13c] sm:$0xf] %vm1678, %v2531
    %v2923 = vld [vmem:[%s2748 + $0x140] sm:$0x1]
    %v2924 = vsel %vm1695, %v2532, %v2923
    %2925 = vst [vmem:[%s2748 + $0x140] sm:$0x1] %v2924
    %v2926 = vld [vmem:[%s2748 + $0x144] sm:$0xf]
    %v2927 = vsel %vm2750, %v2539, %v2926
    %2928 = vst [vmem:[%s2748 + $0x144] sm:$0xf] %v2927
    %2929 = vst.msk [vmem:[%s2748 + $0x148] sm:$0xf] %vm1678, %v2548
    %v2930 = vld [vmem:[%s2748 + $0x14c] sm:$0x1]
    %v2931 = vsel %vm1695, %v2549, %v2930
    %2932 = vst [vmem:[%s2748 + $0x14c] sm:$0x1] %v2931
    %v2933 = vld [vmem:[%s2748 + $0x150] sm:$0xf]
    %v2934 = vsel %vm2750, %v2556, %v2933
    %2935 = vst [vmem:[%s2748 + $0x150] sm:$0xf] %v2934
    %2936 = vst.msk [vmem:[%s2748 + $0x154] sm:$0xf] %vm1678, %v2565
    %v2937 = vld [vmem:[%s2748 + $0x158] sm:$0x1]
    %v2938 = vsel %vm1695, %v2566, %v2937
    %2939 = vst [vmem:[%s2748 + $0x158] sm:$0x1] %v2938
    %v2940 = vld [vmem:[%s2748 + $0x15c] sm:$0xf]
    %v2941 = vsel %vm2750, %v2573, %v2940
    %2942 = vst [vmem:[%s2748 + $0x15c] sm:$0xf] %v2941
    %2943 = vst.msk [vmem:[%s2748 + $0x160] sm:$0xf] %vm1678, %v2582
    %v2944 = vld [vmem:[%s2748 + $0x164] sm:$0x1]
    %v2945 = vsel %vm1695, %v2583, %v2944
    %2946 = vst [vmem:[%s2748 + $0x164] sm:$0x1] %v2945
    %v2947 = vld [vmem:[%s2748 + $0x168] sm:$0xf]
    %v2948 = vsel %vm2750, %v2590, %v2947
    %2949 = vst [vmem:[%s2748 + $0x168] sm:$0xf] %v2948
    %2950 = vst.msk [vmem:[%s2748 + $0x16c] sm:$0xf] %vm1678, %v2599
    %v2951 = vld [vmem:[%s2748 + $0x170] sm:$0x1]
    %v2952 = vsel %vm1695, %v2600, %v2951
    %2953 = vst [vmem:[%s2748 + $0x170] sm:$0x1] %v2952
    %v2954 = vld [vmem:[%s2748 + $0x174] sm:$0xf]
    %v2955 = vsel %vm2750, %v2607, %v2954
    %2956 = vst [vmem:[%s2748 + $0x174] sm:$0xf] %v2955
    %2957 = vst.msk [vmem:[%s2748 + $0x178] sm:$0xf] %vm1678, %v2616
    %v2958 = vld [vmem:[%s2748 + $0x17c] sm:$0x1]
    %v2959 = vsel %vm1695, %v2617, %v2958
    %2960 = vst [vmem:[%s2748 + $0x17c] sm:$0x1] %v2959
    %v2961 = vld [vmem:[%s2748 + $0x180] sm:$0xf]
    %v2962 = vsel %vm2750, %v2624, %v2961
    %2963 = vst [vmem:[%s2748 + $0x180] sm:$0xf] %v2962
    %2964 = vst.msk [vmem:[%s2748 + $0x184] sm:$0xf] %vm1678, %v2633
    %v2965 = vld [vmem:[%s2748 + $0x188] sm:$0x1]
    %v2966 = vsel %vm1695, %v2634, %v2965
    %2967 = vst [vmem:[%s2748 + $0x188] sm:$0x1] %v2966
    %v2968 = vld [vmem:[%s2748 + $0x18c] sm:$0xf]
    %v2969 = vsel %vm2750, %v2641, %v2968
    %2970 = vst [vmem:[%s2748 + $0x18c] sm:$0xf] %v2969
    %2971 = vst.msk [vmem:[%s2748 + $0x190] sm:$0xf] %vm1678, %v2650
    %v2972 = vld [vmem:[%s2748 + $0x194] sm:$0x1]
    %v2973 = vsel %vm1695, %v2651, %v2972
    %2974 = vst [vmem:[%s2748 + $0x194] sm:$0x1] %v2973
    %v2975 = vld [vmem:[#allocation2] sm:$0xf]
    %v2976 = vld [vmem:[#allocation2 + $0x4] sm:$0xf]
    %v2977 = vld [vmem:[#allocation2 + $0xc] sm:$0xf]
    %v2978 = vld [vmem:[#allocation2 + $0x10] sm:$0xf]
    %v2979 = vld [vmem:[#allocation2 + $0x18] sm:$0xf]
    %v2980 = vld [vmem:[#allocation2 + $0x1c] sm:$0xf]
    %v2981 = vld [vmem:[#allocation2 + $0x24] sm:$0xf]
    %v2982 = vld [vmem:[#allocation2 + $0x28] sm:$0xf]
    %v2983 = vld [vmem:[#allocation2 + $0x30] sm:$0xf]
    %v2984 = vld [vmem:[#allocation2 + $0x34] sm:$0xf]
    %v2985 = vld [vmem:[#allocation2 + $0x3c] sm:$0xf]
    %v2986 = vld [vmem:[#allocation2 + $0x40] sm:$0xf]
    %v2987 = vld [vmem:[#allocation2 + $0x48] sm:$0xf]
    %v2988 = vld [vmem:[#allocation2 + $0x4c] sm:$0xf]
    %v2989 = vld [vmem:[#allocation2 + $0x54] sm:$0xf]
    %v2990 = vld [vmem:[#allocation2 + $0x58] sm:$0xf]
    %v2991 = vld [vmem:[#allocation2 + $0x60] sm:$0xf]
    %v2992 = vld [vmem:[#allocation2 + $0x64] sm:$0xf]
    %v2993 = vld [vmem:[#allocation2 + $0x6c] sm:$0xf]
    %v2994 = vld [vmem:[#allocation2 + $0x70] sm:$0xf]
    %v2995 = vld [vmem:[#allocation2 + $0x78] sm:$0xf]
    %v2996 = vld [vmem:[#allocation2 + $0x7c] sm:$0xf]
    %v2997 = vld [vmem:[#allocation2 + $0x84] sm:$0xf]
    %v2998 = vld [vmem:[#allocation2 + $0x88] sm:$0xf]
    %v2999 = vld [vmem:[#allocation2 + $0x90] sm:$0xf]
    %v3000 = vld [vmem:[#allocation2 + $0x94] sm:$0xf]
    %v3001 = vld [vmem:[#allocation2 + $0x9c] sm:$0xf]
    %v3002 = vld [vmem:[#allocation2 + $0xa0] sm:$0xf]
    %v3003 = vld [vmem:[#allocation2 + $0xa8] sm:$0xf]
    %v3004 = vld [vmem:[#allocation2 + $0xac] sm:$0xf]
    %v3005 = vld [vmem:[#allocation2 + $0xb4] sm:$0xf]
    %v3006 = vld [vmem:[#allocation2 + $0xb8] sm:$0xf]
    %v3007 = vld [vmem:[#allocation2 + $0xd8] sm:$0xf]
    %v3008 = vld [vmem:[#allocation2 + $0xdc] sm:$0xf]
    %v3009 = vld [vmem:[#allocation2 + $0xe4] sm:$0xf]
    %v3010 = vld [vmem:[#allocation2 + $0xe8] sm:$0xf]
    %v3011 = vld [vmem:[#allocation2 + $0xf0] sm:$0xf]
    %v3012 = vld [vmem:[#allocation2 + $0xf4] sm:$0xf]
    %v3013 = vld [vmem:[#allocation2 + $0xfc] sm:$0xf]
    %v3014 = vld [vmem:[#allocation2 + $0x100] sm:$0xf]
    %v3015 = vld [vmem:[#allocation2 + $0x108] sm:$0xf]
    %v3016 = vld [vmem:[#allocation2 + $0x10c] sm:$0xf]
    %v3017 = vld [vmem:[#allocation2 + $0x114] sm:$0xf]
    %v3018 = vld [vmem:[#allocation2 + $0x118] sm:$0xf]
    %v3019 = vld [vmem:[#allocation2 + $0x120] sm:$0xf]
    %v3020 = vld [vmem:[#allocation2 + $0x124] sm:$0xf]
    %v3021 = vld [vmem:[#allocation2 + $0x12c] sm:$0xf]
    %v3022 = vld [vmem:[#allocation2 + $0x130] sm:$0xf]
    %v3023 = vld [vmem:[#allocation2 + $0x138] sm:$0xf]
    %v3024 = vld [vmem:[#allocation2 + $0x13c] sm:$0xf]
    %v3025 = vld [vmem:[#allocation2 + $0x144] sm:$0xf]
    %v3026 = vld [vmem:[#allocation2 + $0x148] sm:$0xf]
    %v3027 = vld [vmem:[#allocation2 + $0x150] sm:$0xf]
    %v3028 = vld [vmem:[#allocation2 + $0x154] sm:$0xf]
    %v3029 = vld [vmem:[#allocation2 + $0x15c] sm:$0xf]
    %v3030 = vld [vmem:[#allocation2 + $0x160] sm:$0xf]
    %v3031 = vld [vmem:[#allocation2 + $0x168] sm:$0xf]
    %v3032 = vld [vmem:[#allocation2 + $0x16c] sm:$0xf]
    %v3033 = vld [vmem:[#allocation2 + $0x174] sm:$0xf]
    %v3034 = vld [vmem:[#allocation2 + $0x178] sm:$0xf]
    %v3035 = vld [vmem:[#allocation2 + $0x180] sm:$0xf]
    %v3036 = vld [vmem:[#allocation2 + $0x184] sm:$0xf]
    %v3037 = vld [vmem:[#allocation2 + $0x18c] sm:$0xf]
    %v3038 = vld [vmem:[#allocation2 + $0x190] sm:$0xf]
    %v3039 = vld [vmem:[#allocation3] sm:$0xf]
    %v3040 = vld [vmem:[#allocation3 + $0x4] sm:$0xf]
    %v3041 = vld [vmem:[#allocation3 + $0x8] sm:$0xf]
    %v3042 = vld [vmem:[#allocation3 + $0xc] sm:$0xf]
    %v3043 = vld [vmem:[#allocation3 + $0x10] sm:$0xf]
    %v3044 = vld [vmem:[#allocation3 + $0x14] sm:$0xf]
    %v3045 = vld [vmem:[#allocation3 + $0x18] sm:$0xf]
    %v3046 = vld [vmem:[#allocation3 + $0x1c] sm:$0xf]
    %v3047 = vld [vmem:[#allocation2 + $0x8] sm:$0x1]
    %v3048 = vld [vmem:[#allocation2 + $0x14] sm:$0x1]
    %v3049 = vld [vmem:[#allocation2 + $0x20] sm:$0x1]
    %v3050 = vld [vmem:[#allocation2 + $0x2c] sm:$0x1]
    %v3051 = vld [vmem:[#allocation2 + $0x38] sm:$0x1]
    %v3052 = vld [vmem:[#allocation2 + $0x44] sm:$0x1]
    %v3053 = vld [vmem:[#allocation2 + $0x50] sm:$0x1]
    %v3054 = vld [vmem:[#allocation2 + $0x5c] sm:$0x1]
    %v3055 = vld [vmem:[#allocation2 + $0x68] sm:$0x1]
    %v3056 = vld [vmem:[#allocation2 + $0x74] sm:$0x1]
    %v3057 = vld [vmem:[#allocation2 + $0x80] sm:$0x1]
    %v3058 = vld [vmem:[#allocation2 + $0x8c] sm:$0x1]
    %v3059 = vld [vmem:[#allocation2 + $0x98] sm:$0x1]
    %v3060 = vld [vmem:[#allocation2 + $0xa4] sm:$0x1]
    %v3061 = vld [vmem:[#allocation2 + $0xb0] sm:$0x1]
    %v3062 = vld [vmem:[#allocation2 + $0xbc] sm:$0x1]
    %v3063 = vld [vmem:[#allocation2 + $0xe0] sm:$0x1]
    %v3064 = vld [vmem:[#allocation2 + $0xec] sm:$0x1]
    %v3065 = vld [vmem:[#allocation2 + $0xf8] sm:$0x1]
    %v3066 = vld [vmem:[#allocation2 + $0x104] sm:$0x1]
    %v3067 = vld [vmem:[#allocation2 + $0x110] sm:$0x1]
    %v3068 = vld [vmem:[#allocation2 + $0x11c] sm:$0x1]
    %v3069 = vld [vmem:[#allocation2 + $0x128] sm:$0x1]
    %v3070 = vld [vmem:[#allocation2 + $0x134] sm:$0x1]
    %v3071 = vld [vmem:[#allocation2 + $0x140] sm:$0x1]
    %v3072 = vld [vmem:[#allocation2 + $0x14c] sm:$0x1]
    %v3073 = vld [vmem:[#allocation2 + $0x158] sm:$0x1]
    %v3074 = vld [vmem:[#allocation2 + $0x164] sm:$0x1]
    %v3075 = vld [vmem:[#allocation2 + $0x170] sm:$0x1]
    %v3076 = vld [vmem:[#allocation2 + $0x17c] sm:$0x1]
    %v3077 = vld [vmem:[#allocation2 + $0x188] sm:$0x1]
    %v3078 = vld [vmem:[#allocation2 + $0x194] sm:$0x1]
    %vm3079 = vsmask.f32 3328
    %vm3080 = vsmask.f32 7440
    %vm3081 = vmor %vm3079, %vm3080
    %v3083 = vshrl.u32 %v2975, 16
    %v3085 = vrot.slane %v3083, 4
    %v3086 = vshll.u32 %v2975, 16
    %v3088 = vrot.slane %v3086, 5
    %v3089 = vor.u32 %v3085, %v3088
    %v3090 = vrot.slane %v3089, 4
    %v3092 = vshll.u32 %v2976, 16
    %v3094 = vrot.slane %v3092, 5
    %v3095 = vsel %vm3081, %v3090, %v3094
    %v3096 = vshrl.u32 %v2976, 16
    %v3098 = vrot.slane %v3096, 4
    %v3099 = vor.u32 %v3098, %v3094
    %v3100 = vrot.slane %v3099, 4
    %v3102 = vshll.u32 %v3047, 16
    %v3104 = vrot.slane %v3102, 5
    %v3105 = vsel %vm3081, %v3100, %v3104
    %v3107 = vshrl.u32 %v2977, 16
    %v3109 = vrot.slane %v3107, 4
    %v3110 = vshll.u32 %v2977, 16
    %v3112 = vrot.slane %v3110, 5
    %v3113 = vor.u32 %v3109, %v3112
    %v3114 = vrot.slane %v3113, 4
    %v3116 = vshll.u32 %v2978, 16
    %v3118 = vrot.slane %v3116, 5
    %v3119 = vsel %vm3081, %v3114, %v3118
    %v3120 = vshrl.u32 %v2978, 16
    %v3122 = vrot.slane %v3120, 4
    %v3123 = vor.u32 %v3122, %v3118
    %v3124 = vrot.slane %v3123, 4
    %v3126 = vshll.u32 %v3048, 16
    %v3128 = vrot.slane %v3126, 5
    %v3129 = vsel %vm3081, %v3124, %v3128
    %v3131 = vshrl.u32 %v2979, 16
    %v3133 = vrot.slane %v3131, 4
    %v3134 = vshll.u32 %v2979, 16
    %v3136 = vrot.slane %v3134, 5
    %v3137 = vor.u32 %v3133, %v3136
    %v3138 = vrot.slane %v3137, 4
    %v3140 = vshll.u32 %v2980, 16
    %v3142 = vrot.slane %v3140, 5
    %v3143 = vsel %vm3081, %v3138, %v3142
    %v3144 = vshrl.u32 %v2980, 16
    %v3146 = vrot.slane %v3144, 4
    %v3147 = vor.u32 %v3146, %v3142
    %v3148 = vrot.slane %v3147, 4
    %v3150 = vshll.u32 %v3049, 16
    %v3152 = vrot.slane %v3150, 5
    %v3153 = vsel %vm3081, %v3148, %v3152
    %v3155 = vshrl.u32 %v2981, 16
    %v3157 = vrot.slane %v3155, 4
    %v3158 = vshll.u32 %v2981, 16
    %v3160 = vrot.slane %v3158, 5
    %v3161 = vor.u32 %v3157, %v3160
    %v3162 = vrot.slane %v3161, 4
    %v3164 = vshll.u32 %v2982, 16
    %v3166 = vrot.slane %v3164, 5
    %v3167 = vsel %vm3081, %v3162, %v3166
    %v3168 = vshrl.u32 %v2982, 16
    %v3170 = vrot.slane %v3168, 4
    %v3171 = vor.u32 %v3170, %v3166
    %v3172 = vrot.slane %v3171, 4
    %v3174 = vshll.u32 %v3050, 16
    %v3176 = vrot.slane %v3174, 5
    %v3177 = vsel %vm3081, %v3172, %v3176
    %v3179 = vshrl.u32 %v2983, 16
    %v3181 = vrot.slane %v3179, 4
    %v3182 = vshll.u32 %v2983, 16
    %v3184 = vrot.slane %v3182, 5
    %v3185 = vor.u32 %v3181, %v3184
    %v3186 = vrot.slane %v3185, 4
    %v3188 = vshll.u32 %v2984, 16
    %v3190 = vrot.slane %v3188, 5
    %v3191 = vsel %vm3081, %v3186, %v3190
    %v3192 = vshrl.u32 %v2984, 16
    %v3194 = vrot.slane %v3192, 4
    %v3195 = vor.u32 %v3194, %v3190
    %v3196 = vrot.slane %v3195, 4
    %v3198 = vshll.u32 %v3051, 16
    %v3200 = vrot.slane %v3198, 5
    %v3201 = vsel %vm3081, %v3196, %v3200
    %v3203 = vshrl.u32 %v2985, 16
    %v3205 = vrot.slane %v3203, 4
    %v3206 = vshll.u32 %v2985, 16
    %v3208 = vrot.slane %v3206, 5
    %v3209 = vor.u32 %v3205, %v3208
    %v3210 = vrot.slane %v3209, 4
    %v3212 = vshll.u32 %v2986, 16
    %v3214 = vrot.slane %v3212, 5
    %v3215 = vsel %vm3081, %v3210, %v3214
    %v3216 = vshrl.u32 %v2986, 16
    %v3218 = vrot.slane %v3216, 4
    %v3219 = vor.u32 %v3218, %v3214
    %v3220 = vrot.slane %v3219, 4
    %v3222 = vshll.u32 %v3052, 16
    %v3224 = vrot.slane %v3222, 5
    %v3225 = vsel %vm3081, %v3220, %v3224
    %v3227 = vshrl.u32 %v2987, 16
    %v3229 = vrot.slane %v3227, 4
    %v3230 = vshll.u32 %v2987, 16
    %v3232 = vrot.slane %v3230, 5
    %v3233 = vor.u32 %v3229, %v3232
    %v3234 = vrot.slane %v3233, 4
    %v3236 = vshll.u32 %v2988, 16
    %v3238 = vrot.slane %v3236, 5
    %v3239 = vsel %vm3081, %v3234, %v3238
    %v3240 = vshrl.u32 %v2988, 16
    %v3242 = vrot.slane %v3240, 4
    %v3243 = vor.u32 %v3242, %v3238
    %v3244 = vrot.slane %v3243, 4
    %v3246 = vshll.u32 %v3053, 16
    %v3248 = vrot.slane %v3246, 5
    %v3249 = vsel %vm3081, %v3244, %v3248
    %v3251 = vshrl.u32 %v2989, 16
    %v3253 = vrot.slane %v3251, 4
    %v3254 = vshll.u32 %v2989, 16
    %v3256 = vrot.slane %v3254, 5
    %v3257 = vor.u32 %v3253, %v3256
    %v3258 = vrot.slane %v3257, 4
    %v3260 = vshll.u32 %v2990, 16
    %v3262 = vrot.slane %v3260, 5
    %v3263 = vsel %vm3081, %v3258, %v3262
    %v3264 = vshrl.u32 %v2990, 16
    %v3266 = vrot.slane %v3264, 4
    %v3267 = vor.u32 %v3266, %v3262
    %v3268 = vrot.slane %v3267, 4
    %v3270 = vshll.u32 %v3054, 16
    %v3272 = vrot.slane %v3270, 5
    %v3273 = vsel %vm3081, %v3268, %v3272
    %v3275 = vshrl.u32 %v2991, 16
    %v3277 = vrot.slane %v3275, 4
    %v3278 = vshll.u32 %v2991, 16
    %v3280 = vrot.slane %v3278, 5
    %v3281 = vor.u32 %v3277, %v3280
    %v3282 = vrot.slane %v3281, 4
    %v3284 = vshll.u32 %v2992, 16
    %v3286 = vrot.slane %v3284, 5
    %v3287 = vsel %vm3081, %v3282, %v3286
    %v3288 = vshrl.u32 %v2992, 16
    %v3290 = vrot.slane %v3288, 4
    %v3291 = vor.u32 %v3290, %v3286
    %v3292 = vrot.slane %v3291, 4
    %v3294 = vshll.u32 %v3055, 16
    %v3296 = vrot.slane %v3294, 5
    %v3297 = vsel %vm3081, %v3292, %v3296
    %v3299 = vshrl.u32 %v2993, 16
    %v3301 = vrot.slane %v3299, 4
    %v3302 = vshll.u32 %v2993, 16
    %v3304 = vrot.slane %v3302, 5
    %v3305 = vor.u32 %v3301, %v3304
    %v3306 = vrot.slane %v3305, 4
    %v3308 = vshll.u32 %v2994, 16
    %v3310 = vrot.slane %v3308, 5
    %v3311 = vsel %vm3081, %v3306, %v3310
    %v3312 = vshrl.u32 %v2994, 16
    %v3314 = vrot.slane %v3312, 4
    %v3315 = vor.u32 %v3314, %v3310
    %v3316 = vrot.slane %v3315, 4
    %v3318 = vshll.u32 %v3056, 16
    %v3320 = vrot.slane %v3318, 5
    %v3321 = vsel %vm3081, %v3316, %v3320
    %v3323 = vshrl.u32 %v2995, 16
    %v3325 = vrot.slane %v3323, 4
    %v3326 = vshll.u32 %v2995, 16
    %v3328 = vrot.slane %v3326, 5
    %v3329 = vor.u32 %v3325, %v3328
    %v3330 = vrot.slane %v3329, 4
    %v3332 = vshll.u32 %v2996, 16
    %v3334 = vrot.slane %v3332, 5
    %v3335 = vsel %vm3081, %v3330, %v3334
    %v3336 = vshrl.u32 %v2996, 16
    %v3338 = vrot.slane %v3336, 4
    %v3339 = vor.u32 %v3338, %v3334
    %v3340 = vrot.slane %v3339, 4
    %v3342 = vshll.u32 %v3057, 16
    %v3344 = vrot.slane %v3342, 5
    %v3345 = vsel %vm3081, %v3340, %v3344
    %v3347 = vshrl.u32 %v2997, 16
    %v3349 = vrot.slane %v3347, 4
    %v3350 = vshll.u32 %v2997, 16
    %v3352 = vrot.slane %v3350, 5
    %v3353 = vor.u32 %v3349, %v3352
    %v3354 = vrot.slane %v3353, 4
    %v3356 = vshll.u32 %v2998, 16
    %v3358 = vrot.slane %v3356, 5
    %v3359 = vsel %vm3081, %v3354, %v3358
    %v3360 = vshrl.u32 %v2998, 16
    %v3362 = vrot.slane %v3360, 4
    %v3363 = vor.u32 %v3362, %v3358
    %v3364 = vrot.slane %v3363, 4
    %v3366 = vshll.u32 %v3058, 16
    %v3368 = vrot.slane %v3366, 5
    %v3369 = vsel %vm3081, %v3364, %v3368
    %v3371 = vshrl.u32 %v2999, 16
    %v3373 = vrot.slane %v3371, 4
    %v3374 = vshll.u32 %v2999, 16
    %v3376 = vrot.slane %v3374, 5
    %v3377 = vor.u32 %v3373, %v3376
    %v3378 = vrot.slane %v3377, 4
    %v3380 = vshll.u32 %v3000, 16
    %v3382 = vrot.slane %v3380, 5
    %v3383 = vsel %vm3081, %v3378, %v3382
    %v3384 = vshrl.u32 %v3000, 16
    %v3386 = vrot.slane %v3384, 4
    %v3387 = vor.u32 %v3386, %v3382
    %v3388 = vrot.slane %v3387, 4
    %v3390 = vshll.u32 %v3059, 16
    %v3392 = vrot.slane %v3390, 5
    %v3393 = vsel %vm3081, %v3388, %v3392
    %v3395 = vshrl.u32 %v3001, 16
    %v3397 = vrot.slane %v3395, 4
    %v3398 = vshll.u32 %v3001, 16
    %v3400 = vrot.slane %v3398, 5
    %v3401 = vor.u32 %v3397, %v3400
    %v3402 = vrot.slane %v3401, 4
    %v3404 = vshll.u32 %v3002, 16
    %v3406 = vrot.slane %v3404, 5
    %v3407 = vsel %vm3081, %v3402, %v3406
    %v3408 = vshrl.u32 %v3002, 16
    %v3410 = vrot.slane %v3408, 4
    %v3411 = vor.u32 %v3410, %v3406
    %v3412 = vrot.slane %v3411, 4
    %v3414 = vshll.u32 %v3060, 16
    %v3416 = vrot.slane %v3414, 5
    %v3417 = vsel %vm3081, %v3412, %v3416
    %v3419 = vshrl.u32 %v3003, 16
    %v3421 = vrot.slane %v3419, 4
    %v3422 = vshll.u32 %v3003, 16
    %v3424 = vrot.slane %v3422, 5
    %v3425 = vor.u32 %v3421, %v3424
    %v3426 = vrot.slane %v3425, 4
    %v3428 = vshll.u32 %v3004, 16
    %v3430 = vrot.slane %v3428, 5
    %v3431 = vsel %vm3081, %v3426, %v3430
    %v3432 = vshrl.u32 %v3004, 16
    %v3434 = vrot.slane %v3432, 4
    %v3435 = vor.u32 %v3434, %v3430
    %v3436 = vrot.slane %v3435, 4
    %v3438 = vshll.u32 %v3061, 16
    %v3440 = vrot.slane %v3438, 5
    %v3441 = vsel %vm3081, %v3436, %v3440
    %v3443 = vshrl.u32 %v3005, 16
    %v3445 = vrot.slane %v3443, 4
    %v3446 = vshll.u32 %v3005, 16
    %v3448 = vrot.slane %v3446, 5
    %v3449 = vor.u32 %v3445, %v3448
    %v3450 = vrot.slane %v3449, 4
    %v3452 = vshll.u32 %v3006, 16
    %v3454 = vrot.slane %v3452, 5
    %v3455 = vsel %vm3081, %v3450, %v3454
    %v3456 = vshrl.u32 %v3006, 16
    %v3458 = vrot.slane %v3456, 4
    %v3459 = vor.u32 %v3458, %v3454
    %v3460 = vrot.slane %v3459, 4
    %v3462 = vshll.u32 %v3062, 16
    %v3464 = vrot.slane %v3462, 5
    %v3465 = vsel %vm3081, %v3460, %v3464
    %v3467 = vshrl.u32 %v3007, 16
    %v3469 = vrot.slane %v3467, 4
    %v3470 = vshll.u32 %v3007, 16
    %v3472 = vrot.slane %v3470, 5
    %v3473 = vor.u32 %v3469, %v3472
    %v3474 = vrot.slane %v3473, 4
    %v3476 = vshll.u32 %v3008, 16
    %v3478 = vrot.slane %v3476, 5
    %v3479 = vsel %vm3081, %v3474, %v3478
    %v3480 = vshrl.u32 %v3008, 16
    %v3482 = vrot.slane %v3480, 4
    %v3483 = vor.u32 %v3482, %v3478
    %v3484 = vrot.slane %v3483, 4
    %v3486 = vshll.u32 %v3063, 16
    %v3488 = vrot.slane %v3486, 5
    %v3489 = vsel %vm3081, %v3484, %v3488
    %v3491 = vshrl.u32 %v3009, 16
    %v3493 = vrot.slane %v3491, 4
    %v3494 = vshll.u32 %v3009, 16
    %v3496 = vrot.slane %v3494, 5
    %v3497 = vor.u32 %v3493, %v3496
    %v3498 = vrot.slane %v3497, 4
    %v3500 = vshll.u32 %v3010, 16
    %v3502 = vrot.slane %v3500, 5
    %v3503 = vsel %vm3081, %v3498, %v3502
    %v3504 = vshrl.u32 %v3010, 16
    %v3506 = vrot.slane %v3504, 4
    %v3507 = vor.u32 %v3506, %v3502
    %v3508 = vrot.slane %v3507, 4
    %v3510 = vshll.u32 %v3064, 16
    %v3512 = vrot.slane %v3510, 5
    %v3513 = vsel %vm3081, %v3508, %v3512
    %v3515 = vshrl.u32 %v3011, 16
    %v3517 = vrot.slane %v3515, 4
    %v3518 = vshll.u32 %v3011, 16
    %v3520 = vrot.slane %v3518, 5
    %v3521 = vor.u32 %v3517, %v3520
    %v3522 = vrot.slane %v3521, 4
    %v3524 = vshll.u32 %v3012, 16
    %v3526 = vrot.slane %v3524, 5
    %v3527 = vsel %vm3081, %v3522, %v3526
    %v3528 = vshrl.u32 %v3012, 16
    %v3530 = vrot.slane %v3528, 4
    %v3531 = vor.u32 %v3530, %v3526
    %v3532 = vrot.slane %v3531, 4
    %v3534 = vshll.u32 %v3065, 16
    %v3536 = vrot.slane %v3534, 5
    %v3537 = vsel %vm3081, %v3532, %v3536
    %v3539 = vshrl.u32 %v3013, 16
    %v3541 = vrot.slane %v3539, 4
    %v3542 = vshll.u32 %v3013, 16
    %v3544 = vrot.slane %v3542, 5
    %v3545 = vor.u32 %v3541, %v3544
    %v3546 = vrot.slane %v3545, 4
    %v3548 = vshll.u32 %v3014, 16
    %v3550 = vrot.slane %v3548, 5
    %v3551 = vsel %vm3081, %v3546, %v3550
    %v3552 = vshrl.u32 %v3014, 16
    %v3554 = vrot.slane %v3552, 4
    %v3555 = vor.u32 %v3554, %v3550
    %v3556 = vrot.slane %v3555, 4
    %v3558 = vshll.u32 %v3066, 16
    %v3560 = vrot.slane %v3558, 5
    %v3561 = vsel %vm3081, %v3556, %v3560
    %v3563 = vshrl.u32 %v3015, 16
    %v3565 = vrot.slane %v3563, 4
    %v3566 = vshll.u32 %v3015, 16
    %v3568 = vrot.slane %v3566, 5
    %v3569 = vor.u32 %v3565, %v3568
    %v3570 = vrot.slane %v3569, 4
    %v3572 = vshll.u32 %v3016, 16
    %v3574 = vrot.slane %v3572, 5
    %v3575 = vsel %vm3081, %v3570, %v3574
    %v3576 = vshrl.u32 %v3016, 16
    %v3578 = vrot.slane %v3576, 4
    %v3579 = vor.u32 %v3578, %v3574
    %v3580 = vrot.slane %v3579, 4
    %v3582 = vshll.u32 %v3067, 16
    %v3584 = vrot.slane %v3582, 5
    %v3585 = vsel %vm3081, %v3580, %v3584
    %v3587 = vshrl.u32 %v3017, 16
    %v3589 = vrot.slane %v3587, 4
    %v3590 = vshll.u32 %v3017, 16
    %v3592 = vrot.slane %v3590, 5
    %v3593 = vor.u32 %v3589, %v3592
    %v3594 = vrot.slane %v3593, 4
    %v3596 = vshll.u32 %v3018, 16
    %v3598 = vrot.slane %v3596, 5
    %v3599 = vsel %vm3081, %v3594, %v3598
    %v3600 = vshrl.u32 %v3018, 16
    %v3602 = vrot.slane %v3600, 4
    %v3603 = vor.u32 %v3602, %v3598
    %v3604 = vrot.slane %v3603, 4
    %v3606 = vshll.u32 %v3068, 16
    %v3608 = vrot.slane %v3606, 5
    %v3609 = vsel %vm3081, %v3604, %v3608
    %v3611 = vshrl.u32 %v3019, 16
    %v3613 = vrot.slane %v3611, 4
    %v3614 = vshll.u32 %v3019, 16
    %v3616 = vrot.slane %v3614, 5
    %v3617 = vor.u32 %v3613, %v3616
    %v3618 = vrot.slane %v3617, 4
    %v3620 = vshll.u32 %v3020, 16
    %v3622 = vrot.slane %v3620, 5
    %v3623 = vsel %vm3081, %v3618, %v3622
    %v3624 = vshrl.u32 %v3020, 16
    %v3626 = vrot.slane %v3624, 4
    %v3627 = vor.u32 %v3626, %v3622
    %v3628 = vrot.slane %v3627, 4
    %v3630 = vshll.u32 %v3069, 16
    %v3632 = vrot.slane %v3630, 5
    %v3633 = vsel %vm3081, %v3628, %v3632
    %v3635 = vshrl.u32 %v3021, 16
    %v3637 = vrot.slane %v3635, 4
    %v3638 = vshll.u32 %v3021, 16
    %v3640 = vrot.slane %v3638, 5
    %v3641 = vor.u32 %v3637, %v3640
    %v3642 = vrot.slane %v3641, 4
    %v3644 = vshll.u32 %v3022, 16
    %v3646 = vrot.slane %v3644, 5
    %v3647 = vsel %vm3081, %v3642, %v3646
    %v3648 = vshrl.u32 %v3022, 16
    %v3650 = vrot.slane %v3648, 4
    %v3651 = vor.u32 %v3650, %v3646
    %v3652 = vrot.slane %v3651, 4
    %v3654 = vshll.u32 %v3070, 16
    %v3656 = vrot.slane %v3654, 5
    %v3657 = vsel %vm3081, %v3652, %v3656
    %v3659 = vshrl.u32 %v3023, 16
    %v3661 = vrot.slane %v3659, 4
    %v3662 = vshll.u32 %v3023, 16
    %v3664 = vrot.slane %v3662, 5
    %v3665 = vor.u32 %v3661, %v3664
    %v3666 = vrot.slane %v3665, 4
    %v3668 = vshll.u32 %v3024, 16
    %v3670 = vrot.slane %v3668, 5
    %v3671 = vsel %vm3081, %v3666, %v3670
    %v3672 = vshrl.u32 %v3024, 16
    %v3674 = vrot.slane %v3672, 4
    %v3675 = vor.u32 %v3674, %v3670
    %v3676 = vrot.slane %v3675, 4
    %v3678 = vshll.u32 %v3071, 16
    %v3680 = vrot.slane %v3678, 5
    %v3681 = vsel %vm3081, %v3676, %v3680
    %v3683 = vshrl.u32 %v3025, 16
    %v3685 = vrot.slane %v3683, 4
    %v3686 = vshll.u32 %v3025, 16
    %v3688 = vrot.slane %v3686, 5
    %v3689 = vor.u32 %v3685, %v3688
    %v3690 = vrot.slane %v3689, 4
    %v3692 = vshll.u32 %v3026, 16
    %v3694 = vrot.slane %v3692, 5
    %v3695 = vsel %vm3081, %v3690, %v3694
    %v3696 = vshrl.u32 %v3026, 16
    %v3698 = vrot.slane %v3696, 4
    %v3699 = vor.u32 %v3698, %v3694
    %v3700 = vrot.slane %v3699, 4
    %v3702 = vshll.u32 %v3072, 16
    %v3704 = vrot.slane %v3702, 5
    %v3705 = vsel %vm3081, %v3700, %v3704
    %v3707 = vshrl.u32 %v3027, 16
    %v3709 = vrot.slane %v3707, 4
    %v3710 = vshll.u32 %v3027, 16
    %v3712 = vrot.slane %v3710, 5
    %v3713 = vor.u32 %v3709, %v3712
    %v3714 = vrot.slane %v3713, 4
    %v3716 = vshll.u32 %v3028, 16
    %v3718 = vrot.slane %v3716, 5
    %v3719 = vsel %vm3081, %v3714, %v3718
    %v3720 = vshrl.u32 %v3028, 16
    %v3722 = vrot.slane %v3720, 4
    %v3723 = vor.u32 %v3722, %v3718
    %v3724 = vrot.slane %v3723, 4
    %v3726 = vshll.u32 %v3073, 16
    %v3728 = vrot.slane %v3726, 5
    %v3729 = vsel %vm3081, %v3724, %v3728
    %v3731 = vshrl.u32 %v3029, 16
    %v3733 = vrot.slane %v3731, 4
    %v3734 = vshll.u32 %v3029, 16
    %v3736 = vrot.slane %v3734, 5
    %v3737 = vor.u32 %v3733, %v3736
    %v3738 = vrot.slane %v3737, 4
    %v3740 = vshll.u32 %v3030, 16
    %v3742 = vrot.slane %v3740, 5
    %v3743 = vsel %vm3081, %v3738, %v3742
    %v3744 = vshrl.u32 %v3030, 16
    %v3746 = vrot.slane %v3744, 4
    %v3747 = vor.u32 %v3746, %v3742
    %v3748 = vrot.slane %v3747, 4
    %v3750 = vshll.u32 %v3074, 16
    %v3752 = vrot.slane %v3750, 5
    %v3753 = vsel %vm3081, %v3748, %v3752
    %v3755 = vshrl.u32 %v3031, 16
    %v3757 = vrot.slane %v3755, 4
    %v3758 = vshll.u32 %v3031, 16
    %v3760 = vrot.slane %v3758, 5
    %v3761 = vor.u32 %v3757, %v3760
    %v3762 = vrot.slane %v3761, 4
    %v3764 = vshll.u32 %v3032, 16
    %v3766 = vrot.slane %v3764, 5
    %v3767 = vsel %vm3081, %v3762, %v3766
    %v3768 = vshrl.u32 %v3032, 16
    %v3770 = vrot.slane %v3768, 4
    %v3771 = vor.u32 %v3770, %v3766
    %v3772 = vrot.slane %v3771, 4
    %v3774 = vshll.u32 %v3075, 16
    %v3776 = vrot.slane %v3774, 5
    %v3777 = vsel %vm3081, %v3772, %v3776
    %v3779 = vshrl.u32 %v3033, 16
    %v3781 = vrot.slane %v3779, 4
    %v3782 = vshll.u32 %v3033, 16
    %v3784 = vrot.slane %v3782, 5
    %v3785 = vor.u32 %v3781, %v3784
    %v3786 = vrot.slane %v3785, 4
    %v3788 = vshll.u32 %v3034, 16
    %v3790 = vrot.slane %v3788, 5
    %v3791 = vsel %vm3081, %v3786, %v3790
    %v3792 = vshrl.u32 %v3034, 16
    %v3794 = vrot.slane %v3792, 4
    %v3795 = vor.u32 %v3794, %v3790
    %v3796 = vrot.slane %v3795, 4
    %v3798 = vshll.u32 %v3076, 16
    %v3800 = vrot.slane %v3798, 5
    %v3801 = vsel %vm3081, %v3796, %v3800
    %v3803 = vshrl.u32 %v3035, 16
    %v3805 = vrot.slane %v3803, 4
    %v3806 = vshll.u32 %v3035, 16
    %v3808 = vrot.slane %v3806, 5
    %v3809 = vor.u32 %v3805, %v3808
    %v3810 = vrot.slane %v3809, 4
    %v3812 = vshll.u32 %v3036, 16
    %v3814 = vrot.slane %v3812, 5
    %v3815 = vsel %vm3081, %v3810, %v3814
    %v3816 = vshrl.u32 %v3036, 16
    %v3818 = vrot.slane %v3816, 4
    %v3819 = vor.u32 %v3818, %v3814
    %v3820 = vrot.slane %v3819, 4
    %v3822 = vshll.u32 %v3077, 16
    %v3824 = vrot.slane %v3822, 5
    %v3825 = vsel %vm3081, %v3820, %v3824
    %v3827 = vshrl.u32 %v3037, 16
    %v3829 = vrot.slane %v3827, 4
    %v3830 = vshll.u32 %v3037, 16
    %v3832 = vrot.slane %v3830, 5
    %v3833 = vor.u32 %v3829, %v3832
    %v3834 = vrot.slane %v3833, 4
    %v3836 = vshll.u32 %v3038, 16
    %v3838 = vrot.slane %v3836, 5
    %v3839 = vsel %vm3081, %v3834, %v3838
    %v3840 = vshrl.u32 %v3038, 16
    %v3842 = vrot.slane %v3840, 4
    %v3843 = vor.u32 %v3842, %v3838
    %v3844 = vrot.slane %v3843, 4
    %v3846 = vshll.u32 %v3078, 16
    %v3848 = vrot.slane %v3846, 5
    %v3849 = vsel %vm3081, %v3844, %v3848
    %s3850 = scalar_lea.vmem [#allocation3], 32
    %v3851 = vld [vmem:[%s3850] sm:$0xf]
    %v3852 = vld [vmem:[%s3850 + $0x4] sm:$0xf]
    %v3853 = vld [vmem:[%s3850 + $0x8] sm:$0xf]
    %v3854 = vld [vmem:[%s3850 + $0xc] sm:$0xf]
    %v3855 = vld [vmem:[%s3850 + $0x10] sm:$0xf]
    %v3856 = vld [vmem:[%s3850 + $0x14] sm:$0xf]
    %v3857 = vld [vmem:[%s3850 + $0x18] sm:$0xf]
    %v3858 = vld [vmem:[%s3850 + $0x1c] sm:$0xf]
    %v3859 = vunpack.c.l.b16 %v3095
    %v3860 = vunpack.c.l.b16 %v3105
    %v3861 = vunpack.c.l.b16 %v3119
    %v3862 = vunpack.c.l.b16 %v3129
    %v3863 = vunpack.c.l.b16 %v3143
    %v3864 = vunpack.c.l.b16 %v3153
    %v3865 = vunpack.c.l.b16 %v3167
    %v3866 = vunpack.c.l.b16 %v3177
    %v3867 = vunpack.c.l.b16 %v3191
    %v3868 = vunpack.c.l.b16 %v3201
    %v3869 = vunpack.c.l.b16 %v3215
    %v3870 = vunpack.c.l.b16 %v3225
    %v3871 = vunpack.c.l.b16 %v3239
    %v3872 = vunpack.c.l.b16 %v3249
    %v3873 = vunpack.c.l.b16 %v3263
    %v3874 = vunpack.c.l.b16 %v3273
    %v3875 = vunpack.c.l.b16 %v3287
    %v3876 = vunpack.c.l.b16 %v3297
    %v3877 = vunpack.c.l.b16 %v3311
    %v3878 = vunpack.c.l.b16 %v3321
    %v3879 = vunpack.c.l.b16 %v3335
    %v3880 = vunpack.c.l.b16 %v3345
    %v3881 = vunpack.c.l.b16 %v3359
    %v3882 = vunpack.c.l.b16 %v3369
    %v3883 = vunpack.c.l.b16 %v3383
    %v3884 = vunpack.c.l.b16 %v3393
    %v3885 = vunpack.c.l.b16 %v3407
    %v3886 = vunpack.c.l.b16 %v3417
    %v3887 = vunpack.c.l.b16 %v3431
    %v3888 = vunpack.c.l.b16 %v3441
    %v3889 = vunpack.c.l.b16 %v3455
    %v3890 = vunpack.c.l.b16 %v3465
    %v3891 = vunpack.c.l.b16 %v3479
    %v3892 = vunpack.c.l.b16 %v3489
    %v3893 = vunpack.c.l.b16 %v3503
    %v3894 = vunpack.c.l.b16 %v3513
    %v3895 = vunpack.c.l.b16 %v3527
    %v3896 = vunpack.c.l.b16 %v3537
    %v3897 = vunpack.c.l.b16 %v3551
    %v3898 = vunpack.c.l.b16 %v3561
    %v3899 = vunpack.c.l.b16 %v3575
    %v3900 = vunpack.c.l.b16 %v3585
    %v3901 = vunpack.c.l.b16 %v3599
    %v3902 = vunpack.c.l.b16 %v3609
    %v3903 = vunpack.c.l.b16 %v3623
    %v3904 = vunpack.c.l.b16 %v3633
    %v3905 = vunpack.c.l.b16 %v3647
    %v3906 = vunpack.c.l.b16 %v3657
    %v3907 = vunpack.c.l.b16 %v3671
    %v3908 = vunpack.c.l.b16 %v3681
    %v3909 = vunpack.c.l.b16 %v3695
    %v3910 = vunpack.c.l.b16 %v3705
    %v3911 = vunpack.c.l.b16 %v3719
    %v3912 = vunpack.c.l.b16 %v3729
    %v3913 = vunpack.c.l.b16 %v3743
    %v3914 = vunpack.c.l.b16 %v3753
    %v3915 = vunpack.c.l.b16 %v3767
    %v3916 = vunpack.c.l.b16 %v3777
    %v3917 = vunpack.c.l.b16 %v3791
    %v3918 = vunpack.c.l.b16 %v3801
    %v3919 = vunpack.c.l.b16 %v3815
    %v3920 = vunpack.c.l.b16 %v3825
    %v3921 = vunpack.c.l.b16 %v3839
    %v3922 = vunpack.c.l.b16 %v3849
    %v3923 = vpack.c.b16 %v3860, %v3859
    %v3924 = vpack.c.b16 %v3862, %v3861
    %v3925 = vpack.c.b16 %v3864, %v3863
    %v3926 = vpack.c.b16 %v3866, %v3865
    %v3927 = vpack.c.b16 %v3868, %v3867
    %v3928 = vpack.c.b16 %v3870, %v3869
    %v3929 = vpack.c.b16 %v3872, %v3871
    %v3930 = vpack.c.b16 %v3874, %v3873
    %v3931 = vpack.c.b16 %v3876, %v3875
    %v3932 = vpack.c.b16 %v3878, %v3877
    %v3933 = vpack.c.b16 %v3880, %v3879
    %v3934 = vpack.c.b16 %v3882, %v3881
    %v3935 = vpack.c.b16 %v3884, %v3883
    %v3936 = vpack.c.b16 %v3886, %v3885
    %v3937 = vpack.c.b16 %v3888, %v3887
    %v3938 = vpack.c.b16 %v3890, %v3889
    %v3939 = vpack.c.b16 %v3892, %v3891
    %v3940 = vpack.c.b16 %v3894, %v3893
    %v3941 = vpack.c.b16 %v3896, %v3895
    %v3942 = vpack.c.b16 %v3898, %v3897
    %v3943 = vpack.c.b16 %v3900, %v3899
    %v3944 = vpack.c.b16 %v3902, %v3901
    %v3945 = vpack.c.b16 %v3904, %v3903
    %v3946 = vpack.c.b16 %v3906, %v3905
    %v3947 = vpack.c.b16 %v3908, %v3907
    %v3948 = vpack.c.b16 %v3910, %v3909
    %v3949 = vpack.c.b16 %v3912, %v3911
    %v3950 = vpack.c.b16 %v3914, %v3913
    %v3951 = vpack.c.b16 %v3916, %v3915
    %v3952 = vpack.c.b16 %v3918, %v3917
    %v3953 = vpack.c.b16 %v3920, %v3919
    %v3954 = vpack.c.b16 %v3922, %v3921
    %v3963 = vunpack.c.l.b16 %v3851
    %v3964 = vunpack.c.l.b16 %v3852
    %v3965 = vunpack.c.l.b16 %v3853
    %v3966 = vunpack.c.l.b16 %v3854
    %v3967 = vunpack.c.l.b16 %v3855
    %v3968 = vunpack.c.l.b16 %v3856
    %v3969 = vunpack.c.l.b16 %v3857
    %v3970 = vunpack.c.l.b16 %v3858
    %v3971 = vpack.c.b16 %v3964, %v3963
    %v3972 = vpack.c.b16 %v3966, %v3965
    %v3973 = vpack.c.b16 %v3968, %v3967
    %v3974 = vpack.c.b16 %v3970, %v3969
    %v3980 = vsel %vm792, %v3923, 0
    %v3983 = vsel %vm792, %v3924, 0
    %v3986 = vsel %vm792, %v3925, 0
    %v3989 = vsel %vm792, %v3926, 0
    %v3992 = vsel %vm792, %v3927, 0
    %v3995 = vsel %vm792, %v3928, 0
    %v3998 = vsel %vm792, %v3929, 0
    %v4001 = vsel %vm792, %v3930, 0
    %v4004 = vsel %vm792, %v3931, 0
    %v4007 = vsel %vm792, %v3932, 0
    %v4010 = vsel %vm792, %v3933, 0
    %v4013 = vsel %vm792, %v3934, 0
    %v4016 = vsel %vm792, %v3935, 0
    %v4019 = vsel %vm792, %v3936, 0
    %v4022 = vsel %vm792, %v3937, 0
    %v4025 = vsel %vm792, %v3938, 0
    %v4028 = vsel %vm792, %v3939, 0
    %v4031 = vsel %vm792, %v3940, 0
    %v4034 = vsel %vm792, %v3941, 0
    %v4037 = vsel %vm792, %v3942, 0
    %v4040 = vsel %vm792, %v3943, 0
    %v4043 = vsel %vm792, %v3944, 0
    %v4046 = vsel %vm792, %v3945, 0
    %v4049 = vsel %vm792, %v3946, 0
    %v4052 = vsel %vm792, %v3947, 0
    %v4055 = vsel %vm792, %v3948, 0
    %v4058 = vsel %vm792, %v3949, 0
    %v4061 = vsel %vm792, %v3950, 0
    %v4064 = vsel %vm792, %v3951, 0
    %v4067 = vsel %vm792, %v3952, 0
    %v4070 = vsel %vm792, %v3953, 0
    %v4073 = vsel %vm792, %v3954, 0
    %4075 = vmatprep.subr.bf16.mxu0 0
    %4076 = vmatpush1.bf16.msra.mxu0 0
    %4077 = vmatprep.subr.bf16.mxu0 0
    %4078 = vmatpush1.bf16.msra.mxu0 0
    %4079 = vmatprep.subr.bf16.mxu0 0
    %4080 = vmatpush1.bf16.msra.mxu0 0
    %4081 = vmatprep.subr.bf16.mxu0 0
    %4082 = vmatpush1.bf16.msra.mxu0 0
    %4083 = vmatprep.subr.bf16.mxu0 0
    %4084 = vmatpush1.bf16.msra.mxu0 %v3974
    %4085 = vmatprep.subr.bf16.mxu0 0
    %4086 = vmatpush1.bf16.msra.mxu0 %v3973
    %4087 = vmatprep.subr.bf16.mxu0 0
    %4088 = vmatpush1.bf16.msra.mxu0 %v3972
    %4089 = vmatprep.subr.bf16.mxu0 0
    %4090 = vmatpush1.bf16.msra.mxu0 %v3971
    %4091 = vmatprep.subr.bf16.mxu0 0
    %4092 = vmatpush2.bf16.msra.mxu0 0
    %4093 = vmatprep.subr.bf16.mxu0 0
    %4094 = vmatpush2.bf16.msra.mxu0 0
    %4095 = vmatprep.subr.bf16.mxu0 0
    %4096 = vmatpush2.bf16.msra.mxu0 0
    %4097 = vmatprep.subr.bf16.mxu0 0
    %4098 = vmatpush2.bf16.msra.mxu0 0
    %4099 = vmatprep.subr.bf16.mxu0 0
    %4100 = vmatpush2.bf16.msra.mxu0 0
    %4101 = vmatprep.subr.bf16.mxu0 0
    %4102 = vmatpush2.bf16.msra.mxu0 0
    %4103 = vmatprep.subr.bf16.mxu0 0
    %4104 = vmatpush2.bf16.msra.mxu0 0
    %4105 = vmatprep.subr.bf16.mxu0 0
    %4106 = vmatpush2.bf16.msra.mxu0 0
    %4107 = vmatprep.mubr.bf16.mxu0 0
    %4108 = vmatmul.mubr.bf16.gmra.mxu0 %v3980
    %v4109 = vpop.f32.mrf.mxu0
    %v4110 = vadd.f32 0.0, %v4109
    %v4111 = vpop.f32.mrf.mxu0
    %v4112 = vpop.f32.mrf.mxu0
    %v4113 = vadd.f32 0.0, %v4112
    %v4114 = vpop.f32.mrf.mxu0
    %4115 = vmatprep.mubr.bf16.mxu0 0
    %4116 = vmatmul.mubr.bf16.gmra.mxu0 %v3983
    %v4117 = vpop.f32.mrf.mxu0
    %v4118 = vadd.f32 0.0, %v4117
    %v4119 = vpop.f32.mrf.mxu0
    %v4120 = vpop.f32.mrf.mxu0
    %v4121 = vadd.f32 0.0, %v4120
    %v4122 = vpop.f32.mrf.mxu0
    %4123 = vmatprep.mubr.bf16.mxu0 0
    %4124 = vmatmul.mubr.bf16.gmra.mxu0 %v3986
    %v4125 = vpop.f32.mrf.mxu0
    %v4126 = vadd.f32 0.0, %v4125
    %v4127 = vpop.f32.mrf.mxu0
    %v4128 = vpop.f32.mrf.mxu0
    %v4129 = vadd.f32 0.0, %v4128
    %v4130 = vpop.f32.mrf.mxu0
    %4131 = vmatprep.mubr.bf16.mxu0 0
    %4132 = vmatmul.mubr.bf16.gmra.mxu0 %v3989
    %v4133 = vpop.f32.mrf.mxu0
    %v4134 = vadd.f32 0.0, %v4133
    %v4135 = vpop.f32.mrf.mxu0
    %v4136 = vpop.f32.mrf.mxu0
    %v4137 = vadd.f32 0.0, %v4136
    %v4138 = vpop.f32.mrf.mxu0
    %4139 = vmatprep.mubr.bf16.mxu0 0
    %4140 = vmatmul.mubr.bf16.gmra.mxu0 %v3992
    %v4141 = vpop.f32.mrf.mxu0
    %v4142 = vadd.f32 0.0, %v4141
    %v4143 = vpop.f32.mrf.mxu0
    %v4144 = vpop.f32.mrf.mxu0
    %v4145 = vadd.f32 0.0, %v4144
    %v4146 = vpop.f32.mrf.mxu0
    %4147 = vmatprep.mubr.bf16.mxu0 0
    %4148 = vmatmul.mubr.bf16.gmra.mxu0 %v3995
    %v4149 = vpop.f32.mrf.mxu0
    %v4150 = vadd.f32 0.0, %v4149
    %v4151 = vpop.f32.mrf.mxu0
    %v4152 = vpop.f32.mrf.mxu0
    %v4153 = vadd.f32 0.0, %v4152
    %v4154 = vpop.f32.mrf.mxu0
    %4155 = vmatprep.mubr.bf16.mxu0 0
    %4156 = vmatmul.mubr.bf16.gmra.mxu0 %v3998
    %v4157 = vpop.f32.mrf.mxu0
    %v4158 = vadd.f32 0.0, %v4157
    %v4159 = vpop.f32.mrf.mxu0
    %v4160 = vpop.f32.mrf.mxu0
    %v4161 = vadd.f32 0.0, %v4160
    %v4162 = vpop.f32.mrf.mxu0
    %4163 = vmatprep.mubr.bf16.mxu0 0
    %4164 = vmatmul.mubr.bf16.gmra.mxu0 %v4001
    %v4165 = vpop.f32.mrf.mxu0
    %v4166 = vadd.f32 0.0, %v4165
    %v4167 = vpop.f32.mrf.mxu0
    %v4168 = vpop.f32.mrf.mxu0
    %v4169 = vadd.f32 0.0, %v4168
    %v4170 = vpop.f32.mrf.mxu0
    %4171 = vmatprep.mubr.bf16.mxu0 0
    %4172 = vmatmul.mubr.bf16.gmra.mxu0 %v4004
    %v4173 = vpop.f32.mrf.mxu0
    %v4174 = vadd.f32 0.0, %v4173
    %v4175 = vpop.f32.mrf.mxu0
    %v4176 = vpop.f32.mrf.mxu0
    %v4177 = vadd.f32 0.0, %v4176
    %v4178 = vpop.f32.mrf.mxu0
    %4179 = vmatprep.mubr.bf16.mxu0 0
    %4180 = vmatmul.mubr.bf16.gmra.mxu0 %v4007
    %v4181 = vpop.f32.mrf.mxu0
    %v4182 = vadd.f32 0.0, %v4181
    %v4183 = vpop.f32.mrf.mxu0
    %v4184 = vpop.f32.mrf.mxu0
    %v4185 = vadd.f32 0.0, %v4184
    %v4186 = vpop.f32.mrf.mxu0
    %4187 = vmatprep.mubr.bf16.mxu0 0
    %4188 = vmatmul.mubr.bf16.gmra.mxu0 %v4010
    %v4189 = vpop.f32.mrf.mxu0
    %v4190 = vadd.f32 0.0, %v4189
    %v4191 = vpop.f32.mrf.mxu0
    %v4192 = vpop.f32.mrf.mxu0
    %v4193 = vadd.f32 0.0, %v4192
    %v4194 = vpop.f32.mrf.mxu0
    %4195 = vmatprep.mubr.bf16.mxu0 0
    %4196 = vmatmul.mubr.bf16.gmra.mxu0 %v4013
    %v4197 = vpop.f32.mrf.mxu0
    %v4198 = vadd.f32 0.0, %v4197
    %v4199 = vpop.f32.mrf.mxu0
    %v4200 = vpop.f32.mrf.mxu0
    %v4201 = vadd.f32 0.0, %v4200
    %v4202 = vpop.f32.mrf.mxu0
    %4203 = vmatprep.mubr.bf16.mxu0 0
    %4204 = vmatmul.mubr.bf16.gmra.mxu0 %v4016
    %v4205 = vpop.f32.mrf.mxu0
    %v4206 = vadd.f32 0.0, %v4205
    %v4207 = vpop.f32.mrf.mxu0
    %v4208 = vpop.f32.mrf.mxu0
    %v4209 = vadd.f32 0.0, %v4208
    %v4210 = vpop.f32.mrf.mxu0
    %4211 = vmatprep.mubr.bf16.mxu0 0
    %4212 = vmatmul.mubr.bf16.gmra.mxu0 %v4019
    %v4213 = vpop.f32.mrf.mxu0
    %v4214 = vadd.f32 0.0, %v4213
    %v4215 = vpop.f32.mrf.mxu0
    %v4216 = vpop.f32.mrf.mxu0
    %v4217 = vadd.f32 0.0, %v4216
    %v4218 = vpop.f32.mrf.mxu0
    %4219 = vmatprep.mubr.bf16.mxu0 0
    %4220 = vmatmul.mubr.bf16.gmra.mxu0 %v4022
    %v4221 = vpop.f32.mrf.mxu0
    %v4222 = vadd.f32 0.0, %v4221
    %v4223 = vpop.f32.mrf.mxu0
    %v4224 = vpop.f32.mrf.mxu0
    %v4225 = vadd.f32 0.0, %v4224
    %v4226 = vpop.f32.mrf.mxu0
    %4227 = vmatprep.mubr.bf16.mxu0 0
    %4228 = vmatmul.mubr.bf16.gmra.mxu0 %v4025
    %v4229 = vpop.f32.mrf.mxu0
    %v4230 = vadd.f32 0.0, %v4229
    %v4231 = vpop.f32.mrf.mxu0
    %v4232 = vpop.f32.mrf.mxu0
    %v4233 = vadd.f32 0.0, %v4232
    %v4234 = vpop.f32.mrf.mxu0
    %4235 = vmatprep.mubr.bf16.mxu0 0
    %4236 = vmatmul.mubr.bf16.gmra.mxu0 %v4028
    %v4237 = vpop.f32.mrf.mxu0
    %v4238 = vadd.f32 0.0, %v4237
    %v4239 = vpop.f32.mrf.mxu0
    %v4240 = vpop.f32.mrf.mxu0
    %v4241 = vadd.f32 0.0, %v4240
    %v4242 = vpop.f32.mrf.mxu0
    %4243 = vmatprep.mubr.bf16.mxu0 0
    %4244 = vmatmul.mubr.bf16.gmra.mxu0 %v4031
    %v4245 = vpop.f32.mrf.mxu0
    %v4246 = vadd.f32 0.0, %v4245
    %v4247 = vpop.f32.mrf.mxu0
    %v4248 = vpop.f32.mrf.mxu0
    %v4249 = vadd.f32 0.0, %v4248
    %v4250 = vpop.f32.mrf.mxu0
    %4251 = vmatprep.mubr.bf16.mxu0 0
    %4252 = vmatmul.mubr.bf16.gmra.mxu0 %v4034
    %v4253 = vpop.f32.mrf.mxu0
    %v4254 = vadd.f32 0.0, %v4253
    %v4255 = vpop.f32.mrf.mxu0
    %v4256 = vpop.f32.mrf.mxu0
    %v4257 = vadd.f32 0.0, %v4256
    %v4258 = vpop.f32.mrf.mxu0
    %4259 = vmatprep.mubr.bf16.mxu0 0
    %4260 = vmatmul.mubr.bf16.gmra.mxu0 %v4037
    %v4261 = vpop.f32.mrf.mxu0
    %v4262 = vadd.f32 0.0, %v4261
    %v4263 = vpop.f32.mrf.mxu0
    %v4264 = vpop.f32.mrf.mxu0
    %v4265 = vadd.f32 0.0, %v4264
    %v4266 = vpop.f32.mrf.mxu0
    %4267 = vmatprep.mubr.bf16.mxu0 0
    %4268 = vmatmul.mubr.bf16.gmra.mxu0 %v4040
    %v4269 = vpop.f32.mrf.mxu0
    %v4270 = vadd.f32 0.0, %v4269
    %v4271 = vpop.f32.mrf.mxu0
    %v4272 = vpop.f32.mrf.mxu0
    %v4273 = vadd.f32 0.0, %v4272
    %v4274 = vpop.f32.mrf.mxu0
    %4275 = vmatprep.mubr.bf16.mxu0 0
    %4276 = vmatmul.mubr.bf16.gmra.mxu0 %v4043
    %v4277 = vpop.f32.mrf.mxu0
    %v4278 = vadd.f32 0.0, %v4277
    %v4279 = vpop.f32.mrf.mxu0
    %v4280 = vpop.f32.mrf.mxu0
    %v4281 = vadd.f32 0.0, %v4280
    %v4282 = vpop.f32.mrf.mxu0
    %4283 = vmatprep.mubr.bf16.mxu0 0
    %4284 = vmatmul.mubr.bf16.gmra.mxu0 %v4046
    %v4285 = vpop.f32.mrf.mxu0
    %v4286 = vadd.f32 0.0, %v4285
    %v4287 = vpop.f32.mrf.mxu0
    %v4288 = vpop.f32.mrf.mxu0
    %v4289 = vadd.f32 0.0, %v4288
    %v4290 = vpop.f32.mrf.mxu0
    %4291 = vmatprep.mubr.bf16.mxu0 0
    %4292 = vmatmul.mubr.bf16.gmra.mxu0 %v4049
    %v4293 = vpop.f32.mrf.mxu0
    %v4294 = vadd.f32 0.0, %v4293
    %v4295 = vpop.f32.mrf.mxu0
    %v4296 = vpop.f32.mrf.mxu0
    %v4297 = vadd.f32 0.0, %v4296
    %v4298 = vpop.f32.mrf.mxu0
    %4299 = vmatprep.mubr.bf16.mxu0 0
    %4300 = vmatmul.mubr.bf16.gmra.mxu0 %v4052
    %v4301 = vpop.f32.mrf.mxu0
    %v4302 = vadd.f32 0.0, %v4301
    %v4303 = vpop.f32.mrf.mxu0
    %v4304 = vpop.f32.mrf.mxu0
    %v4305 = vadd.f32 0.0, %v4304
    %v4306 = vpop.f32.mrf.mxu0
    %4307 = vmatprep.mubr.bf16.mxu0 0
    %4308 = vmatmul.mubr.bf16.gmra.mxu0 %v4055
    %v4309 = vpop.f32.mrf.mxu0
    %v4310 = vadd.f32 0.0, %v4309
    %v4311 = vpop.f32.mrf.mxu0
    %v4312 = vpop.f32.mrf.mxu0
    %v4313 = vadd.f32 0.0, %v4312
    %v4314 = vpop.f32.mrf.mxu0
    %4315 = vmatprep.mubr.bf16.mxu0 0
    %4316 = vmatmul.mubr.bf16.gmra.mxu0 %v4058
    %v4317 = vpop.f32.mrf.mxu0
    %v4318 = vadd.f32 0.0, %v4317
    %v4319 = vpop.f32.mrf.mxu0
    %v4320 = vpop.f32.mrf.mxu0
    %v4321 = vadd.f32 0.0, %v4320
    %v4322 = vpop.f32.mrf.mxu0
    %4323 = vmatprep.mubr.bf16.mxu0 0
    %4324 = vmatmul.mubr.bf16.gmra.mxu0 %v4061
    %v4325 = vpop.f32.mrf.mxu0
    %v4326 = vadd.f32 0.0, %v4325
    %v4327 = vpop.f32.mrf.mxu0
    %v4328 = vpop.f32.mrf.mxu0
    %v4329 = vadd.f32 0.0, %v4328
    %v4330 = vpop.f32.mrf.mxu0
    %4331 = vmatprep.mubr.bf16.mxu0 0
    %4332 = vmatmul.mubr.bf16.gmra.mxu0 %v4064
    %v4333 = vpop.f32.mrf.mxu0
    %v4334 = vadd.f32 0.0, %v4333
    %v4335 = vpop.f32.mrf.mxu0
    %v4336 = vpop.f32.mrf.mxu0
    %v4337 = vadd.f32 0.0, %v4336
    %v4338 = vpop.f32.mrf.mxu0
    %4339 = vmatprep.mubr.bf16.mxu0 0
    %4340 = vmatmul.mubr.bf16.gmra.mxu0 %v4067
    %v4341 = vpop.f32.mrf.mxu0
    %v4342 = vadd.f32 0.0, %v4341
    %v4343 = vpop.f32.mrf.mxu0
    %v4344 = vpop.f32.mrf.mxu0
    %v4345 = vadd.f32 0.0, %v4344
    %v4346 = vpop.f32.mrf.mxu0
    %4347 = vmatprep.mubr.bf16.mxu0 0
    %4348 = vmatmul.mubr.bf16.gmra.mxu0 %v4070
    %v4349 = vpop.f32.mrf.mxu0
    %v4350 = vadd.f32 0.0, %v4349
    %v4351 = vpop.f32.mrf.mxu0
    %v4352 = vpop.f32.mrf.mxu0
    %v4353 = vadd.f32 0.0, %v4352
    %v4354 = vpop.f32.mrf.mxu0
    %4355 = vmatprep.mubr.bf16.mxu0 0
    %4356 = vmatmul.mubr.bf16.gmra.mxu0 %v4073
    %v4357 = vpop.f32.mrf.mxu0
    %v4358 = vadd.f32 0.0, %v4357
    %v4359 = vpop.f32.mrf.mxu0
    %v4360 = vpop.f32.mrf.mxu0
    %v4361 = vadd.f32 0.0, %v4360
    %v4362 = vpop.f32.mrf.mxu0
    %4363 = vdwg.mxu0
    %v4428 = vunpack.c.l.b16 %v2975
    %v4429 = vunpack.c.l.b16 %v2976
    %v4430 = vunpack.c.l.b16 %v2977
    %v4431 = vunpack.c.l.b16 %v2978
    %v4432 = vunpack.c.l.b16 %v2979
    %v4433 = vunpack.c.l.b16 %v2980
    %v4434 = vunpack.c.l.b16 %v2981
    %v4435 = vunpack.c.l.b16 %v2982
    %v4436 = vunpack.c.l.b16 %v2983
    %v4437 = vunpack.c.l.b16 %v2984
    %v4438 = vunpack.c.l.b16 %v2985
    %v4439 = vunpack.c.l.b16 %v2986
    %v4440 = vunpack.c.l.b16 %v2987
    %v4441 = vunpack.c.l.b16 %v2988
    %v4442 = vunpack.c.l.b16 %v2989
    %v4443 = vunpack.c.l.b16 %v2990
    %v4444 = vunpack.c.l.b16 %v2991
    %v4445 = vunpack.c.l.b16 %v2992
    %v4446 = vunpack.c.l.b16 %v2993
    %v4447 = vunpack.c.l.b16 %v2994
    %v4448 = vunpack.c.l.b16 %v2995
    %v4449 = vunpack.c.l.b16 %v2996
    %v4450 = vunpack.c.l.b16 %v2997
    %v4451 = vunpack.c.l.b16 %v2998
    %v4452 = vunpack.c.l.b16 %v2999
    %v4453 = vunpack.c.l.b16 %v3000
    %v4454 = vunpack.c.l.b16 %v3001
    %v4455 = vunpack.c.l.b16 %v3002
    %v4456 = vunpack.c.l.b16 %v3003
    %v4457 = vunpack.c.l.b16 %v3004
    %v4458 = vunpack.c.l.b16 %v3005
    %v4459 = vunpack.c.l.b16 %v3006
    %v4460 = vunpack.c.l.b16 %v3007
    %v4461 = vunpack.c.l.b16 %v3008
    %v4462 = vunpack.c.l.b16 %v3009
    %v4463 = vunpack.c.l.b16 %v3010
    %v4464 = vunpack.c.l.b16 %v3011
    %v4465 = vunpack.c.l.b16 %v3012
    %v4466 = vunpack.c.l.b16 %v3013
    %v4467 = vunpack.c.l.b16 %v3014
    %v4468 = vunpack.c.l.b16 %v3015
    %v4469 = vunpack.c.l.b16 %v3016
    %v4470 = vunpack.c.l.b16 %v3017
    %v4471 = vunpack.c.l.b16 %v3018
    %v4472 = vunpack.c.l.b16 %v3019
    %v4473 = vunpack.c.l.b16 %v3020
    %v4474 = vunpack.c.l.b16 %v3021
    %v4475 = vunpack.c.l.b16 %v3022
    %v4476 = vunpack.c.l.b16 %v3023
    %v4477 = vunpack.c.l.b16 %v3024
    %v4478 = vunpack.c.l.b16 %v3025
    %v4479 = vunpack.c.l.b16 %v3026
    %v4480 = vunpack.c.l.b16 %v3027
    %v4481 = vunpack.c.l.b16 %v3028
    %v4482 = vunpack.c.l.b16 %v3029
    %v4483 = vunpack.c.l.b16 %v3030
    %v4484 = vunpack.c.l.b16 %v3031
    %v4485 = vunpack.c.l.b16 %v3032
    %v4486 = vunpack.c.l.b16 %v3033
    %v4487 = vunpack.c.l.b16 %v3034
    %v4488 = vunpack.c.l.b16 %v3035
    %v4489 = vunpack.c.l.b16 %v3036
    %v4490 = vunpack.c.l.b16 %v3037
    %v4491 = vunpack.c.l.b16 %v3038
    %v4492 = vpack.c.b16 %v4429, %v4428
    %v4493 = vpack.c.b16 %v4431, %v4430
    %v4494 = vpack.c.b16 %v4433, %v4432
    %v4495 = vpack.c.b16 %v4435, %v4434
    %v4496 = vpack.c.b16 %v4437, %v4436
    %v4497 = vpack.c.b16 %v4439, %v4438
    %v4498 = vpack.c.b16 %v4441, %v4440
    %v4499 = vpack.c.b16 %v4443, %v4442
    %v4500 = vpack.c.b16 %v4445, %v4444
    %v4501 = vpack.c.b16 %v4447, %v4446
    %v4502 = vpack.c.b16 %v4449, %v4448
    %v4503 = vpack.c.b16 %v4451, %v4450
    %v4504 = vpack.c.b16 %v4453, %v4452
    %v4505 = vpack.c.b16 %v4455, %v4454
    %v4506 = vpack.c.b16 %v4457, %v4456
    %v4507 = vpack.c.b16 %v4459, %v4458
    %v4508 = vpack.c.b16 %v4461, %v4460
    %v4509 = vpack.c.b16 %v4463, %v4462
    %v4510 = vpack.c.b16 %v4465, %v4464
    %v4511 = vpack.c.b16 %v4467, %v4466
    %v4512 = vpack.c.b16 %v4469, %v4468
    %v4513 = vpack.c.b16 %v4471, %v4470
    %v4514 = vpack.c.b16 %v4473, %v4472
    %v4515 = vpack.c.b16 %v4475, %v4474
    %v4516 = vpack.c.b16 %v4477, %v4476
    %v4517 = vpack.c.b16 %v4479, %v4478
    %v4518 = vpack.c.b16 %v4481, %v4480
    %v4519 = vpack.c.b16 %v4483, %v4482
    %v4520 = vpack.c.b16 %v4485, %v4484
    %v4521 = vpack.c.b16 %v4487, %v4486
    %v4522 = vpack.c.b16 %v4489, %v4488
    %v4523 = vpack.c.b16 %v4491, %v4490
    %v4532 = vunpack.c.l.b16 %v3039
    %v4533 = vunpack.c.l.b16 %v3040
    %v4534 = vunpack.c.l.b16 %v3041
    %v4535 = vunpack.c.l.b16 %v3042
    %v4536 = vunpack.c.l.b16 %v3043
    %v4537 = vunpack.c.l.b16 %v3044
    %v4538 = vunpack.c.l.b16 %v3045
    %v4539 = vunpack.c.l.b16 %v3046
    %v4540 = vpack.c.b16 %v4533, %v4532
    %v4541 = vpack.c.b16 %v4535, %v4534
    %v4542 = vpack.c.b16 %v4537, %v4536
    %v4543 = vpack.c.b16 %v4539, %v4538
    %v4549 = vsel %vm792, %v4492, 0
    %v4552 = vsel %vm792, %v4493, 0
    %v4555 = vsel %vm792, %v4494, 0
    %v4558 = vsel %vm792, %v4495, 0
    %v4561 = vsel %vm792, %v4496, 0
    %v4564 = vsel %vm792, %v4497, 0
    %v4567 = vsel %vm792, %v4498, 0
    %v4570 = vsel %vm792, %v4499, 0
    %v4573 = vsel %vm792, %v4500, 0
    %v4576 = vsel %vm792, %v4501, 0
    %v4579 = vsel %vm792, %v4502, 0
    %v4582 = vsel %vm792, %v4503, 0
    %v4585 = vsel %vm792, %v4504, 0
    %v4588 = vsel %vm792, %v4505, 0
    %v4591 = vsel %vm792, %v4506, 0
    %v4594 = vsel %vm792, %v4507, 0
    %v4597 = vsel %vm792, %v4508, 0
    %v4600 = vsel %vm792, %v4509, 0
    %v4603 = vsel %vm792, %v4510, 0
    %v4606 = vsel %vm792, %v4511, 0
    %v4609 = vsel %vm792, %v4512, 0
    %v4612 = vsel %vm792, %v4513, 0
    %v4615 = vsel %vm792, %v4514, 0
    %v4618 = vsel %vm792, %v4515, 0
    %v4621 = vsel %vm792, %v4516, 0
    %v4624 = vsel %vm792, %v4517, 0
    %v4627 = vsel %vm792, %v4518, 0
    %v4630 = vsel %vm792, %v4519, 0
    %v4633 = vsel %vm792, %v4520, 0
    %v4636 = vsel %vm792, %v4521, 0
    %v4639 = vsel %vm792, %v4522, 0
    %v4642 = vsel %vm792, %v4523, 0
    %4644 = vmatprep.subr.bf16.mxu0 0
    %4645 = vmatpush1.bf16.msra.mxu0 0
    %4646 = vmatprep.subr.bf16.mxu0 0
    %4647 = vmatpush1.bf16.msra.mxu0 0
    %4648 = vmatprep.subr.bf16.mxu0 0
    %4649 = vmatpush1.bf16.msra.mxu0 0
    %4650 = vmatprep.subr.bf16.mxu0 0
    %4651 = vmatpush1.bf16.msra.mxu0 0
    %4652 = vmatprep.subr.bf16.mxu0 0
    %4653 = vmatpush1.bf16.msra.mxu0 %v4543
    %4654 = vmatprep.subr.bf16.mxu0 0
    %4655 = vmatpush1.bf16.msra.mxu0 %v4542
    %4656 = vmatprep.subr.bf16.mxu0 0
    %4657 = vmatpush1.bf16.msra.mxu0 %v4541
    %4658 = vmatprep.subr.bf16.mxu0 0
    %4659 = vmatpush1.bf16.msra.mxu0 %v4540
    %4660 = vmatprep.subr.bf16.mxu0 0
    %4661 = vmatpush2.bf16.msra.mxu0 0
    %4662 = vmatprep.subr.bf16.mxu0 0
    %4663 = vmatpush2.bf16.msra.mxu0 0
    %4664 = vmatprep.subr.bf16.mxu0 0
    %4665 = vmatpush2.bf16.msra.mxu0 0
    %4666 = vmatprep.subr.bf16.mxu0 0
    %4667 = vmatpush2.bf16.msra.mxu0 0
    %4668 = vmatprep.subr.bf16.mxu0 0
    %4669 = vmatpush2.bf16.msra.mxu0 0
    %4670 = vmatprep.subr.bf16.mxu0 0
    %4671 = vmatpush2.bf16.msra.mxu0 0
    %4672 = vmatprep.subr.bf16.mxu0 0
    %4673 = vmatpush2.bf16.msra.mxu0 0
    %4674 = vmatprep.subr.bf16.mxu0 0
    %4675 = vmatpush2.bf16.msra.mxu0 0
    %4676 = vmatprep.mubr.bf16.mxu0 0
    %4677 = vmatmul.mubr.bf16.gmra.mxu0 %v4549
    %v4678 = vpop.f32.mrf.mxu0
    %v4679 = vadd.f32 %v4110, %v4678
    %v4680 = vpop.f32.mrf.mxu0
    %v4681 = vpop.f32.mrf.mxu0
    %v4682 = vadd.f32 %v4113, %v4681
    %v4683 = vpop.f32.mrf.mxu0
    %4684 = vmatprep.mubr.bf16.mxu0 0
    %4685 = vmatmul.mubr.bf16.gmra.mxu0 %v4552
    %v4686 = vpop.f32.mrf.mxu0
    %v4687 = vadd.f32 %v4118, %v4686
    %v4688 = vpop.f32.mrf.mxu0
    %v4689 = vpop.f32.mrf.mxu0
    %v4690 = vadd.f32 %v4121, %v4689
    %v4691 = vpop.f32.mrf.mxu0
    %4692 = vmatprep.mubr.bf16.mxu0 0
    %4693 = vmatmul.mubr.bf16.gmra.mxu0 %v4555
    %v4694 = vpop.f32.mrf.mxu0
    %v4695 = vadd.f32 %v4126, %v4694
    %v4696 = vpop.f32.mrf.mxu0
    %v4697 = vpop.f32.mrf.mxu0
    %v4698 = vadd.f32 %v4129, %v4697
    %v4699 = vpop.f32.mrf.mxu0
    %4700 = vmatprep.mubr.bf16.mxu0 0
    %4701 = vmatmul.mubr.bf16.gmra.mxu0 %v4558
    %v4702 = vpop.f32.mrf.mxu0
    %v4703 = vadd.f32 %v4134, %v4702
    %v4704 = vpop.f32.mrf.mxu0
    %v4705 = vpop.f32.mrf.mxu0
    %v4706 = vadd.f32 %v4137, %v4705
    %v4707 = vpop.f32.mrf.mxu0
    %4708 = vmatprep.mubr.bf16.mxu0 0
    %4709 = vmatmul.mubr.bf16.gmra.mxu0 %v4561
    %v4710 = vpop.f32.mrf.mxu0
    %v4711 = vadd.f32 %v4142, %v4710
    %v4712 = vpop.f32.mrf.mxu0
    %v4713 = vpop.f32.mrf.mxu0
    %v4714 = vadd.f32 %v4145, %v4713
    %v4715 = vpop.f32.mrf.mxu0
    %4716 = vmatprep.mubr.bf16.mxu0 0
    %4717 = vmatmul.mubr.bf16.gmra.mxu0 %v4564
    %v4718 = vpop.f32.mrf.mxu0
    %v4719 = vadd.f32 %v4150, %v4718
    %v4720 = vpop.f32.mrf.mxu0
    %v4721 = vpop.f32.mrf.mxu0
    %v4722 = vadd.f32 %v4153, %v4721
    %v4723 = vpop.f32.mrf.mxu0
    %4724 = vmatprep.mubr.bf16.mxu0 0
    %4725 = vmatmul.mubr.bf16.gmra.mxu0 %v4567
    %v4726 = vpop.f32.mrf.mxu0
    %v4727 = vadd.f32 %v4158, %v4726
    %v4728 = vpop.f32.mrf.mxu0
    %v4729 = vpop.f32.mrf.mxu0
    %v4730 = vadd.f32 %v4161, %v4729
    %v4731 = vpop.f32.mrf.mxu0
    %4732 = vmatprep.mubr.bf16.mxu0 0
    %4733 = vmatmul.mubr.bf16.gmra.mxu0 %v4570
    %v4734 = vpop.f32.mrf.mxu0
    %v4735 = vadd.f32 %v4166, %v4734
    %v4736 = vpop.f32.mrf.mxu0
    %v4737 = vpop.f32.mrf.mxu0
    %v4738 = vadd.f32 %v4169, %v4737
    %v4739 = vpop.f32.mrf.mxu0
    %4740 = vmatprep.mubr.bf16.mxu0 0
    %4741 = vmatmul.mubr.bf16.gmra.mxu0 %v4573
    %v4742 = vpop.f32.mrf.mxu0
    %v4743 = vadd.f32 %v4174, %v4742
    %v4744 = vpop.f32.mrf.mxu0
    %v4745 = vpop.f32.mrf.mxu0
    %v4746 = vadd.f32 %v4177, %v4745
    %v4747 = vpop.f32.mrf.mxu0
    %4748 = vmatprep.mubr.bf16.mxu0 0
    %4749 = vmatmul.mubr.bf16.gmra.mxu0 %v4576
    %v4750 = vpop.f32.mrf.mxu0
    %v4751 = vadd.f32 %v4182, %v4750
    %v4752 = vpop.f32.mrf.mxu0
    %v4753 = vpop.f32.mrf.mxu0
    %v4754 = vadd.f32 %v4185, %v4753
    %v4755 = vpop.f32.mrf.mxu0
    %4756 = vmatprep.mubr.bf16.mxu0 0
    %4757 = vmatmul.mubr.bf16.gmra.mxu0 %v4579
    %v4758 = vpop.f32.mrf.mxu0
    %v4759 = vadd.f32 %v4190, %v4758
    %v4760 = vpop.f32.mrf.mxu0
    %v4761 = vpop.f32.mrf.mxu0
    %v4762 = vadd.f32 %v4193, %v4761
    %v4763 = vpop.f32.mrf.mxu0
    %4764 = vmatprep.mubr.bf16.mxu0 0
    %4765 = vmatmul.mubr.bf16.gmra.mxu0 %v4582
    %v4766 = vpop.f32.mrf.mxu0
    %v4767 = vadd.f32 %v4198, %v4766
    %v4768 = vpop.f32.mrf.mxu0
    %v4769 = vpop.f32.mrf.mxu0
    %v4770 = vadd.f32 %v4201, %v4769
    %v4771 = vpop.f32.mrf.mxu0
    %4772 = vmatprep.mubr.bf16.mxu0 0
    %4773 = vmatmul.mubr.bf16.gmra.mxu0 %v4585
    %v4774 = vpop.f32.mrf.mxu0
    %v4775 = vadd.f32 %v4206, %v4774
    %v4776 = vpop.f32.mrf.mxu0
    %v4777 = vpop.f32.mrf.mxu0
    %v4778 = vadd.f32 %v4209, %v4777
    %v4779 = vpop.f32.mrf.mxu0
    %4780 = vmatprep.mubr.bf16.mxu0 0
    %4781 = vmatmul.mubr.bf16.gmra.mxu0 %v4588
    %v4782 = vpop.f32.mrf.mxu0
    %v4783 = vadd.f32 %v4214, %v4782
    %v4784 = vpop.f32.mrf.mxu0
    %v4785 = vpop.f32.mrf.mxu0
    %v4786 = vadd.f32 %v4217, %v4785
    %v4787 = vpop.f32.mrf.mxu0
    %4788 = vmatprep.mubr.bf16.mxu0 0
    %4789 = vmatmul.mubr.bf16.gmra.mxu0 %v4591
    %v4790 = vpop.f32.mrf.mxu0
    %v4791 = vadd.f32 %v4222, %v4790
    %v4792 = vpop.f32.mrf.mxu0
    %v4793 = vpop.f32.mrf.mxu0
    %v4794 = vadd.f32 %v4225, %v4793
    %v4795 = vpop.f32.mrf.mxu0
    %4796 = vmatprep.mubr.bf16.mxu0 0
    %4797 = vmatmul.mubr.bf16.gmra.mxu0 %v4594
    %v4798 = vpop.f32.mrf.mxu0
    %v4799 = vadd.f32 %v4230, %v4798
    %v4800 = vpop.f32.mrf.mxu0
    %v4801 = vpop.f32.mrf.mxu0
    %v4802 = vadd.f32 %v4233, %v4801
    %v4803 = vpop.f32.mrf.mxu0
    %4804 = vmatprep.mubr.bf16.mxu0 0
    %4805 = vmatmul.mubr.bf16.gmra.mxu0 %v4597
    %v4806 = vpop.f32.mrf.mxu0
    %v4807 = vadd.f32 %v4238, %v4806
    %v4808 = vpop.f32.mrf.mxu0
    %v4809 = vpop.f32.mrf.mxu0
    %v4810 = vadd.f32 %v4241, %v4809
    %v4811 = vpop.f32.mrf.mxu0
    %4812 = vmatprep.mubr.bf16.mxu0 0
    %4813 = vmatmul.mubr.bf16.gmra.mxu0 %v4600
    %v4814 = vpop.f32.mrf.mxu0
    %v4815 = vadd.f32 %v4246, %v4814
    %v4816 = vpop.f32.mrf.mxu0
    %v4817 = vpop.f32.mrf.mxu0
    %v4818 = vadd.f32 %v4249, %v4817
    %v4819 = vpop.f32.mrf.mxu0
    %4820 = vmatprep.mubr.bf16.mxu0 0
    %4821 = vmatmul.mubr.bf16.gmra.mxu0 %v4603
    %v4822 = vpop.f32.mrf.mxu0
    %v4823 = vadd.f32 %v4254, %v4822
    %v4824 = vpop.f32.mrf.mxu0
    %v4825 = vpop.f32.mrf.mxu0
    %v4826 = vadd.f32 %v4257, %v4825
    %v4827 = vpop.f32.mrf.mxu0
    %4828 = vmatprep.mubr.bf16.mxu0 0
    %4829 = vmatmul.mubr.bf16.gmra.mxu0 %v4606
    %v4830 = vpop.f32.mrf.mxu0
    %v4831 = vadd.f32 %v4262, %v4830
    %v4832 = vpop.f32.mrf.mxu0
    %v4833 = vpop.f32.mrf.mxu0
    %v4834 = vadd.f32 %v4265, %v4833
    %v4835 = vpop.f32.mrf.mxu0
    %4836 = vmatprep.mubr.bf16.mxu0 0
    %4837 = vmatmul.mubr.bf16.gmra.mxu0 %v4609
    %v4838 = vpop.f32.mrf.mxu0
    %v4839 = vadd.f32 %v4270, %v4838
    %v4840 = vpop.f32.mrf.mxu0
    %v4841 = vpop.f32.mrf.mxu0
    %v4842 = vadd.f32 %v4273, %v4841
    %v4843 = vpop.f32.mrf.mxu0
    %4844 = vmatprep.mubr.bf16.mxu0 0
    %4845 = vmatmul.mubr.bf16.gmra.mxu0 %v4612
    %v4846 = vpop.f32.mrf.mxu0
    %v4847 = vadd.f32 %v4278, %v4846
    %v4848 = vpop.f32.mrf.mxu0
    %v4849 = vpop.f32.mrf.mxu0
    %v4850 = vadd.f32 %v4281, %v4849
    %v4851 = vpop.f32.mrf.mxu0
    %4852 = vmatprep.mubr.bf16.mxu0 0
    %4853 = vmatmul.mubr.bf16.gmra.mxu0 %v4615
    %v4854 = vpop.f32.mrf.mxu0
    %v4855 = vadd.f32 %v4286, %v4854
    %v4856 = vpop.f32.mrf.mxu0
    %v4857 = vpop.f32.mrf.mxu0
    %v4858 = vadd.f32 %v4289, %v4857
    %v4859 = vpop.f32.mrf.mxu0
    %4860 = vmatprep.mubr.bf16.mxu0 0
    %4861 = vmatmul.mubr.bf16.gmra.mxu0 %v4618
    %v4862 = vpop.f32.mrf.mxu0
    %v4863 = vadd.f32 %v4294, %v4862
    %v4864 = vpop.f32.mrf.mxu0
    %v4865 = vpop.f32.mrf.mxu0
    %v4866 = vadd.f32 %v4297, %v4865
    %v4867 = vpop.f32.mrf.mxu0
    %4868 = vmatprep.mubr.bf16.mxu0 0
    %4869 = vmatmul.mubr.bf16.gmra.mxu0 %v4621
    %v4870 = vpop.f32.mrf.mxu0
    %v4871 = vadd.f32 %v4302, %v4870
    %v4872 = vpop.f32.mrf.mxu0
    %v4873 = vpop.f32.mrf.mxu0
    %v4874 = vadd.f32 %v4305, %v4873
    %v4875 = vpop.f32.mrf.mxu0
    %4876 = vmatprep.mubr.bf16.mxu0 0
    %4877 = vmatmul.mubr.bf16.gmra.mxu0 %v4624
    %v4878 = vpop.f32.mrf.mxu0
    %v4879 = vadd.f32 %v4310, %v4878
    %v4880 = vpop.f32.mrf.mxu0
    %v4881 = vpop.f32.mrf.mxu0
    %v4882 = vadd.f32 %v4313, %v4881
    %v4883 = vpop.f32.mrf.mxu0
    %4884 = vmatprep.mubr.bf16.mxu0 0
    %4885 = vmatmul.mubr.bf16.gmra.mxu0 %v4627
    %v4886 = vpop.f32.mrf.mxu0
    %v4887 = vadd.f32 %v4318, %v4886
    %v4888 = vpop.f32.mrf.mxu0
    %v4889 = vpop.f32.mrf.mxu0
    %v4890 = vadd.f32 %v4321, %v4889
    %v4891 = vpop.f32.mrf.mxu0
    %4892 = vmatprep.mubr.bf16.mxu0 0
    %4893 = vmatmul.mubr.bf16.gmra.mxu0 %v4630
    %v4894 = vpop.f32.mrf.mxu0
    %v4895 = vadd.f32 %v4326, %v4894
    %v4896 = vpop.f32.mrf.mxu0
    %v4897 = vpop.f32.mrf.mxu0
    %v4898 = vadd.f32 %v4329, %v4897
    %v4899 = vpop.f32.mrf.mxu0
    %4900 = vmatprep.mubr.bf16.mxu0 0
    %4901 = vmatmul.mubr.bf16.gmra.mxu0 %v4633
    %v4902 = vpop.f32.mrf.mxu0
    %v4903 = vadd.f32 %v4334, %v4902
    %v4904 = vpop.f32.mrf.mxu0
    %v4905 = vpop.f32.mrf.mxu0
    %v4906 = vadd.f32 %v4337, %v4905
    %v4907 = vpop.f32.mrf.mxu0
    %4908 = vmatprep.mubr.bf16.mxu0 0
    %4909 = vmatmul.mubr.bf16.gmra.mxu0 %v4636
    %v4910 = vpop.f32.mrf.mxu0
    %v4911 = vadd.f32 %v4342, %v4910
    %v4912 = vpop.f32.mrf.mxu0
    %v4913 = vpop.f32.mrf.mxu0
    %v4914 = vadd.f32 %v4345, %v4913
    %v4915 = vpop.f32.mrf.mxu0
    %4916 = vmatprep.mubr.bf16.mxu0 0
    %4917 = vmatmul.mubr.bf16.gmra.mxu0 %v4639
    %v4918 = vpop.f32.mrf.mxu0
    %v4919 = vadd.f32 %v4350, %v4918
    %v4920 = vpop.f32.mrf.mxu0
    %v4921 = vpop.f32.mrf.mxu0
    %v4922 = vadd.f32 %v4353, %v4921
    %v4923 = vpop.f32.mrf.mxu0
    %4924 = vmatprep.mubr.bf16.mxu0 0
    %4925 = vmatmul.mubr.bf16.gmra.mxu0 %v4642
    %v4926 = vpop.f32.mrf.mxu0
    %v4927 = vadd.f32 %v4358, %v4926
    %v4928 = vpop.f32.mrf.mxu0
    %v4929 = vpop.f32.mrf.mxu0
    %v4930 = vadd.f32 %v4361, %v4929
    %v4931 = vpop.f32.mrf.mxu0
    %4932 = vdwg.mxu0
    %v4933 = vld [vmem:[#allocation2] sm:$0xe]
    %v4934 = vld [vmem:[#allocation2 + $0xc] sm:$0xe]
    %v4935 = vld [vmem:[#allocation2 + $0x18] sm:$0xe]
    %v4936 = vld [vmem:[#allocation2 + $0x24] sm:$0xe]
    %v4937 = vld [vmem:[#allocation2 + $0x30] sm:$0xe]
    %v4938 = vld [vmem:[#allocation2 + $0x3c] sm:$0xe]
    %v4939 = vld [vmem:[#allocation2 + $0x48] sm:$0xe]
    %v4940 = vld [vmem:[#allocation2 + $0x54] sm:$0xe]
    %v4941 = vld [vmem:[#allocation2 + $0x60] sm:$0xe]
    %v4942 = vld [vmem:[#allocation2 + $0x6c] sm:$0xe]
    %v4943 = vld [vmem:[#allocation2 + $0x78] sm:$0xe]
    %v4944 = vld [vmem:[#allocation2 + $0x84] sm:$0xe]
    %v4945 = vld [vmem:[#allocation2 + $0x90] sm:$0xe]
    %v4946 = vld [vmem:[#allocation2 + $0x9c] sm:$0xe]
    %v4947 = vld [vmem:[#allocation2 + $0xa8] sm:$0xe]
    %v4948 = vld [vmem:[#allocation2 + $0xb4] sm:$0xe]
    %v4949 = vld [vmem:[#allocation2 + $0xd8] sm:$0xe]
    %v4950 = vld [vmem:[#allocation2 + $0xe4] sm:$0xe]
    %v4951 = vld [vmem:[#allocation2 + $0xf0] sm:$0xe]
    %v4952 = vld [vmem:[#allocation2 + $0xfc] sm:$0xe]
    %v4953 = vld [vmem:[#allocation2 + $0x108] sm:$0xe]
    %v4954 = vld [vmem:[#allocation2 + $0x114] sm:$0xe]
    %v4955 = vld [vmem:[#allocation2 + $0x120] sm:$0xe]
    %v4956 = vld [vmem:[#allocation2 + $0x12c] sm:$0xe]
    %v4957 = vld [vmem:[#allocation2 + $0x138] sm:$0xe]
    %v4958 = vld [vmem:[#allocation2 + $0x144] sm:$0xe]
    %v4959 = vld [vmem:[#allocation2 + $0x150] sm:$0xe]
    %v4960 = vld [vmem:[#allocation2 + $0x15c] sm:$0xe]
    %v4961 = vld [vmem:[#allocation2 + $0x168] sm:$0xe]
    %v4962 = vld [vmem:[#allocation2 + $0x174] sm:$0xe]
    %v4963 = vld [vmem:[#allocation2 + $0x180] sm:$0xe]
    %v4964 = vld [vmem:[#allocation2 + $0x18c] sm:$0xe]
    %vm5029 = vcmask 1042432
    %vm5030 = vcmask 1046532
    %vm5031 = vmor %vm5029, %vm5030
    %v5032 = vrot.slane %v4933, 5
    %v5033 = vrot.slane %v5032, 4
    %v5034 = vrot.slane %v2976, 5
    %v5035 = vsel %vm5031, %v5033, %v5034
    %v5036 = vrot.slane %v5034, 4
    %v5037 = vrot.slane %v3047, 5
    %v5038 = vsel %vm5031, %v5036, %v5037
    %v5039 = vrot.slane %v4934, 5
    %v5040 = vrot.slane %v5039, 4
    %v5041 = vrot.slane %v2978, 5
    %v5042 = vsel %vm5031, %v5040, %v5041
    %v5043 = vrot.slane %v5041, 4
    %v5044 = vrot.slane %v3048, 5
    %v5045 = vsel %vm5031, %v5043, %v5044
    %v5046 = vrot.slane %v4935, 5
    %v5047 = vrot.slane %v5046, 4
    %v5048 = vrot.slane %v2980, 5
    %v5049 = vsel %vm5031, %v5047, %v5048
    %v5050 = vrot.slane %v5048, 4
    %v5051 = vrot.slane %v3049, 5
    %v5052 = vsel %vm5031, %v5050, %v5051
    %v5053 = vrot.slane %v4936, 5
    %v5054 = vrot.slane %v5053, 4
    %v5055 = vrot.slane %v2982, 5
    %v5056 = vsel %vm5031, %v5054, %v5055
    %v5057 = vrot.slane %v5055, 4
    %v5058 = vrot.slane %v3050, 5
    %v5059 = vsel %vm5031, %v5057, %v5058
    %v5060 = vrot.slane %v4937, 5
    %v5061 = vrot.slane %v5060, 4
    %v5062 = vrot.slane %v2984, 5
    %v5063 = vsel %vm5031, %v5061, %v5062
    %v5064 = vrot.slane %v5062, 4
    %v5065 = vrot.slane %v3051, 5
    %v5066 = vsel %vm5031, %v5064, %v5065
    %v5067 = vrot.slane %v4938, 5
    %v5068 = vrot.slane %v5067, 4
    %v5069 = vrot.slane %v2986, 5
    %v5070 = vsel %vm5031, %v5068, %v5069
    %v5071 = vrot.slane %v5069, 4
    %v5072 = vrot.slane %v3052, 5
    %v5073 = vsel %vm5031, %v5071, %v5072
    %v5074 = vrot.slane %v4939, 5
    %v5075 = vrot.slane %v5074, 4
    %v5076 = vrot.slane %v2988, 5
    %v5077 = vsel %vm5031, %v5075, %v5076
    %v5078 = vrot.slane %v5076, 4
    %v5079 = vrot.slane %v3053, 5
    %v5080 = vsel %vm5031, %v5078, %v5079
    %v5081 = vrot.slane %v4940, 5
    %v5082 = vrot.slane %v5081, 4
    %v5083 = vrot.slane %v2990, 5
    %v5084 = vsel %vm5031, %v5082, %v5083
    %v5085 = vrot.slane %v5083, 4
    %v5086 = vrot.slane %v3054, 5
    %v5087 = vsel %vm5031, %v5085, %v5086
    %v5088 = vrot.slane %v4941, 5
    %v5089 = vrot.slane %v5088, 4
    %v5090 = vrot.slane %v2992, 5
    %v5091 = vsel %vm5031, %v5089, %v5090
    %v5092 = vrot.slane %v5090, 4
    %v5093 = vrot.slane %v3055, 5
    %v5094 = vsel %vm5031, %v5092, %v5093
    %v5095 = vrot.slane %v4942, 5
    %v5096 = vrot.slane %v5095, 4
    %v5097 = vrot.slane %v2994, 5
    %v5098 = vsel %vm5031, %v5096, %v5097
    %v5099 = vrot.slane %v5097, 4
    %v5100 = vrot.slane %v3056, 5
    %v5101 = vsel %vm5031, %v5099, %v5100
    %v5102 = vrot.slane %v4943, 5
    %v5103 = vrot.slane %v5102, 4
    %v5104 = vrot.slane %v2996, 5
    %v5105 = vsel %vm5031, %v5103, %v5104
    %v5106 = vrot.slane %v5104, 4
    %v5107 = vrot.slane %v3057, 5
    %v5108 = vsel %vm5031, %v5106, %v5107
    %v5109 = vrot.slane %v4944, 5
    %v5110 = vrot.slane %v5109, 4
    %v5111 = vrot.slane %v2998, 5
    %v5112 = vsel %vm5031, %v5110, %v5111
    %v5113 = vrot.slane %v5111, 4
    %v5114 = vrot.slane %v3058, 5
    %v5115 = vsel %vm5031, %v5113, %v5114
    %v5116 = vrot.slane %v4945, 5
    %v5117 = vrot.slane %v5116, 4
    %v5118 = vrot.slane %v3000, 5
    %v5119 = vsel %vm5031, %v5117, %v5118
    %v5120 = vrot.slane %v5118, 4
    %v5121 = vrot.slane %v3059, 5
    %v5122 = vsel %vm5031, %v5120, %v5121
    %v5123 = vrot.slane %v4946, 5
    %v5124 = vrot.slane %v5123, 4
    %v5125 = vrot.slane %v3002, 5
    %v5126 = vsel %vm5031, %v5124, %v5125
    %v5127 = vrot.slane %v5125, 4
    %v5128 = vrot.slane %v3060, 5
    %v5129 = vsel %vm5031, %v5127, %v5128
    %v5130 = vrot.slane %v4947, 5
    %v5131 = vrot.slane %v5130, 4
    %v5132 = vrot.slane %v3004, 5
    %v5133 = vsel %vm5031, %v5131, %v5132
    %v5134 = vrot.slane %v5132, 4
    %v5135 = vrot.slane %v3061, 5
    %v5136 = vsel %vm5031, %v5134, %v5135
    %v5137 = vrot.slane %v4948, 5
    %v5138 = vrot.slane %v5137, 4
    %v5139 = vrot.slane %v3006, 5
    %v5140 = vsel %vm5031, %v5138, %v5139
    %v5141 = vrot.slane %v5139, 4
    %v5142 = vrot.slane %v3062, 5
    %v5143 = vsel %vm5031, %v5141, %v5142
    %v5144 = vrot.slane %v4949, 5
    %v5145 = vrot.slane %v5144, 4
    %v5146 = vrot.slane %v3008, 5
    %v5147 = vsel %vm5031, %v5145, %v5146
    %v5148 = vrot.slane %v5146, 4
    %v5149 = vrot.slane %v3063, 5
    %v5150 = vsel %vm5031, %v5148, %v5149
    %v5151 = vrot.slane %v4950, 5
    %v5152 = vrot.slane %v5151, 4
    %v5153 = vrot.slane %v3010, 5
    %v5154 = vsel %vm5031, %v5152, %v5153
    %v5155 = vrot.slane %v5153, 4
    %v5156 = vrot.slane %v3064, 5
    %v5157 = vsel %vm5031, %v5155, %v5156
    %v5158 = vrot.slane %v4951, 5
    %v5159 = vrot.slane %v5158, 4
    %v5160 = vrot.slane %v3012, 5
    %v5161 = vsel %vm5031, %v5159, %v5160
    %v5162 = vrot.slane %v5160, 4
    %v5163 = vrot.slane %v3065, 5
    %v5164 = vsel %vm5031, %v5162, %v5163
    %v5165 = vrot.slane %v4952, 5
    %v5166 = vrot.slane %v5165, 4
    %v5167 = vrot.slane %v3014, 5
    %v5168 = vsel %vm5031, %v5166, %v5167
    %v5169 = vrot.slane %v5167, 4
    %v5170 = vrot.slane %v3066, 5
    %v5171 = vsel %vm5031, %v5169, %v5170
    %v5172 = vrot.slane %v4953, 5
    %v5173 = vrot.slane %v5172, 4
    %v5174 = vrot.slane %v3016, 5
    %v5175 = vsel %vm5031, %v5173, %v5174
    %v5176 = vrot.slane %v5174, 4
    %v5177 = vrot.slane %v3067, 5
    %v5178 = vsel %vm5031, %v5176, %v5177
    %v5179 = vrot.slane %v4954, 5
    %v5180 = vrot.slane %v5179, 4
    %v5181 = vrot.slane %v3018, 5
    %v5182 = vsel %vm5031, %v5180, %v5181
    %v5183 = vrot.slane %v5181, 4
    %v5184 = vrot.slane %v3068, 5
    %v5185 = vsel %vm5031, %v5183, %v5184
    %v5186 = vrot.slane %v4955, 5
    %v5187 = vrot.slane %v5186, 4
    %v5188 = vrot.slane %v3020, 5
    %v5189 = vsel %vm5031, %v5187, %v5188
    %v5190 = vrot.slane %v5188, 4
    %v5191 = vrot.slane %v3069, 5
    %v5192 = vsel %vm5031, %v5190, %v5191
    %v5193 = vrot.slane %v4956, 5
    %v5194 = vrot.slane %v5193, 4
    %v5195 = vrot.slane %v3022, 5
    %v5196 = vsel %vm5031, %v5194, %v5195
    %v5197 = vrot.slane %v5195, 4
    %v5198 = vrot.slane %v3070, 5
    %v5199 = vsel %vm5031, %v5197, %v5198
    %v5200 = vrot.slane %v4957, 5
    %v5201 = vrot.slane %v5200, 4
    %v5202 = vrot.slane %v3024, 5
    %v5203 = vsel %vm5031, %v5201, %v5202
    %v5204 = vrot.slane %v5202, 4
    %v5205 = vrot.slane %v3071, 5
    %v5206 = vsel %vm5031, %v5204, %v5205
    %v5207 = vrot.slane %v4958, 5
    %v5208 = vrot.slane %v5207, 4
    %v5209 = vrot.slane %v3026, 5
    %v5210 = vsel %vm5031, %v5208, %v5209
    %v5211 = vrot.slane %v5209, 4
    %v5212 = vrot.slane %v3072, 5
    %v5213 = vsel %vm5031, %v5211, %v5212
    %v5214 = vrot.slane %v4959, 5
    %v5215 = vrot.slane %v5214, 4
    %v5216 = vrot.slane %v3028, 5
    %v5217 = vsel %vm5031, %v5215, %v5216
    %v5218 = vrot.slane %v5216, 4
    %v5219 = vrot.slane %v3073, 5
    %v5220 = vsel %vm5031, %v5218, %v5219
    %v5221 = vrot.slane %v4960, 5
    %v5222 = vrot.slane %v5221, 4
    %v5223 = vrot.slane %v3030, 5
    %v5224 = vsel %vm5031, %v5222, %v5223
    %v5225 = vrot.slane %v5223, 4
    %v5226 = vrot.slane %v3074, 5
    %v5227 = vsel %vm5031, %v5225, %v5226
    %v5228 = vrot.slane %v4961, 5
    %v5229 = vrot.slane %v5228, 4
    %v5230 = vrot.slane %v3032, 5
    %v5231 = vsel %vm5031, %v5229, %v5230
    %v5232 = vrot.slane %v5230, 4
    %v5233 = vrot.slane %v3075, 5
    %v5234 = vsel %vm5031, %v5232, %v5233
    %v5235 = vrot.slane %v4962, 5
    %v5236 = vrot.slane %v5235, 4
    %v5237 = vrot.slane %v3034, 5
    %v5238 = vsel %vm5031, %v5236, %v5237
    %v5239 = vrot.slane %v5237, 4
    %v5240 = vrot.slane %v3076, 5
    %v5241 = vsel %vm5031, %v5239, %v5240
    %v5242 = vrot.slane %v4963, 5
    %v5243 = vrot.slane %v5242, 4
    %v5244 = vrot.slane %v3036, 5
    %v5245 = vsel %vm5031, %v5243, %v5244
    %v5246 = vrot.slane %v5244, 4
    %v5247 = vrot.slane %v3077, 5
    %v5248 = vsel %vm5031, %v5246, %v5247
    %v5249 = vrot.slane %v4964, 5
    %v5250 = vrot.slane %v5249, 4
    %v5251 = vrot.slane %v3038, 5
    %v5252 = vsel %vm5031, %v5250, %v5251
    %v5253 = vrot.slane %v5251, 4
    %v5254 = vrot.slane %v3078, 5
    %v5255 = vsel %vm5031, %v5253, %v5254
    %s5256 = scalar_lea.vmem [#allocation3], 64
    %v5257 = vld [vmem:[%s5256] sm:$0xf]
    %v5258 = vld [vmem:[%s5256 + $0x4] sm:$0xf]
    %v5259 = vld [vmem:[%s5256 + $0x8] sm:$0xf]
    %v5260 = vld [vmem:[%s5256 + $0xc] sm:$0xf]
    %v5261 = vld [vmem:[%s5256 + $0x10] sm:$0xf]
    %v5262 = vld [vmem:[%s5256 + $0x14] sm:$0xf]
    %v5263 = vld [vmem:[%s5256 + $0x18] sm:$0xf]
    %v5264 = vld [vmem:[%s5256 + $0x1c] sm:$0xf]
    %v5265 = vunpack.c.l.b16 %v5035
    %v5266 = vunpack.c.l.b16 %v5038
    %v5267 = vunpack.c.l.b16 %v5042
    %v5268 = vunpack.c.l.b16 %v5045
    %v5269 = vunpack.c.l.b16 %v5049
    %v5270 = vunpack.c.l.b16 %v5052
    %v5271 = vunpack.c.l.b16 %v5056
    %v5272 = vunpack.c.l.b16 %v5059
    %v5273 = vunpack.c.l.b16 %v5063
    %v5274 = vunpack.c.l.b16 %v5066
    %v5275 = vunpack.c.l.b16 %v5070
    %v5276 = vunpack.c.l.b16 %v5073
    %v5277 = vunpack.c.l.b16 %v5077
    %v5278 = vunpack.c.l.b16 %v5080
    %v5279 = vunpack.c.l.b16 %v5084
    %v5280 = vunpack.c.l.b16 %v5087
    %v5281 = vunpack.c.l.b16 %v5091
    %v5282 = vunpack.c.l.b16 %v5094
    %v5283 = vunpack.c.l.b16 %v5098
    %v5284 = vunpack.c.l.b16 %v5101
    %v5285 = vunpack.c.l.b16 %v5105
    %v5286 = vunpack.c.l.b16 %v5108
    %v5287 = vunpack.c.l.b16 %v5112
    %v5288 = vunpack.c.l.b16 %v5115
    %v5289 = vunpack.c.l.b16 %v5119
    %v5290 = vunpack.c.l.b16 %v5122
    %v5291 = vunpack.c.l.b16 %v5126
    %v5292 = vunpack.c.l.b16 %v5129
    %v5293 = vunpack.c.l.b16 %v5133
    %v5294 = vunpack.c.l.b16 %v5136
    %v5295 = vunpack.c.l.b16 %v5140
    %v5296 = vunpack.c.l.b16 %v5143
    %v5297 = vunpack.c.l.b16 %v5147
    %v5298 = vunpack.c.l.b16 %v5150
    %v5299 = vunpack.c.l.b16 %v5154
    %v5300 = vunpack.c.l.b16 %v5157
    %v5301 = vunpack.c.l.b16 %v5161
    %v5302 = vunpack.c.l.b16 %v5164
    %v5303 = vunpack.c.l.b16 %v5168
    %v5304 = vunpack.c.l.b16 %v5171
    %v5305 = vunpack.c.l.b16 %v5175
    %v5306 = vunpack.c.l.b16 %v5178
    %v5307 = vunpack.c.l.b16 %v5182
    %v5308 = vunpack.c.l.b16 %v5185
    %v5309 = vunpack.c.l.b16 %v5189
    %v5310 = vunpack.c.l.b16 %v5192
    %v5311 = vunpack.c.l.b16 %v5196
    %v5312 = vunpack.c.l.b16 %v5199
    %v5313 = vunpack.c.l.b16 %v5203
    %v5314 = vunpack.c.l.b16 %v5206
    %v5315 = vunpack.c.l.b16 %v5210
    %v5316 = vunpack.c.l.b16 %v5213
    %v5317 = vunpack.c.l.b16 %v5217
    %v5318 = vunpack.c.l.b16 %v5220
    %v5319 = vunpack.c.l.b16 %v5224
    %v5320 = vunpack.c.l.b16 %v5227
    %v5321 = vunpack.c.l.b16 %v5231
    %v5322 = vunpack.c.l.b16 %v5234
    %v5323 = vunpack.c.l.b16 %v5238
    %v5324 = vunpack.c.l.b16 %v5241
    %v5325 = vunpack.c.l.b16 %v5245
    %v5326 = vunpack.c.l.b16 %v5248
    %v5327 = vunpack.c.l.b16 %v5252
    %v5328 = vunpack.c.l.b16 %v5255
    %v5329 = vpack.c.b16 %v5266, %v5265
    %v5330 = vpack.c.b16 %v5268, %v5267
    %v5331 = vpack.c.b16 %v5270, %v5269
    %v5332 = vpack.c.b16 %v5272, %v5271
    %v5333 = vpack.c.b16 %v5274, %v5273
    %v5334 = vpack.c.b16 %v5276, %v5275
    %v5335 = vpack.c.b16 %v5278, %v5277
    %v5336 = vpack.c.b16 %v5280, %v5279
    %v5337 = vpack.c.b16 %v5282, %v5281
    %v5338 = vpack.c.b16 %v5284, %v5283
    %v5339 = vpack.c.b16 %v5286, %v5285
    %v5340 = vpack.c.b16 %v5288, %v5287
    %v5341 = vpack.c.b16 %v5290, %v5289
    %v5342 = vpack.c.b16 %v5292, %v5291
    %v5343 = vpack.c.b16 %v5294, %v5293
    %v5344 = vpack.c.b16 %v5296, %v5295
    %v5345 = vpack.c.b16 %v5298, %v5297
    %v5346 = vpack.c.b16 %v5300, %v5299
    %v5347 = vpack.c.b16 %v5302, %v5301
    %v5348 = vpack.c.b16 %v5304, %v5303
    %v5349 = vpack.c.b16 %v5306, %v5305
    %v5350 = vpack.c.b16 %v5308, %v5307
    %v5351 = vpack.c.b16 %v5310, %v5309
    %v5352 = vpack.c.b16 %v5312, %v5311
    %v5353 = vpack.c.b16 %v5314, %v5313
    %v5354 = vpack.c.b16 %v5316, %v5315
    %v5355 = vpack.c.b16 %v5318, %v5317
    %v5356 = vpack.c.b16 %v5320, %v5319
    %v5357 = vpack.c.b16 %v5322, %v5321
    %v5358 = vpack.c.b16 %v5324, %v5323
    %v5359 = vpack.c.b16 %v5326, %v5325
    %v5360 = vpack.c.b16 %v5328, %v5327
    %v5369 = vunpack.c.l.b16 %v5257
    %v5370 = vunpack.c.l.b16 %v5258
    %v5371 = vunpack.c.l.b16 %v5259
    %v5372 = vunpack.c.l.b16 %v5260
    %v5373 = vunpack.c.l.b16 %v5261
    %v5374 = vunpack.c.l.b16 %v5262
    %v5375 = vunpack.c.l.b16 %v5263
    %v5376 = vunpack.c.l.b16 %v5264
    %v5377 = vpack.c.b16 %v5370, %v5369
    %v5378 = vpack.c.b16 %v5372, %v5371
    %v5379 = vpack.c.b16 %v5374, %v5373
    %v5380 = vpack.c.b16 %v5376, %v5375
    %v5386 = vsel %vm792, %v5329, 0
    %v5389 = vsel %vm792, %v5330, 0
    %v5392 = vsel %vm792, %v5331, 0
    %v5395 = vsel %vm792, %v5332, 0
    %v5398 = vsel %vm792, %v5333, 0
    %v5401 = vsel %vm792, %v5334, 0
    %v5404 = vsel %vm792, %v5335, 0
    %v5407 = vsel %vm792, %v5336, 0
    %v5410 = vsel %vm792, %v5337, 0
    %v5413 = vsel %vm792, %v5338, 0
    %v5416 = vsel %vm792, %v5339, 0
    %v5419 = vsel %vm792, %v5340, 0
    %v5422 = vsel %vm792, %v5341, 0
    %v5425 = vsel %vm792, %v5342, 0
    %v5428 = vsel %vm792, %v5343, 0
    %v5431 = vsel %vm792, %v5344, 0
    %v5434 = vsel %vm792, %v5345, 0
    %v5437 = vsel %vm792, %v5346, 0
    %v5440 = vsel %vm792, %v5347, 0
    %v5443 = vsel %vm792, %v5348, 0
    %v5446 = vsel %vm792, %v5349, 0
    %v5449 = vsel %vm792, %v5350, 0
    %v5452 = vsel %vm792, %v5351, 0
    %v5455 = vsel %vm792, %v5352, 0
    %v5458 = vsel %vm792, %v5353, 0
    %v5461 = vsel %vm792, %v5354, 0
    %v5464 = vsel %vm792, %v5355, 0
    %v5467 = vsel %vm792, %v5356, 0
    %v5470 = vsel %vm792, %v5357, 0
    %v5473 = vsel %vm792, %v5358, 0
    %v5476 = vsel %vm792, %v5359, 0
    %v5479 = vsel %vm792, %v5360, 0
    %5481 = vmatprep.subr.bf16.mxu0 0
    %5482 = vmatpush1.bf16.msra.mxu0 0
    %5483 = vmatprep.subr.bf16.mxu0 0
    %5484 = vmatpush1.bf16.msra.mxu0 0
    %5485 = vmatprep.subr.bf16.mxu0 0
    %5486 = vmatpush1.bf16.msra.mxu0 0
    %5487 = vmatprep.subr.bf16.mxu0 0
    %5488 = vmatpush1.bf16.msra.mxu0 0
    %5489 = vmatprep.subr.bf16.mxu0 0
    %5490 = vmatpush1.bf16.msra.mxu0 %v5380
    %5491 = vmatprep.subr.bf16.mxu0 0
    %5492 = vmatpush1.bf16.msra.mxu0 %v5379
    %5493 = vmatprep.subr.bf16.mxu0 0
    %5494 = vmatpush1.bf16.msra.mxu0 %v5378
    %5495 = vmatprep.subr.bf16.mxu0 0
    %5496 = vmatpush1.bf16.msra.mxu0 %v5377
    %5497 = vmatprep.subr.bf16.mxu0 0
    %5498 = vmatpush2.bf16.msra.mxu0 0
    %5499 = vmatprep.subr.bf16.mxu0 0
    %5500 = vmatpush2.bf16.msra.mxu0 0
    %5501 = vmatprep.subr.bf16.mxu0 0
    %5502 = vmatpush2.bf16.msra.mxu0 0
    %5503 = vmatprep.subr.bf16.mxu0 0
    %5504 = vmatpush2.bf16.msra.mxu0 0
    %5505 = vmatprep.subr.bf16.mxu0 0
    %5506 = vmatpush2.bf16.msra.mxu0 0
    %5507 = vmatprep.subr.bf16.mxu0 0
    %5508 = vmatpush2.bf16.msra.mxu0 0
    %5509 = vmatprep.subr.bf16.mxu0 0
    %5510 = vmatpush2.bf16.msra.mxu0 0
    %5511 = vmatprep.subr.bf16.mxu0 0
    %5512 = vmatpush2.bf16.msra.mxu0 0
    %5513 = vmatprep.mubr.bf16.mxu0 0
    %5514 = vmatmul.mubr.bf16.gmra.mxu0 %v5386
    %v5515 = vpop.f32.mrf.mxu0
    %v5516 = vadd.f32 0.0, %v5515
    %v5517 = vpop.f32.mrf.mxu0
    %v5518 = vpop.f32.mrf.mxu0
    %v5519 = vadd.f32 0.0, %v5518
    %v5520 = vpop.f32.mrf.mxu0
    %5521 = vmatprep.mubr.bf16.mxu0 0
    %5522 = vmatmul.mubr.bf16.gmra.mxu0 %v5389
    %v5523 = vpop.f32.mrf.mxu0
    %v5524 = vadd.f32 0.0, %v5523
    %v5525 = vpop.f32.mrf.mxu0
    %v5526 = vpop.f32.mrf.mxu0
    %v5527 = vadd.f32 0.0, %v5526
    %v5528 = vpop.f32.mrf.mxu0
    %5529 = vmatprep.mubr.bf16.mxu0 0
    %5530 = vmatmul.mubr.bf16.gmra.mxu0 %v5392
    %v5531 = vpop.f32.mrf.mxu0
    %v5532 = vadd.f32 0.0, %v5531
    %v5533 = vpop.f32.mrf.mxu0
    %v5534 = vpop.f32.mrf.mxu0
    %v5535 = vadd.f32 0.0, %v5534
    %v5536 = vpop.f32.mrf.mxu0
    %5537 = vmatprep.mubr.bf16.mxu0 0
    %5538 = vmatmul.mubr.bf16.gmra.mxu0 %v5395
    %v5539 = vpop.f32.mrf.mxu0
    %v5540 = vadd.f32 0.0, %v5539
    %v5541 = vpop.f32.mrf.mxu0
    %v5542 = vpop.f32.mrf.mxu0
    %v5543 = vadd.f32 0.0, %v5542
    %v5544 = vpop.f32.mrf.mxu0
    %5545 = vmatprep.mubr.bf16.mxu0 0
    %5546 = vmatmul.mubr.bf16.gmra.mxu0 %v5398
    %v5547 = vpop.f32.mrf.mxu0
    %v5548 = vadd.f32 0.0, %v5547
    %v5549 = vpop.f32.mrf.mxu0
    %v5550 = vpop.f32.mrf.mxu0
    %v5551 = vadd.f32 0.0, %v5550
    %v5552 = vpop.f32.mrf.mxu0
    %5553 = vmatprep.mubr.bf16.mxu0 0
    %5554 = vmatmul.mubr.bf16.gmra.mxu0 %v5401
    %v5555 = vpop.f32.mrf.mxu0
    %v5556 = vadd.f32 0.0, %v5555
    %v5557 = vpop.f32.mrf.mxu0
    %v5558 = vpop.f32.mrf.mxu0
    %v5559 = vadd.f32 0.0, %v5558
    %v5560 = vpop.f32.mrf.mxu0
    %5561 = vmatprep.mubr.bf16.mxu0 0
    %5562 = vmatmul.mubr.bf16.gmra.mxu0 %v5404
    %v5563 = vpop.f32.mrf.mxu0
    %v5564 = vadd.f32 0.0, %v5563
    %v5565 = vpop.f32.mrf.mxu0
    %v5566 = vpop.f32.mrf.mxu0
    %v5567 = vadd.f32 0.0, %v5566
    %v5568 = vpop.f32.mrf.mxu0
    %5569 = vmatprep.mubr.bf16.mxu0 0
    %5570 = vmatmul.mubr.bf16.gmra.mxu0 %v5407
    %v5571 = vpop.f32.mrf.mxu0
    %v5572 = vadd.f32 0.0, %v5571
    %v5573 = vpop.f32.mrf.mxu0
    %v5574 = vpop.f32.mrf.mxu0
    %v5575 = vadd.f32 0.0, %v5574
    %v5576 = vpop.f32.mrf.mxu0
    %5577 = vmatprep.mubr.bf16.mxu0 0
    %5578 = vmatmul.mubr.bf16.gmra.mxu0 %v5410
    %v5579 = vpop.f32.mrf.mxu0
    %v5580 = vadd.f32 0.0, %v5579
    %v5581 = vpop.f32.mrf.mxu0
    %v5582 = vpop.f32.mrf.mxu0
    %v5583 = vadd.f32 0.0, %v5582
    %v5584 = vpop.f32.mrf.mxu0
    %5585 = vmatprep.mubr.bf16.mxu0 0
    %5586 = vmatmul.mubr.bf16.gmra.mxu0 %v5413
    %v5587 = vpop.f32.mrf.mxu0
    %v5588 = vadd.f32 0.0, %v5587
    %v5589 = vpop.f32.mrf.mxu0
    %v5590 = vpop.f32.mrf.mxu0
    %v5591 = vadd.f32 0.0, %v5590
    %v5592 = vpop.f32.mrf.mxu0
    %5593 = vmatprep.mubr.bf16.mxu0 0
    %5594 = vmatmul.mubr.bf16.gmra.mxu0 %v5416
    %v5595 = vpop.f32.mrf.mxu0
    %v5596 = vadd.f32 0.0, %v5595
    %v5597 = vpop.f32.mrf.mxu0
    %v5598 = vpop.f32.mrf.mxu0
    %v5599 = vadd.f32 0.0, %v5598
    %v5600 = vpop.f32.mrf.mxu0
    %5601 = vmatprep.mubr.bf16.mxu0 0
    %5602 = vmatmul.mubr.bf16.gmra.mxu0 %v5419
    %v5603 = vpop.f32.mrf.mxu0
    %v5604 = vadd.f32 0.0, %v5603
    %v5605 = vpop.f32.mrf.mxu0
    %v5606 = vpop.f32.mrf.mxu0
    %v5607 = vadd.f32 0.0, %v5606
    %v5608 = vpop.f32.mrf.mxu0
    %5609 = vmatprep.mubr.bf16.mxu0 0
    %5610 = vmatmul.mubr.bf16.gmra.mxu0 %v5422
    %v5611 = vpop.f32.mrf.mxu0
    %v5612 = vadd.f32 0.0, %v5611
    %v5613 = vpop.f32.mrf.mxu0
    %v5614 = vpop.f32.mrf.mxu0
    %v5615 = vadd.f32 0.0, %v5614
    %v5616 = vpop.f32.mrf.mxu0
    %5617 = vmatprep.mubr.bf16.mxu0 0
    %5618 = vmatmul.mubr.bf16.gmra.mxu0 %v5425
    %v5619 = vpop.f32.mrf.mxu0
    %v5620 = vadd.f32 0.0, %v5619
    %v5621 = vpop.f32.mrf.mxu0
    %v5622 = vpop.f32.mrf.mxu0
    %v5623 = vadd.f32 0.0, %v5622
    %v5624 = vpop.f32.mrf.mxu0
    %5625 = vmatprep.mubr.bf16.mxu0 0
    %5626 = vmatmul.mubr.bf16.gmra.mxu0 %v5428
    %v5627 = vpop.f32.mrf.mxu0
    %v5628 = vadd.f32 0.0, %v5627
    %v5629 = vpop.f32.mrf.mxu0
    %v5630 = vpop.f32.mrf.mxu0
    %v5631 = vadd.f32 0.0, %v5630
    %v5632 = vpop.f32.mrf.mxu0
    %5633 = vmatprep.mubr.bf16.mxu0 0
    %5634 = vmatmul.mubr.bf16.gmra.mxu0 %v5431
    %v5635 = vpop.f32.mrf.mxu0
    %v5636 = vadd.f32 0.0, %v5635
    %v5637 = vpop.f32.mrf.mxu0
    %v5638 = vpop.f32.mrf.mxu0
    %v5639 = vadd.f32 0.0, %v5638
    %v5640 = vpop.f32.mrf.mxu0
    %5641 = vmatprep.mubr.bf16.mxu0 0
    %5642 = vmatmul.mubr.bf16.gmra.mxu0 %v5434
    %v5643 = vpop.f32.mrf.mxu0
    %v5644 = vadd.f32 0.0, %v5643
    %v5645 = vpop.f32.mrf.mxu0
    %v5646 = vpop.f32.mrf.mxu0
    %v5647 = vadd.f32 0.0, %v5646
    %v5648 = vpop.f32.mrf.mxu0
    %5649 = vmatprep.mubr.bf16.mxu0 0
    %5650 = vmatmul.mubr.bf16.gmra.mxu0 %v5437
    %v5651 = vpop.f32.mrf.mxu0
    %v5652 = vadd.f32 0.0, %v5651
    %v5653 = vpop.f32.mrf.mxu0
    %v5654 = vpop.f32.mrf.mxu0
    %v5655 = vadd.f32 0.0, %v5654
    %v5656 = vpop.f32.mrf.mxu0
    %5657 = vmatprep.mubr.bf16.mxu0 0
    %5658 = vmatmul.mubr.bf16.gmra.mxu0 %v5440
    %v5659 = vpop.f32.mrf.mxu0
    %v5660 = vadd.f32 0.0, %v5659
    %v5661 = vpop.f32.mrf.mxu0
    %v5662 = vpop.f32.mrf.mxu0
    %v5663 = vadd.f32 0.0, %v5662
    %v5664 = vpop.f32.mrf.mxu0
    %5665 = vmatprep.mubr.bf16.mxu0 0
    %5666 = vmatmul.mubr.bf16.gmra.mxu0 %v5443
    %v5667 = vpop.f32.mrf.mxu0
    %v5668 = vadd.f32 0.0, %v5667
    %v5669 = vpop.f32.mrf.mxu0
    %v5670 = vpop.f32.mrf.mxu0
    %v5671 = vadd.f32 0.0, %v5670
    %v5672 = vpop.f32.mrf.mxu0
    %5673 = vmatprep.mubr.bf16.mxu0 0
    %5674 = vmatmul.mubr.bf16.gmra.mxu0 %v5446
    %v5675 = vpop.f32.mrf.mxu0
    %v5676 = vadd.f32 0.0, %v5675
    %v5677 = vpop.f32.mrf.mxu0
    %v5678 = vpop.f32.mrf.mxu0
    %v5679 = vadd.f32 0.0, %v5678
    %v5680 = vpop.f32.mrf.mxu0
    %5681 = vmatprep.mubr.bf16.mxu0 0
    %5682 = vmatmul.mubr.bf16.gmra.mxu0 %v5449
    %v5683 = vpop.f32.mrf.mxu0
    %v5684 = vadd.f32 0.0, %v5683
    %v5685 = vpop.f32.mrf.mxu0
    %v5686 = vpop.f32.mrf.mxu0
    %v5687 = vadd.f32 0.0, %v5686
    %v5688 = vpop.f32.mrf.mxu0
    %5689 = vmatprep.mubr.bf16.mxu0 0
    %5690 = vmatmul.mubr.bf16.gmra.mxu0 %v5452
    %v5691 = vpop.f32.mrf.mxu0
    %v5692 = vadd.f32 0.0, %v5691
    %v5693 = vpop.f32.mrf.mxu0
    %v5694 = vpop.f32.mrf.mxu0
    %v5695 = vadd.f32 0.0, %v5694
    %v5696 = vpop.f32.mrf.mxu0
    %5697 = vmatprep.mubr.bf16.mxu0 0
    %5698 = vmatmul.mubr.bf16.gmra.mxu0 %v5455
    %v5699 = vpop.f32.mrf.mxu0
    %v5700 = vadd.f32 0.0, %v5699
    %v5701 = vpop.f32.mrf.mxu0
    %v5702 = vpop.f32.mrf.mxu0
    %v5703 = vadd.f32 0.0, %v5702
    %v5704 = vpop.f32.mrf.mxu0
    %5705 = vmatprep.mubr.bf16.mxu0 0
    %5706 = vmatmul.mubr.bf16.gmra.mxu0 %v5458
    %v5707 = vpop.f32.mrf.mxu0
    %v5708 = vadd.f32 0.0, %v5707
    %v5709 = vpop.f32.mrf.mxu0
    %v5710 = vpop.f32.mrf.mxu0
    %v5711 = vadd.f32 0.0, %v5710
    %v5712 = vpop.f32.mrf.mxu0
    %5713 = vmatprep.mubr.bf16.mxu0 0
    %5714 = vmatmul.mubr.bf16.gmra.mxu0 %v5461
    %v5715 = vpop.f32.mrf.mxu0
    %v5716 = vadd.f32 0.0, %v5715
    %v5717 = vpop.f32.mrf.mxu0
    %v5718 = vpop.f32.mrf.mxu0
    %v5719 = vadd.f32 0.0, %v5718
    %v5720 = vpop.f32.mrf.mxu0
    %5721 = vmatprep.mubr.bf16.mxu0 0
    %5722 = vmatmul.mubr.bf16.gmra.mxu0 %v5464
    %v5723 = vpop.f32.mrf.mxu0
    %v5724 = vadd.f32 0.0, %v5723
    %v5725 = vpop.f32.mrf.mxu0
    %v5726 = vpop.f32.mrf.mxu0
    %v5727 = vadd.f32 0.0, %v5726
    %v5728 = vpop.f32.mrf.mxu0
    %5729 = vmatprep.mubr.bf16.mxu0 0
    %5730 = vmatmul.mubr.bf16.gmra.mxu0 %v5467
    %v5731 = vpop.f32.mrf.mxu0
    %v5732 = vadd.f32 0.0, %v5731
    %v5733 = vpop.f32.mrf.mxu0
    %v5734 = vpop.f32.mrf.mxu0
    %v5735 = vadd.f32 0.0, %v5734
    %v5736 = vpop.f32.mrf.mxu0
    %5737 = vmatprep.mubr.bf16.mxu0 0
    %5738 = vmatmul.mubr.bf16.gmra.mxu0 %v5470
    %v5739 = vpop.f32.mrf.mxu0
    %v5740 = vadd.f32 0.0, %v5739
    %v5741 = vpop.f32.mrf.mxu0
    %v5742 = vpop.f32.mrf.mxu0
    %v5743 = vadd.f32 0.0, %v5742
    %v5744 = vpop.f32.mrf.mxu0
    %5745 = vmatprep.mubr.bf16.mxu0 0
    %5746 = vmatmul.mubr.bf16.gmra.mxu0 %v5473
    %v5747 = vpop.f32.mrf.mxu0
    %v5748 = vadd.f32 0.0, %v5747
    %v5749 = vpop.f32.mrf.mxu0
    %v5750 = vpop.f32.mrf.mxu0
    %v5751 = vadd.f32 0.0, %v5750
    %v5752 = vpop.f32.mrf.mxu0
    %5753 = vmatprep.mubr.bf16.mxu0 0
    %5754 = vmatmul.mubr.bf16.gmra.mxu0 %v5476
    %v5755 = vpop.f32.mrf.mxu0
    %v5756 = vadd.f32 0.0, %v5755
    %v5757 = vpop.f32.mrf.mxu0
    %v5758 = vpop.f32.mrf.mxu0
    %v5759 = vadd.f32 0.0, %v5758
    %v5760 = vpop.f32.mrf.mxu0
    %5761 = vmatprep.mubr.bf16.mxu0 0
    %5762 = vmatmul.mubr.bf16.gmra.mxu0 %v5479
    %v5763 = vpop.f32.mrf.mxu0
    %v5764 = vadd.f32 0.0, %v5763
    %v5765 = vpop.f32.mrf.mxu0
    %v5766 = vpop.f32.mrf.mxu0
    %v5767 = vadd.f32 0.0, %v5766
    %v5768 = vpop.f32.mrf.mxu0
    %5769 = vdwg.mxu0
    %v5770 = vadd.f32 %v4679, %v5516
    %v5771 = vadd.f32 %v4682, %v5519
    %v5772 = vadd.f32 %v4687, %v5524
    %v5773 = vadd.f32 %v4690, %v5527
    %v5774 = vadd.f32 %v4695, %v5532
    %v5775 = vadd.f32 %v4698, %v5535
    %v5776 = vadd.f32 %v4703, %v5540
    %v5777 = vadd.f32 %v4706, %v5543
    %v5778 = vadd.f32 %v4711, %v5548
    %v5779 = vadd.f32 %v4714, %v5551
    %v5780 = vadd.f32 %v4719, %v5556
    %v5781 = vadd.f32 %v4722, %v5559
    %v5782 = vadd.f32 %v4727, %v5564
    %v5783 = vadd.f32 %v4730, %v5567
    %v5784 = vadd.f32 %v4735, %v5572
    %v5785 = vadd.f32 %v4738, %v5575
    %v5786 = vadd.f32 %v4743, %v5580
    %v5787 = vadd.f32 %v4746, %v5583
    %v5788 = vadd.f32 %v4751, %v5588
    %v5789 = vadd.f32 %v4754, %v5591
    %v5790 = vadd.f32 %v4759, %v5596
    %v5791 = vadd.f32 %v4762, %v5599
    %v5792 = vadd.f32 %v4767, %v5604
    %v5793 = vadd.f32 %v4770, %v5607
    %v5794 = vadd.f32 %v4775, %v5612
    %v5795 = vadd.f32 %v4778, %v5615
    %v5796 = vadd.f32 %v4783, %v5620
    %v5797 = vadd.f32 %v4786, %v5623
    %v5798 = vadd.f32 %v4791, %v5628
    %v5799 = vadd.f32 %v4794, %v5631
    %v5800 = vadd.f32 %v4799, %v5636
    %v5801 = vadd.f32 %v4802, %v5639
    %v5802 = vadd.f32 %v4807, %v5644
    %v5803 = vadd.f32 %v4810, %v5647
    %v5804 = vadd.f32 %v4815, %v5652
    %v5805 = vadd.f32 %v4818, %v5655
    %v5806 = vadd.f32 %v4823, %v5660
    %v5807 = vadd.f32 %v4826, %v5663
    %v5808 = vadd.f32 %v4831, %v5668
    %v5809 = vadd.f32 %v4834, %v5671
    %v5810 = vadd.f32 %v4839, %v5676
    %v5811 = vadd.f32 %v4842, %v5679
    %v5812 = vadd.f32 %v4847, %v5684
    %v5813 = vadd.f32 %v4850, %v5687
    %v5814 = vadd.f32 %v4855, %v5692
    %v5815 = vadd.f32 %v4858, %v5695
    %v5816 = vadd.f32 %v4863, %v5700
    %v5817 = vadd.f32 %v4866, %v5703
    %v5818 = vadd.f32 %v4871, %v5708
    %v5819 = vadd.f32 %v4874, %v5711
    %v5820 = vadd.f32 %v4879, %v5716
    %v5821 = vadd.f32 %v4882, %v5719
    %v5822 = vadd.f32 %v4887, %v5724
    %v5823 = vadd.f32 %v4890, %v5727
    %v5824 = vadd.f32 %v4895, %v5732
    %v5825 = vadd.f32 %v4898, %v5735
    %v5826 = vadd.f32 %v4903, %v5740
    %v5827 = vadd.f32 %v4906, %v5743
    %v5828 = vadd.f32 %v4911, %v5748
    %v5829 = vadd.f32 %v4914, %v5751
    %v5830 = vadd.f32 %v4919, %v5756
    %v5831 = vadd.f32 %v4922, %v5759
    %v5832 = vadd.f32 %v4927, %v5764
    %v5833 = vadd.f32 %v4930, %v5767
    %v5834 = vld [vmem:[%s2748] sm:$0xf]
    %v5835 = vld [vmem:[%s2748 + $0x4] sm:$0xf]
    %v5836 = vld [vmem:[%s2748 + $0xc] sm:$0xf]
    %v5837 = vld [vmem:[%s2748 + $0x10] sm:$0xf]
    %v5838 = vld [vmem:[%s2748 + $0x18] sm:$0xf]
    %v5839 = vld [vmem:[%s2748 + $0x1c] sm:$0xf]
    %v5840 = vld [vmem:[%s2748 + $0x24] sm:$0xf]
    %v5841 = vld [vmem:[%s2748 + $0x28] sm:$0xf]
    %v5842 = vld [vmem:[%s2748 + $0x30] sm:$0xf]
    %v5843 = vld [vmem:[%s2748 + $0x34] sm:$0xf]
    %v5844 = vld [vmem:[%s2748 + $0x3c] sm:$0xf]
    %v5845 = vld [vmem:[%s2748 + $0x40] sm:$0xf]
    %v5846 = vld [vmem:[%s2748 + $0x48] sm:$0xf]
    %v5847 = vld [vmem:[%s2748 + $0x4c] sm:$0xf]
    %v5848 = vld [vmem:[%s2748 + $0x54] sm:$0xf]
    %v5849 = vld [vmem:[%s2748 + $0x58] sm:$0xf]
    %v5850 = vld [vmem:[%s2748 + $0x60] sm:$0xf]
    %v5851 = vld [vmem:[%s2748 + $0x64] sm:$0xf]
    %v5852 = vld [vmem:[%s2748 + $0x6c] sm:$0xf]
    %v5853 = vld [vmem:[%s2748 + $0x70] sm:$0xf]
    %v5854 = vld [vmem:[%s2748 + $0x78] sm:$0xf]
    %v5855 = vld [vmem:[%s2748 + $0x7c] sm:$0xf]
    %v5856 = vld [vmem:[%s2748 + $0x84] sm:$0xf]
    %v5857 = vld [vmem:[%s2748 + $0x88] sm:$0xf]
    %v5858 = vld [vmem:[%s2748 + $0x90] sm:$0xf]
    %v5859 = vld [vmem:[%s2748 + $0x94] sm:$0xf]
    %v5860 = vld [vmem:[%s2748 + $0x9c] sm:$0xf]
    %v5861 = vld [vmem:[%s2748 + $0xa0] sm:$0xf]
    %v5862 = vld [vmem:[%s2748 + $0xa8] sm:$0xf]
    %v5863 = vld [vmem:[%s2748 + $0xac] sm:$0xf]
    %v5864 = vld [vmem:[%s2748 + $0xb4] sm:$0xf]
    %v5865 = vld [vmem:[%s2748 + $0xb8] sm:$0xf]
    %v5866 = vld [vmem:[%s2748 + $0xd8] sm:$0xf]
    %v5867 = vld [vmem:[%s2748 + $0xdc] sm:$0xf]
    %v5868 = vld [vmem:[%s2748 + $0xe4] sm:$0xf]
    %v5869 = vld [vmem:[%s2748 + $0xe8] sm:$0xf]
    %v5870 = vld [vmem:[%s2748 + $0xf0] sm:$0xf]
    %v5871 = vld [vmem:[%s2748 + $0xf4] sm:$0xf]
    %v5872 = vld [vmem:[%s2748 + $0xfc] sm:$0xf]
    %v5873 = vld [vmem:[%s2748 + $0x100] sm:$0xf]
    %v5874 = vld [vmem:[%s2748 + $0x108] sm:$0xf]
    %v5875 = vld [vmem:[%s2748 + $0x10c] sm:$0xf]
    %v5876 = vld [vmem:[%s2748 + $0x114] sm:$0xf]
    %v5877 = vld [vmem:[%s2748 + $0x118] sm:$0xf]
    %v5878 = vld [vmem:[%s2748 + $0x120] sm:$0xf]
    %v5879 = vld [vmem:[%s2748 + $0x124] sm:$0xf]
    %v5880 = vld [vmem:[%s2748 + $0x12c] sm:$0xf]
    %v5881 = vld [vmem:[%s2748 + $0x130] sm:$0xf]
    %v5882 = vld [vmem:[%s2748 + $0x138] sm:$0xf]
    %v5883 = vld [vmem:[%s2748 + $0x13c] sm:$0xf]
    %v5884 = vld [vmem:[%s2748 + $0x144] sm:$0xf]
    %v5885 = vld [vmem:[%s2748 + $0x148] sm:$0xf]
    %v5886 = vld [vmem:[%s2748 + $0x150] sm:$0xf]
    %v5887 = vld [vmem:[%s2748 + $0x154] sm:$0xf]
    %v5888 = vld [vmem:[%s2748 + $0x15c] sm:$0xf]
    %v5889 = vld [vmem:[%s2748 + $0x160] sm:$0xf]
    %v5890 = vld [vmem:[%s2748 + $0x168] sm:$0xf]
    %v5891 = vld [vmem:[%s2748 + $0x16c] sm:$0xf]
    %v5892 = vld [vmem:[%s2748 + $0x174] sm:$0xf]
    %v5893 = vld [vmem:[%s2748 + $0x178] sm:$0xf]
    %v5894 = vld [vmem:[%s2748 + $0x180] sm:$0xf]
    %v5895 = vld [vmem:[%s2748 + $0x184] sm:$0xf]
    %v5896 = vld [vmem:[%s2748 + $0x18c] sm:$0xf]
    %v5897 = vld [vmem:[%s2748 + $0x190] sm:$0xf]
    %s5898 = scalar_lea.vmem [#allocation3], 96
    %v5899 = vld [vmem:[%s5898] sm:$0xf]
    %v5900 = vld [vmem:[%s5898 + $0x4] sm:$0xf]
    %v5901 = vld [vmem:[%s5898 + $0x8] sm:$0xf]
    %v5902 = vld [vmem:[%s5898 + $0xc] sm:$0xf]
    %v5903 = vld [vmem:[%s5898 + $0x10] sm:$0xf]
    %v5904 = vld [vmem:[%s5898 + $0x14] sm:$0xf]
    %v5905 = vld [vmem:[%s5898 + $0x18] sm:$0xf]
    %v5906 = vld [vmem:[%s5898 + $0x1c] sm:$0xf]
    %v5971 = vunpack.c.l.b16 %v5834
    %v5972 = vunpack.c.l.b16 %v5835
    %v5973 = vunpack.c.l.b16 %v5836
    %v5974 = vunpack.c.l.b16 %v5837
    %v5975 = vunpack.c.l.b16 %v5838
    %v5976 = vunpack.c.l.b16 %v5839
    %v5977 = vunpack.c.l.b16 %v5840
    %v5978 = vunpack.c.l.b16 %v5841
    %v5979 = vunpack.c.l.b16 %v5842
    %v5980 = vunpack.c.l.b16 %v5843
    %v5981 = vunpack.c.l.b16 %v5844
    %v5982 = vunpack.c.l.b16 %v5845
    %v5983 = vunpack.c.l.b16 %v5846
    %v5984 = vunpack.c.l.b16 %v5847
    %v5985 = vunpack.c.l.b16 %v5848
    %v5986 = vunpack.c.l.b16 %v5849
    %v5987 = vunpack.c.l.b16 %v5850
    %v5988 = vunpack.c.l.b16 %v5851
    %v5989 = vunpack.c.l.b16 %v5852
    %v5990 = vunpack.c.l.b16 %v5853
    %v5991 = vunpack.c.l.b16 %v5854
    %v5992 = vunpack.c.l.b16 %v5855
    %v5993 = vunpack.c.l.b16 %v5856
    %v5994 = vunpack.c.l.b16 %v5857
    %v5995 = vunpack.c.l.b16 %v5858
    %v5996 = vunpack.c.l.b16 %v5859
    %v5997 = vunpack.c.l.b16 %v5860
    %v5998 = vunpack.c.l.b16 %v5861
    %v5999 = vunpack.c.l.b16 %v5862
    %v6000 = vunpack.c.l.b16 %v5863
    %v6001 = vunpack.c.l.b16 %v5864
    %v6002 = vunpack.c.l.b16 %v5865
    %v6003 = vunpack.c.l.b16 %v5866
    %v6004 = vunpack.c.l.b16 %v5867
    %v6005 = vunpack.c.l.b16 %v5868
    %v6006 = vunpack.c.l.b16 %v5869
    %v6007 = vunpack.c.l.b16 %v5870
    %v6008 = vunpack.c.l.b16 %v5871
    %v6009 = vunpack.c.l.b16 %v5872
    %v6010 = vunpack.c.l.b16 %v5873
    %v6011 = vunpack.c.l.b16 %v5874
    %v6012 = vunpack.c.l.b16 %v5875
    %v6013 = vunpack.c.l.b16 %v5876
    %v6014 = vunpack.c.l.b16 %v5877
    %v6015 = vunpack.c.l.b16 %v5878
    %v6016 = vunpack.c.l.b16 %v5879
    %v6017 = vunpack.c.l.b16 %v5880
    %v6018 = vunpack.c.l.b16 %v5881
    %v6019 = vunpack.c.l.b16 %v5882
    %v6020 = vunpack.c.l.b16 %v5883
    %v6021 = vunpack.c.l.b16 %v5884
    %v6022 = vunpack.c.l.b16 %v5885
    %v6023 = vunpack.c.l.b16 %v5886
    %v6024 = vunpack.c.l.b16 %v5887
    %v6025 = vunpack.c.l.b16 %v5888
    %v6026 = vunpack.c.l.b16 %v5889
    %v6027 = vunpack.c.l.b16 %v5890
    %v6028 = vunpack.c.l.b16 %v5891
    %v6029 = vunpack.c.l.b16 %v5892
    %v6030 = vunpack.c.l.b16 %v5893
    %v6031 = vunpack.c.l.b16 %v5894
    %v6032 = vunpack.c.l.b16 %v5895
    %v6033 = vunpack.c.l.b16 %v5896
    %v6034 = vunpack.c.l.b16 %v5897
    %v6035 = vpack.c.b16 %v5972, %v5971
    %v6036 = vpack.c.b16 %v5974, %v5973
    %v6037 = vpack.c.b16 %v5976, %v5975
    %v6038 = vpack.c.b16 %v5978, %v5977
    %v6039 = vpack.c.b16 %v5980, %v5979
    %v6040 = vpack.c.b16 %v5982, %v5981
    %v6041 = vpack.c.b16 %v5984, %v5983
    %v6042 = vpack.c.b16 %v5986, %v5985
    %v6043 = vpack.c.b16 %v5988, %v5987
    %v6044 = vpack.c.b16 %v5990, %v5989
    %v6045 = vpack.c.b16 %v5992, %v5991
    %v6046 = vpack.c.b16 %v5994, %v5993
    %v6047 = vpack.c.b16 %v5996, %v5995
    %v6048 = vpack.c.b16 %v5998, %v5997
    %v6049 = vpack.c.b16 %v6000, %v5999
    %v6050 = vpack.c.b16 %v6002, %v6001
    %v6051 = vpack.c.b16 %v6004, %v6003
    %v6052 = vpack.c.b16 %v6006, %v6005
    %v6053 = vpack.c.b16 %v6008, %v6007
    %v6054 = vpack.c.b16 %v6010, %v6009
    %v6055 = vpack.c.b16 %v6012, %v6011
    %v6056 = vpack.c.b16 %v6014, %v6013
    %v6057 = vpack.c.b16 %v6016, %v6015
    %v6058 = vpack.c.b16 %v6018, %v6017
    %v6059 = vpack.c.b16 %v6020, %v6019
    %v6060 = vpack.c.b16 %v6022, %v6021
    %v6061 = vpack.c.b16 %v6024, %v6023
    %v6062 = vpack.c.b16 %v6026, %v6025
    %v6063 = vpack.c.b16 %v6028, %v6027
    %v6064 = vpack.c.b16 %v6030, %v6029
    %v6065 = vpack.c.b16 %v6032, %v6031
    %v6066 = vpack.c.b16 %v6034, %v6033
    %v6075 = vunpack.c.l.b16 %v5899
    %v6076 = vunpack.c.l.b16 %v5900
    %v6077 = vunpack.c.l.b16 %v5901
    %v6078 = vunpack.c.l.b16 %v5902
    %v6079 = vunpack.c.l.b16 %v5903
    %v6080 = vunpack.c.l.b16 %v5904
    %v6081 = vunpack.c.l.b16 %v5905
    %v6082 = vunpack.c.l.b16 %v5906
    %v6083 = vpack.c.b16 %v6076, %v6075
    %v6084 = vpack.c.b16 %v6078, %v6077
    %v6085 = vpack.c.b16 %v6080, %v6079
    %v6086 = vpack.c.b16 %v6082, %v6081
    %v6092 = vsel %vm792, %v6035, 0
    %v6095 = vsel %vm792, %v6036, 0
    %v6098 = vsel %vm792, %v6037, 0
    %v6101 = vsel %vm792, %v6038, 0
    %v6104 = vsel %vm792, %v6039, 0
    %v6107 = vsel %vm792, %v6040, 0
    %v6110 = vsel %vm792, %v6041, 0
    %v6113 = vsel %vm792, %v6042, 0
    %v6116 = vsel %vm792, %v6043, 0
    %v6119 = vsel %vm792, %v6044, 0
    %v6122 = vsel %vm792, %v6045, 0
    %v6125 = vsel %vm792, %v6046, 0
    %v6128 = vsel %vm792, %v6047, 0
    %v6131 = vsel %vm792, %v6048, 0
    %v6134 = vsel %vm792, %v6049, 0
    %v6137 = vsel %vm792, %v6050, 0
    %v6140 = vsel %vm792, %v6051, 0
    %v6143 = vsel %vm792, %v6052, 0
    %v6146 = vsel %vm792, %v6053, 0
    %v6149 = vsel %vm792, %v6054, 0
    %v6152 = vsel %vm792, %v6055, 0
    %v6155 = vsel %vm792, %v6056, 0
    %v6158 = vsel %vm792, %v6057, 0
    %v6161 = vsel %vm792, %v6058, 0
    %v6164 = vsel %vm792, %v6059, 0
    %v6167 = vsel %vm792, %v6060, 0
    %v6170 = vsel %vm792, %v6061, 0
    %v6173 = vsel %vm792, %v6062, 0
    %v6176 = vsel %vm792, %v6063, 0
    %v6179 = vsel %vm792, %v6064, 0
    %v6182 = vsel %vm792, %v6065, 0
    %v6185 = vsel %vm792, %v6066, 0
    %6187 = vmatprep.subr.bf16.mxu0 0
    %6188 = vmatpush1.bf16.msra.mxu0 0
    %6189 = vmatprep.subr.bf16.mxu0 0
    %6190 = vmatpush1.bf16.msra.mxu0 0
    %6191 = vmatprep.subr.bf16.mxu0 0
    %6192 = vmatpush1.bf16.msra.mxu0 0
    %6193 = vmatprep.subr.bf16.mxu0 0
    %6194 = vmatpush1.bf16.msra.mxu0 0
    %6195 = vmatprep.subr.bf16.mxu0 0
    %6196 = vmatpush1.bf16.msra.mxu0 %v6086
    %6197 = vmatprep.subr.bf16.mxu0 0
    %6198 = vmatpush1.bf16.msra.mxu0 %v6085
    %6199 = vmatprep.subr.bf16.mxu0 0
    %6200 = vmatpush1.bf16.msra.mxu0 %v6084
    %6201 = vmatprep.subr.bf16.mxu0 0
    %6202 = vmatpush1.bf16.msra.mxu0 %v6083
    %6203 = vmatprep.subr.bf16.mxu0 0
    %6204 = vmatpush2.bf16.msra.mxu0 0
    %6205 = vmatprep.subr.bf16.mxu0 0
    %6206 = vmatpush2.bf16.msra.mxu0 0
    %6207 = vmatprep.subr.bf16.mxu0 0
    %6208 = vmatpush2.bf16.msra.mxu0 0
    %6209 = vmatprep.subr.bf16.mxu0 0
    %6210 = vmatpush2.bf16.msra.mxu0 0
    %6211 = vmatprep.subr.bf16.mxu0 0
    %6212 = vmatpush2.bf16.msra.mxu0 0
    %6213 = vmatprep.subr.bf16.mxu0 0
    %6214 = vmatpush2.bf16.msra.mxu0 0
    %6215 = vmatprep.subr.bf16.mxu0 0
    %6216 = vmatpush2.bf16.msra.mxu0 0
    %6217 = vmatprep.subr.bf16.mxu0 0
    %6218 = vmatpush2.bf16.msra.mxu0 0
    %6219 = vmatprep.mubr.bf16.mxu0 0
    %6220 = vmatmul.mubr.bf16.gmra.mxu0 %v6092
    %v6221 = vpop.f32.mrf.mxu0
    %v6222 = vadd.f32 0.0, %v6221
    %v6223 = vpop.f32.mrf.mxu0
    %v6224 = vpop.f32.mrf.mxu0
    %v6225 = vadd.f32 0.0, %v6224
    %v6226 = vpop.f32.mrf.mxu0
    %6227 = vmatprep.mubr.bf16.mxu0 0
    %6228 = vmatmul.mubr.bf16.gmra.mxu0 %v6095
    %v6229 = vpop.f32.mrf.mxu0
    %v6230 = vadd.f32 0.0, %v6229
    %v6231 = vpop.f32.mrf.mxu0
    %v6232 = vpop.f32.mrf.mxu0
    %v6233 = vadd.f32 0.0, %v6232
    %v6234 = vpop.f32.mrf.mxu0
    %6235 = vmatprep.mubr.bf16.mxu0 0
    %6236 = vmatmul.mubr.bf16.gmra.mxu0 %v6098
    %v6237 = vpop.f32.mrf.mxu0
    %v6238 = vadd.f32 0.0, %v6237
    %v6239 = vpop.f32.mrf.mxu0
    %v6240 = vpop.f32.mrf.mxu0
    %v6241 = vadd.f32 0.0, %v6240
    %v6242 = vpop.f32.mrf.mxu0
    %6243 = vmatprep.mubr.bf16.mxu0 0
    %6244 = vmatmul.mubr.bf16.gmra.mxu0 %v6101
    %v6245 = vpop.f32.mrf.mxu0
    %v6246 = vadd.f32 0.0, %v6245
    %v6247 = vpop.f32.mrf.mxu0
    %v6248 = vpop.f32.mrf.mxu0
    %v6249 = vadd.f32 0.0, %v6248
    %v6250 = vpop.f32.mrf.mxu0
    %6251 = vmatprep.mubr.bf16.mxu0 0
    %6252 = vmatmul.mubr.bf16.gmra.mxu0 %v6104
    %v6253 = vpop.f32.mrf.mxu0
    %v6254 = vadd.f32 0.0, %v6253
    %v6255 = vpop.f32.mrf.mxu0
    %v6256 = vpop.f32.mrf.mxu0
    %v6257 = vadd.f32 0.0, %v6256
    %v6258 = vpop.f32.mrf.mxu0
    %6259 = vmatprep.mubr.bf16.mxu0 0
    %6260 = vmatmul.mubr.bf16.gmra.mxu0 %v6107
    %v6261 = vpop.f32.mrf.mxu0
    %v6262 = vadd.f32 0.0, %v6261
    %v6263 = vpop.f32.mrf.mxu0
    %v6264 = vpop.f32.mrf.mxu0
    %v6265 = vadd.f32 0.0, %v6264
    %v6266 = vpop.f32.mrf.mxu0
    %6267 = vmatprep.mubr.bf16.mxu0 0
    %6268 = vmatmul.mubr.bf16.gmra.mxu0 %v6110
    %v6269 = vpop.f32.mrf.mxu0
    %v6270 = vadd.f32 0.0, %v6269
    %v6271 = vpop.f32.mrf.mxu0
    %v6272 = vpop.f32.mrf.mxu0
    %v6273 = vadd.f32 0.0, %v6272
    %v6274 = vpop.f32.mrf.mxu0
    %6275 = vmatprep.mubr.bf16.mxu0 0
    %6276 = vmatmul.mubr.bf16.gmra.mxu0 %v6113
    %v6277 = vpop.f32.mrf.mxu0
    %v6278 = vadd.f32 0.0, %v6277
    %v6279 = vpop.f32.mrf.mxu0
    %v6280 = vpop.f32.mrf.mxu0
    %v6281 = vadd.f32 0.0, %v6280
    %v6282 = vpop.f32.mrf.mxu0
    %6283 = vmatprep.mubr.bf16.mxu0 0
    %6284 = vmatmul.mubr.bf16.gmra.mxu0 %v6116
    %v6285 = vpop.f32.mrf.mxu0
    %v6286 = vadd.f32 0.0, %v6285
    %v6287 = vpop.f32.mrf.mxu0
    %v6288 = vpop.f32.mrf.mxu0
    %v6289 = vadd.f32 0.0, %v6288
    %v6290 = vpop.f32.mrf.mxu0
    %6291 = vmatprep.mubr.bf16.mxu0 0
    %6292 = vmatmul.mubr.bf16.gmra.mxu0 %v6119
    %v6293 = vpop.f32.mrf.mxu0
    %v6294 = vadd.f32 0.0, %v6293
    %v6295 = vpop.f32.mrf.mxu0
    %v6296 = vpop.f32.mrf.mxu0
    %v6297 = vadd.f32 0.0, %v6296
    %v6298 = vpop.f32.mrf.mxu0
    %6299 = vmatprep.mubr.bf16.mxu0 0
    %6300 = vmatmul.mubr.bf16.gmra.mxu0 %v6122
    %v6301 = vpop.f32.mrf.mxu0
    %v6302 = vadd.f32 0.0, %v6301
    %v6303 = vpop.f32.mrf.mxu0
    %v6304 = vpop.f32.mrf.mxu0
    %v6305 = vadd.f32 0.0, %v6304
    %v6306 = vpop.f32.mrf.mxu0
    %6307 = vmatprep.mubr.bf16.mxu0 0
    %6308 = vmatmul.mubr.bf16.gmra.mxu0 %v6125
    %v6309 = vpop.f32.mrf.mxu0
    %v6310 = vadd.f32 0.0, %v6309
    %v6311 = vpop.f32.mrf.mxu0
    %v6312 = vpop.f32.mrf.mxu0
    %v6313 = vadd.f32 0.0, %v6312
    %v6314 = vpop.f32.mrf.mxu0
    %6315 = vmatprep.mubr.bf16.mxu0 0
    %6316 = vmatmul.mubr.bf16.gmra.mxu0 %v6128
    %v6317 = vpop.f32.mrf.mxu0
    %v6318 = vadd.f32 0.0, %v6317
    %v6319 = vpop.f32.mrf.mxu0
    %v6320 = vpop.f32.mrf.mxu0
    %v6321 = vadd.f32 0.0, %v6320
    %v6322 = vpop.f32.mrf.mxu0
    %6323 = vmatprep.mubr.bf16.mxu0 0
    %6324 = vmatmul.mubr.bf16.gmra.mxu0 %v6131
    %v6325 = vpop.f32.mrf.mxu0
    %v6326 = vadd.f32 0.0, %v6325
    %v6327 = vpop.f32.mrf.mxu0
    %v6328 = vpop.f32.mrf.mxu0
    %v6329 = vadd.f32 0.0, %v6328
    %v6330 = vpop.f32.mrf.mxu0
    %6331 = vmatprep.mubr.bf16.mxu0 0
    %6332 = vmatmul.mubr.bf16.gmra.mxu0 %v6134
    %v6333 = vpop.f32.mrf.mxu0
    %v6334 = vadd.f32 0.0, %v6333
    %v6335 = vpop.f32.mrf.mxu0
    %v6336 = vpop.f32.mrf.mxu0
    %v6337 = vadd.f32 0.0, %v6336
    %v6338 = vpop.f32.mrf.mxu0
    %6339 = vmatprep.mubr.bf16.mxu0 0
    %6340 = vmatmul.mubr.bf16.gmra.mxu0 %v6137
    %v6341 = vpop.f32.mrf.mxu0
    %v6342 = vadd.f32 0.0, %v6341
    %v6343 = vpop.f32.mrf.mxu0
    %v6344 = vpop.f32.mrf.mxu0
    %v6345 = vadd.f32 0.0, %v6344
    %v6346 = vpop.f32.mrf.mxu0
    %6347 = vmatprep.mubr.bf16.mxu0 0
    %6348 = vmatmul.mubr.bf16.gmra.mxu0 %v6140
    %v6349 = vpop.f32.mrf.mxu0
    %v6350 = vadd.f32 0.0, %v6349
    %v6351 = vpop.f32.mrf.mxu0
    %v6352 = vpop.f32.mrf.mxu0
    %v6353 = vadd.f32 0.0, %v6352
    %v6354 = vpop.f32.mrf.mxu0
    %6355 = vmatprep.mubr.bf16.mxu0 0
    %6356 = vmatmul.mubr.bf16.gmra.mxu0 %v6143
    %v6357 = vpop.f32.mrf.mxu0
    %v6358 = vadd.f32 0.0, %v6357
    %v6359 = vpop.f32.mrf.mxu0
    %v6360 = vpop.f32.mrf.mxu0
    %v6361 = vadd.f32 0.0, %v6360
    %v6362 = vpop.f32.mrf.mxu0
    %6363 = vmatprep.mubr.bf16.mxu0 0
    %6364 = vmatmul.mubr.bf16.gmra.mxu0 %v6146
    %v6365 = vpop.f32.mrf.mxu0
    %v6366 = vadd.f32 0.0, %v6365
    %v6367 = vpop.f32.mrf.mxu0
    %v6368 = vpop.f32.mrf.mxu0
    %v6369 = vadd.f32 0.0, %v6368
    %v6370 = vpop.f32.mrf.mxu0
    %6371 = vmatprep.mubr.bf16.mxu0 0
    %6372 = vmatmul.mubr.bf16.gmra.mxu0 %v6149
    %v6373 = vpop.f32.mrf.mxu0
    %v6374 = vadd.f32 0.0, %v6373
    %v6375 = vpop.f32.mrf.mxu0
    %v6376 = vpop.f32.mrf.mxu0
    %v6377 = vadd.f32 0.0, %v6376
    %v6378 = vpop.f32.mrf.mxu0
    %6379 = vmatprep.mubr.bf16.mxu0 0
    %6380 = vmatmul.mubr.bf16.gmra.mxu0 %v6152
    %v6381 = vpop.f32.mrf.mxu0
    %v6382 = vadd.f32 0.0, %v6381
    %v6383 = vpop.f32.mrf.mxu0
    %v6384 = vpop.f32.mrf.mxu0
    %v6385 = vadd.f32 0.0, %v6384
    %v6386 = vpop.f32.mrf.mxu0
    %6387 = vmatprep.mubr.bf16.mxu0 0
    %6388 = vmatmul.mubr.bf16.gmra.mxu0 %v6155
    %v6389 = vpop.f32.mrf.mxu0
    %v6390 = vadd.f32 0.0, %v6389
    %v6391 = vpop.f32.mrf.mxu0
    %v6392 = vpop.f32.mrf.mxu0
    %v6393 = vadd.f32 0.0, %v6392
    %v6394 = vpop.f32.mrf.mxu0
    %6395 = vmatprep.mubr.bf16.mxu0 0
    %6396 = vmatmul.mubr.bf16.gmra.mxu0 %v6158
    %v6397 = vpop.f32.mrf.mxu0
    %v6398 = vadd.f32 0.0, %v6397
    %v6399 = vpop.f32.mrf.mxu0
    %v6400 = vpop.f32.mrf.mxu0
    %v6401 = vadd.f32 0.0, %v6400
    %v6402 = vpop.f32.mrf.mxu0
    %6403 = vmatprep.mubr.bf16.mxu0 0
    %6404 = vmatmul.mubr.bf16.gmra.mxu0 %v6161
    %v6405 = vpop.f32.mrf.mxu0
    %v6406 = vadd.f32 0.0, %v6405
    %v6407 = vpop.f32.mrf.mxu0
    %v6408 = vpop.f32.mrf.mxu0
    %v6409 = vadd.f32 0.0, %v6408
    %v6410 = vpop.f32.mrf.mxu0
    %6411 = vmatprep.mubr.bf16.mxu0 0
    %6412 = vmatmul.mubr.bf16.gmra.mxu0 %v6164
    %v6413 = vpop.f32.mrf.mxu0
    %v6414 = vadd.f32 0.0, %v6413
    %v6415 = vpop.f32.mrf.mxu0
    %v6416 = vpop.f32.mrf.mxu0
    %v6417 = vadd.f32 0.0, %v6416
    %v6418 = vpop.f32.mrf.mxu0
    %6419 = vmatprep.mubr.bf16.mxu0 0
    %6420 = vmatmul.mubr.bf16.gmra.mxu0 %v6167
    %v6421 = vpop.f32.mrf.mxu0
    %v6422 = vadd.f32 0.0, %v6421
    %v6423 = vpop.f32.mrf.mxu0
    %v6424 = vpop.f32.mrf.mxu0
    %v6425 = vadd.f32 0.0, %v6424
    %v6426 = vpop.f32.mrf.mxu0
    %6427 = vmatprep.mubr.bf16.mxu0 0
    %6428 = vmatmul.mubr.bf16.gmra.mxu0 %v6170
    %v6429 = vpop.f32.mrf.mxu0
    %v6430 = vadd.f32 0.0, %v6429
    %v6431 = vpop.f32.mrf.mxu0
    %v6432 = vpop.f32.mrf.mxu0
    %v6433 = vadd.f32 0.0, %v6432
    %v6434 = vpop.f32.mrf.mxu0
    %6435 = vmatprep.mubr.bf16.mxu0 0
    %6436 = vmatmul.mubr.bf16.gmra.mxu0 %v6173
    %v6437 = vpop.f32.mrf.mxu0
    %v6438 = vadd.f32 0.0, %v6437
    %v6439 = vpop.f32.mrf.mxu0
    %v6440 = vpop.f32.mrf.mxu0
    %v6441 = vadd.f32 0.0, %v6440
    %v6442 = vpop.f32.mrf.mxu0
    %6443 = vmatprep.mubr.bf16.mxu0 0
    %6444 = vmatmul.mubr.bf16.gmra.mxu0 %v6176
    %v6445 = vpop.f32.mrf.mxu0
    %v6446 = vadd.f32 0.0, %v6445
    %v6447 = vpop.f32.mrf.mxu0
    %v6448 = vpop.f32.mrf.mxu0
    %v6449 = vadd.f32 0.0, %v6448
    %v6450 = vpop.f32.mrf.mxu0
    %6451 = vmatprep.mubr.bf16.mxu0 0
    %6452 = vmatmul.mubr.bf16.gmra.mxu0 %v6179
    %v6453 = vpop.f32.mrf.mxu0
    %v6454 = vadd.f32 0.0, %v6453
    %v6455 = vpop.f32.mrf.mxu0
    %v6456 = vpop.f32.mrf.mxu0
    %v6457 = vadd.f32 0.0, %v6456
    %v6458 = vpop.f32.mrf.mxu0
    %6459 = vmatprep.mubr.bf16.mxu0 0
    %6460 = vmatmul.mubr.bf16.gmra.mxu0 %v6182
    %v6461 = vpop.f32.mrf.mxu0
    %v6462 = vadd.f32 0.0, %v6461
    %v6463 = vpop.f32.mrf.mxu0
    %v6464 = vpop.f32.mrf.mxu0
    %v6465 = vadd.f32 0.0, %v6464
    %v6466 = vpop.f32.mrf.mxu0
    %6467 = vmatprep.mubr.bf16.mxu0 0
    %6468 = vmatmul.mubr.bf16.gmra.mxu0 %v6185
    %v6469 = vpop.f32.mrf.mxu0
    %v6470 = vadd.f32 0.0, %v6469
    %v6471 = vpop.f32.mrf.mxu0
    %v6472 = vpop.f32.mrf.mxu0
    %v6473 = vadd.f32 0.0, %v6472
    %v6474 = vpop.f32.mrf.mxu0
    %6475 = vdwg.mxu0
    %v6476 = vadd.f32 %v5770, %v6222
    %v6477 = vadd.f32 %v5771, %v6225
    %v6478 = vadd.f32 %v5772, %v6230
    %v6479 = vadd.f32 %v5773, %v6233
    %v6480 = vadd.f32 %v5774, %v6238
    %v6481 = vadd.f32 %v5775, %v6241
    %v6482 = vadd.f32 %v5776, %v6246
    %v6483 = vadd.f32 %v5777, %v6249
    %v6484 = vadd.f32 %v5778, %v6254
    %v6485 = vadd.f32 %v5779, %v6257
    %v6486 = vadd.f32 %v5780, %v6262
    %v6487 = vadd.f32 %v5781, %v6265
    %v6488 = vadd.f32 %v5782, %v6270
    %v6489 = vadd.f32 %v5783, %v6273
    %v6490 = vadd.f32 %v5784, %v6278
    %v6491 = vadd.f32 %v5785, %v6281
    %v6492 = vadd.f32 %v5786, %v6286
    %v6493 = vadd.f32 %v5787, %v6289
    %v6494 = vadd.f32 %v5788, %v6294
    %v6495 = vadd.f32 %v5789, %v6297
    %v6496 = vadd.f32 %v5790, %v6302
    %v6497 = vadd.f32 %v5791, %v6305
    %v6498 = vadd.f32 %v5792, %v6310
    %v6499 = vadd.f32 %v5793, %v6313
    %v6500 = vadd.f32 %v5794, %v6318
    %v6501 = vadd.f32 %v5795, %v6321
    %v6502 = vadd.f32 %v5796, %v6326
    %v6503 = vadd.f32 %v5797, %v6329
    %v6504 = vadd.f32 %v5798, %v6334
    %v6505 = vadd.f32 %v5799, %v6337
    %v6506 = vadd.f32 %v5800, %v6342
    %v6507 = vadd.f32 %v5801, %v6345
    %v6508 = vadd.f32 %v5802, %v6350
    %v6509 = vadd.f32 %v5803, %v6353
    %v6510 = vadd.f32 %v5804, %v6358
    %v6511 = vadd.f32 %v5805, %v6361
    %v6512 = vadd.f32 %v5806, %v6366
    %v6513 = vadd.f32 %v5807, %v6369
    %v6514 = vadd.f32 %v5808, %v6374
    %v6515 = vadd.f32 %v5809, %v6377
    %v6516 = vadd.f32 %v5810, %v6382
    %v6517 = vadd.f32 %v5811, %v6385
    %v6518 = vadd.f32 %v5812, %v6390
    %v6519 = vadd.f32 %v5813, %v6393
    %v6520 = vadd.f32 %v5814, %v6398
    %v6521 = vadd.f32 %v5815, %v6401
    %v6522 = vadd.f32 %v5816, %v6406
    %v6523 = vadd.f32 %v5817, %v6409
    %v6524 = vadd.f32 %v5818, %v6414
    %v6525 = vadd.f32 %v5819, %v6417
    %v6526 = vadd.f32 %v5820, %v6422
    %v6527 = vadd.f32 %v5821, %v6425
    %v6528 = vadd.f32 %v5822, %v6430
    %v6529 = vadd.f32 %v5823, %v6433
    %v6530 = vadd.f32 %v5824, %v6438
    %v6531 = vadd.f32 %v5825, %v6441
    %v6532 = vadd.f32 %v5826, %v6446
    %v6533 = vadd.f32 %v5827, %v6449
    %v6534 = vadd.f32 %v5828, %v6454
    %v6535 = vadd.f32 %v5829, %v6457
    %v6536 = vadd.f32 %v5830, %v6462
    %v6537 = vadd.f32 %v5831, %v6465
    %v6538 = vadd.f32 %v5832, %v6470
    %v6539 = vadd.f32 %v5833, %v6473
    %v6540 = vld [vmem:[%s2748] sm:$0xf]
    %v6541 = vld [vmem:[%s2748 + $0x4] sm:$0xf]
    %v6542 = vld [vmem:[%s2748 + $0x8] sm:$0x1]
    %v6543 = vld [vmem:[%s2748 + $0xc] sm:$0xf]
    %v6544 = vld [vmem:[%s2748 + $0x10] sm:$0xf]
    %v6545 = vld [vmem:[%s2748 + $0x14] sm:$0x1]
    %v6546 = vld [vmem:[%s2748 + $0x18] sm:$0xf]
    %v6547 = vld [vmem:[%s2748 + $0x1c] sm:$0xf]
    %v6548 = vld [vmem:[%s2748 + $0x20] sm:$0x1]
    %v6549 = vld [vmem:[%s2748 + $0x24] sm:$0xf]
    %v6550 = vld [vmem:[%s2748 + $0x28] sm:$0xf]
    %v6551 = vld [vmem:[%s2748 + $0x2c] sm:$0x1]
    %v6552 = vld [vmem:[%s2748 + $0x30] sm:$0xf]
    %v6553 = vld [vmem:[%s2748 + $0x34] sm:$0xf]
    %v6554 = vld [vmem:[%s2748 + $0x38] sm:$0x1]
    %v6555 = vld [vmem:[%s2748 + $0x3c] sm:$0xf]
    %v6556 = vld [vmem:[%s2748 + $0x40] sm:$0xf]
    %v6557 = vld [vmem:[%s2748 + $0x44] sm:$0x1]
    %v6558 = vld [vmem:[%s2748 + $0x48] sm:$0xf]
    %v6559 = vld [vmem:[%s2748 + $0x4c] sm:$0xf]
    %v6560 = vld [vmem:[%s2748 + $0x50] sm:$0x1]
    %v6561 = vld [vmem:[%s2748 + $0x54] sm:$0xf]
    %v6562 = vld [vmem:[%s2748 + $0x58] sm:$0xf]
    %v6563 = vld [vmem:[%s2748 + $0x5c] sm:$0x1]
    %v6564 = vld [vmem:[%s2748 + $0x60] sm:$0xf]
    %v6565 = vld [vmem:[%s2748 + $0x64] sm:$0xf]
    %v6566 = vld [vmem:[%s2748 + $0x68] sm:$0x1]
    %v6567 = vld [vmem:[%s2748 + $0x6c] sm:$0xf]
    %v6568 = vld [vmem:[%s2748 + $0x70] sm:$0xf]
    %v6569 = vld [vmem:[%s2748 + $0x74] sm:$0x1]
    %v6570 = vld [vmem:[%s2748 + $0x78] sm:$0xf]
    %v6571 = vld [vmem:[%s2748 + $0x7c] sm:$0xf]
    %v6572 = vld [vmem:[%s2748 + $0x80] sm:$0x1]
    %v6573 = vld [vmem:[%s2748 + $0x84] sm:$0xf]
    %v6574 = vld [vmem:[%s2748 + $0x88] sm:$0xf]
    %v6575 = vld [vmem:[%s2748 + $0x8c] sm:$0x1]
    %v6576 = vld [vmem:[%s2748 + $0x90] sm:$0xf]
    %v6577 = vld [vmem:[%s2748 + $0x94] sm:$0xf]
    %v6578 = vld [vmem:[%s2748 + $0x98] sm:$0x1]
    %v6579 = vld [vmem:[%s2748 + $0x9c] sm:$0xf]
    %v6580 = vld [vmem:[%s2748 + $0xa0] sm:$0xf]
    %v6581 = vld [vmem:[%s2748 + $0xa4] sm:$0x1]
    %v6582 = vld [vmem:[%s2748 + $0xa8] sm:$0xf]
    %v6583 = vld [vmem:[%s2748 + $0xac] sm:$0xf]
    %v6584 = vld [vmem:[%s2748 + $0xb0] sm:$0x1]
    %v6585 = vld [vmem:[%s2748 + $0xb4] sm:$0xf]
    %v6586 = vld [vmem:[%s2748 + $0xb8] sm:$0xf]
    %v6587 = vld [vmem:[%s2748 + $0xbc] sm:$0x1]
    %v6588 = vld [vmem:[%s2748 + $0xd8] sm:$0xf]
    %v6589 = vld [vmem:[%s2748 + $0xdc] sm:$0xf]
    %v6590 = vld [vmem:[%s2748 + $0xe0] sm:$0x1]
    %v6591 = vld [vmem:[%s2748 + $0xe4] sm:$0xf]
    %v6592 = vld [vmem:[%s2748 + $0xe8] sm:$0xf]
    %v6593 = vld [vmem:[%s2748 + $0xec] sm:$0x1]
    %v6594 = vld [vmem:[%s2748 + $0xf0] sm:$0xf]
    %v6595 = vld [vmem:[%s2748 + $0xf4] sm:$0xf]
    %v6596 = vld [vmem:[%s2748 + $0xf8] sm:$0x1]
    %v6597 = vld [vmem:[%s2748 + $0xfc] sm:$0xf]
    %v6598 = vld [vmem:[%s2748 + $0x100] sm:$0xf]
    %v6599 = vld [vmem:[%s2748 + $0x104] sm:$0x1]
    %v6600 = vld [vmem:[%s2748 + $0x108] sm:$0xf]
    %v6601 = vld [vmem:[%s2748 + $0x10c] sm:$0xf]
    %v6602 = vld [vmem:[%s2748 + $0x110] sm:$0x1]
    %v6603 = vld [vmem:[%s2748 + $0x114] sm:$0xf]
    %v6604 = vld [vmem:[%s2748 + $0x118] sm:$0xf]
    %v6605 = vld [vmem:[%s2748 + $0x11c] sm:$0x1]
    %v6606 = vld [vmem:[%s2748 + $0x120] sm:$0xf]
    %v6607 = vld [vmem:[%s2748 + $0x124] sm:$0xf]
    %v6608 = vld [vmem:[%s2748 + $0x128] sm:$0x1]
    %v6609 = vld [vmem:[%s2748 + $0x12c] sm:$0xf]
    %v6610 = vld [vmem:[%s2748 + $0x130] sm:$0xf]
    %v6611 = vld [vmem:[%s2748 + $0x134] sm:$0x1]
    %v6612 = vld [vmem:[%s2748 + $0x138] sm:$0xf]
    %v6613 = vld [vmem:[%s2748 + $0x13c] sm:$0xf]
    %v6614 = vld [vmem:[%s2748 + $0x140] sm:$0x1]
    %v6615 = vld [vmem:[%s2748 + $0x144] sm:$0xf]
    %v6616 = vld [vmem:[%s2748 + $0x148] sm:$0xf]
    %v6617 = vld [vmem:[%s2748 + $0x14c] sm:$0x1]
    %v6618 = vld [vmem:[%s2748 + $0x150] sm:$0xf]
    %v6619 = vld [vmem:[%s2748 + $0x154] sm:$0xf]
    %v6620 = vld [vmem:[%s2748 + $0x158] sm:$0x1]
    %v6621 = vld [vmem:[%s2748 + $0x15c] sm:$0xf]
    %v6622 = vld [vmem:[%s2748 + $0x160] sm:$0xf]
    %v6623 = vld [vmem:[%s2748 + $0x164] sm:$0x1]
    %v6624 = vld [vmem:[%s2748 + $0x168] sm:$0xf]
    %v6625 = vld [vmem:[%s2748 + $0x16c] sm:$0xf]
    %v6626 = vld [vmem:[%s2748 + $0x170] sm:$0x1]
    %v6627 = vld [vmem:[%s2748 + $0x174] sm:$0xf]
    %v6628 = vld [vmem:[%s2748 + $0x178] sm:$0xf]
    %v6629 = vld [vmem:[%s2748 + $0x17c] sm:$0x1]
    %v6630 = vld [vmem:[%s2748 + $0x180] sm:$0xf]
    %v6631 = vld [vmem:[%s2748 + $0x184] sm:$0xf]
    %v6632 = vld [vmem:[%s2748 + $0x188] sm:$0x1]
    %v6633 = vld [vmem:[%s2748 + $0x18c] sm:$0xf]
    %v6634 = vld [vmem:[%s2748 + $0x190] sm:$0xf]
    %v6635 = vld [vmem:[%s2748 + $0x194] sm:$0x1]
    %v6637 = vshrl.u32 %v6540, 16
    %v6639 = vrot.slane %v6637, 4
    %v6640 = vshll.u32 %v6540, 16
    %v6642 = vrot.slane %v6640, 5
    %v6643 = vor.u32 %v6639, %v6642
    %v6644 = vrot.slane %v6643, 4
    %v6646 = vshll.u32 %v6541, 16
    %v6648 = vrot.slane %v6646, 5
    %v6649 = vsel %vm3081, %v6644, %v6648
    %v6650 = vshrl.u32 %v6541, 16
    %v6652 = vrot.slane %v6650, 4
    %v6653 = vor.u32 %v6652, %v6648
    %v6654 = vrot.slane %v6653, 4
    %v6656 = vshll.u32 %v6542, 16
    %v6658 = vrot.slane %v6656, 5
    %v6659 = vsel %vm3081, %v6654, %v6658
    %v6661 = vshrl.u32 %v6543, 16
    %v6663 = vrot.slane %v6661, 4
    %v6664 = vshll.u32 %v6543, 16
    %v6666 = vrot.slane %v6664, 5
    %v6667 = vor.u32 %v6663, %v6666
    %v6668 = vrot.slane %v6667, 4
    %v6670 = vshll.u32 %v6544, 16
    %v6672 = vrot.slane %v6670, 5
    %v6673 = vsel %vm3081, %v6668, %v6672
    %v6674 = vshrl.u32 %v6544, 16
    %v6676 = vrot.slane %v6674, 4
    %v6677 = vor.u32 %v6676, %v6672
    %v6678 = vrot.slane %v6677, 4
    %v6680 = vshll.u32 %v6545, 16
    %v6682 = vrot.slane %v6680, 5
    %v6683 = vsel %vm3081, %v6678, %v6682
    %v6685 = vshrl.u32 %v6546, 16
    %v6687 = vrot.slane %v6685, 4
    %v6688 = vshll.u32 %v6546, 16
    %v6690 = vrot.slane %v6688, 5
    %v6691 = vor.u32 %v6687, %v6690
    %v6692 = vrot.slane %v6691, 4
    %v6694 = vshll.u32 %v6547, 16
    %v6696 = vrot.slane %v6694, 5
    %v6697 = vsel %vm3081, %v6692, %v6696
    %v6698 = vshrl.u32 %v6547, 16
    %v6700 = vrot.slane %v6698, 4
    %v6701 = vor.u32 %v6700, %v6696
    %v6702 = vrot.slane %v6701, 4
    %v6704 = vshll.u32 %v6548, 16
    %v6706 = vrot.slane %v6704, 5
    %v6707 = vsel %vm3081, %v6702, %v6706
    %v6709 = vshrl.u32 %v6549, 16
    %v6711 = vrot.slane %v6709, 4
    %v6712 = vshll.u32 %v6549, 16
    %v6714 = vrot.slane %v6712, 5
    %v6715 = vor.u32 %v6711, %v6714
    %v6716 = vrot.slane %v6715, 4
    %v6718 = vshll.u32 %v6550, 16
    %v6720 = vrot.slane %v6718, 5
    %v6721 = vsel %vm3081, %v6716, %v6720
    %v6722 = vshrl.u32 %v6550, 16
    %v6724 = vrot.slane %v6722, 4
    %v6725 = vor.u32 %v6724, %v6720
    %v6726 = vrot.slane %v6725, 4
    %v6728 = vshll.u32 %v6551, 16
    %v6730 = vrot.slane %v6728, 5
    %v6731 = vsel %vm3081, %v6726, %v6730
    %v6733 = vshrl.u32 %v6552, 16
    %v6735 = vrot.slane %v6733, 4
    %v6736 = vshll.u32 %v6552, 16
    %v6738 = vrot.slane %v6736, 5
    %v6739 = vor.u32 %v6735, %v6738
    %v6740 = vrot.slane %v6739, 4
    %v6742 = vshll.u32 %v6553, 16
    %v6744 = vrot.slane %v6742, 5
    %v6745 = vsel %vm3081, %v6740, %v6744
    %v6746 = vshrl.u32 %v6553, 16
    %v6748 = vrot.slane %v6746, 4
    %v6749 = vor.u32 %v6748, %v6744
    %v6750 = vrot.slane %v6749, 4
    %v6752 = vshll.u32 %v6554, 16
    %v6754 = vrot.slane %v6752, 5
    %v6755 = vsel %vm3081, %v6750, %v6754
    %v6757 = vshrl.u32 %v6555, 16
    %v6759 = vrot.slane %v6757, 4
    %v6760 = vshll.u32 %v6555, 16
    %v6762 = vrot.slane %v6760, 5
    %v6763 = vor.u32 %v6759, %v6762
    %v6764 = vrot.slane %v6763, 4
    %v6766 = vshll.u32 %v6556, 16
    %v6768 = vrot.slane %v6766, 5
    %v6769 = vsel %vm3081, %v6764, %v6768
    %v6770 = vshrl.u32 %v6556, 16
    %v6772 = vrot.slane %v6770, 4
    %v6773 = vor.u32 %v6772, %v6768
    %v6774 = vrot.slane %v6773, 4
    %v6776 = vshll.u32 %v6557, 16
    %v6778 = vrot.slane %v6776, 5
    %v6779 = vsel %vm3081, %v6774, %v6778
    %v6781 = vshrl.u32 %v6558, 16
    %v6783 = vrot.slane %v6781, 4
    %v6784 = vshll.u32 %v6558, 16
    %v6786 = vrot.slane %v6784, 5
    %v6787 = vor.u32 %v6783, %v6786
    %v6788 = vrot.slane %v6787, 4
    %v6790 = vshll.u32 %v6559, 16
    %v6792 = vrot.slane %v6790, 5
    %v6793 = vsel %vm3081, %v6788, %v6792
    %v6794 = vshrl.u32 %v6559, 16
    %v6796 = vrot.slane %v6794, 4
    %v6797 = vor.u32 %v6796, %v6792
    %v6798 = vrot.slane %v6797, 4
    %v6800 = vshll.u32 %v6560, 16
    %v6802 = vrot.slane %v6800, 5
    %v6803 = vsel %vm3081, %v6798, %v6802
    %v6805 = vshrl.u32 %v6561, 16
    %v6807 = vrot.slane %v6805, 4
    %v6808 = vshll.u32 %v6561, 16
    %v6810 = vrot.slane %v6808, 5
    %v6811 = vor.u32 %v6807, %v6810
    %v6812 = vrot.slane %v6811, 4
    %v6814 = vshll.u32 %v6562, 16
    %v6816 = vrot.slane %v6814, 5
    %v6817 = vsel %vm3081, %v6812, %v6816
    %v6818 = vshrl.u32 %v6562, 16
    %v6820 = vrot.slane %v6818, 4
    %v6821 = vor.u32 %v6820, %v6816
    %v6822 = vrot.slane %v6821, 4
    %v6824 = vshll.u32 %v6563, 16
    %v6826 = vrot.slane %v6824, 5
    %v6827 = vsel %vm3081, %v6822, %v6826
    %v6829 = vshrl.u32 %v6564, 16
    %v6831 = vrot.slane %v6829, 4
    %v6832 = vshll.u32 %v6564, 16
    %v6834 = vrot.slane %v6832, 5
    %v6835 = vor.u32 %v6831, %v6834
    %v6836 = vrot.slane %v6835, 4
    %v6838 = vshll.u32 %v6565, 16
    %v6840 = vrot.slane %v6838, 5
    %v6841 = vsel %vm3081, %v6836, %v6840
    %v6842 = vshrl.u32 %v6565, 16
    %v6844 = vrot.slane %v6842, 4
    %v6845 = vor.u32 %v6844, %v6840
    %v6846 = vrot.slane %v6845, 4
    %v6848 = vshll.u32 %v6566, 16
    %v6850 = vrot.slane %v6848, 5
    %v6851 = vsel %vm3081, %v6846, %v6850
    %v6853 = vshrl.u32 %v6567, 16
    %v6855 = vrot.slane %v6853, 4
    %v6856 = vshll.u32 %v6567, 16
    %v6858 = vrot.slane %v6856, 5
    %v6859 = vor.u32 %v6855, %v6858
    %v6860 = vrot.slane %v6859, 4
    %v6862 = vshll.u32 %v6568, 16
    %v6864 = vrot.slane %v6862, 5
    %v6865 = vsel %vm3081, %v6860, %v6864
    %v6866 = vshrl.u32 %v6568, 16
    %v6868 = vrot.slane %v6866, 4
    %v6869 = vor.u32 %v6868, %v6864
    %v6870 = vrot.slane %v6869, 4
    %v6872 = vshll.u32 %v6569, 16
    %v6874 = vrot.slane %v6872, 5
    %v6875 = vsel %vm3081, %v6870, %v6874
    %v6877 = vshrl.u32 %v6570, 16
    %v6879 = vrot.slane %v6877, 4
    %v6880 = vshll.u32 %v6570, 16
    %v6882 = vrot.slane %v6880, 5
    %v6883 = vor.u32 %v6879, %v6882
    %v6884 = vrot.slane %v6883, 4
    %v6886 = vshll.u32 %v6571, 16
    %v6888 = vrot.slane %v6886, 5
    %v6889 = vsel %vm3081, %v6884, %v6888
    %v6890 = vshrl.u32 %v6571, 16
    %v6892 = vrot.slane %v6890, 4
    %v6893 = vor.u32 %v6892, %v6888
    %v6894 = vrot.slane %v6893, 4
    %v6896 = vshll.u32 %v6572, 16
    %v6898 = vrot.slane %v6896, 5
    %v6899 = vsel %vm3081, %v6894, %v6898
    %v6901 = vshrl.u32 %v6573, 16
    %v6903 = vrot.slane %v6901, 4
    %v6904 = vshll.u32 %v6573, 16
    %v6906 = vrot.slane %v6904, 5
    %v6907 = vor.u32 %v6903, %v6906
    %v6908 = vrot.slane %v6907, 4
    %v6910 = vshll.u32 %v6574, 16
    %v6912 = vrot.slane %v6910, 5
    %v6913 = vsel %vm3081, %v6908, %v6912
    %v6914 = vshrl.u32 %v6574, 16
    %v6916 = vrot.slane %v6914, 4
    %v6917 = vor.u32 %v6916, %v6912
    %v6918 = vrot.slane %v6917, 4
    %v6920 = vshll.u32 %v6575, 16
    %v6922 = vrot.slane %v6920, 5
    %v6923 = vsel %vm3081, %v6918, %v6922
    %v6925 = vshrl.u32 %v6576, 16
    %v6927 = vrot.slane %v6925, 4
    %v6928 = vshll.u32 %v6576, 16
    %v6930 = vrot.slane %v6928, 5
    %v6931 = vor.u32 %v6927, %v6930
    %v6932 = vrot.slane %v6931, 4
    %v6934 = vshll.u32 %v6577, 16
    %v6936 = vrot.slane %v6934, 5
    %v6937 = vsel %vm3081, %v6932, %v6936
    %v6938 = vshrl.u32 %v6577, 16
    %v6940 = vrot.slane %v6938, 4
    %v6941 = vor.u32 %v6940, %v6936
    %v6942 = vrot.slane %v6941, 4
    %v6944 = vshll.u32 %v6578, 16
    %v6946 = vrot.slane %v6944, 5
    %v6947 = vsel %vm3081, %v6942, %v6946
    %v6949 = vshrl.u32 %v6579, 16
    %v6951 = vrot.slane %v6949, 4
    %v6952 = vshll.u32 %v6579, 16
    %v6954 = vrot.slane %v6952, 5
    %v6955 = vor.u32 %v6951, %v6954
    %v6956 = vrot.slane %v6955, 4
    %v6958 = vshll.u32 %v6580, 16
    %v6960 = vrot.slane %v6958, 5
    %v6961 = vsel %vm3081, %v6956, %v6960
    %v6962 = vshrl.u32 %v6580, 16
    %v6964 = vrot.slane %v6962, 4
    %v6965 = vor.u32 %v6964, %v6960
    %v6966 = vrot.slane %v6965, 4
    %v6968 = vshll.u32 %v6581, 16
    %v6970 = vrot.slane %v6968, 5
    %v6971 = vsel %vm3081, %v6966, %v6970
    %v6973 = vshrl.u32 %v6582, 16
    %v6975 = vrot.slane %v6973, 4
    %v6976 = vshll.u32 %v6582, 16
    %v6978 = vrot.slane %v6976, 5
    %v6979 = vor.u32 %v6975, %v6978
    %v6980 = vrot.slane %v6979, 4
    %v6982 = vshll.u32 %v6583, 16
    %v6984 = vrot.slane %v6982, 5
    %v6985 = vsel %vm3081, %v6980, %v6984
    %v6986 = vshrl.u32 %v6583, 16
    %v6988 = vrot.slane %v6986, 4
    %v6989 = vor.u32 %v6988, %v6984
    %v6990 = vrot.slane %v6989, 4
    %v6992 = vshll.u32 %v6584, 16
    %v6994 = vrot.slane %v6992, 5
    %v6995 = vsel %vm3081, %v6990, %v6994
    %v6997 = vshrl.u32 %v6585, 16
    %v6999 = vrot.slane %v6997, 4
    %v7000 = vshll.u32 %v6585, 16
    %v7002 = vrot.slane %v7000, 5
    %v7003 = vor.u32 %v6999, %v7002
    %v7004 = vrot.slane %v7003, 4
    %v7006 = vshll.u32 %v6586, 16
    %v7008 = vrot.slane %v7006, 5
    %v7009 = vsel %vm3081, %v7004, %v7008
    %v7010 = vshrl.u32 %v6586, 16
    %v7012 = vrot.slane %v7010, 4
    %v7013 = vor.u32 %v7012, %v7008
    %v7014 = vrot.slane %v7013, 4
    %v7016 = vshll.u32 %v6587, 16
    %v7018 = vrot.slane %v7016, 5
    %v7019 = vsel %vm3081, %v7014, %v7018
    %v7021 = vshrl.u32 %v6588, 16
    %v7023 = vrot.slane %v7021, 4
    %v7024 = vshll.u32 %v6588, 16
    %v7026 = vrot.slane %v7024, 5
    %v7027 = vor.u32 %v7023, %v7026
    %v7028 = vrot.slane %v7027, 4
    %v7030 = vshll.u32 %v6589, 16
    %v7032 = vrot.slane %v7030, 5
    %v7033 = vsel %vm3081, %v7028, %v7032
    %v7034 = vshrl.u32 %v6589, 16
    %v7036 = vrot.slane %v7034, 4
    %v7037 = vor.u32 %v7036, %v7032
    %v7038 = vrot.slane %v7037, 4
    %v7040 = vshll.u32 %v6590, 16
    %v7042 = vrot.slane %v7040, 5
    %v7043 = vsel %vm3081, %v7038, %v7042
    %v7045 = vshrl.u32 %v6591, 16
    %v7047 = vrot.slane %v7045, 4
    %v7048 = vshll.u32 %v6591, 16
    %v7050 = vrot.slane %v7048, 5
    %v7051 = vor.u32 %v7047, %v7050
    %v7052 = vrot.slane %v7051, 4
    %v7054 = vshll.u32 %v6592, 16
    %v7056 = vrot.slane %v7054, 5
    %v7057 = vsel %vm3081, %v7052, %v7056
    %v7058 = vshrl.u32 %v6592, 16
    %v7060 = vrot.slane %v7058, 4
    %v7061 = vor.u32 %v7060, %v7056
    %v7062 = vrot.slane %v7061, 4
    %v7064 = vshll.u32 %v6593, 16
    %v7066 = vrot.slane %v7064, 5
    %v7067 = vsel %vm3081, %v7062, %v7066
    %v7069 = vshrl.u32 %v6594, 16
    %v7071 = vrot.slane %v7069, 4
    %v7072 = vshll.u32 %v6594, 16
    %v7074 = vrot.slane %v7072, 5
    %v7075 = vor.u32 %v7071, %v7074
    %v7076 = vrot.slane %v7075, 4
    %v7078 = vshll.u32 %v6595, 16
    %v7080 = vrot.slane %v7078, 5
    %v7081 = vsel %vm3081, %v7076, %v7080
    %v7082 = vshrl.u32 %v6595, 16
    %v7084 = vrot.slane %v7082, 4
    %v7085 = vor.u32 %v7084, %v7080
    %v7086 = vrot.slane %v7085, 4
    %v7088 = vshll.u32 %v6596, 16
    %v7090 = vrot.slane %v7088, 5
    %v7091 = vsel %vm3081, %v7086, %v7090
    %v7093 = vshrl.u32 %v6597, 16
    %v7095 = vrot.slane %v7093, 4
    %v7096 = vshll.u32 %v6597, 16
    %v7098 = vrot.slane %v7096, 5
    %v7099 = vor.u32 %v7095, %v7098
    %v7100 = vrot.slane %v7099, 4
    %v7102 = vshll.u32 %v6598, 16
    %v7104 = vrot.slane %v7102, 5
    %v7105 = vsel %vm3081, %v7100, %v7104
    %v7106 = vshrl.u32 %v6598, 16
    %v7108 = vrot.slane %v7106, 4
    %v7109 = vor.u32 %v7108, %v7104
    %v7110 = vrot.slane %v7109, 4
    %v7112 = vshll.u32 %v6599, 16
    %v7114 = vrot.slane %v7112, 5
    %v7115 = vsel %vm3081, %v7110, %v7114
    %v7117 = vshrl.u32 %v6600, 16
    %v7119 = vrot.slane %v7117, 4
    %v7120 = vshll.u32 %v6600, 16
    %v7122 = vrot.slane %v7120, 5
    %v7123 = vor.u32 %v7119, %v7122
    %v7124 = vrot.slane %v7123, 4
    %v7126 = vshll.u32 %v6601, 16
    %v7128 = vrot.slane %v7126, 5
    %v7129 = vsel %vm3081, %v7124, %v7128
    %v7130 = vshrl.u32 %v6601, 16
    %v7132 = vrot.slane %v7130, 4
    %v7133 = vor.u32 %v7132, %v7128
    %v7134 = vrot.slane %v7133, 4
    %v7136 = vshll.u32 %v6602, 16
    %v7138 = vrot.slane %v7136, 5
    %v7139 = vsel %vm3081, %v7134, %v7138
    %v7141 = vshrl.u32 %v6603, 16
    %v7143 = vrot.slane %v7141, 4
    %v7144 = vshll.u32 %v6603, 16
    %v7146 = vrot.slane %v7144, 5
    %v7147 = vor.u32 %v7143, %v7146
    %v7148 = vrot.slane %v7147, 4
    %v7150 = vshll.u32 %v6604, 16
    %v7152 = vrot.slane %v7150, 5
    %v7153 = vsel %vm3081, %v7148, %v7152
    %v7154 = vshrl.u32 %v6604, 16
    %v7156 = vrot.slane %v7154, 4
    %v7157 = vor.u32 %v7156, %v7152
    %v7158 = vrot.slane %v7157, 4
    %v7160 = vshll.u32 %v6605, 16
    %v7162 = vrot.slane %v7160, 5
    %v7163 = vsel %vm3081, %v7158, %v7162
    %v7165 = vshrl.u32 %v6606, 16
    %v7167 = vrot.slane %v7165, 4
    %v7168 = vshll.u32 %v6606, 16
    %v7170 = vrot.slane %v7168, 5
    %v7171 = vor.u32 %v7167, %v7170
    %v7172 = vrot.slane %v7171, 4
    %v7174 = vshll.u32 %v6607, 16
    %v7176 = vrot.slane %v7174, 5
    %v7177 = vsel %vm3081, %v7172, %v7176
    %v7178 = vshrl.u32 %v6607, 16
    %v7180 = vrot.slane %v7178, 4
    %v7181 = vor.u32 %v7180, %v7176
    %v7182 = vrot.slane %v7181, 4
    %v7184 = vshll.u32 %v6608, 16
    %v7186 = vrot.slane %v7184, 5
    %v7187 = vsel %vm3081, %v7182, %v7186
    %v7189 = vshrl.u32 %v6609, 16
    %v7191 = vrot.slane %v7189, 4
    %v7192 = vshll.u32 %v6609, 16
    %v7194 = vrot.slane %v7192, 5
    %v7195 = vor.u32 %v7191, %v7194
    %v7196 = vrot.slane %v7195, 4
    %v7198 = vshll.u32 %v6610, 16
    %v7200 = vrot.slane %v7198, 5
    %v7201 = vsel %vm3081, %v7196, %v7200
    %v7202 = vshrl.u32 %v6610, 16
    %v7204 = vrot.slane %v7202, 4
    %v7205 = vor.u32 %v7204, %v7200
    %v7206 = vrot.slane %v7205, 4
    %v7208 = vshll.u32 %v6611, 16
    %v7210 = vrot.slane %v7208, 5
    %v7211 = vsel %vm3081, %v7206, %v7210
    %v7213 = vshrl.u32 %v6612, 16
    %v7215 = vrot.slane %v7213, 4
    %v7216 = vshll.u32 %v6612, 16
    %v7218 = vrot.slane %v7216, 5
    %v7219 = vor.u32 %v7215, %v7218
    %v7220 = vrot.slane %v7219, 4
    %v7222 = vshll.u32 %v6613, 16
    %v7224 = vrot.slane %v7222, 5
    %v7225 = vsel %vm3081, %v7220, %v7224
    %v7226 = vshrl.u32 %v6613, 16
    %v7228 = vrot.slane %v7226, 4
    %v7229 = vor.u32 %v7228, %v7224
    %v7230 = vrot.slane %v7229, 4
    %v7232 = vshll.u32 %v6614, 16
    %v7234 = vrot.slane %v7232, 5
    %v7235 = vsel %vm3081, %v7230, %v7234
    %v7237 = vshrl.u32 %v6615, 16
    %v7239 = vrot.slane %v7237, 4
    %v7240 = vshll.u32 %v6615, 16
    %v7242 = vrot.slane %v7240, 5
    %v7243 = vor.u32 %v7239, %v7242
    %v7244 = vrot.slane %v7243, 4
    %v7246 = vshll.u32 %v6616, 16
    %v7248 = vrot.slane %v7246, 5
    %v7249 = vsel %vm3081, %v7244, %v7248
    %v7250 = vshrl.u32 %v6616, 16
    %v7252 = vrot.slane %v7250, 4
    %v7253 = vor.u32 %v7252, %v7248
    %v7254 = vrot.slane %v7253, 4
    %v7256 = vshll.u32 %v6617, 16
    %v7258 = vrot.slane %v7256, 5
    %v7259 = vsel %vm3081, %v7254, %v7258
    %v7261 = vshrl.u32 %v6618, 16
    %v7263 = vrot.slane %v7261, 4
    %v7264 = vshll.u32 %v6618, 16
    %v7266 = vrot.slane %v7264, 5
    %v7267 = vor.u32 %v7263, %v7266
    %v7268 = vrot.slane %v7267, 4
    %v7270 = vshll.u32 %v6619, 16
    %v7272 = vrot.slane %v7270, 5
    %v7273 = vsel %vm3081, %v7268, %v7272
    %v7274 = vshrl.u32 %v6619, 16
    %v7276 = vrot.slane %v7274, 4
    %v7277 = vor.u32 %v7276, %v7272
    %v7278 = vrot.slane %v7277, 4
    %v7280 = vshll.u32 %v6620, 16
    %v7282 = vrot.slane %v7280, 5
    %v7283 = vsel %vm3081, %v7278, %v7282
    %v7285 = vshrl.u32 %v6621, 16
    %v7287 = vrot.slane %v7285, 4
    %v7288 = vshll.u32 %v6621, 16
    %v7290 = vrot.slane %v7288, 5
    %v7291 = vor.u32 %v7287, %v7290
    %v7292 = vrot.slane %v7291, 4
    %v7294 = vshll.u32 %v6622, 16
    %v7296 = vrot.slane %v7294, 5
    %v7297 = vsel %vm3081, %v7292, %v7296
    %v7298 = vshrl.u32 %v6622, 16
    %v7300 = vrot.slane %v7298, 4
    %v7301 = vor.u32 %v7300, %v7296
    %v7302 = vrot.slane %v7301, 4
    %v7304 = vshll.u32 %v6623, 16
    %v7306 = vrot.slane %v7304, 5
    %v7307 = vsel %vm3081, %v7302, %v7306
    %v7309 = vshrl.u32 %v6624, 16
    %v7311 = vrot.slane %v7309, 4
    %v7312 = vshll.u32 %v6624, 16
    %v7314 = vrot.slane %v7312, 5
    %v7315 = vor.u32 %v7311, %v7314
    %v7316 = vrot.slane %v7315, 4
    %v7318 = vshll.u32 %v6625, 16
    %v7320 = vrot.slane %v7318, 5
    %v7321 = vsel %vm3081, %v7316, %v7320
    %v7322 = vshrl.u32 %v6625, 16
    %v7324 = vrot.slane %v7322, 4
    %v7325 = vor.u32 %v7324, %v7320
    %v7326 = vrot.slane %v7325, 4
    %v7328 = vshll.u32 %v6626, 16
    %v7330 = vrot.slane %v7328, 5
    %v7331 = vsel %vm3081, %v7326, %v7330
    %v7333 = vshrl.u32 %v6627, 16
    %v7335 = vrot.slane %v7333, 4
    %v7336 = vshll.u32 %v6627, 16
    %v7338 = vrot.slane %v7336, 5
    %v7339 = vor.u32 %v7335, %v7338
    %v7340 = vrot.slane %v7339, 4
    %v7342 = vshll.u32 %v6628, 16
    %v7344 = vrot.slane %v7342, 5
    %v7345 = vsel %vm3081, %v7340, %v7344
    %v7346 = vshrl.u32 %v6628, 16
    %v7348 = vrot.slane %v7346, 4
    %v7349 = vor.u32 %v7348, %v7344
    %v7350 = vrot.slane %v7349, 4
    %v7352 = vshll.u32 %v6629, 16
    %v7354 = vrot.slane %v7352, 5
    %v7355 = vsel %vm3081, %v7350, %v7354
    %v7357 = vshrl.u32 %v6630, 16
    %v7359 = vrot.slane %v7357, 4
    %v7360 = vshll.u32 %v6630, 16
    %v7362 = vrot.slane %v7360, 5
    %v7363 = vor.u32 %v7359, %v7362
    %v7364 = vrot.slane %v7363, 4
    %v7366 = vshll.u32 %v6631, 16
    %v7368 = vrot.slane %v7366, 5
    %v7369 = vsel %vm3081, %v7364, %v7368
    %v7370 = vshrl.u32 %v6631, 16
    %v7372 = vrot.slane %v7370, 4
    %v7373 = vor.u32 %v7372, %v7368
    %v7374 = vrot.slane %v7373, 4
    %v7376 = vshll.u32 %v6632, 16
    %v7378 = vrot.slane %v7376, 5
    %v7379 = vsel %vm3081, %v7374, %v7378
    %v7381 = vshrl.u32 %v6633, 16
    %v7383 = vrot.slane %v7381, 4
    %v7384 = vshll.u32 %v6633, 16
    %v7386 = vrot.slane %v7384, 5
    %v7387 = vor.u32 %v7383, %v7386
    %v7388 = vrot.slane %v7387, 4
    %v7390 = vshll.u32 %v6634, 16
    %v7392 = vrot.slane %v7390, 5
    %v7393 = vsel %vm3081, %v7388, %v7392
    %v7394 = vshrl.u32 %v6634, 16
    %v7396 = vrot.slane %v7394, 4
    %v7397 = vor.u32 %v7396, %v7392
    %v7398 = vrot.slane %v7397, 4
    %v7400 = vshll.u32 %v6635, 16
    %v7402 = vrot.slane %v7400, 5
    %v7403 = vsel %vm3081, %v7398, %v7402
    %s7404 = scalar_lea.vmem [#allocation3], 128
    %v7405 = vld [vmem:[%s7404] sm:$0xf]
    %v7406 = vld [vmem:[%s7404 + $0x4] sm:$0xf]
    %v7407 = vld [vmem:[%s7404 + $0x8] sm:$0xf]
    %v7408 = vld [vmem:[%s7404 + $0xc] sm:$0xf]
    %v7409 = vld [vmem:[%s7404 + $0x10] sm:$0xf]
    %v7410 = vld [vmem:[%s7404 + $0x14] sm:$0xf]
    %v7411 = vld [vmem:[%s7404 + $0x18] sm:$0xf]
    %v7412 = vld [vmem:[%s7404 + $0x1c] sm:$0xf]
    %v7413 = vunpack.c.l.b16 %v6649
    %v7414 = vunpack.c.l.b16 %v6659
    %v7415 = vunpack.c.l.b16 %v6673
    %v7416 = vunpack.c.l.b16 %v6683
    %v7417 = vunpack.c.l.b16 %v6697
    %v7418 = vunpack.c.l.b16 %v6707
    %v7419 = vunpack.c.l.b16 %v6721
    %v7420 = vunpack.c.l.b16 %v6731
    %v7421 = vunpack.c.l.b16 %v6745
    %v7422 = vunpack.c.l.b16 %v6755
    %v7423 = vunpack.c.l.b16 %v6769
    %v7424 = vunpack.c.l.b16 %v6779
    %v7425 = vunpack.c.l.b16 %v6793
    %v7426 = vunpack.c.l.b16 %v6803
    %v7427 = vunpack.c.l.b16 %v6817
    %v7428 = vunpack.c.l.b16 %v6827
    %v7429 = vunpack.c.l.b16 %v6841
    %v7430 = vunpack.c.l.b16 %v6851
    %v7431 = vunpack.c.l.b16 %v6865
    %v7432 = vunpack.c.l.b16 %v6875
    %v7433 = vunpack.c.l.b16 %v6889
    %v7434 = vunpack.c.l.b16 %v6899
    %v7435 = vunpack.c.l.b16 %v6913
    %v7436 = vunpack.c.l.b16 %v6923
    %v7437 = vunpack.c.l.b16 %v6937
    %v7438 = vunpack.c.l.b16 %v6947
    %v7439 = vunpack.c.l.b16 %v6961
    %v7440 = vunpack.c.l.b16 %v6971
    %v7441 = vunpack.c.l.b16 %v6985
    %v7442 = vunpack.c.l.b16 %v6995
    %v7443 = vunpack.c.l.b16 %v7009
    %v7444 = vunpack.c.l.b16 %v7019
    %v7445 = vunpack.c.l.b16 %v7033
    %v7446 = vunpack.c.l.b16 %v7043
    %v7447 = vunpack.c.l.b16 %v7057
    %v7448 = vunpack.c.l.b16 %v7067
    %v7449 = vunpack.c.l.b16 %v7081
    %v7450 = vunpack.c.l.b16 %v7091
    %v7451 = vunpack.c.l.b16 %v7105
    %v7452 = vunpack.c.l.b16 %v7115
    %v7453 = vunpack.c.l.b16 %v7129
    %v7454 = vunpack.c.l.b16 %v7139
    %v7455 = vunpack.c.l.b16 %v7153
    %v7456 = vunpack.c.l.b16 %v7163
    %v7457 = vunpack.c.l.b16 %v7177
    %v7458 = vunpack.c.l.b16 %v7187
    %v7459 = vunpack.c.l.b16 %v7201
    %v7460 = vunpack.c.l.b16 %v7211
    %v7461 = vunpack.c.l.b16 %v7225
    %v7462 = vunpack.c.l.b16 %v7235
    %v7463 = vunpack.c.l.b16 %v7249
    %v7464 = vunpack.c.l.b16 %v7259
    %v7465 = vunpack.c.l.b16 %v7273
    %v7466 = vunpack.c.l.b16 %v7283
    %v7467 = vunpack.c.l.b16 %v7297
    %v7468 = vunpack.c.l.b16 %v7307
    %v7469 = vunpack.c.l.b16 %v7321
    %v7470 = vunpack.c.l.b16 %v7331
    %v7471 = vunpack.c.l.b16 %v7345
    %v7472 = vunpack.c.l.b16 %v7355
    %v7473 = vunpack.c.l.b16 %v7369
    %v7474 = vunpack.c.l.b16 %v7379
    %v7475 = vunpack.c.l.b16 %v7393
    %v7476 = vunpack.c.l.b16 %v7403
    %v7477 = vpack.c.b16 %v7414, %v7413
    %v7478 = vpack.c.b16 %v7416, %v7415
    %v7479 = vpack.c.b16 %v7418, %v7417
    %v7480 = vpack.c.b16 %v7420, %v7419
    %v7481 = vpack.c.b16 %v7422, %v7421
    %v7482 = vpack.c.b16 %v7424, %v7423
    %v7483 = vpack.c.b16 %v7426, %v7425
    %v7484 = vpack.c.b16 %v7428, %v7427
    %v7485 = vpack.c.b16 %v7430, %v7429
    %v7486 = vpack.c.b16 %v7432, %v7431
    %v7487 = vpack.c.b16 %v7434, %v7433
    %v7488 = vpack.c.b16 %v7436, %v7435
    %v7489 = vpack.c.b16 %v7438, %v7437
    %v7490 = vpack.c.b16 %v7440, %v7439
    %v7491 = vpack.c.b16 %v7442, %v7441
    %v7492 = vpack.c.b16 %v7444, %v7443
    %v7493 = vpack.c.b16 %v7446, %v7445
    %v7494 = vpack.c.b16 %v7448, %v7447
    %v7495 = vpack.c.b16 %v7450, %v7449
    %v7496 = vpack.c.b16 %v7452, %v7451
    %v7497 = vpack.c.b16 %v7454, %v7453
    %v7498 = vpack.c.b16 %v7456, %v7455
    %v7499 = vpack.c.b16 %v7458, %v7457
    %v7500 = vpack.c.b16 %v7460, %v7459
    %v7501 = vpack.c.b16 %v7462, %v7461
    %v7502 = vpack.c.b16 %v7464, %v7463
    %v7503 = vpack.c.b16 %v7466, %v7465
    %v7504 = vpack.c.b16 %v7468, %v7467
    %v7505 = vpack.c.b16 %v7470, %v7469
    %v7506 = vpack.c.b16 %v7472, %v7471
    %v7507 = vpack.c.b16 %v7474, %v7473
    %v7508 = vpack.c.b16 %v7476, %v7475
    %v7517 = vunpack.c.l.b16 %v7405
    %v7518 = vunpack.c.l.b16 %v7406
    %v7519 = vunpack.c.l.b16 %v7407
    %v7520 = vunpack.c.l.b16 %v7408
    %v7521 = vunpack.c.l.b16 %v7409
    %v7522 = vunpack.c.l.b16 %v7410
    %v7523 = vunpack.c.l.b16 %v7411
    %v7524 = vunpack.c.l.b16 %v7412
    %v7525 = vpack.c.b16 %v7518, %v7517
    %v7526 = vpack.c.b16 %v7520, %v7519
    %v7527 = vpack.c.b16 %v7522, %v7521
    %v7528 = vpack.c.b16 %v7524, %v7523
    %v7534 = vsel %vm792, %v7477, 0
    %v7537 = vsel %vm792, %v7478, 0
    %v7540 = vsel %vm792, %v7479, 0
    %v7543 = vsel %vm792, %v7480, 0
    %v7546 = vsel %vm792, %v7481, 0
    %v7549 = vsel %vm792, %v7482, 0
    %v7552 = vsel %vm792, %v7483, 0
    %v7555 = vsel %vm792, %v7484, 0
    %v7558 = vsel %vm792, %v7485, 0
    %v7561 = vsel %vm792, %v7486, 0
    %v7564 = vsel %vm792, %v7487, 0
    %v7567 = vsel %vm792, %v7488, 0
    %v7570 = vsel %vm792, %v7489, 0
    %v7573 = vsel %vm792, %v7490, 0
    %v7576 = vsel %vm792, %v7491, 0
    %v7579 = vsel %vm792, %v7492, 0
    %v7582 = vsel %vm792, %v7493, 0
    %v7585 = vsel %vm792, %v7494, 0
    %v7588 = vsel %vm792, %v7495, 0
    %v7591 = vsel %vm792, %v7496, 0
    %v7594 = vsel %vm792, %v7497, 0
    %v7597 = vsel %vm792, %v7498, 0
    %v7600 = vsel %vm792, %v7499, 0
    %v7603 = vsel %vm792, %v7500, 0
    %v7606 = vsel %vm792, %v7501, 0
    %v7609 = vsel %vm792, %v7502, 0
    %v7612 = vsel %vm792, %v7503, 0
    %v7615 = vsel %vm792, %v7504, 0
    %v7618 = vsel %vm792, %v7505, 0
    %v7621 = vsel %vm792, %v7506, 0
    %v7624 = vsel %vm792, %v7507, 0
    %v7627 = vsel %vm792, %v7508, 0
    %7629 = vmatprep.subr.bf16.mxu0 0
    %7630 = vmatpush1.bf16.msra.mxu0 0
    %7631 = vmatprep.subr.bf16.mxu0 0
    %7632 = vmatpush1.bf16.msra.mxu0 0
    %7633 = vmatprep.subr.bf16.mxu0 0
    %7634 = vmatpush1.bf16.msra.mxu0 0
    %7635 = vmatprep.subr.bf16.mxu0 0
    %7636 = vmatpush1.bf16.msra.mxu0 0
    %7637 = vmatprep.subr.bf16.mxu0 0
    %7638 = vmatpush1.bf16.msra.mxu0 %v7528
    %7639 = vmatprep.subr.bf16.mxu0 0
    %7640 = vmatpush1.bf16.msra.mxu0 %v7527
    %7641 = vmatprep.subr.bf16.mxu0 0
    %7642 = vmatpush1.bf16.msra.mxu0 %v7526
    %7643 = vmatprep.subr.bf16.mxu0 0
    %7644 = vmatpush1.bf16.msra.mxu0 %v7525
    %7645 = vmatprep.subr.bf16.mxu0 0
    %7646 = vmatpush2.bf16.msra.mxu0 0
    %7647 = vmatprep.subr.bf16.mxu0 0
    %7648 = vmatpush2.bf16.msra.mxu0 0
    %7649 = vmatprep.subr.bf16.mxu0 0
    %7650 = vmatpush2.bf16.msra.mxu0 0
    %7651 = vmatprep.subr.bf16.mxu0 0
    %7652 = vmatpush2.bf16.msra.mxu0 0
    %7653 = vmatprep.subr.bf16.mxu0 0
    %7654 = vmatpush2.bf16.msra.mxu0 0
    %7655 = vmatprep.subr.bf16.mxu0 0
    %7656 = vmatpush2.bf16.msra.mxu0 0
    %7657 = vmatprep.subr.bf16.mxu0 0
    %7658 = vmatpush2.bf16.msra.mxu0 0
    %7659 = vmatprep.subr.bf16.mxu0 0
    %7660 = vmatpush2.bf16.msra.mxu0 0
    %7661 = vmatprep.mubr.bf16.mxu0 0
    %7662 = vmatmul.mubr.bf16.gmra.mxu0 %v7534
    %v7663 = vpop.f32.mrf.mxu0
    %v7664 = vadd.f32 0.0, %v7663
    %v7665 = vpop.f32.mrf.mxu0
    %v7666 = vpop.f32.mrf.mxu0
    %v7667 = vadd.f32 0.0, %v7666
    %v7668 = vpop.f32.mrf.mxu0
    %7669 = vmatprep.mubr.bf16.mxu0 0
    %7670 = vmatmul.mubr.bf16.gmra.mxu0 %v7537
    %v7671 = vpop.f32.mrf.mxu0
    %v7672 = vadd.f32 0.0, %v7671
    %v7673 = vpop.f32.mrf.mxu0
    %v7674 = vpop.f32.mrf.mxu0
    %v7675 = vadd.f32 0.0, %v7674
    %v7676 = vpop.f32.mrf.mxu0
    %7677 = vmatprep.mubr.bf16.mxu0 0
    %7678 = vmatmul.mubr.bf16.gmra.mxu0 %v7540
    %v7679 = vpop.f32.mrf.mxu0
    %v7680 = vadd.f32 0.0, %v7679
    %v7681 = vpop.f32.mrf.mxu0
    %v7682 = vpop.f32.mrf.mxu0
    %v7683 = vadd.f32 0.0, %v7682
    %v7684 = vpop.f32.mrf.mxu0
    %7685 = vmatprep.mubr.bf16.mxu0 0
    %7686 = vmatmul.mubr.bf16.gmra.mxu0 %v7543
    %v7687 = vpop.f32.mrf.mxu0
    %v7688 = vadd.f32 0.0, %v7687
    %v7689 = vpop.f32.mrf.mxu0
    %v7690 = vpop.f32.mrf.mxu0
    %v7691 = vadd.f32 0.0, %v7690
    %v7692 = vpop.f32.mrf.mxu0
    %7693 = vmatprep.mubr.bf16.mxu0 0
    %7694 = vmatmul.mubr.bf16.gmra.mxu0 %v7546
    %v7695 = vpop.f32.mrf.mxu0
    %v7696 = vadd.f32 0.0, %v7695
    %v7697 = vpop.f32.mrf.mxu0
    %v7698 = vpop.f32.mrf.mxu0
    %v7699 = vadd.f32 0.0, %v7698
    %v7700 = vpop.f32.mrf.mxu0
    %7701 = vmatprep.mubr.bf16.mxu0 0
    %7702 = vmatmul.mubr.bf16.gmra.mxu0 %v7549
    %v7703 = vpop.f32.mrf.mxu0
    %v7704 = vadd.f32 0.0, %v7703
    %v7705 = vpop.f32.mrf.mxu0
    %v7706 = vpop.f32.mrf.mxu0
    %v7707 = vadd.f32 0.0, %v7706
    %v7708 = vpop.f32.mrf.mxu0
    %7709 = vmatprep.mubr.bf16.mxu0 0
    %7710 = vmatmul.mubr.bf16.gmra.mxu0 %v7552
    %v7711 = vpop.f32.mrf.mxu0
    %v7712 = vadd.f32 0.0, %v7711
    %v7713 = vpop.f32.mrf.mxu0
    %v7714 = vpop.f32.mrf.mxu0
    %v7715 = vadd.f32 0.0, %v7714
    %v7716 = vpop.f32.mrf.mxu0
    %7717 = vmatprep.mubr.bf16.mxu0 0
    %7718 = vmatmul.mubr.bf16.gmra.mxu0 %v7555
    %v7719 = vpop.f32.mrf.mxu0
    %v7720 = vadd.f32 0.0, %v7719
    %v7721 = vpop.f32.mrf.mxu0
    %v7722 = vpop.f32.mrf.mxu0
    %v7723 = vadd.f32 0.0, %v7722
    %v7724 = vpop.f32.mrf.mxu0
    %7725 = vmatprep.mubr.bf16.mxu0 0
    %7726 = vmatmul.mubr.bf16.gmra.mxu0 %v7558
    %v7727 = vpop.f32.mrf.mxu0
    %v7728 = vadd.f32 0.0, %v7727
    %v7729 = vpop.f32.mrf.mxu0
    %v7730 = vpop.f32.mrf.mxu0
    %v7731 = vadd.f32 0.0, %v7730
    %v7732 = vpop.f32.mrf.mxu0
    %7733 = vmatprep.mubr.bf16.mxu0 0
    %7734 = vmatmul.mubr.bf16.gmra.mxu0 %v7561
    %v7735 = vpop.f32.mrf.mxu0
    %v7736 = vadd.f32 0.0, %v7735
    %v7737 = vpop.f32.mrf.mxu0
    %v7738 = vpop.f32.mrf.mxu0
    %v7739 = vadd.f32 0.0, %v7738
    %v7740 = vpop.f32.mrf.mxu0
    %7741 = vmatprep.mubr.bf16.mxu0 0
    %7742 = vmatmul.mubr.bf16.gmra.mxu0 %v7564
    %v7743 = vpop.f32.mrf.mxu0
    %v7744 = vadd.f32 0.0, %v7743
    %v7745 = vpop.f32.mrf.mxu0
    %v7746 = vpop.f32.mrf.mxu0
    %v7747 = vadd.f32 0.0, %v7746
    %v7748 = vpop.f32.mrf.mxu0
    %7749 = vmatprep.mubr.bf16.mxu0 0
    %7750 = vmatmul.mubr.bf16.gmra.mxu0 %v7567
    %v7751 = vpop.f32.mrf.mxu0
    %v7752 = vadd.f32 0.0, %v7751
    %v7753 = vpop.f32.mrf.mxu0
    %v7754 = vpop.f32.mrf.mxu0
    %v7755 = vadd.f32 0.0, %v7754
    %v7756 = vpop.f32.mrf.mxu0
    %7757 = vmatprep.mubr.bf16.mxu0 0
    %7758 = vmatmul.mubr.bf16.gmra.mxu0 %v7570
    %v7759 = vpop.f32.mrf.mxu0
    %v7760 = vadd.f32 0.0, %v7759
    %v7761 = vpop.f32.mrf.mxu0
    %v7762 = vpop.f32.mrf.mxu0
    %v7763 = vadd.f32 0.0, %v7762
    %v7764 = vpop.f32.mrf.mxu0
    %7765 = vmatprep.mubr.bf16.mxu0 0
    %7766 = vmatmul.mubr.bf16.gmra.mxu0 %v7573
    %v7767 = vpop.f32.mrf.mxu0
    %v7768 = vadd.f32 0.0, %v7767
    %v7769 = vpop.f32.mrf.mxu0
    %v7770 = vpop.f32.mrf.mxu0
    %v7771 = vadd.f32 0.0, %v7770
    %v7772 = vpop.f32.mrf.mxu0
    %7773 = vmatprep.mubr.bf16.mxu0 0
    %7774 = vmatmul.mubr.bf16.gmra.mxu0 %v7576
    %v7775 = vpop.f32.mrf.mxu0
    %v7776 = vadd.f32 0.0, %v7775
    %v7777 = vpop.f32.mrf.mxu0
    %v7778 = vpop.f32.mrf.mxu0
    %v7779 = vadd.f32 0.0, %v7778
    %v7780 = vpop.f32.mrf.mxu0
    %7781 = vmatprep.mubr.bf16.mxu0 0
    %7782 = vmatmul.mubr.bf16.gmra.mxu0 %v7579
    %v7783 = vpop.f32.mrf.mxu0
    %v7784 = vadd.f32 0.0, %v7783
    %v7785 = vpop.f32.mrf.mxu0
    %v7786 = vpop.f32.mrf.mxu0
    %v7787 = vadd.f32 0.0, %v7786
    %v7788 = vpop.f32.mrf.mxu0
    %7789 = vmatprep.mubr.bf16.mxu0 0
    %7790 = vmatmul.mubr.bf16.gmra.mxu0 %v7582
    %v7791 = vpop.f32.mrf.mxu0
    %v7792 = vadd.f32 0.0, %v7791
    %v7793 = vpop.f32.mrf.mxu0
    %v7794 = vpop.f32.mrf.mxu0
    %v7795 = vadd.f32 0.0, %v7794
    %v7796 = vpop.f32.mrf.mxu0
    %7797 = vmatprep.mubr.bf16.mxu0 0
    %7798 = vmatmul.mubr.bf16.gmra.mxu0 %v7585
    %v7799 = vpop.f32.mrf.mxu0
    %v7800 = vadd.f32 0.0, %v7799
    %v7801 = vpop.f32.mrf.mxu0
    %v7802 = vpop.f32.mrf.mxu0
    %v7803 = vadd.f32 0.0, %v7802
    %v7804 = vpop.f32.mrf.mxu0
    %7805 = vmatprep.mubr.bf16.mxu0 0
    %7806 = vmatmul.mubr.bf16.gmra.mxu0 %v7588
    %v7807 = vpop.f32.mrf.mxu0
    %v7808 = vadd.f32 0.0, %v7807
    %v7809 = vpop.f32.mrf.mxu0
    %v7810 = vpop.f32.mrf.mxu0
    %v7811 = vadd.f32 0.0, %v7810
    %v7812 = vpop.f32.mrf.mxu0
    %7813 = vmatprep.mubr.bf16.mxu0 0
    %7814 = vmatmul.mubr.bf16.gmra.mxu0 %v7591
    %v7815 = vpop.f32.mrf.mxu0
    %v7816 = vadd.f32 0.0, %v7815
    %v7817 = vpop.f32.mrf.mxu0
    %v7818 = vpop.f32.mrf.mxu0
    %v7819 = vadd.f32 0.0, %v7818
    %v7820 = vpop.f32.mrf.mxu0
    %7821 = vmatprep.mubr.bf16.mxu0 0
    %7822 = vmatmul.mubr.bf16.gmra.mxu0 %v7594
    %v7823 = vpop.f32.mrf.mxu0
    %v7824 = vadd.f32 0.0, %v7823
    %v7825 = vpop.f32.mrf.mxu0
    %v7826 = vpop.f32.mrf.mxu0
    %v7827 = vadd.f32 0.0, %v7826
    %v7828 = vpop.f32.mrf.mxu0
    %7829 = vmatprep.mubr.bf16.mxu0 0
    %7830 = vmatmul.mubr.bf16.gmra.mxu0 %v7597
    %v7831 = vpop.f32.mrf.mxu0
    %v7832 = vadd.f32 0.0, %v7831
    %v7833 = vpop.f32.mrf.mxu0
    %v7834 = vpop.f32.mrf.mxu0
    %v7835 = vadd.f32 0.0, %v7834
    %v7836 = vpop.f32.mrf.mxu0
    %7837 = vmatprep.mubr.bf16.mxu0 0
    %7838 = vmatmul.mubr.bf16.gmra.mxu0 %v7600
    %v7839 = vpop.f32.mrf.mxu0
    %v7840 = vadd.f32 0.0, %v7839
    %v7841 = vpop.f32.mrf.mxu0
    %v7842 = vpop.f32.mrf.mxu0
    %v7843 = vadd.f32 0.0, %v7842
    %v7844 = vpop.f32.mrf.mxu0
    %7845 = vmatprep.mubr.bf16.mxu0 0
    %7846 = vmatmul.mubr.bf16.gmra.mxu0 %v7603
    %v7847 = vpop.f32.mrf.mxu0
    %v7848 = vadd.f32 0.0, %v7847
    %v7849 = vpop.f32.mrf.mxu0
    %v7850 = vpop.f32.mrf.mxu0
    %v7851 = vadd.f32 0.0, %v7850
    %v7852 = vpop.f32.mrf.mxu0
    %7853 = vmatprep.mubr.bf16.mxu0 0
    %7854 = vmatmul.mubr.bf16.gmra.mxu0 %v7606
    %v7855 = vpop.f32.mrf.mxu0
    %v7856 = vadd.f32 0.0, %v7855
    %v7857 = vpop.f32.mrf.mxu0
    %v7858 = vpop.f32.mrf.mxu0
    %v7859 = vadd.f32 0.0, %v7858
    %v7860 = vpop.f32.mrf.mxu0
    %7861 = vmatprep.mubr.bf16.mxu0 0
    %7862 = vmatmul.mubr.bf16.gmra.mxu0 %v7609
    %v7863 = vpop.f32.mrf.mxu0
    %v7864 = vadd.f32 0.0, %v7863
    %v7865 = vpop.f32.mrf.mxu0
    %v7866 = vpop.f32.mrf.mxu0
    %v7867 = vadd.f32 0.0, %v7866
    %v7868 = vpop.f32.mrf.mxu0
    %7869 = vmatprep.mubr.bf16.mxu0 0
    %7870 = vmatmul.mubr.bf16.gmra.mxu0 %v7612
    %v7871 = vpop.f32.mrf.mxu0
    %v7872 = vadd.f32 0.0, %v7871
    %v7873 = vpop.f32.mrf.mxu0
    %v7874 = vpop.f32.mrf.mxu0
    %v7875 = vadd.f32 0.0, %v7874
    %v7876 = vpop.f32.mrf.mxu0
    %7877 = vmatprep.mubr.bf16.mxu0 0
    %7878 = vmatmul.mubr.bf16.gmra.mxu0 %v7615
    %v7879 = vpop.f32.mrf.mxu0
    %v7880 = vadd.f32 0.0, %v7879
    %v7881 = vpop.f32.mrf.mxu0
    %v7882 = vpop.f32.mrf.mxu0
    %v7883 = vadd.f32 0.0, %v7882
    %v7884 = vpop.f32.mrf.mxu0
    %7885 = vmatprep.mubr.bf16.mxu0 0
    %7886 = vmatmul.mubr.bf16.gmra.mxu0 %v7618
    %v7887 = vpop.f32.mrf.mxu0
    %v7888 = vadd.f32 0.0, %v7887
    %v7889 = vpop.f32.mrf.mxu0
    %v7890 = vpop.f32.mrf.mxu0
    %v7891 = vadd.f32 0.0, %v7890
    %v7892 = vpop.f32.mrf.mxu0
    %7893 = vmatprep.mubr.bf16.mxu0 0
    %7894 = vmatmul.mubr.bf16.gmra.mxu0 %v7621
    %v7895 = vpop.f32.mrf.mxu0
    %v7896 = vadd.f32 0.0, %v7895
    %v7897 = vpop.f32.mrf.mxu0
    %v7898 = vpop.f32.mrf.mxu0
    %v7899 = vadd.f32 0.0, %v7898
    %v7900 = vpop.f32.mrf.mxu0
    %7901 = vmatprep.mubr.bf16.mxu0 0
    %7902 = vmatmul.mubr.bf16.gmra.mxu0 %v7624
    %v7903 = vpop.f32.mrf.mxu0
    %v7904 = vadd.f32 0.0, %v7903
    %v7905 = vpop.f32.mrf.mxu0
    %v7906 = vpop.f32.mrf.mxu0
    %v7907 = vadd.f32 0.0, %v7906
    %v7908 = vpop.f32.mrf.mxu0
    %7909 = vmatprep.mubr.bf16.mxu0 0
    %7910 = vmatmul.mubr.bf16.gmra.mxu0 %v7627
    %v7911 = vpop.f32.mrf.mxu0
    %v7912 = vadd.f32 0.0, %v7911
    %v7913 = vpop.f32.mrf.mxu0
    %v7914 = vpop.f32.mrf.mxu0
    %v7915 = vadd.f32 0.0, %v7914
    %v7916 = vpop.f32.mrf.mxu0
    %7917 = vdwg.mxu0
    %v7918 = vadd.f32 %v6476, %v7664
    %v7919 = vadd.f32 %v6477, %v7667
    %v7920 = vadd.f32 %v6478, %v7672
    %v7921 = vadd.f32 %v6479, %v7675
    %v7922 = vadd.f32 %v6480, %v7680
    %v7923 = vadd.f32 %v6481, %v7683
    %v7924 = vadd.f32 %v6482, %v7688
    %v7925 = vadd.f32 %v6483, %v7691
    %v7926 = vadd.f32 %v6484, %v7696
    %v7927 = vadd.f32 %v6485, %v7699
    %v7928 = vadd.f32 %v6486, %v7704
    %v7929 = vadd.f32 %v6487, %v7707
    %v7930 = vadd.f32 %v6488, %v7712
    %v7931 = vadd.f32 %v6489, %v7715
    %v7932 = vadd.f32 %v6490, %v7720
    %v7933 = vadd.f32 %v6491, %v7723
    %v7934 = vadd.f32 %v6492, %v7728
    %v7935 = vadd.f32 %v6493, %v7731
    %v7936 = vadd.f32 %v6494, %v7736
    %v7937 = vadd.f32 %v6495, %v7739
    %v7938 = vadd.f32 %v6496, %v7744
    %v7939 = vadd.f32 %v6497, %v7747
    %v7940 = vadd.f32 %v6498, %v7752
    %v7941 = vadd.f32 %v6499, %v7755
    %v7942 = vadd.f32 %v6500, %v7760
    %v7943 = vadd.f32 %v6501, %v7763
    %v7944 = vadd.f32 %v6502, %v7768
    %v7945 = vadd.f32 %v6503, %v7771
    %v7946 = vadd.f32 %v6504, %v7776
    %v7947 = vadd.f32 %v6505, %v7779
    %v7948 = vadd.f32 %v6506, %v7784
    %v7949 = vadd.f32 %v6507, %v7787
    %v7950 = vadd.f32 %v6508, %v7792
    %v7951 = vadd.f32 %v6509, %v7795
    %v7952 = vadd.f32 %v6510, %v7800
    %v7953 = vadd.f32 %v6511, %v7803
    %v7954 = vadd.f32 %v6512, %v7808
    %v7955 = vadd.f32 %v6513, %v7811
    %v7956 = vadd.f32 %v6514, %v7816
    %v7957 = vadd.f32 %v6515, %v7819
    %v7958 = vadd.f32 %v6516, %v7824
    %v7959 = vadd.f32 %v6517, %v7827
    %v7960 = vadd.f32 %v6518, %v7832
    %v7961 = vadd.f32 %v6519, %v7835
    %v7962 = vadd.f32 %v6520, %v7840
    %v7963 = vadd.f32 %v6521, %v7843
    %v7964 = vadd.f32 %v6522, %v7848
    %v7965 = vadd.f32 %v6523, %v7851
    %v7966 = vadd.f32 %v6524, %v7856
    %v7967 = vadd.f32 %v6525, %v7859
    %v7968 = vadd.f32 %v6526, %v7864
    %v7969 = vadd.f32 %v6527, %v7867
    %v7970 = vadd.f32 %v6528, %v7872
    %v7971 = vadd.f32 %v6529, %v7875
    %v7972 = vadd.f32 %v6530, %v7880
    %v7973 = vadd.f32 %v6531, %v7883
    %v7974 = vadd.f32 %v6532, %v7888
    %v7975 = vadd.f32 %v6533, %v7891
    %v7976 = vadd.f32 %v6534, %v7896
    %v7977 = vadd.f32 %v6535, %v7899
    %v7978 = vadd.f32 %v6536, %v7904
    %v7979 = vadd.f32 %v6537, %v7907
    %v7980 = vadd.f32 %v6538, %v7912
    %v7981 = vadd.f32 %v6539, %v7915
    %v7982 = vld [vmem:[%s2748] sm:$0xe]
    %v7983 = vld [vmem:[%s2748 + $0xc] sm:$0xe]
    %v7984 = vld [vmem:[%s2748 + $0x18] sm:$0xe]
    %v7985 = vld [vmem:[%s2748 + $0x24] sm:$0xe]
    %v7986 = vld [vmem:[%s2748 + $0x30] sm:$0xe]
    %v7987 = vld [vmem:[%s2748 + $0x3c] sm:$0xe]
    %v7988 = vld [vmem:[%s2748 + $0x48] sm:$0xe]
    %v7989 = vld [vmem:[%s2748 + $0x54] sm:$0xe]
    %v7990 = vld [vmem:[%s2748 + $0x60] sm:$0xe]
    %v7991 = vld [vmem:[%s2748 + $0x6c] sm:$0xe]
    %v7992 = vld [vmem:[%s2748 + $0x78] sm:$0xe]
    %v7993 = vld [vmem:[%s2748 + $0x84] sm:$0xe]
    %v7994 = vld [vmem:[%s2748 + $0x90] sm:$0xe]
    %v7995 = vld [vmem:[%s2748 + $0x9c] sm:$0xe]
    %v7996 = vld [vmem:[%s2748 + $0xa8] sm:$0xe]
    %v7997 = vld [vmem:[%s2748 + $0xb4] sm:$0xe]
    %v7998 = vld [vmem:[%s2748 + $0xd8] sm:$0xe]
    %v7999 = vld [vmem:[%s2748 + $0xe4] sm:$0xe]
    %v8000 = vld [vmem:[%s2748 + $0xf0] sm:$0xe]
    %v8001 = vld [vmem:[%s2748 + $0xfc] sm:$0xe]
    %v8002 = vld [vmem:[%s2748 + $0x108] sm:$0xe]
    %v8003 = vld [vmem:[%s2748 + $0x114] sm:$0xe]
    %v8004 = vld [vmem:[%s2748 + $0x120] sm:$0xe]
    %v8005 = vld [vmem:[%s2748 + $0x12c] sm:$0xe]
    %v8006 = vld [vmem:[%s2748 + $0x138] sm:$0xe]
    %v8007 = vld [vmem:[%s2748 + $0x144] sm:$0xe]
    %v8008 = vld [vmem:[%s2748 + $0x150] sm:$0xe]
    %v8009 = vld [vmem:[%s2748 + $0x15c] sm:$0xe]
    %v8010 = vld [vmem:[%s2748 + $0x168] sm:$0xe]
    %v8011 = vld [vmem:[%s2748 + $0x174] sm:$0xe]
    %v8012 = vld [vmem:[%s2748 + $0x180] sm:$0xe]
    %v8013 = vld [vmem:[%s2748 + $0x18c] sm:$0xe]
    %v8110 = vrot.slane %v7982, 5
    %v8111 = vrot.slane %v8110, 4
    %v8112 = vrot.slane %v6541, 5
    %v8113 = vsel %vm5031, %v8111, %v8112
    %v8114 = vrot.slane %v8112, 4
    %v8115 = vrot.slane %v6542, 5
    %v8116 = vsel %vm5031, %v8114, %v8115
    %v8117 = vrot.slane %v7983, 5
    %v8118 = vrot.slane %v8117, 4
    %v8119 = vrot.slane %v6544, 5
    %v8120 = vsel %vm5031, %v8118, %v8119
    %v8121 = vrot.slane %v8119, 4
    %v8122 = vrot.slane %v6545, 5
    %v8123 = vsel %vm5031, %v8121, %v8122
    %v8124 = vrot.slane %v7984, 5
    %v8125 = vrot.slane %v8124, 4
    %v8126 = vrot.slane %v6547, 5
    %v8127 = vsel %vm5031, %v8125, %v8126
    %v8128 = vrot.slane %v8126, 4
    %v8129 = vrot.slane %v6548, 5
    %v8130 = vsel %vm5031, %v8128, %v8129
    %v8131 = vrot.slane %v7985, 5
    %v8132 = vrot.slane %v8131, 4
    %v8133 = vrot.slane %v6550, 5
    %v8134 = vsel %vm5031, %v8132, %v8133
    %v8135 = vrot.slane %v8133, 4
    %v8136 = vrot.slane %v6551, 5
    %v8137 = vsel %vm5031, %v8135, %v8136
    %v8138 = vrot.slane %v7986, 5
    %v8139 = vrot.slane %v8138, 4
    %v8140 = vrot.slane %v6553, 5
    %v8141 = vsel %vm5031, %v8139, %v8140
    %v8142 = vrot.slane %v8140, 4
    %v8143 = vrot.slane %v6554, 5
    %v8144 = vsel %vm5031, %v8142, %v8143
    %v8145 = vrot.slane %v7987, 5
    %v8146 = vrot.slane %v8145, 4
    %v8147 = vrot.slane %v6556, 5
    %v8148 = vsel %vm5031, %v8146, %v8147
    %v8149 = vrot.slane %v8147, 4
    %v8150 = vrot.slane %v6557, 5
    %v8151 = vsel %vm5031, %v8149, %v8150
    %v8152 = vrot.slane %v7988, 5
    %v8153 = vrot.slane %v8152, 4
    %v8154 = vrot.slane %v6559, 5
    %v8155 = vsel %vm5031, %v8153, %v8154
    %v8156 = vrot.slane %v8154, 4
    %v8157 = vrot.slane %v6560, 5
    %v8158 = vsel %vm5031, %v8156, %v8157
    %v8159 = vrot.slane %v7989, 5
    %v8160 = vrot.slane %v8159, 4
    %v8161 = vrot.slane %v6562, 5
    %v8162 = vsel %vm5031, %v8160, %v8161
    %v8163 = vrot.slane %v8161, 4
    %v8164 = vrot.slane %v6563, 5
    %v8165 = vsel %vm5031, %v8163, %v8164
    %v8166 = vrot.slane %v7990, 5
    %v8167 = vrot.slane %v8166, 4
    %v8168 = vrot.slane %v6565, 5
    %v8169 = vsel %vm5031, %v8167, %v8168
    %v8170 = vrot.slane %v8168, 4
    %v8171 = vrot.slane %v6566, 5
    %v8172 = vsel %vm5031, %v8170, %v8171
    %v8173 = vrot.slane %v7991, 5
    %v8174 = vrot.slane %v8173, 4
    %v8175 = vrot.slane %v6568, 5
    %v8176 = vsel %vm5031, %v8174, %v8175
    %v8177 = vrot.slane %v8175, 4
    %v8178 = vrot.slane %v6569, 5
    %v8179 = vsel %vm5031, %v8177, %v8178
    %v8180 = vrot.slane %v7992, 5
    %v8181 = vrot.slane %v8180, 4
    %v8182 = vrot.slane %v6571, 5
    %v8183 = vsel %vm5031, %v8181, %v8182
    %v8184 = vrot.slane %v8182, 4
    %v8185 = vrot.slane %v6572, 5
    %v8186 = vsel %vm5031, %v8184, %v8185
    %v8187 = vrot.slane %v7993, 5
    %v8188 = vrot.slane %v8187, 4
    %v8189 = vrot.slane %v6574, 5
    %v8190 = vsel %vm5031, %v8188, %v8189
    %v8191 = vrot.slane %v8189, 4
    %v8192 = vrot.slane %v6575, 5
    %v8193 = vsel %vm5031, %v8191, %v8192
    %v8194 = vrot.slane %v7994, 5
    %v8195 = vrot.slane %v8194, 4
    %v8196 = vrot.slane %v6577, 5
    %v8197 = vsel %vm5031, %v8195, %v8196
    %v8198 = vrot.slane %v8196, 4
    %v8199 = vrot.slane %v6578, 5
    %v8200 = vsel %vm5031, %v8198, %v8199
    %v8201 = vrot.slane %v7995, 5
    %v8202 = vrot.slane %v8201, 4
    %v8203 = vrot.slane %v6580, 5
    %v8204 = vsel %vm5031, %v8202, %v8203
    %v8205 = vrot.slane %v8203, 4
    %v8206 = vrot.slane %v6581, 5
    %v8207 = vsel %vm5031, %v8205, %v8206
    %v8208 = vrot.slane %v7996, 5
    %v8209 = vrot.slane %v8208, 4
    %v8210 = vrot.slane %v6583, 5
    %v8211 = vsel %vm5031, %v8209, %v8210
    %v8212 = vrot.slane %v8210, 4
    %v8213 = vrot.slane %v6584, 5
    %v8214 = vsel %vm5031, %v8212, %v8213
    %v8215 = vrot.slane %v7997, 5
    %v8216 = vrot.slane %v8215, 4
    %v8217 = vrot.slane %v6586, 5
    %v8218 = vsel %vm5031, %v8216, %v8217
    %v8219 = vrot.slane %v8217, 4
    %v8220 = vrot.slane %v6587, 5
    %v8221 = vsel %vm5031, %v8219, %v8220
    %v8222 = vrot.slane %v7998, 5
    %v8223 = vrot.slane %v8222, 4
    %v8224 = vrot.slane %v6589, 5
    %v8225 = vsel %vm5031, %v8223, %v8224
    %v8226 = vrot.slane %v8224, 4
    %v8227 = vrot.slane %v6590, 5
    %v8228 = vsel %vm5031, %v8226, %v8227
    %v8229 = vrot.slane %v7999, 5
    %v8230 = vrot.slane %v8229, 4
    %v8231 = vrot.slane %v6592, 5
    %v8232 = vsel %vm5031, %v8230, %v8231
    %v8233 = vrot.slane %v8231, 4
    %v8234 = vrot.slane %v6593, 5
    %v8235 = vsel %vm5031, %v8233, %v8234
    %v8236 = vrot.slane %v8000, 5
    %v8237 = vrot.slane %v8236, 4
    %v8238 = vrot.slane %v6595, 5
    %v8239 = vsel %vm5031, %v8237, %v8238
    %v8240 = vrot.slane %v8238, 4
    %v8241 = vrot.slane %v6596, 5
    %v8242 = vsel %vm5031, %v8240, %v8241
    %v8243 = vrot.slane %v8001, 5
    %v8244 = vrot.slane %v8243, 4
    %v8245 = vrot.slane %v6598, 5
    %v8246 = vsel %vm5031, %v8244, %v8245
    %v8247 = vrot.slane %v8245, 4
    %v8248 = vrot.slane %v6599, 5
    %v8249 = vsel %vm5031, %v8247, %v8248
    %v8250 = vrot.slane %v8002, 5
    %v8251 = vrot.slane %v8250, 4
    %v8252 = vrot.slane %v6601, 5
    %v8253 = vsel %vm5031, %v8251, %v8252
    %v8254 = vrot.slane %v8252, 4
    %v8255 = vrot.slane %v6602, 5
    %v8256 = vsel %vm5031, %v8254, %v8255
    %v8257 = vrot.slane %v8003, 5
    %v8258 = vrot.slane %v8257, 4
    %v8259 = vrot.slane %v6604, 5
    %v8260 = vsel %vm5031, %v8258, %v8259
    %v8261 = vrot.slane %v8259, 4
    %v8262 = vrot.slane %v6605, 5
    %v8263 = vsel %vm5031, %v8261, %v8262
    %v8264 = vrot.slane %v8004, 5
    %v8265 = vrot.slane %v8264, 4
    %v8266 = vrot.slane %v6607, 5
    %v8267 = vsel %vm5031, %v8265, %v8266
    %v8268 = vrot.slane %v8266, 4
    %v8269 = vrot.slane %v6608, 5
    %v8270 = vsel %vm5031, %v8268, %v8269
    %v8271 = vrot.slane %v8005, 5
    %v8272 = vrot.slane %v8271, 4
    %v8273 = vrot.slane %v6610, 5
    %v8274 = vsel %vm5031, %v8272, %v8273
    %v8275 = vrot.slane %v8273, 4
    %v8276 = vrot.slane %v6611, 5
    %v8277 = vsel %vm5031, %v8275, %v8276
    %v8278 = vrot.slane %v8006, 5
    %v8279 = vrot.slane %v8278, 4
    %v8280 = vrot.slane %v6613, 5
    %v8281 = vsel %vm5031, %v8279, %v8280
    %v8282 = vrot.slane %v8280, 4
    %v8283 = vrot.slane %v6614, 5
    %v8284 = vsel %vm5031, %v8282, %v8283
    %v8285 = vrot.slane %v8007, 5
    %v8286 = vrot.slane %v8285, 4
    %v8287 = vrot.slane %v6616, 5
    %v8288 = vsel %vm5031, %v8286, %v8287
    %v8289 = vrot.slane %v8287, 4
    %v8290 = vrot.slane %v6617, 5
    %v8291 = vsel %vm5031, %v8289, %v8290
    %v8292 = vrot.slane %v8008, 5
    %v8293 = vrot.slane %v8292, 4
    %v8294 = vrot.slane %v6619, 5
    %v8295 = vsel %vm5031, %v8293, %v8294
    %v8296 = vrot.slane %v8294, 4
    %v8297 = vrot.slane %v6620, 5
    %v8298 = vsel %vm5031, %v8296, %v8297
    %v8299 = vrot.slane %v8009, 5
    %v8300 = vrot.slane %v8299, 4
    %v8301 = vrot.slane %v6622, 5
    %v8302 = vsel %vm5031, %v8300, %v8301
    %v8303 = vrot.slane %v8301, 4
    %v8304 = vrot.slane %v6623, 5
    %v8305 = vsel %vm5031, %v8303, %v8304
    %v8306 = vrot.slane %v8010, 5
    %v8307 = vrot.slane %v8306, 4
    %v8308 = vrot.slane %v6625, 5
    %v8309 = vsel %vm5031, %v8307, %v8308
    %v8310 = vrot.slane %v8308, 4
    %v8311 = vrot.slane %v6626, 5
    %v8312 = vsel %vm5031, %v8310, %v8311
    %v8313 = vrot.slane %v8011, 5
    %v8314 = vrot.slane %v8313, 4
    %v8315 = vrot.slane %v6628, 5
    %v8316 = vsel %vm5031, %v8314, %v8315
    %v8317 = vrot.slane %v8315, 4
    %v8318 = vrot.slane %v6629, 5
    %v8319 = vsel %vm5031, %v8317, %v8318
    %v8320 = vrot.slane %v8012, 5
    %v8321 = vrot.slane %v8320, 4
    %v8322 = vrot.slane %v6631, 5
    %v8323 = vsel %vm5031, %v8321, %v8322
    %v8324 = vrot.slane %v8322, 4
    %v8325 = vrot.slane %v6632, 5
    %v8326 = vsel %vm5031, %v8324, %v8325
    %v8327 = vrot.slane %v8013, 5
    %v8328 = vrot.slane %v8327, 4
    %v8329 = vrot.slane %v6634, 5
    %v8330 = vsel %vm5031, %v8328, %v8329
    %v8331 = vrot.slane %v8329, 4
    %v8332 = vrot.slane %v6635, 5
    %v8333 = vsel %vm5031, %v8331, %v8332
    %s8334 = scalar_lea.vmem [#allocation3], 160
    %v8335 = vld [vmem:[%s8334] sm:$0xf]
    %v8336 = vld [vmem:[%s8334 + $0x4] sm:$0xf]
    %v8337 = vld [vmem:[%s8334 + $0x8] sm:$0xf]
    %v8338 = vld [vmem:[%s8334 + $0xc] sm:$0xf]
    %v8339 = vld [vmem:[%s8334 + $0x10] sm:$0xf]
    %v8340 = vld [vmem:[%s8334 + $0x14] sm:$0xf]
    %v8341 = vld [vmem:[%s8334 + $0x18] sm:$0xf]
    %v8342 = vld [vmem:[%s8334 + $0x1c] sm:$0xf]
    %v8343 = vunpack.c.l.b16 %v8113
    %v8344 = vunpack.c.l.b16 %v8116
    %v8345 = vunpack.c.l.b16 %v8120
    %v8346 = vunpack.c.l.b16 %v8123
    %v8347 = vunpack.c.l.b16 %v8127
    %v8348 = vunpack.c.l.b16 %v8130
    %v8349 = vunpack.c.l.b16 %v8134
    %v8350 = vunpack.c.l.b16 %v8137
    %v8351 = vunpack.c.l.b16 %v8141
    %v8352 = vunpack.c.l.b16 %v8144
    %v8353 = vunpack.c.l.b16 %v8148
    %v8354 = vunpack.c.l.b16 %v8151
    %v8355 = vunpack.c.l.b16 %v8155
    %v8356 = vunpack.c.l.b16 %v8158
    %v8357 = vunpack.c.l.b16 %v8162
    %v8358 = vunpack.c.l.b16 %v8165
    %v8359 = vunpack.c.l.b16 %v8169
    %v8360 = vunpack.c.l.b16 %v8172
    %v8361 = vunpack.c.l.b16 %v8176
    %v8362 = vunpack.c.l.b16 %v8179
    %v8363 = vunpack.c.l.b16 %v8183
    %v8364 = vunpack.c.l.b16 %v8186
    %v8365 = vunpack.c.l.b16 %v8190
    %v8366 = vunpack.c.l.b16 %v8193
    %v8367 = vunpack.c.l.b16 %v8197
    %v8368 = vunpack.c.l.b16 %v8200
    %v8369 = vunpack.c.l.b16 %v8204
    %v8370 = vunpack.c.l.b16 %v8207
    %v8371 = vunpack.c.l.b16 %v8211
    %v8372 = vunpack.c.l.b16 %v8214
    %v8373 = vunpack.c.l.b16 %v8218
    %v8374 = vunpack.c.l.b16 %v8221
    %v8375 = vunpack.c.l.b16 %v8225
    %v8376 = vunpack.c.l.b16 %v8228
    %v8377 = vunpack.c.l.b16 %v8232
    %v8378 = vunpack.c.l.b16 %v8235
    %v8379 = vunpack.c.l.b16 %v8239
    %v8380 = vunpack.c.l.b16 %v8242
    %v8381 = vunpack.c.l.b16 %v8246
    %v8382 = vunpack.c.l.b16 %v8249
    %v8383 = vunpack.c.l.b16 %v8253
    %v8384 = vunpack.c.l.b16 %v8256
    %v8385 = vunpack.c.l.b16 %v8260
    %v8386 = vunpack.c.l.b16 %v8263
    %v8387 = vunpack.c.l.b16 %v8267
    %v8388 = vunpack.c.l.b16 %v8270
    %v8389 = vunpack.c.l.b16 %v8274
    %v8390 = vunpack.c.l.b16 %v8277
    %v8391 = vunpack.c.l.b16 %v8281
    %v8392 = vunpack.c.l.b16 %v8284
    %v8393 = vunpack.c.l.b16 %v8288
    %v8394 = vunpack.c.l.b16 %v8291
    %v8395 = vunpack.c.l.b16 %v8295
    %v8396 = vunpack.c.l.b16 %v8298
    %v8397 = vunpack.c.l.b16 %v8302
    %v8398 = vunpack.c.l.b16 %v8305
    %v8399 = vunpack.c.l.b16 %v8309
    %v8400 = vunpack.c.l.b16 %v8312
    %v8401 = vunpack.c.l.b16 %v8316
    %v8402 = vunpack.c.l.b16 %v8319
    %v8403 = vunpack.c.l.b16 %v8323
    %v8404 = vunpack.c.l.b16 %v8326
    %v8405 = vunpack.c.l.b16 %v8330
    %v8406 = vunpack.c.l.b16 %v8333
    %v8407 = vpack.c.b16 %v8344, %v8343
    %v8408 = vpack.c.b16 %v8346, %v8345
    %v8409 = vpack.c.b16 %v8348, %v8347
    %v8410 = vpack.c.b16 %v8350, %v8349
    %v8411 = vpack.c.b16 %v8352, %v8351
    %v8412 = vpack.c.b16 %v8354, %v8353
    %v8413 = vpack.c.b16 %v8356, %v8355
    %v8414 = vpack.c.b16 %v8358, %v8357
    %v8415 = vpack.c.b16 %v8360, %v8359
    %v8416 = vpack.c.b16 %v8362, %v8361
    %v8417 = vpack.c.b16 %v8364, %v8363
    %v8418 = vpack.c.b16 %v8366, %v8365
    %v8419 = vpack.c.b16 %v8368, %v8367
    %v8420 = vpack.c.b16 %v8370, %v8369
    %v8421 = vpack.c.b16 %v8372, %v8371
    %v8422 = vpack.c.b16 %v8374, %v8373
    %v8423 = vpack.c.b16 %v8376, %v8375
    %v8424 = vpack.c.b16 %v8378, %v8377
    %v8425 = vpack.c.b16 %v8380, %v8379
    %v8426 = vpack.c.b16 %v8382, %v8381
    %v8427 = vpack.c.b16 %v8384, %v8383
    %v8428 = vpack.c.b16 %v8386, %v8385
    %v8429 = vpack.c.b16 %v8388, %v8387
    %v8430 = vpack.c.b16 %v8390, %v8389
    %v8431 = vpack.c.b16 %v8392, %v8391
    %v8432 = vpack.c.b16 %v8394, %v8393
    %v8433 = vpack.c.b16 %v8396, %v8395
    %v8434 = vpack.c.b16 %v8398, %v8397
    %v8435 = vpack.c.b16 %v8400, %v8399
    %v8436 = vpack.c.b16 %v8402, %v8401
    %v8437 = vpack.c.b16 %v8404, %v8403
    %v8438 = vpack.c.b16 %v8406, %v8405
    %v8447 = vunpack.c.l.b16 %v8335
    %v8448 = vunpack.c.l.b16 %v8336
    %v8449 = vunpack.c.l.b16 %v8337
    %v8450 = vunpack.c.l.b16 %v8338
    %v8451 = vunpack.c.l.b16 %v8339
    %v8452 = vunpack.c.l.b16 %v8340
    %v8453 = vunpack.c.l.b16 %v8341
    %v8454 = vunpack.c.l.b16 %v8342
    %v8455 = vpack.c.b16 %v8448, %v8447
    %v8456 = vpack.c.b16 %v8450, %v8449
    %v8457 = vpack.c.b16 %v8452, %v8451
    %v8458 = vpack.c.b16 %v8454, %v8453
    %v8464 = vsel %vm792, %v8407, 0
    %v8467 = vsel %vm792, %v8408, 0
    %v8470 = vsel %vm792, %v8409, 0
    %v8473 = vsel %vm792, %v8410, 0
    %v8476 = vsel %vm792, %v8411, 0
    %v8479 = vsel %vm792, %v8412, 0
    %v8482 = vsel %vm792, %v8413, 0
    %v8485 = vsel %vm792, %v8414, 0
    %v8488 = vsel %vm792, %v8415, 0
    %v8491 = vsel %vm792, %v8416, 0
    %v8494 = vsel %vm792, %v8417, 0
    %v8497 = vsel %vm792, %v8418, 0
    %v8500 = vsel %vm792, %v8419, 0
    %v8503 = vsel %vm792, %v8420, 0
    %v8506 = vsel %vm792, %v8421, 0
    %v8509 = vsel %vm792, %v8422, 0
    %v8512 = vsel %vm792, %v8423, 0
    %v8515 = vsel %vm792, %v8424, 0
    %v8518 = vsel %vm792, %v8425, 0
    %v8521 = vsel %vm792, %v8426, 0
    %v8524 = vsel %vm792, %v8427, 0
    %v8527 = vsel %vm792, %v8428, 0
    %v8530 = vsel %vm792, %v8429, 0
    %v8533 = vsel %vm792, %v8430, 0
    %v8536 = vsel %vm792, %v8431, 0
    %v8539 = vsel %vm792, %v8432, 0
    %v8542 = vsel %vm792, %v8433, 0
    %v8545 = vsel %vm792, %v8434, 0
    %v8548 = vsel %vm792, %v8435, 0
    %v8551 = vsel %vm792, %v8436, 0
    %v8554 = vsel %vm792, %v8437, 0
    %v8557 = vsel %vm792, %v8438, 0
    %8559 = vmatprep.subr.bf16.mxu0 0
    %8560 = vmatpush1.bf16.msra.mxu0 0
    %8561 = vmatprep.subr.bf16.mxu0 0
    %8562 = vmatpush1.bf16.msra.mxu0 0
    %8563 = vmatprep.subr.bf16.mxu0 0
    %8564 = vmatpush1.bf16.msra.mxu0 0
    %8565 = vmatprep.subr.bf16.mxu0 0
    %8566 = vmatpush1.bf16.msra.mxu0 0
    %8567 = vmatprep.subr.bf16.mxu0 0
    %8568 = vmatpush1.bf16.msra.mxu0 %v8458
    %8569 = vmatprep.subr.bf16.mxu0 0
    %8570 = vmatpush1.bf16.msra.mxu0 %v8457
    %8571 = vmatprep.subr.bf16.mxu0 0
    %8572 = vmatpush1.bf16.msra.mxu0 %v8456
    %8573 = vmatprep.subr.bf16.mxu0 0
    %8574 = vmatpush1.bf16.msra.mxu0 %v8455
    %8575 = vmatprep.subr.bf16.mxu0 0
    %8576 = vmatpush2.bf16.msra.mxu0 0
    %8577 = vmatprep.subr.bf16.mxu0 0
    %8578 = vmatpush2.bf16.msra.mxu0 0
    %8579 = vmatprep.subr.bf16.mxu0 0
    %8580 = vmatpush2.bf16.msra.mxu0 0
    %8581 = vmatprep.subr.bf16.mxu0 0
    %8582 = vmatpush2.bf16.msra.mxu0 0
    %8583 = vmatprep.subr.bf16.mxu0 0
    %8584 = vmatpush2.bf16.msra.mxu0 0
    %8585 = vmatprep.subr.bf16.mxu0 0
    %8586 = vmatpush2.bf16.msra.mxu0 0
    %8587 = vmatprep.subr.bf16.mxu0 0
    %8588 = vmatpush2.bf16.msra.mxu0 0
    %8589 = vmatprep.subr.bf16.mxu0 0
    %8590 = vmatpush2.bf16.msra.mxu0 0
    %8591 = vmatprep.mubr.bf16.mxu0 0
    %8592 = vmatmul.mubr.bf16.gmra.mxu0 %v8464
    %v8593 = vpop.f32.mrf.mxu0
    %v8594 = vadd.f32 0.0, %v8593
    %v8595 = vpop.f32.mrf.mxu0
    %v8596 = vpop.f32.mrf.mxu0
    %v8597 = vadd.f32 0.0, %v8596
    %v8598 = vpop.f32.mrf.mxu0
    %8599 = vmatprep.mubr.bf16.mxu0 0
    %8600 = vmatmul.mubr.bf16.gmra.mxu0 %v8467
    %v8601 = vpop.f32.mrf.mxu0
    %v8602 = vadd.f32 0.0, %v8601
    %v8603 = vpop.f32.mrf.mxu0
    %v8604 = vpop.f32.mrf.mxu0
    %v8605 = vadd.f32 0.0, %v8604
    %v8606 = vpop.f32.mrf.mxu0
    %8607 = vmatprep.mubr.bf16.mxu0 0
    %8608 = vmatmul.mubr.bf16.gmra.mxu0 %v8470
    %v8609 = vpop.f32.mrf.mxu0
    %v8610 = vadd.f32 0.0, %v8609
    %v8611 = vpop.f32.mrf.mxu0
    %v8612 = vpop.f32.mrf.mxu0
    %v8613 = vadd.f32 0.0, %v8612
    %v8614 = vpop.f32.mrf.mxu0
    %8615 = vmatprep.mubr.bf16.mxu0 0
    %8616 = vmatmul.mubr.bf16.gmra.mxu0 %v8473
    %v8617 = vpop.f32.mrf.mxu0
    %v8618 = vadd.f32 0.0, %v8617
    %v8619 = vpop.f32.mrf.mxu0
    %v8620 = vpop.f32.mrf.mxu0
    %v8621 = vadd.f32 0.0, %v8620
    %v8622 = vpop.f32.mrf.mxu0
    %8623 = vmatprep.mubr.bf16.mxu0 0
    %8624 = vmatmul.mubr.bf16.gmra.mxu0 %v8476
    %v8625 = vpop.f32.mrf.mxu0
    %v8626 = vadd.f32 0.0, %v8625
    %v8627 = vpop.f32.mrf.mxu0
    %v8628 = vpop.f32.mrf.mxu0
    %v8629 = vadd.f32 0.0, %v8628
    %v8630 = vpop.f32.mrf.mxu0
    %8631 = vmatprep.mubr.bf16.mxu0 0
    %8632 = vmatmul.mubr.bf16.gmra.mxu0 %v8479
    %v8633 = vpop.f32.mrf.mxu0
    %v8634 = vadd.f32 0.0, %v8633
    %v8635 = vpop.f32.mrf.mxu0
    %v8636 = vpop.f32.mrf.mxu0
    %v8637 = vadd.f32 0.0, %v8636
    %v8638 = vpop.f32.mrf.mxu0
    %8639 = vmatprep.mubr.bf16.mxu0 0
    %8640 = vmatmul.mubr.bf16.gmra.mxu0 %v8482
    %v8641 = vpop.f32.mrf.mxu0
    %v8642 = vadd.f32 0.0, %v8641
    %v8643 = vpop.f32.mrf.mxu0
    %v8644 = vpop.f32.mrf.mxu0
    %v8645 = vadd.f32 0.0, %v8644
    %v8646 = vpop.f32.mrf.mxu0
    %8647 = vmatprep.mubr.bf16.mxu0 0
    %8648 = vmatmul.mubr.bf16.gmra.mxu0 %v8485
    %v8649 = vpop.f32.mrf.mxu0
    %v8650 = vadd.f32 0.0, %v8649
    %v8651 = vpop.f32.mrf.mxu0
    %v8652 = vpop.f32.mrf.mxu0
    %v8653 = vadd.f32 0.0, %v8652
    %v8654 = vpop.f32.mrf.mxu0
    %8655 = vmatprep.mubr.bf16.mxu0 0
    %8656 = vmatmul.mubr.bf16.gmra.mxu0 %v8488
    %v8657 = vpop.f32.mrf.mxu0
    %v8658 = vadd.f32 0.0, %v8657
    %v8659 = vpop.f32.mrf.mxu0
    %v8660 = vpop.f32.mrf.mxu0
    %v8661 = vadd.f32 0.0, %v8660
    %v8662 = vpop.f32.mrf.mxu0
    %8663 = vmatprep.mubr.bf16.mxu0 0
    %8664 = vmatmul.mubr.bf16.gmra.mxu0 %v8491
    %v8665 = vpop.f32.mrf.mxu0
    %v8666 = vadd.f32 0.0, %v8665
    %v8667 = vpop.f32.mrf.mxu0
    %v8668 = vpop.f32.mrf.mxu0
    %v8669 = vadd.f32 0.0, %v8668
    %v8670 = vpop.f32.mrf.mxu0
    %8671 = vmatprep.mubr.bf16.mxu0 0
    %8672 = vmatmul.mubr.bf16.gmra.mxu0 %v8494
    %v8673 = vpop.f32.mrf.mxu0
    %v8674 = vadd.f32 0.0, %v8673
    %v8675 = vpop.f32.mrf.mxu0
    %v8676 = vpop.f32.mrf.mxu0
    %v8677 = vadd.f32 0.0, %v8676
    %v8678 = vpop.f32.mrf.mxu0
    %8679 = vmatprep.mubr.bf16.mxu0 0
    %8680 = vmatmul.mubr.bf16.gmra.mxu0 %v8497
    %v8681 = vpop.f32.mrf.mxu0
    %v8682 = vadd.f32 0.0, %v8681
    %v8683 = vpop.f32.mrf.mxu0
    %v8684 = vpop.f32.mrf.mxu0
    %v8685 = vadd.f32 0.0, %v8684
    %v8686 = vpop.f32.mrf.mxu0
    %8687 = vmatprep.mubr.bf16.mxu0 0
    %8688 = vmatmul.mubr.bf16.gmra.mxu0 %v8500
    %v8689 = vpop.f32.mrf.mxu0
    %v8690 = vadd.f32 0.0, %v8689
    %v8691 = vpop.f32.mrf.mxu0
    %v8692 = vpop.f32.mrf.mxu0
    %v8693 = vadd.f32 0.0, %v8692
    %v8694 = vpop.f32.mrf.mxu0
    %8695 = vmatprep.mubr.bf16.mxu0 0
    %8696 = vmatmul.mubr.bf16.gmra.mxu0 %v8503
    %v8697 = vpop.f32.mrf.mxu0
    %v8698 = vadd.f32 0.0, %v8697
    %v8699 = vpop.f32.mrf.mxu0
    %v8700 = vpop.f32.mrf.mxu0
    %v8701 = vadd.f32 0.0, %v8700
    %v8702 = vpop.f32.mrf.mxu0
    %8703 = vmatprep.mubr.bf16.mxu0 0
    %8704 = vmatmul.mubr.bf16.gmra.mxu0 %v8506
    %v8705 = vpop.f32.mrf.mxu0
    %v8706 = vadd.f32 0.0, %v8705
    %v8707 = vpop.f32.mrf.mxu0
    %v8708 = vpop.f32.mrf.mxu0
    %v8709 = vadd.f32 0.0, %v8708
    %v8710 = vpop.f32.mrf.mxu0
    %8711 = vmatprep.mubr.bf16.mxu0 0
    %8712 = vmatmul.mubr.bf16.gmra.mxu0 %v8509
    %v8713 = vpop.f32.mrf.mxu0
    %v8714 = vadd.f32 0.0, %v8713
    %v8715 = vpop.f32.mrf.mxu0
    %v8716 = vpop.f32.mrf.mxu0
    %v8717 = vadd.f32 0.0, %v8716
    %v8718 = vpop.f32.mrf.mxu0
    %8719 = vmatprep.mubr.bf16.mxu0 0
    %8720 = vmatmul.mubr.bf16.gmra.mxu0 %v8512
    %v8721 = vpop.f32.mrf.mxu0
    %v8722 = vadd.f32 0.0, %v8721
    %v8723 = vpop.f32.mrf.mxu0
    %v8724 = vpop.f32.mrf.mxu0
    %v8725 = vadd.f32 0.0, %v8724
    %v8726 = vpop.f32.mrf.mxu0
    %8727 = vmatprep.mubr.bf16.mxu0 0
    %8728 = vmatmul.mubr.bf16.gmra.mxu0 %v8515
    %v8729 = vpop.f32.mrf.mxu0
    %v8730 = vadd.f32 0.0, %v8729
    %v8731 = vpop.f32.mrf.mxu0
    %v8732 = vpop.f32.mrf.mxu0
    %v8733 = vadd.f32 0.0, %v8732
    %v8734 = vpop.f32.mrf.mxu0
    %8735 = vmatprep.mubr.bf16.mxu0 0
    %8736 = vmatmul.mubr.bf16.gmra.mxu0 %v8518
    %v8737 = vpop.f32.mrf.mxu0
    %v8738 = vadd.f32 0.0, %v8737
    %v8739 = vpop.f32.mrf.mxu0
    %v8740 = vpop.f32.mrf.mxu0
    %v8741 = vadd.f32 0.0, %v8740
    %v8742 = vpop.f32.mrf.mxu0
    %8743 = vmatprep.mubr.bf16.mxu0 0
    %8744 = vmatmul.mubr.bf16.gmra.mxu0 %v8521
    %v8745 = vpop.f32.mrf.mxu0
    %v8746 = vadd.f32 0.0, %v8745
    %v8747 = vpop.f32.mrf.mxu0
    %v8748 = vpop.f32.mrf.mxu0
    %v8749 = vadd.f32 0.0, %v8748
    %v8750 = vpop.f32.mrf.mxu0
    %8751 = vmatprep.mubr.bf16.mxu0 0
    %8752 = vmatmul.mubr.bf16.gmra.mxu0 %v8524
    %v8753 = vpop.f32.mrf.mxu0
    %v8754 = vadd.f32 0.0, %v8753
    %v8755 = vpop.f32.mrf.mxu0
    %v8756 = vpop.f32.mrf.mxu0
    %v8757 = vadd.f32 0.0, %v8756
    %v8758 = vpop.f32.mrf.mxu0
    %8759 = vmatprep.mubr.bf16.mxu0 0
    %8760 = vmatmul.mubr.bf16.gmra.mxu0 %v8527
    %v8761 = vpop.f32.mrf.mxu0
    %v8762 = vadd.f32 0.0, %v8761
    %v8763 = vpop.f32.mrf.mxu0
    %v8764 = vpop.f32.mrf.mxu0
    %v8765 = vadd.f32 0.0, %v8764
    %v8766 = vpop.f32.mrf.mxu0
    %8767 = vmatprep.mubr.bf16.mxu0 0
    %8768 = vmatmul.mubr.bf16.gmra.mxu0 %v8530
    %v8769 = vpop.f32.mrf.mxu0
    %v8770 = vadd.f32 0.0, %v8769
    %v8771 = vpop.f32.mrf.mxu0
    %v8772 = vpop.f32.mrf.mxu0
    %v8773 = vadd.f32 0.0, %v8772
    %v8774 = vpop.f32.mrf.mxu0
    %8775 = vmatprep.mubr.bf16.mxu0 0
    %8776 = vmatmul.mubr.bf16.gmra.mxu0 %v8533
    %v8777 = vpop.f32.mrf.mxu0
    %v8778 = vadd.f32 0.0, %v8777
    %v8779 = vpop.f32.mrf.mxu0
    %v8780 = vpop.f32.mrf.mxu0
    %v8781 = vadd.f32 0.0, %v8780
    %v8782 = vpop.f32.mrf.mxu0
    %8783 = vmatprep.mubr.bf16.mxu0 0
    %8784 = vmatmul.mubr.bf16.gmra.mxu0 %v8536
    %v8785 = vpop.f32.mrf.mxu0
    %v8786 = vadd.f32 0.0, %v8785
    %v8787 = vpop.f32.mrf.mxu0
    %v8788 = vpop.f32.mrf.mxu0
    %v8789 = vadd.f32 0.0, %v8788
    %v8790 = vpop.f32.mrf.mxu0
    %8791 = vmatprep.mubr.bf16.mxu0 0
    %8792 = vmatmul.mubr.bf16.gmra.mxu0 %v8539
    %v8793 = vpop.f32.mrf.mxu0
    %v8794 = vadd.f32 0.0, %v8793
    %v8795 = vpop.f32.mrf.mxu0
    %v8796 = vpop.f32.mrf.mxu0
    %v8797 = vadd.f32 0.0, %v8796
    %v8798 = vpop.f32.mrf.mxu0
    %8799 = vmatprep.mubr.bf16.mxu0 0
    %8800 = vmatmul.mubr.bf16.gmra.mxu0 %v8542
    %v8801 = vpop.f32.mrf.mxu0
    %v8802 = vadd.f32 0.0, %v8801
    %v8803 = vpop.f32.mrf.mxu0
    %v8804 = vpop.f32.mrf.mxu0
    %v8805 = vadd.f32 0.0, %v8804
    %v8806 = vpop.f32.mrf.mxu0
    %8807 = vmatprep.mubr.bf16.mxu0 0
    %8808 = vmatmul.mubr.bf16.gmra.mxu0 %v8545
    %v8809 = vpop.f32.mrf.mxu0
    %v8810 = vadd.f32 0.0, %v8809
    %v8811 = vpop.f32.mrf.mxu0
    %v8812 = vpop.f32.mrf.mxu0
    %v8813 = vadd.f32 0.0, %v8812
    %v8814 = vpop.f32.mrf.mxu0
    %8815 = vmatprep.mubr.bf16.mxu0 0
    %8816 = vmatmul.mubr.bf16.gmra.mxu0 %v8548
    %v8817 = vpop.f32.mrf.mxu0
    %v8818 = vadd.f32 0.0, %v8817
    %v8819 = vpop.f32.mrf.mxu0
    %v8820 = vpop.f32.mrf.mxu0
    %v8821 = vadd.f32 0.0, %v8820
    %v8822 = vpop.f32.mrf.mxu0
    %8823 = vmatprep.mubr.bf16.mxu0 0
    %8824 = vmatmul.mubr.bf16.gmra.mxu0 %v8551
    %v8825 = vpop.f32.mrf.mxu0
    %v8826 = vadd.f32 0.0, %v8825
    %v8827 = vpop.f32.mrf.mxu0
    %v8828 = vpop.f32.mrf.mxu0
    %v8829 = vadd.f32 0.0, %v8828
    %v8830 = vpop.f32.mrf.mxu0
    %8831 = vmatprep.mubr.bf16.mxu0 0
    %8832 = vmatmul.mubr.bf16.gmra.mxu0 %v8554
    %v8833 = vpop.f32.mrf.mxu0
    %v8834 = vadd.f32 0.0, %v8833
    %v8835 = vpop.f32.mrf.mxu0
    %v8836 = vpop.f32.mrf.mxu0
    %v8837 = vadd.f32 0.0, %v8836
    %v8838 = vpop.f32.mrf.mxu0
    %8839 = vmatprep.mubr.bf16.mxu0 0
    %8840 = vmatmul.mubr.bf16.gmra.mxu0 %v8557
    %v8841 = vpop.f32.mrf.mxu0
    %v8842 = vadd.f32 0.0, %v8841
    %v8843 = vpop.f32.mrf.mxu0
    %v8844 = vpop.f32.mrf.mxu0
    %v8845 = vadd.f32 0.0, %v8844
    %v8846 = vpop.f32.mrf.mxu0
    %8847 = vdwg.mxu0
    %v8848 = vadd.f32 %v7918, %v8594
    %v8849 = vadd.f32 %v7919, %v8597
    %v8850 = vadd.f32 %v7920, %v8602
    %v8851 = vadd.f32 %v7921, %v8605
    %v8852 = vadd.f32 %v7922, %v8610
    %v8853 = vadd.f32 %v7923, %v8613
    %v8854 = vadd.f32 %v7924, %v8618
    %v8855 = vadd.f32 %v7925, %v8621
    %v8856 = vadd.f32 %v7926, %v8626
    %v8857 = vadd.f32 %v7927, %v8629
    %v8858 = vadd.f32 %v7928, %v8634
    %v8859 = vadd.f32 %v7929, %v8637
    %v8860 = vadd.f32 %v7930, %v8642
    %v8861 = vadd.f32 %v7931, %v8645
    %v8862 = vadd.f32 %v7932, %v8650
    %v8863 = vadd.f32 %v7933, %v8653
    %v8864 = vadd.f32 %v7934, %v8658
    %v8865 = vadd.f32 %v7935, %v8661
    %v8866 = vadd.f32 %v7936, %v8666
    %v8867 = vadd.f32 %v7937, %v8669
    %v8868 = vadd.f32 %v7938, %v8674
    %v8869 = vadd.f32 %v7939, %v8677
    %v8870 = vadd.f32 %v7940, %v8682
    %v8871 = vadd.f32 %v7941, %v8685
    %v8872 = vadd.f32 %v7942, %v8690
    %v8873 = vadd.f32 %v7943, %v8693
    %v8874 = vadd.f32 %v7944, %v8698
    %v8875 = vadd.f32 %v7945, %v8701
    %v8876 = vadd.f32 %v7946, %v8706
    %v8877 = vadd.f32 %v7947, %v8709
    %v8878 = vadd.f32 %v7948, %v8714
    %v8879 = vadd.f32 %v7949, %v8717
    %v8880 = vadd.f32 %v7950, %v8722
    %v8881 = vadd.f32 %v7951, %v8725
    %v8882 = vadd.f32 %v7952, %v8730
    %v8883 = vadd.f32 %v7953, %v8733
    %v8884 = vadd.f32 %v7954, %v8738
    %v8885 = vadd.f32 %v7955, %v8741
    %v8886 = vadd.f32 %v7956, %v8746
    %v8887 = vadd.f32 %v7957, %v8749
    %v8888 = vadd.f32 %v7958, %v8754
    %v8889 = vadd.f32 %v7959, %v8757
    %v8890 = vadd.f32 %v7960, %v8762
    %v8891 = vadd.f32 %v7961, %v8765
    %v8892 = vadd.f32 %v7962, %v8770
    %v8893 = vadd.f32 %v7963, %v8773
    %v8894 = vadd.f32 %v7964, %v8778
    %v8895 = vadd.f32 %v7965, %v8781
    %v8896 = vadd.f32 %v7966, %v8786
    %v8897 = vadd.f32 %v7967, %v8789
    %v8898 = vadd.f32 %v7968, %v8794
    %v8899 = vadd.f32 %v7969, %v8797
    %v8900 = vadd.f32 %v7970, %v8802
    %v8901 = vadd.f32 %v7971, %v8805
    %v8902 = vadd.f32 %v7972, %v8810
    %v8903 = vadd.f32 %v7973, %v8813
    %v8904 = vadd.f32 %v7974, %v8818
    %v8905 = vadd.f32 %v7975, %v8821
    %v8906 = vadd.f32 %v7976, %v8826
    %v8907 = vadd.f32 %v7977, %v8829
    %v8908 = vadd.f32 %v7978, %v8834
    %v8909 = vadd.f32 %v7979, %v8837
    %v8910 = vadd.f32 %v7980, %v8842
    %v8911 = vadd.f32 %v7981, %v8845
    %s8912 = scalar_lea.vmem [#allocation2], 24
    %v8913 = vld [vmem:[%s8912] sm:$0xf]
    %v8914 = vld [vmem:[%s8912 + $0x4] sm:$0xf]
    %v8915 = vld [vmem:[%s8912 + $0xc] sm:$0xf]
    %v8916 = vld [vmem:[%s8912 + $0x10] sm:$0xf]
    %v8917 = vld [vmem:[%s8912 + $0x18] sm:$0xf]
    %v8918 = vld [vmem:[%s8912 + $0x1c] sm:$0xf]
    %v8919 = vld [vmem:[%s8912 + $0x24] sm:$0xf]
    %v8920 = vld [vmem:[%s8912 + $0x28] sm:$0xf]
    %v8921 = vld [vmem:[%s8912 + $0x30] sm:$0xf]
    %v8922 = vld [vmem:[%s8912 + $0x34] sm:$0xf]
    %v8923 = vld [vmem:[%s8912 + $0x3c] sm:$0xf]
    %v8924 = vld [vmem:[%s8912 + $0x40] sm:$0xf]
    %v8925 = vld [vmem:[%s8912 + $0x48] sm:$0xf]
    %v8926 = vld [vmem:[%s8912 + $0x4c] sm:$0xf]
    %v8927 = vld [vmem:[%s8912 + $0x54] sm:$0xf]
    %v8928 = vld [vmem:[%s8912 + $0x58] sm:$0xf]
    %v8929 = vld [vmem:[%s8912 + $0x60] sm:$0xf]
    %v8930 = vld [vmem:[%s8912 + $0x64] sm:$0xf]
    %v8931 = vld [vmem:[%s8912 + $0x6c] sm:$0xf]
    %v8932 = vld [vmem:[%s8912 + $0x70] sm:$0xf]
    %v8933 = vld [vmem:[%s8912 + $0x78] sm:$0xf]
    %v8934 = vld [vmem:[%s8912 + $0x7c] sm:$0xf]
    %v8935 = vld [vmem:[%s8912 + $0x84] sm:$0xf]
    %v8936 = vld [vmem:[%s8912 + $0x88] sm:$0xf]
    %v8937 = vld [vmem:[%s8912 + $0x90] sm:$0xf]
    %v8938 = vld [vmem:[%s8912 + $0x94] sm:$0xf]
    %v8939 = vld [vmem:[%s8912 + $0x9c] sm:$0xf]
    %v8940 = vld [vmem:[%s8912 + $0xa0] sm:$0xf]
    %v8941 = vld [vmem:[%s8912 + $0xa8] sm:$0xf]
    %v8942 = vld [vmem:[%s8912 + $0xac] sm:$0xf]
    %v8943 = vld [vmem:[%s8912 + $0xb4] sm:$0xf]
    %v8944 = vld [vmem:[%s8912 + $0xb8] sm:$0xf]
    %v8945 = vld [vmem:[%s8912 + $0xd8] sm:$0xf]
    %v8946 = vld [vmem:[%s8912 + $0xdc] sm:$0xf]
    %v8947 = vld [vmem:[%s8912 + $0xe4] sm:$0xf]
    %v8948 = vld [vmem:[%s8912 + $0xe8] sm:$0xf]
    %v8949 = vld [vmem:[%s8912 + $0xf0] sm:$0xf]
    %v8950 = vld [vmem:[%s8912 + $0xf4] sm:$0xf]
    %v8951 = vld [vmem:[%s8912 + $0xfc] sm:$0xf]
    %v8952 = vld [vmem:[%s8912 + $0x100] sm:$0xf]
    %v8953 = vld [vmem:[%s8912 + $0x108] sm:$0xf]
    %v8954 = vld [vmem:[%s8912 + $0x10c] sm:$0xf]
    %v8955 = vld [vmem:[%s8912 + $0x114] sm:$0xf]
    %v8956 = vld [vmem:[%s8912 + $0x118] sm:$0xf]
    %v8957 = vld [vmem:[%s8912 + $0x120] sm:$0xf]
    %v8958 = vld [vmem:[%s8912 + $0x124] sm:$0xf]
    %v8959 = vld [vmem:[%s8912 + $0x12c] sm:$0xf]
    %v8960 = vld [vmem:[%s8912 + $0x130] sm:$0xf]
    %v8961 = vld [vmem:[%s8912 + $0x138] sm:$0xf]
    %v8962 = vld [vmem:[%s8912 + $0x13c] sm:$0xf]
    %v8963 = vld [vmem:[%s8912 + $0x144] sm:$0xf]
    %v8964 = vld [vmem:[%s8912 + $0x148] sm:$0xf]
    %v8965 = vld [vmem:[%s8912 + $0x150] sm:$0xf]
    %v8966 = vld [vmem:[%s8912 + $0x154] sm:$0xf]
    %v8967 = vld [vmem:[%s8912 + $0x15c] sm:$0xf]
    %v8968 = vld [vmem:[%s8912 + $0x160] sm:$0xf]
    %v8969 = vld [vmem:[%s8912 + $0x168] sm:$0xf]
    %v8970 = vld [vmem:[%s8912 + $0x16c] sm:$0xf]
    %v8971 = vld [vmem:[%s8912 + $0x174] sm:$0xf]
    %v8972 = vld [vmem:[%s8912 + $0x178] sm:$0xf]
    %v8973 = vld [vmem:[%s8912 + $0x180] sm:$0xf]
    %v8974 = vld [vmem:[%s8912 + $0x184] sm:$0xf]
    %v8975 = vld [vmem:[%s8912 + $0x18c] sm:$0xf]
    %v8976 = vld [vmem:[%s8912 + $0x190] sm:$0xf]
    %s8977 = scalar_lea.vmem [#allocation3], 192
    %v8978 = vld [vmem:[%s8977] sm:$0xf]
    %v8979 = vld [vmem:[%s8977 + $0x4] sm:$0xf]
    %v8980 = vld [vmem:[%s8977 + $0x8] sm:$0xf]
    %v8981 = vld [vmem:[%s8977 + $0xc] sm:$0xf]
    %v8982 = vld [vmem:[%s8977 + $0x10] sm:$0xf]
    %v8983 = vld [vmem:[%s8977 + $0x14] sm:$0xf]
    %v8984 = vld [vmem:[%s8977 + $0x18] sm:$0xf]
    %v8985 = vld [vmem:[%s8977 + $0x1c] sm:$0xf]
    %v9050 = vunpack.c.l.b16 %v8913
    %v9051 = vunpack.c.l.b16 %v8914
    %v9052 = vunpack.c.l.b16 %v8915
    %v9053 = vunpack.c.l.b16 %v8916
    %v9054 = vunpack.c.l.b16 %v8917
    %v9055 = vunpack.c.l.b16 %v8918
    %v9056 = vunpack.c.l.b16 %v8919
    %v9057 = vunpack.c.l.b16 %v8920
    %v9058 = vunpack.c.l.b16 %v8921
    %v9059 = vunpack.c.l.b16 %v8922
    %v9060 = vunpack.c.l.b16 %v8923
    %v9061 = vunpack.c.l.b16 %v8924
    %v9062 = vunpack.c.l.b16 %v8925
    %v9063 = vunpack.c.l.b16 %v8926
    %v9064 = vunpack.c.l.b16 %v8927
    %v9065 = vunpack.c.l.b16 %v8928
    %v9066 = vunpack.c.l.b16 %v8929
    %v9067 = vunpack.c.l.b16 %v8930
    %v9068 = vunpack.c.l.b16 %v8931
    %v9069 = vunpack.c.l.b16 %v8932
    %v9070 = vunpack.c.l.b16 %v8933
    %v9071 = vunpack.c.l.b16 %v8934
    %v9072 = vunpack.c.l.b16 %v8935
    %v9073 = vunpack.c.l.b16 %v8936
    %v9074 = vunpack.c.l.b16 %v8937
    %v9075 = vunpack.c.l.b16 %v8938
    %v9076 = vunpack.c.l.b16 %v8939
    %v9077 = vunpack.c.l.b16 %v8940
    %v9078 = vunpack.c.l.b16 %v8941
    %v9079 = vunpack.c.l.b16 %v8942
    %v9080 = vunpack.c.l.b16 %v8943
    %v9081 = vunpack.c.l.b16 %v8944
    %v9082 = vunpack.c.l.b16 %v8945
    %v9083 = vunpack.c.l.b16 %v8946
    %v9084 = vunpack.c.l.b16 %v8947
    %v9085 = vunpack.c.l.b16 %v8948
    %v9086 = vunpack.c.l.b16 %v8949
    %v9087 = vunpack.c.l.b16 %v8950
    %v9088 = vunpack.c.l.b16 %v8951
    %v9089 = vunpack.c.l.b16 %v8952
    %v9090 = vunpack.c.l.b16 %v8953
    %v9091 = vunpack.c.l.b16 %v8954
    %v9092 = vunpack.c.l.b16 %v8955
    %v9093 = vunpack.c.l.b16 %v8956
    %v9094 = vunpack.c.l.b16 %v8957
    %v9095 = vunpack.c.l.b16 %v8958
    %v9096 = vunpack.c.l.b16 %v8959
    %v9097 = vunpack.c.l.b16 %v8960
    %v9098 = vunpack.c.l.b16 %v8961
    %v9099 = vunpack.c.l.b16 %v8962
    %v9100 = vunpack.c.l.b16 %v8963
    %v9101 = vunpack.c.l.b16 %v8964
    %v9102 = vunpack.c.l.b16 %v8965
    %v9103 = vunpack.c.l.b16 %v8966
    %v9104 = vunpack.c.l.b16 %v8967
    %v9105 = vunpack.c.l.b16 %v8968
    %v9106 = vunpack.c.l.b16 %v8969
    %v9107 = vunpack.c.l.b16 %v8970
    %v9108 = vunpack.c.l.b16 %v8971
    %v9109 = vunpack.c.l.b16 %v8972
    %v9110 = vunpack.c.l.b16 %v8973
    %v9111 = vunpack.c.l.b16 %v8974
    %v9112 = vunpack.c.l.b16 %v8975
    %v9113 = vunpack.c.l.b16 %v8976
    %v9114 = vpack.c.b16 %v9051, %v9050
    %v9115 = vpack.c.b16 %v9053, %v9052
    %v9116 = vpack.c.b16 %v9055, %v9054
    %v9117 = vpack.c.b16 %v9057, %v9056
    %v9118 = vpack.c.b16 %v9059, %v9058
    %v9119 = vpack.c.b16 %v9061, %v9060
    %v9120 = vpack.c.b16 %v9063, %v9062
    %v9121 = vpack.c.b16 %v9065, %v9064
    %v9122 = vpack.c.b16 %v9067, %v9066
    %v9123 = vpack.c.b16 %v9069, %v9068
    %v9124 = vpack.c.b16 %v9071, %v9070
    %v9125 = vpack.c.b16 %v9073, %v9072
    %v9126 = vpack.c.b16 %v9075, %v9074
    %v9127 = vpack.c.b16 %v9077, %v9076
    %v9128 = vpack.c.b16 %v9079, %v9078
    %v9129 = vpack.c.b16 %v9081, %v9080
    %v9130 = vpack.c.b16 %v9083, %v9082
    %v9131 = vpack.c.b16 %v9085, %v9084
    %v9132 = vpack.c.b16 %v9087, %v9086
    %v9133 = vpack.c.b16 %v9089, %v9088
    %v9134 = vpack.c.b16 %v9091, %v9090
    %v9135 = vpack.c.b16 %v9093, %v9092
    %v9136 = vpack.c.b16 %v9095, %v9094
    %v9137 = vpack.c.b16 %v9097, %v9096
    %v9138 = vpack.c.b16 %v9099, %v9098
    %v9139 = vpack.c.b16 %v9101, %v9100
    %v9140 = vpack.c.b16 %v9103, %v9102
    %v9141 = vpack.c.b16 %v9105, %v9104
    %v9142 = vpack.c.b16 %v9107, %v9106
    %v9143 = vpack.c.b16 %v9109, %v9108
    %v9144 = vpack.c.b16 %v9111, %v9110
    %v9145 = vpack.c.b16 %v9113, %v9112
    %v9154 = vunpack.c.l.b16 %v8978
    %v9155 = vunpack.c.l.b16 %v8979
    %v9156 = vunpack.c.l.b16 %v8980
    %v9157 = vunpack.c.l.b16 %v8981
    %v9158 = vunpack.c.l.b16 %v8982
    %v9159 = vunpack.c.l.b16 %v8983
    %v9160 = vunpack.c.l.b16 %v8984
    %v9161 = vunpack.c.l.b16 %v8985
    %v9162 = vpack.c.b16 %v9155, %v9154
    %v9163 = vpack.c.b16 %v9157, %v9156
    %v9164 = vpack.c.b16 %v9159, %v9158
    %v9165 = vpack.c.b16 %v9161, %v9160
    %v9171 = vsel %vm792, %v9114, 0
    %v9174 = vsel %vm792, %v9115, 0
    %v9177 = vsel %vm792, %v9116, 0
    %v9180 = vsel %vm792, %v9117, 0
    %v9183 = vsel %vm792, %v9118, 0
    %v9186 = vsel %vm792, %v9119, 0
    %v9189 = vsel %vm792, %v9120, 0
    %v9192 = vsel %vm792, %v9121, 0
    %v9195 = vsel %vm792, %v9122, 0
    %v9198 = vsel %vm792, %v9123, 0
    %v9201 = vsel %vm792, %v9124, 0
    %v9204 = vsel %vm792, %v9125, 0
    %v9207 = vsel %vm792, %v9126, 0
    %v9210 = vsel %vm792, %v9127, 0
    %v9213 = vsel %vm792, %v9128, 0
    %v9216 = vsel %vm792, %v9129, 0
    %v9219 = vsel %vm792, %v9130, 0
    %v9222 = vsel %vm792, %v9131, 0
    %v9225 = vsel %vm792, %v9132, 0
    %v9228 = vsel %vm792, %v9133, 0
    %v9231 = vsel %vm792, %v9134, 0
    %v9234 = vsel %vm792, %v9135, 0
    %v9237 = vsel %vm792, %v9136, 0
    %v9240 = vsel %vm792, %v9137, 0
    %v9243 = vsel %vm792, %v9138, 0
    %v9246 = vsel %vm792, %v9139, 0
    %v9249 = vsel %vm792, %v9140, 0
    %v9252 = vsel %vm792, %v9141, 0
    %v9255 = vsel %vm792, %v9142, 0
    %v9258 = vsel %vm792, %v9143, 0
    %v9261 = vsel %vm792, %v9144, 0
    %v9264 = vsel %vm792, %v9145, 0
    %9266 = vmatprep.subr.bf16.mxu0 0
    %9267 = vmatpush1.bf16.msra.mxu0 0
    %9268 = vmatprep.subr.bf16.mxu0 0
    %9269 = vmatpush1.bf16.msra.mxu0 0
    %9270 = vmatprep.subr.bf16.mxu0 0
    %9271 = vmatpush1.bf16.msra.mxu0 0
    %9272 = vmatprep.subr.bf16.mxu0 0
    %9273 = vmatpush1.bf16.msra.mxu0 0
    %9274 = vmatprep.subr.bf16.mxu0 0
    %9275 = vmatpush1.bf16.msra.mxu0 %v9165
    %9276 = vmatprep.subr.bf16.mxu0 0
    %9277 = vmatpush1.bf16.msra.mxu0 %v9164
    %9278 = vmatprep.subr.bf16.mxu0 0
    %9279 = vmatpush1.bf16.msra.mxu0 %v9163
    %9280 = vmatprep.subr.bf16.mxu0 0
    %9281 = vmatpush1.bf16.msra.mxu0 %v9162
    %9282 = vmatprep.subr.bf16.mxu0 0
    %9283 = vmatpush2.bf16.msra.mxu0 0
    %9284 = vmatprep.subr.bf16.mxu0 0
    %9285 = vmatpush2.bf16.msra.mxu0 0
    %9286 = vmatprep.subr.bf16.mxu0 0
    %9287 = vmatpush2.bf16.msra.mxu0 0
    %9288 = vmatprep.subr.bf16.mxu0 0
    %9289 = vmatpush2.bf16.msra.mxu0 0
    %9290 = vmatprep.subr.bf16.mxu0 0
    %9291 = vmatpush2.bf16.msra.mxu0 0
    %9292 = vmatprep.subr.bf16.mxu0 0
    %9293 = vmatpush2.bf16.msra.mxu0 0
    %9294 = vmatprep.subr.bf16.mxu0 0
    %9295 = vmatpush2.bf16.msra.mxu0 0
    %9296 = vmatprep.subr.bf16.mxu0 0
    %9297 = vmatpush2.bf16.msra.mxu0 0
    %9298 = vmatprep.mubr.bf16.mxu0 0
    %9299 = vmatmul.mubr.bf16.gmra.mxu0 %v9171
    %v9300 = vpop.f32.mrf.mxu0
    %v9301 = vadd.f32 0.0, %v9300
    %v9302 = vpop.f32.mrf.mxu0
    %v9303 = vpop.f32.mrf.mxu0
    %v9304 = vadd.f32 0.0, %v9303
    %v9305 = vpop.f32.mrf.mxu0
    %9306 = vmatprep.mubr.bf16.mxu0 0
    %9307 = vmatmul.mubr.bf16.gmra.mxu0 %v9174
    %v9308 = vpop.f32.mrf.mxu0
    %v9309 = vadd.f32 0.0, %v9308
    %v9310 = vpop.f32.mrf.mxu0
    %v9311 = vpop.f32.mrf.mxu0
    %v9312 = vadd.f32 0.0, %v9311
    %v9313 = vpop.f32.mrf.mxu0
    %9314 = vmatprep.mubr.bf16.mxu0 0
    %9315 = vmatmul.mubr.bf16.gmra.mxu0 %v9177
    %v9316 = vpop.f32.mrf.mxu0
    %v9317 = vadd.f32 0.0, %v9316
    %v9318 = vpop.f32.mrf.mxu0
    %v9319 = vpop.f32.mrf.mxu0
    %v9320 = vadd.f32 0.0, %v9319
    %v9321 = vpop.f32.mrf.mxu0
    %9322 = vmatprep.mubr.bf16.mxu0 0
    %9323 = vmatmul.mubr.bf16.gmra.mxu0 %v9180
    %v9324 = vpop.f32.mrf.mxu0
    %v9325 = vadd.f32 0.0, %v9324
    %v9326 = vpop.f32.mrf.mxu0
    %v9327 = vpop.f32.mrf.mxu0
    %v9328 = vadd.f32 0.0, %v9327
    %v9329 = vpop.f32.mrf.mxu0
    %9330 = vmatprep.mubr.bf16.mxu0 0
    %9331 = vmatmul.mubr.bf16.gmra.mxu0 %v9183
    %v9332 = vpop.f32.mrf.mxu0
    %v9333 = vadd.f32 0.0, %v9332
    %v9334 = vpop.f32.mrf.mxu0
    %v9335 = vpop.f32.mrf.mxu0
    %v9336 = vadd.f32 0.0, %v9335
    %v9337 = vpop.f32.mrf.mxu0
    %9338 = vmatprep.mubr.bf16.mxu0 0
    %9339 = vmatmul.mubr.bf16.gmra.mxu0 %v9186
    %v9340 = vpop.f32.mrf.mxu0
    %v9341 = vadd.f32 0.0, %v9340
    %v9342 = vpop.f32.mrf.mxu0
    %v9343 = vpop.f32.mrf.mxu0
    %v9344 = vadd.f32 0.0, %v9343
    %v9345 = vpop.f32.mrf.mxu0
    %9346 = vmatprep.mubr.bf16.mxu0 0
    %9347 = vmatmul.mubr.bf16.gmra.mxu0 %v9189
    %v9348 = vpop.f32.mrf.mxu0
    %v9349 = vadd.f32 0.0, %v9348
    %v9350 = vpop.f32.mrf.mxu0
    %v9351 = vpop.f32.mrf.mxu0
    %v9352 = vadd.f32 0.0, %v9351
    %v9353 = vpop.f32.mrf.mxu0
    %9354 = vmatprep.mubr.bf16.mxu0 0
    %9355 = vmatmul.mubr.bf16.gmra.mxu0 %v9192
    %v9356 = vpop.f32.mrf.mxu0
    %v9357 = vadd.f32 0.0, %v9356
    %v9358 = vpop.f32.mrf.mxu0
    %v9359 = vpop.f32.mrf.mxu0
    %v9360 = vadd.f32 0.0, %v9359
    %v9361 = vpop.f32.mrf.mxu0
    %9362 = vmatprep.mubr.bf16.mxu0 0
    %9363 = vmatmul.mubr.bf16.gmra.mxu0 %v9195
    %v9364 = vpop.f32.mrf.mxu0
    %v9365 = vadd.f32 0.0, %v9364
    %v9366 = vpop.f32.mrf.mxu0
    %v9367 = vpop.f32.mrf.mxu0
    %v9368 = vadd.f32 0.0, %v9367
    %v9369 = vpop.f32.mrf.mxu0
    %9370 = vmatprep.mubr.bf16.mxu0 0
    %9371 = vmatmul.mubr.bf16.gmra.mxu0 %v9198
    %v9372 = vpop.f32.mrf.mxu0
    %v9373 = vadd.f32 0.0, %v9372
    %v9374 = vpop.f32.mrf.mxu0
    %v9375 = vpop.f32.mrf.mxu0
    %v9376 = vadd.f32 0.0, %v9375
    %v9377 = vpop.f32.mrf.mxu0
    %9378 = vmatprep.mubr.bf16.mxu0 0
    %9379 = vmatmul.mubr.bf16.gmra.mxu0 %v9201
    %v9380 = vpop.f32.mrf.mxu0
    %v9381 = vadd.f32 0.0, %v9380
    %v9382 = vpop.f32.mrf.mxu0
    %v9383 = vpop.f32.mrf.mxu0
    %v9384 = vadd.f32 0.0, %v9383
    %v9385 = vpop.f32.mrf.mxu0
    %9386 = vmatprep.mubr.bf16.mxu0 0
    %9387 = vmatmul.mubr.bf16.gmra.mxu0 %v9204
    %v9388 = vpop.f32.mrf.mxu0
    %v9389 = vadd.f32 0.0, %v9388
    %v9390 = vpop.f32.mrf.mxu0
    %v9391 = vpop.f32.mrf.mxu0
    %v9392 = vadd.f32 0.0, %v9391
    %v9393 = vpop.f32.mrf.mxu0
    %9394 = vmatprep.mubr.bf16.mxu0 0
    %9395 = vmatmul.mubr.bf16.gmra.mxu0 %v9207
    %v9396 = vpop.f32.mrf.mxu0
    %v9397 = vadd.f32 0.0, %v9396
    %v9398 = vpop.f32.mrf.mxu0
    %v9399 = vpop.f32.mrf.mxu0
    %v9400 = vadd.f32 0.0, %v9399
    %v9401 = vpop.f32.mrf.mxu0
    %9402 = vmatprep.mubr.bf16.mxu0 0
    %9403 = vmatmul.mubr.bf16.gmra.mxu0 %v9210
    %v9404 = vpop.f32.mrf.mxu0
    %v9405 = vadd.f32 0.0, %v9404
    %v9406 = vpop.f32.mrf.mxu0
    %v9407 = vpop.f32.mrf.mxu0
    %v9408 = vadd.f32 0.0, %v9407
    %v9409 = vpop.f32.mrf.mxu0
    %9410 = vmatprep.mubr.bf16.mxu0 0
    %9411 = vmatmul.mubr.bf16.gmra.mxu0 %v9213
    %v9412 = vpop.f32.mrf.mxu0
    %v9413 = vadd.f32 0.0, %v9412
    %v9414 = vpop.f32.mrf.mxu0
    %v9415 = vpop.f32.mrf.mxu0
    %v9416 = vadd.f32 0.0, %v9415
    %v9417 = vpop.f32.mrf.mxu0
    %9418 = vmatprep.mubr.bf16.mxu0 0
    %9419 = vmatmul.mubr.bf16.gmra.mxu0 %v9216
    %v9420 = vpop.f32.mrf.mxu0
    %v9421 = vadd.f32 0.0, %v9420
    %v9422 = vpop.f32.mrf.mxu0
    %v9423 = vpop.f32.mrf.mxu0
    %v9424 = vadd.f32 0.0, %v9423
    %v9425 = vpop.f32.mrf.mxu0
    %9426 = vmatprep.mubr.bf16.mxu0 0
    %9427 = vmatmul.mubr.bf16.gmra.mxu0 %v9219
    %v9428 = vpop.f32.mrf.mxu0
    %v9429 = vadd.f32 0.0, %v9428
    %v9430 = vpop.f32.mrf.mxu0
    %v9431 = vpop.f32.mrf.mxu0
    %v9432 = vadd.f32 0.0, %v9431
    %v9433 = vpop.f32.mrf.mxu0
    %9434 = vmatprep.mubr.bf16.mxu0 0
    %9435 = vmatmul.mubr.bf16.gmra.mxu0 %v9222
    %v9436 = vpop.f32.mrf.mxu0
    %v9437 = vadd.f32 0.0, %v9436
    %v9438 = vpop.f32.mrf.mxu0
    %v9439 = vpop.f32.mrf.mxu0
    %v9440 = vadd.f32 0.0, %v9439
    %v9441 = vpop.f32.mrf.mxu0
    %9442 = vmatprep.mubr.bf16.mxu0 0
    %9443 = vmatmul.mubr.bf16.gmra.mxu0 %v9225
    %v9444 = vpop.f32.mrf.mxu0
    %v9445 = vadd.f32 0.0, %v9444
    %v9446 = vpop.f32.mrf.mxu0
    %v9447 = vpop.f32.mrf.mxu0
    %v9448 = vadd.f32 0.0, %v9447
    %v9449 = vpop.f32.mrf.mxu0
    %9450 = vmatprep.mubr.bf16.mxu0 0
    %9451 = vmatmul.mubr.bf16.gmra.mxu0 %v9228
    %v9452 = vpop.f32.mrf.mxu0
    %v9453 = vadd.f32 0.0, %v9452
    %v9454 = vpop.f32.mrf.mxu0
    %v9455 = vpop.f32.mrf.mxu0
    %v9456 = vadd.f32 0.0, %v9455
    %v9457 = vpop.f32.mrf.mxu0
    %9458 = vmatprep.mubr.bf16.mxu0 0
    %9459 = vmatmul.mubr.bf16.gmra.mxu0 %v9231
    %v9460 = vpop.f32.mrf.mxu0
    %v9461 = vadd.f32 0.0, %v9460
    %v9462 = vpop.f32.mrf.mxu0
    %v9463 = vpop.f32.mrf.mxu0
    %v9464 = vadd.f32 0.0, %v9463
    %v9465 = vpop.f32.mrf.mxu0
    %9466 = vmatprep.mubr.bf16.mxu0 0
    %9467 = vmatmul.mubr.bf16.gmra.mxu0 %v9234
    %v9468 = vpop.f32.mrf.mxu0
    %v9469 = vadd.f32 0.0, %v9468
    %v9470 = vpop.f32.mrf.mxu0
    %v9471 = vpop.f32.mrf.mxu0
    %v9472 = vadd.f32 0.0, %v9471
    %v9473 = vpop.f32.mrf.mxu0
    %9474 = vmatprep.mubr.bf16.mxu0 0
    %9475 = vmatmul.mubr.bf16.gmra.mxu0 %v9237
    %v9476 = vpop.f32.mrf.mxu0
    %v9477 = vadd.f32 0.0, %v9476
    %v9478 = vpop.f32.mrf.mxu0
    %v9479 = vpop.f32.mrf.mxu0
    %v9480 = vadd.f32 0.0, %v9479
    %v9481 = vpop.f32.mrf.mxu0
    %9482 = vmatprep.mubr.bf16.mxu0 0
    %9483 = vmatmul.mubr.bf16.gmra.mxu0 %v9240
    %v9484 = vpop.f32.mrf.mxu0
    %v9485 = vadd.f32 0.0, %v9484
    %v9486 = vpop.f32.mrf.mxu0
    %v9487 = vpop.f32.mrf.mxu0
    %v9488 = vadd.f32 0.0, %v9487
    %v9489 = vpop.f32.mrf.mxu0
    %9490 = vmatprep.mubr.bf16.mxu0 0
    %9491 = vmatmul.mubr.bf16.gmra.mxu0 %v9243
    %v9492 = vpop.f32.mrf.mxu0
    %v9493 = vadd.f32 0.0, %v9492
    %v9494 = vpop.f32.mrf.mxu0
    %v9495 = vpop.f32.mrf.mxu0
    %v9496 = vadd.f32 0.0, %v9495
    %v9497 = vpop.f32.mrf.mxu0
    %9498 = vmatprep.mubr.bf16.mxu0 0
    %9499 = vmatmul.mubr.bf16.gmra.mxu0 %v9246
    %v9500 = vpop.f32.mrf.mxu0
    %v9501 = vadd.f32 0.0, %v9500
    %v9502 = vpop.f32.mrf.mxu0
    %v9503 = vpop.f32.mrf.mxu0
    %v9504 = vadd.f32 0.0, %v9503
    %v9505 = vpop.f32.mrf.mxu0
    %9506 = vmatprep.mubr.bf16.mxu0 0
    %9507 = vmatmul.mubr.bf16.gmra.mxu0 %v9249
    %v9508 = vpop.f32.mrf.mxu0
    %v9509 = vadd.f32 0.0, %v9508
    %v9510 = vpop.f32.mrf.mxu0
    %v9511 = vpop.f32.mrf.mxu0
    %v9512 = vadd.f32 0.0, %v9511
    %v9513 = vpop.f32.mrf.mxu0
    %9514 = vmatprep.mubr.bf16.mxu0 0
    %9515 = vmatmul.mubr.bf16.gmra.mxu0 %v9252
    %v9516 = vpop.f32.mrf.mxu0
    %v9517 = vadd.f32 0.0, %v9516
    %v9518 = vpop.f32.mrf.mxu0
    %v9519 = vpop.f32.mrf.mxu0
    %v9520 = vadd.f32 0.0, %v9519
    %v9521 = vpop.f32.mrf.mxu0
    %9522 = vmatprep.mubr.bf16.mxu0 0
    %9523 = vmatmul.mubr.bf16.gmra.mxu0 %v9255
    %v9524 = vpop.f32.mrf.mxu0
    %v9525 = vadd.f32 0.0, %v9524
    %v9526 = vpop.f32.mrf.mxu0
    %v9527 = vpop.f32.mrf.mxu0
    %v9528 = vadd.f32 0.0, %v9527
    %v9529 = vpop.f32.mrf.mxu0
    %9530 = vmatprep.mubr.bf16.mxu0 0
    %9531 = vmatmul.mubr.bf16.gmra.mxu0 %v9258
    %v9532 = vpop.f32.mrf.mxu0
    %v9533 = vadd.f32 0.0, %v9532
    %v9534 = vpop.f32.mrf.mxu0
    %v9535 = vpop.f32.mrf.mxu0
    %v9536 = vadd.f32 0.0, %v9535
    %v9537 = vpop.f32.mrf.mxu0
    %9538 = vmatprep.mubr.bf16.mxu0 0
    %9539 = vmatmul.mubr.bf16.gmra.mxu0 %v9261
    %v9540 = vpop.f32.mrf.mxu0
    %v9541 = vadd.f32 0.0, %v9540
    %v9542 = vpop.f32.mrf.mxu0
    %v9543 = vpop.f32.mrf.mxu0
    %v9544 = vadd.f32 0.0, %v9543
    %v9545 = vpop.f32.mrf.mxu0
    %9546 = vmatprep.mubr.bf16.mxu0 0
    %9547 = vmatmul.mubr.bf16.gmra.mxu0 %v9264
    %v9548 = vpop.f32.mrf.mxu0
    %v9549 = vadd.f32 0.0, %v9548
    %v9550 = vpop.f32.mrf.mxu0
    %v9551 = vpop.f32.mrf.mxu0
    %v9552 = vadd.f32 0.0, %v9551
    %v9553 = vpop.f32.mrf.mxu0
    %9554 = vdwg.mxu0
    %v9555 = vadd.f32 %v8848, %v9301
    %v9556 = vadd.f32 %v8849, %v9304
    %v9557 = vadd.f32 %v8850, %v9309
    %v9558 = vadd.f32 %v8851, %v9312
    %v9559 = vadd.f32 %v8852, %v9317
    %v9560 = vadd.f32 %v8853, %v9320
    %v9561 = vadd.f32 %v8854, %v9325
    %v9562 = vadd.f32 %v8855, %v9328
    %v9563 = vadd.f32 %v8856, %v9333
    %v9564 = vadd.f32 %v8857, %v9336
    %v9565 = vadd.f32 %v8858, %v9341
    %v9566 = vadd.f32 %v8859, %v9344
    %v9567 = vadd.f32 %v8860, %v9349
    %v9568 = vadd.f32 %v8861, %v9352
    %v9569 = vadd.f32 %v8862, %v9357
    %v9570 = vadd.f32 %v8863, %v9360
    %v9571 = vadd.f32 %v8864, %v9365
    %v9572 = vadd.f32 %v8865, %v9368
    %v9573 = vadd.f32 %v8866, %v9373
    %v9574 = vadd.f32 %v8867, %v9376
    %v9575 = vadd.f32 %v8868, %v9381
    %v9576 = vadd.f32 %v8869, %v9384
    %v9577 = vadd.f32 %v8870, %v9389
    %v9578 = vadd.f32 %v8871, %v9392
    %v9579 = vadd.f32 %v8872, %v9397
    %v9580 = vadd.f32 %v8873, %v9400
    %v9581 = vadd.f32 %v8874, %v9405
    %v9582 = vadd.f32 %v8875, %v9408
    %v9583 = vadd.f32 %v8876, %v9413
    %v9584 = vadd.f32 %v8877, %v9416
    %v9585 = vadd.f32 %v8878, %v9421
    %v9586 = vadd.f32 %v8879, %v9424
    %v9587 = vadd.f32 %v8880, %v9429
    %v9588 = vadd.f32 %v8881, %v9432
    %v9589 = vadd.f32 %v8882, %v9437
    %v9590 = vadd.f32 %v8883, %v9440
    %v9591 = vadd.f32 %v8884, %v9445
    %v9592 = vadd.f32 %v8885, %v9448
    %v9593 = vadd.f32 %v8886, %v9453
    %v9594 = vadd.f32 %v8887, %v9456
    %v9595 = vadd.f32 %v8888, %v9461
    %v9596 = vadd.f32 %v8889, %v9464
    %v9597 = vadd.f32 %v8890, %v9469
    %v9598 = vadd.f32 %v8891, %v9472
    %v9599 = vadd.f32 %v8892, %v9477
    %v9600 = vadd.f32 %v8893, %v9480
    %v9601 = vadd.f32 %v8894, %v9485
    %v9602 = vadd.f32 %v8895, %v9488
    %v9603 = vadd.f32 %v8896, %v9493
    %v9604 = vadd.f32 %v8897, %v9496
    %v9605 = vadd.f32 %v8898, %v9501
    %v9606 = vadd.f32 %v8899, %v9504
    %v9607 = vadd.f32 %v8900, %v9509
    %v9608 = vadd.f32 %v8901, %v9512
    %v9609 = vadd.f32 %v8902, %v9517
    %v9610 = vadd.f32 %v8903, %v9520
    %v9611 = vadd.f32 %v8904, %v9525
    %v9612 = vadd.f32 %v8905, %v9528
    %v9613 = vadd.f32 %v8906, %v9533
    %v9614 = vadd.f32 %v8907, %v9536
    %v9615 = vadd.f32 %v8908, %v9541
    %v9616 = vadd.f32 %v8909, %v9544
    %v9617 = vadd.f32 %v8910, %v9549
    %v9618 = vadd.f32 %v8911, %v9552
    %v9619 = vld [vmem:[%s8912] sm:$0xf]
    %v9620 = vld [vmem:[%s8912 + $0x4] sm:$0xf]
    %v9621 = vld [vmem:[%s8912 + $0x8] sm:$0x1]
    %v9622 = vld [vmem:[%s8912 + $0xc] sm:$0xf]
    %v9623 = vld [vmem:[%s8912 + $0x10] sm:$0xf]
    %v9624 = vld [vmem:[%s8912 + $0x14] sm:$0x1]
    %v9625 = vld [vmem:[%s8912 + $0x18] sm:$0xf]
    %v9626 = vld [vmem:[%s8912 + $0x1c] sm:$0xf]
    %v9627 = vld [vmem:[%s8912 + $0x20] sm:$0x1]
    %v9628 = vld [vmem:[%s8912 + $0x24] sm:$0xf]
    %v9629 = vld [vmem:[%s8912 + $0x28] sm:$0xf]
    %v9630 = vld [vmem:[%s8912 + $0x2c] sm:$0x1]
    %v9631 = vld [vmem:[%s8912 + $0x30] sm:$0xf]
    %v9632 = vld [vmem:[%s8912 + $0x34] sm:$0xf]
    %v9633 = vld [vmem:[%s8912 + $0x38] sm:$0x1]
    %v9634 = vld [vmem:[%s8912 + $0x3c] sm:$0xf]
    %v9635 = vld [vmem:[%s8912 + $0x40] sm:$0xf]
    %v9636 = vld [vmem:[%s8912 + $0x44] sm:$0x1]
    %v9637 = vld [vmem:[%s8912 + $0x48] sm:$0xf]
    %v9638 = vld [vmem:[%s8912 + $0x4c] sm:$0xf]
    %v9639 = vld [vmem:[%s8912 + $0x50] sm:$0x1]
    %v9640 = vld [vmem:[%s8912 + $0x54] sm:$0xf]
    %v9641 = vld [vmem:[%s8912 + $0x58] sm:$0xf]
    %v9642 = vld [vmem:[%s8912 + $0x5c] sm:$0x1]
    %v9643 = vld [vmem:[%s8912 + $0x60] sm:$0xf]
    %v9644 = vld [vmem:[%s8912 + $0x64] sm:$0xf]
    %v9645 = vld [vmem:[%s8912 + $0x68] sm:$0x1]
    %v9646 = vld [vmem:[%s8912 + $0x6c] sm:$0xf]
    %v9647 = vld [vmem:[%s8912 + $0x70] sm:$0xf]
    %v9648 = vld [vmem:[%s8912 + $0x74] sm:$0x1]
    %v9649 = vld [vmem:[%s8912 + $0x78] sm:$0xf]
    %v9650 = vld [vmem:[%s8912 + $0x7c] sm:$0xf]
    %v9651 = vld [vmem:[%s8912 + $0x80] sm:$0x1]
    %v9652 = vld [vmem:[%s8912 + $0x84] sm:$0xf]
    %v9653 = vld [vmem:[%s8912 + $0x88] sm:$0xf]
    %v9654 = vld [vmem:[%s8912 + $0x8c] sm:$0x1]
    %v9655 = vld [vmem:[%s8912 + $0x90] sm:$0xf]
    %v9656 = vld [vmem:[%s8912 + $0x94] sm:$0xf]
    %v9657 = vld [vmem:[%s8912 + $0x98] sm:$0x1]
    %v9658 = vld [vmem:[%s8912 + $0x9c] sm:$0xf]
    %v9659 = vld [vmem:[%s8912 + $0xa0] sm:$0xf]
    %v9660 = vld [vmem:[%s8912 + $0xa4] sm:$0x1]
    %v9661 = vld [vmem:[%s8912 + $0xa8] sm:$0xf]
    %v9662 = vld [vmem:[%s8912 + $0xac] sm:$0xf]
    %v9663 = vld [vmem:[%s8912 + $0xb0] sm:$0x1]
    %v9664 = vld [vmem:[%s8912 + $0xb4] sm:$0xf]
    %v9665 = vld [vmem:[%s8912 + $0xb8] sm:$0xf]
    %v9666 = vld [vmem:[%s8912 + $0xbc] sm:$0x1]
    %v9667 = vld [vmem:[%s8912 + $0xd8] sm:$0xf]
    %v9668 = vld [vmem:[%s8912 + $0xdc] sm:$0xf]
    %v9669 = vld [vmem:[%s8912 + $0xe0] sm:$0x1]
    %v9670 = vld [vmem:[%s8912 + $0xe4] sm:$0xf]
    %v9671 = vld [vmem:[%s8912 + $0xe8] sm:$0xf]
    %v9672 = vld [vmem:[%s8912 + $0xec] sm:$0x1]
    %v9673 = vld [vmem:[%s8912 + $0xf0] sm:$0xf]
    %v9674 = vld [vmem:[%s8912 + $0xf4] sm:$0xf]
    %v9675 = vld [vmem:[%s8912 + $0xf8] sm:$0x1]
    %v9676 = vld [vmem:[%s8912 + $0xfc] sm:$0xf]
    %v9677 = vld [vmem:[%s8912 + $0x100] sm:$0xf]
    %v9678 = vld [vmem:[%s8912 + $0x104] sm:$0x1]
    %v9679 = vld [vmem:[%s8912 + $0x108] sm:$0xf]
    %v9680 = vld [vmem:[%s8912 + $0x10c] sm:$0xf]
    %v9681 = vld [vmem:[%s8912 + $0x110] sm:$0x1]
    %v9682 = vld [vmem:[%s8912 + $0x114] sm:$0xf]
    %v9683 = vld [vmem:[%s8912 + $0x118] sm:$0xf]
    %v9684 = vld [vmem:[%s8912 + $0x11c] sm:$0x1]
    %v9685 = vld [vmem:[%s8912 + $0x120] sm:$0xf]
    %v9686 = vld [vmem:[%s8912 + $0x124] sm:$0xf]
    %v9687 = vld [vmem:[%s8912 + $0x128] sm:$0x1]
    %v9688 = vld [vmem:[%s8912 + $0x12c] sm:$0xf]
    %v9689 = vld [vmem:[%s8912 + $0x130] sm:$0xf]
    %v9690 = vld [vmem:[%s8912 + $0x134] sm:$0x1]
    %v9691 = vld [vmem:[%s8912 + $0x138] sm:$0xf]
    %v9692 = vld [vmem:[%s8912 + $0x13c] sm:$0xf]
    %v9693 = vld [vmem:[%s8912 + $0x140] sm:$0x1]
    %v9694 = vld [vmem:[%s8912 + $0x144] sm:$0xf]
    %v9695 = vld [vmem:[%s8912 + $0x148] sm:$0xf]
    %v9696 = vld [vmem:[%s8912 + $0x14c] sm:$0x1]
    %v9697 = vld [vmem:[%s8912 + $0x150] sm:$0xf]
    %v9698 = vld [vmem:[%s8912 + $0x154] sm:$0xf]
    %v9699 = vld [vmem:[%s8912 + $0x158] sm:$0x1]
    %v9700 = vld [vmem:[%s8912 + $0x15c] sm:$0xf]
    %v9701 = vld [vmem:[%s8912 + $0x160] sm:$0xf]
    %v9702 = vld [vmem:[%s8912 + $0x164] sm:$0x1]
    %v9703 = vld [vmem:[%s8912 + $0x168] sm:$0xf]
    %v9704 = vld [vmem:[%s8912 + $0x16c] sm:$0xf]
    %v9705 = vld [vmem:[%s8912 + $0x170] sm:$0x1]
    %v9706 = vld [vmem:[%s8912 + $0x174] sm:$0xf]
    %v9707 = vld [vmem:[%s8912 + $0x178] sm:$0xf]
    %v9708 = vld [vmem:[%s8912 + $0x17c] sm:$0x1]
    %v9709 = vld [vmem:[%s8912 + $0x180] sm:$0xf]
    %v9710 = vld [vmem:[%s8912 + $0x184] sm:$0xf]
    %v9711 = vld [vmem:[%s8912 + $0x188] sm:$0x1]
    %v9712 = vld [vmem:[%s8912 + $0x18c] sm:$0xf]
    %v9713 = vld [vmem:[%s8912 + $0x190] sm:$0xf]
    %v9714 = vld [vmem:[%s8912 + $0x194] sm:$0x1]
    %v9716 = vshrl.u32 %v9619, 16
    %v9718 = vrot.slane %v9716, 4
    %v9719 = vshll.u32 %v9619, 16
    %v9721 = vrot.slane %v9719, 5
    %v9722 = vor.u32 %v9718, %v9721
    %v9723 = vrot.slane %v9722, 4
    %v9725 = vshll.u32 %v9620, 16
    %v9727 = vrot.slane %v9725, 5
    %v9728 = vsel %vm3081, %v9723, %v9727
    %v9729 = vshrl.u32 %v9620, 16
    %v9731 = vrot.slane %v9729, 4
    %v9732 = vor.u32 %v9731, %v9727
    %v9733 = vrot.slane %v9732, 4
    %v9735 = vshll.u32 %v9621, 16
    %v9737 = vrot.slane %v9735, 5
    %v9738 = vsel %vm3081, %v9733, %v9737
    %v9740 = vshrl.u32 %v9622, 16
    %v9742 = vrot.slane %v9740, 4
    %v9743 = vshll.u32 %v9622, 16
    %v9745 = vrot.slane %v9743, 5
    %v9746 = vor.u32 %v9742, %v9745
    %v9747 = vrot.slane %v9746, 4
    %v9749 = vshll.u32 %v9623, 16
    %v9751 = vrot.slane %v9749, 5
    %v9752 = vsel %vm3081, %v9747, %v9751
    %v9753 = vshrl.u32 %v9623, 16
    %v9755 = vrot.slane %v9753, 4
    %v9756 = vor.u32 %v9755, %v9751
    %v9757 = vrot.slane %v9756, 4
    %v9759 = vshll.u32 %v9624, 16
    %v9761 = vrot.slane %v9759, 5
    %v9762 = vsel %vm3081, %v9757, %v9761
    %v9764 = vshrl.u32 %v9625, 16
    %v9766 = vrot.slane %v9764, 4
    %v9767 = vshll.u32 %v9625, 16
    %v9769 = vrot.slane %v9767, 5
    %v9770 = vor.u32 %v9766, %v9769
    %v9771 = vrot.slane %v9770, 4
    %v9773 = vshll.u32 %v9626, 16
    %v9775 = vrot.slane %v9773, 5
    %v9776 = vsel %vm3081, %v9771, %v9775
    %v9777 = vshrl.u32 %v9626, 16
    %v9779 = vrot.slane %v9777, 4
    %v9780 = vor.u32 %v9779, %v9775
    %v9781 = vrot.slane %v9780, 4
    %v9783 = vshll.u32 %v9627, 16
    %v9785 = vrot.slane %v9783, 5
    %v9786 = vsel %vm3081, %v9781, %v9785
    %v9788 = vshrl.u32 %v9628, 16
    %v9790 = vrot.slane %v9788, 4
    %v9791 = vshll.u32 %v9628, 16
    %v9793 = vrot.slane %v9791, 5
    %v9794 = vor.u32 %v9790, %v9793
    %v9795 = vrot.slane %v9794, 4
    %v9797 = vshll.u32 %v9629, 16
    %v9799 = vrot.slane %v9797, 5
    %v9800 = vsel %vm3081, %v9795, %v9799
    %v9801 = vshrl.u32 %v9629, 16
    %v9803 = vrot.slane %v9801, 4
    %v9804 = vor.u32 %v9803, %v9799
    %v9805 = vrot.slane %v9804, 4
    %v9807 = vshll.u32 %v9630, 16
    %v9809 = vrot.slane %v9807, 5
    %v9810 = vsel %vm3081, %v9805, %v9809
    %v9812 = vshrl.u32 %v9631, 16
    %v9814 = vrot.slane %v9812, 4
    %v9815 = vshll.u32 %v9631, 16
    %v9817 = vrot.slane %v9815, 5
    %v9818 = vor.u32 %v9814, %v9817
    %v9819 = vrot.slane %v9818, 4
    %v9821 = vshll.u32 %v9632, 16
    %v9823 = vrot.slane %v9821, 5
    %v9824 = vsel %vm3081, %v9819, %v9823
    %v9825 = vshrl.u32 %v9632, 16
    %v9827 = vrot.slane %v9825, 4
    %v9828 = vor.u32 %v9827, %v9823
    %v9829 = vrot.slane %v9828, 4
    %v9831 = vshll.u32 %v9633, 16
    %v9833 = vrot.slane %v9831, 5
    %v9834 = vsel %vm3081, %v9829, %v9833
    %v9836 = vshrl.u32 %v9634, 16
    %v9838 = vrot.slane %v9836, 4
    %v9839 = vshll.u32 %v9634, 16
    %v9841 = vrot.slane %v9839, 5
    %v9842 = vor.u32 %v9838, %v9841
    %v9843 = vrot.slane %v9842, 4
    %v9845 = vshll.u32 %v9635, 16
    %v9847 = vrot.slane %v9845, 5
    %v9848 = vsel %vm3081, %v9843, %v9847
    %v9849 = vshrl.u32 %v9635, 16
    %v9851 = vrot.slane %v9849, 4
    %v9852 = vor.u32 %v9851, %v9847
    %v9853 = vrot.slane %v9852, 4
    %v9855 = vshll.u32 %v9636, 16
    %v9857 = vrot.slane %v9855, 5
    %v9858 = vsel %vm3081, %v9853, %v9857
    %v9860 = vshrl.u32 %v9637, 16
    %v9862 = vrot.slane %v9860, 4
    %v9863 = vshll.u32 %v9637, 16
    %v9865 = vrot.slane %v9863, 5
    %v9866 = vor.u32 %v9862, %v9865
    %v9867 = vrot.slane %v9866, 4
    %v9869 = vshll.u32 %v9638, 16
    %v9871 = vrot.slane %v9869, 5
    %v9872 = vsel %vm3081, %v9867, %v9871
    %v9873 = vshrl.u32 %v9638, 16
    %v9875 = vrot.slane %v9873, 4
    %v9876 = vor.u32 %v9875, %v9871
    %v9877 = vrot.slane %v9876, 4
    %v9879 = vshll.u32 %v9639, 16
    %v9881 = vrot.slane %v9879, 5
    %v9882 = vsel %vm3081, %v9877, %v9881
    %v9884 = vshrl.u32 %v9640, 16
    %v9886 = vrot.slane %v9884, 4
    %v9887 = vshll.u32 %v9640, 16
    %v9889 = vrot.slane %v9887, 5
    %v9890 = vor.u32 %v9886, %v9889
    %v9891 = vrot.slane %v9890, 4
    %v9893 = vshll.u32 %v9641, 16
    %v9895 = vrot.slane %v9893, 5
    %v9896 = vsel %vm3081, %v9891, %v9895
    %v9897 = vshrl.u32 %v9641, 16
    %v9899 = vrot.slane %v9897, 4
    %v9900 = vor.u32 %v9899, %v9895
    %v9901 = vrot.slane %v9900, 4
    %v9903 = vshll.u32 %v9642, 16
    %v9905 = vrot.slane %v9903, 5
    %v9906 = vsel %vm3081, %v9901, %v9905
    %v9908 = vshrl.u32 %v9643, 16
    %v9910 = vrot.slane %v9908, 4
    %v9911 = vshll.u32 %v9643, 16
    %v9913 = vrot.slane %v9911, 5
    %v9914 = vor.u32 %v9910, %v9913
    %v9915 = vrot.slane %v9914, 4
    %v9917 = vshll.u32 %v9644, 16
    %v9919 = vrot.slane %v9917, 5
    %v9920 = vsel %vm3081, %v9915, %v9919
    %v9921 = vshrl.u32 %v9644, 16
    %v9923 = vrot.slane %v9921, 4
    %v9924 = vor.u32 %v9923, %v9919
    %v9925 = vrot.slane %v9924, 4
    %v9927 = vshll.u32 %v9645, 16
    %v9929 = vrot.slane %v9927, 5
    %v9930 = vsel %vm3081, %v9925, %v9929
    %v9932 = vshrl.u32 %v9646, 16
    %v9934 = vrot.slane %v9932, 4
    %v9935 = vshll.u32 %v9646, 16
    %v9937 = vrot.slane %v9935, 5
    %v9938 = vor.u32 %v9934, %v9937
    %v9939 = vrot.slane %v9938, 4
    %v9941 = vshll.u32 %v9647, 16
    %v9943 = vrot.slane %v9941, 5
    %v9944 = vsel %vm3081, %v9939, %v9943
    %v9945 = vshrl.u32 %v9647, 16
    %v9947 = vrot.slane %v9945, 4
    %v9948 = vor.u32 %v9947, %v9943
    %v9949 = vrot.slane %v9948, 4
    %v9951 = vshll.u32 %v9648, 16
    %v9953 = vrot.slane %v9951, 5
    %v9954 = vsel %vm3081, %v9949, %v9953
    %v9956 = vshrl.u32 %v9649, 16
    %v9958 = vrot.slane %v9956, 4
    %v9959 = vshll.u32 %v9649, 16
    %v9961 = vrot.slane %v9959, 5
    %v9962 = vor.u32 %v9958, %v9961
    %v9963 = vrot.slane %v9962, 4
    %v9965 = vshll.u32 %v9650, 16
    %v9967 = vrot.slane %v9965, 5
    %v9968 = vsel %vm3081, %v9963, %v9967
    %v9969 = vshrl.u32 %v9650, 16
    %v9971 = vrot.slane %v9969, 4
    %v9972 = vor.u32 %v9971, %v9967
    %v9973 = vrot.slane %v9972, 4
    %v9975 = vshll.u32 %v9651, 16
    %v9977 = vrot.slane %v9975, 5
    %v9978 = vsel %vm3081, %v9973, %v9977
    %v9980 = vshrl.u32 %v9652, 16
    %v9982 = vrot.slane %v9980, 4
    %v9983 = vshll.u32 %v9652, 16
    %v9985 = vrot.slane %v9983, 5
    %v9986 = vor.u32 %v9982, %v9985
    %v9987 = vrot.slane %v9986, 4
    %v9989 = vshll.u32 %v9653, 16
    %v9991 = vrot.slane %v9989, 5
    %v9992 = vsel %vm3081, %v9987, %v9991
    %v9993 = vshrl.u32 %v9653, 16
    %v9995 = vrot.slane %v9993, 4
    %v9996 = vor.u32 %v9995, %v9991
    %v9997 = vrot.slane %v9996, 4
    %v9999 = vshll.u32 %v9654, 16
    %v10001 = vrot.slane %v9999, 5
    %v10002 = vsel %vm3081, %v9997, %v10001
    %v10004 = vshrl.u32 %v9655, 16
    %v10006 = vrot.slane %v10004, 4
    %v10007 = vshll.u32 %v9655, 16
    %v10009 = vrot.slane %v10007, 5
    %v10010 = vor.u32 %v10006, %v10009
    %v10011 = vrot.slane %v10010, 4
    %v10013 = vshll.u32 %v9656, 16
    %v10015 = vrot.slane %v10013, 5
    %v10016 = vsel %vm3081, %v10011, %v10015
    %v10017 = vshrl.u32 %v9656, 16
    %v10019 = vrot.slane %v10017, 4
    %v10020 = vor.u32 %v10019, %v10015
    %v10021 = vrot.slane %v10020, 4
    %v10023 = vshll.u32 %v9657, 16
    %v10025 = vrot.slane %v10023, 5
    %v10026 = vsel %vm3081, %v10021, %v10025
    %v10028 = vshrl.u32 %v9658, 16
    %v10030 = vrot.slane %v10028, 4
    %v10031 = vshll.u32 %v9658, 16
    %v10033 = vrot.slane %v10031, 5
    %v10034 = vor.u32 %v10030, %v10033
    %v10035 = vrot.slane %v10034, 4
    %v10037 = vshll.u32 %v9659, 16
    %v10039 = vrot.slane %v10037, 5
    %v10040 = vsel %vm3081, %v10035, %v10039
    %v10041 = vshrl.u32 %v9659, 16
    %v10043 = vrot.slane %v10041, 4
    %v10044 = vor.u32 %v10043, %v10039
    %v10045 = vrot.slane %v10044, 4
    %v10047 = vshll.u32 %v9660, 16
    %v10049 = vrot.slane %v10047, 5
    %v10050 = vsel %vm3081, %v10045, %v10049
    %v10052 = vshrl.u32 %v9661, 16
    %v10054 = vrot.slane %v10052, 4
    %v10055 = vshll.u32 %v9661, 16
    %v10057 = vrot.slane %v10055, 5
    %v10058 = vor.u32 %v10054, %v10057
    %v10059 = vrot.slane %v10058, 4
    %v10061 = vshll.u32 %v9662, 16
    %v10063 = vrot.slane %v10061, 5
    %v10064 = vsel %vm3081, %v10059, %v10063
    %v10065 = vshrl.u32 %v9662, 16
    %v10067 = vrot.slane %v10065, 4
    %v10068 = vor.u32 %v10067, %v10063
    %v10069 = vrot.slane %v10068, 4
    %v10071 = vshll.u32 %v9663, 16
    %v10073 = vrot.slane %v10071, 5
    %v10074 = vsel %vm3081, %v10069, %v10073
    %v10076 = vshrl.u32 %v9664, 16
    %v10078 = vrot.slane %v10076, 4
    %v10079 = vshll.u32 %v9664, 16
    %v10081 = vrot.slane %v10079, 5
    %v10082 = vor.u32 %v10078, %v10081
    %v10083 = vrot.slane %v10082, 4
    %v10085 = vshll.u32 %v9665, 16
    %v10087 = vrot.slane %v10085, 5
    %v10088 = vsel %vm3081, %v10083, %v10087
    %v10089 = vshrl.u32 %v9665, 16
    %v10091 = vrot.slane %v10089, 4
    %v10092 = vor.u32 %v10091, %v10087
    %v10093 = vrot.slane %v10092, 4
    %v10095 = vshll.u32 %v9666, 16
    %v10097 = vrot.slane %v10095, 5
    %v10098 = vsel %vm3081, %v10093, %v10097
    %v10100 = vshrl.u32 %v9667, 16
    %v10102 = vrot.slane %v10100, 4
    %v10103 = vshll.u32 %v9667, 16
    %v10105 = vrot.slane %v10103, 5
    %v10106 = vor.u32 %v10102, %v10105
    %v10107 = vrot.slane %v10106, 4
    %v10109 = vshll.u32 %v9668, 16
    %v10111 = vrot.slane %v10109, 5
    %v10112 = vsel %vm3081, %v10107, %v10111
    %v10113 = vshrl.u32 %v9668, 16
    %v10115 = vrot.slane %v10113, 4
    %v10116 = vor.u32 %v10115, %v10111
    %v10117 = vrot.slane %v10116, 4
    %v10119 = vshll.u32 %v9669, 16
    %v10121 = vrot.slane %v10119, 5
    %v10122 = vsel %vm3081, %v10117, %v10121
    %v10124 = vshrl.u32 %v9670, 16
    %v10126 = vrot.slane %v10124, 4
    %v10127 = vshll.u32 %v9670, 16
    %v10129 = vrot.slane %v10127, 5
    %v10130 = vor.u32 %v10126, %v10129
    %v10131 = vrot.slane %v10130, 4
    %v10133 = vshll.u32 %v9671, 16
    %v10135 = vrot.slane %v10133, 5
    %v10136 = vsel %vm3081, %v10131, %v10135
    %v10137 = vshrl.u32 %v9671, 16
    %v10139 = vrot.slane %v10137, 4
    %v10140 = vor.u32 %v10139, %v10135
    %v10141 = vrot.slane %v10140, 4
    %v10143 = vshll.u32 %v9672, 16
    %v10145 = vrot.slane %v10143, 5
    %v10146 = vsel %vm3081, %v10141, %v10145
    %v10148 = vshrl.u32 %v9673, 16
    %v10150 = vrot.slane %v10148, 4
    %v10151 = vshll.u32 %v9673, 16
    %v10153 = vrot.slane %v10151, 5
    %v10154 = vor.u32 %v10150, %v10153
    %v10155 = vrot.slane %v10154, 4
    %v10157 = vshll.u32 %v9674, 16
    %v10159 = vrot.slane %v10157, 5
    %v10160 = vsel %vm3081, %v10155, %v10159
    %v10161 = vshrl.u32 %v9674, 16
    %v10163 = vrot.slane %v10161, 4
    %v10164 = vor.u32 %v10163, %v10159
    %v10165 = vrot.slane %v10164, 4
    %v10167 = vshll.u32 %v9675, 16
    %v10169 = vrot.slane %v10167, 5
    %v10170 = vsel %vm3081, %v10165, %v10169
    %v10172 = vshrl.u32 %v9676, 16
    %v10174 = vrot.slane %v10172, 4
    %v10175 = vshll.u32 %v9676, 16
    %v10177 = vrot.slane %v10175, 5
    %v10178 = vor.u32 %v10174, %v10177
    %v10179 = vrot.slane %v10178, 4
    %v10181 = vshll.u32 %v9677, 16
    %v10183 = vrot.slane %v10181, 5
    %v10184 = vsel %vm3081, %v10179, %v10183
    %v10185 = vshrl.u32 %v9677, 16
    %v10187 = vrot.slane %v10185, 4
    %v10188 = vor.u32 %v10187, %v10183
    %v10189 = vrot.slane %v10188, 4
    %v10191 = vshll.u32 %v9678, 16
    %v10193 = vrot.slane %v10191, 5
    %v10194 = vsel %vm3081, %v10189, %v10193
    %v10196 = vshrl.u32 %v9679, 16
    %v10198 = vrot.slane %v10196, 4
    %v10199 = vshll.u32 %v9679, 16
    %v10201 = vrot.slane %v10199, 5
    %v10202 = vor.u32 %v10198, %v10201
    %v10203 = vrot.slane %v10202, 4
    %v10205 = vshll.u32 %v9680, 16
    %v10207 = vrot.slane %v10205, 5
    %v10208 = vsel %vm3081, %v10203, %v10207
    %v10209 = vshrl.u32 %v9680, 16
    %v10211 = vrot.slane %v10209, 4
    %v10212 = vor.u32 %v10211, %v10207
    %v10213 = vrot.slane %v10212, 4
    %v10215 = vshll.u32 %v9681, 16
    %v10217 = vrot.slane %v10215, 5
    %v10218 = vsel %vm3081, %v10213, %v10217
    %v10220 = vshrl.u32 %v9682, 16
    %v10222 = vrot.slane %v10220, 4
    %v10223 = vshll.u32 %v9682, 16
    %v10225 = vrot.slane %v10223, 5
    %v10226 = vor.u32 %v10222, %v10225
    %v10227 = vrot.slane %v10226, 4
    %v10229 = vshll.u32 %v9683, 16
    %v10231 = vrot.slane %v10229, 5
    %v10232 = vsel %vm3081, %v10227, %v10231
    %v10233 = vshrl.u32 %v9683, 16
    %v10235 = vrot.slane %v10233, 4
    %v10236 = vor.u32 %v10235, %v10231
    %v10237 = vrot.slane %v10236, 4
    %v10239 = vshll.u32 %v9684, 16
    %v10241 = vrot.slane %v10239, 5
    %v10242 = vsel %vm3081, %v10237, %v10241
    %v10244 = vshrl.u32 %v9685, 16
    %v10246 = vrot.slane %v10244, 4
    %v10247 = vshll.u32 %v9685, 16
    %v10249 = vrot.slane %v10247, 5
    %v10250 = vor.u32 %v10246, %v10249
    %v10251 = vrot.slane %v10250, 4
    %v10253 = vshll.u32 %v9686, 16
    %v10255 = vrot.slane %v10253, 5
    %v10256 = vsel %vm3081, %v10251, %v10255
    %v10257 = vshrl.u32 %v9686, 16
    %v10259 = vrot.slane %v10257, 4
    %v10260 = vor.u32 %v10259, %v10255
    %v10261 = vrot.slane %v10260, 4
    %v10263 = vshll.u32 %v9687, 16
    %v10265 = vrot.slane %v10263, 5
    %v10266 = vsel %vm3081, %v10261, %v10265
    %v10268 = vshrl.u32 %v9688, 16
    %v10270 = vrot.slane %v10268, 4
    %v10271 = vshll.u32 %v9688, 16
    %v10273 = vrot.slane %v10271, 5
    %v10274 = vor.u32 %v10270, %v10273
    %v10275 = vrot.slane %v10274, 4
    %v10277 = vshll.u32 %v9689, 16
    %v10279 = vrot.slane %v10277, 5
    %v10280 = vsel %vm3081, %v10275, %v10279
    %v10281 = vshrl.u32 %v9689, 16
    %v10283 = vrot.slane %v10281, 4
    %v10284 = vor.u32 %v10283, %v10279
    %v10285 = vrot.slane %v10284, 4
    %v10287 = vshll.u32 %v9690, 16
    %v10289 = vrot.slane %v10287, 5
    %v10290 = vsel %vm3081, %v10285, %v10289
    %v10292 = vshrl.u32 %v9691, 16
    %v10294 = vrot.slane %v10292, 4
    %v10295 = vshll.u32 %v9691, 16
    %v10297 = vrot.slane %v10295, 5
    %v10298 = vor.u32 %v10294, %v10297
    %v10299 = vrot.slane %v10298, 4
    %v10301 = vshll.u32 %v9692, 16
    %v10303 = vrot.slane %v10301, 5
    %v10304 = vsel %vm3081, %v10299, %v10303
    %v10305 = vshrl.u32 %v9692, 16
    %v10307 = vrot.slane %v10305, 4
    %v10308 = vor.u32 %v10307, %v10303
    %v10309 = vrot.slane %v10308, 4
    %v10311 = vshll.u32 %v9693, 16
    %v10313 = vrot.slane %v10311, 5
    %v10314 = vsel %vm3081, %v10309, %v10313
    %v10316 = vshrl.u32 %v9694, 16
    %v10318 = vrot.slane %v10316, 4
    %v10319 = vshll.u32 %v9694, 16
    %v10321 = vrot.slane %v10319, 5
    %v10322 = vor.u32 %v10318, %v10321
    %v10323 = vrot.slane %v10322, 4
    %v10325 = vshll.u32 %v9695, 16
    %v10327 = vrot.slane %v10325, 5
    %v10328 = vsel %vm3081, %v10323, %v10327
    %v10329 = vshrl.u32 %v9695, 16
    %v10331 = vrot.slane %v10329, 4
    %v10332 = vor.u32 %v10331, %v10327
    %v10333 = vrot.slane %v10332, 4
    %v10335 = vshll.u32 %v9696, 16
    %v10337 = vrot.slane %v10335, 5
    %v10338 = vsel %vm3081, %v10333, %v10337
    %v10340 = vshrl.u32 %v9697, 16
    %v10342 = vrot.slane %v10340, 4
    %v10343 = vshll.u32 %v9697, 16
    %v10345 = vrot.slane %v10343, 5
    %v10346 = vor.u32 %v10342, %v10345
    %v10347 = vrot.slane %v10346, 4
    %v10349 = vshll.u32 %v9698, 16
    %v10351 = vrot.slane %v10349, 5
    %v10352 = vsel %vm3081, %v10347, %v10351
    %v10353 = vshrl.u32 %v9698, 16
    %v10355 = vrot.slane %v10353, 4
    %v10356 = vor.u32 %v10355, %v10351
    %v10357 = vrot.slane %v10356, 4
    %v10359 = vshll.u32 %v9699, 16
    %v10361 = vrot.slane %v10359, 5
    %v10362 = vsel %vm3081, %v10357, %v10361
    %v10364 = vshrl.u32 %v9700, 16
    %v10366 = vrot.slane %v10364, 4
    %v10367 = vshll.u32 %v9700, 16
    %v10369 = vrot.slane %v10367, 5
    %v10370 = vor.u32 %v10366, %v10369
    %v10371 = vrot.slane %v10370, 4
    %v10373 = vshll.u32 %v9701, 16
    %v10375 = vrot.slane %v10373, 5
    %v10376 = vsel %vm3081, %v10371, %v10375
    %v10377 = vshrl.u32 %v9701, 16
    %v10379 = vrot.slane %v10377, 4
    %v10380 = vor.u32 %v10379, %v10375
    %v10381 = vrot.slane %v10380, 4
    %v10383 = vshll.u32 %v9702, 16
    %v10385 = vrot.slane %v10383, 5
    %v10386 = vsel %vm3081, %v10381, %v10385
    %v10388 = vshrl.u32 %v9703, 16
    %v10390 = vrot.slane %v10388, 4
    %v10391 = vshll.u32 %v9703, 16
    %v10393 = vrot.slane %v10391, 5
    %v10394 = vor.u32 %v10390, %v10393
    %v10395 = vrot.slane %v10394, 4
    %v10397 = vshll.u32 %v9704, 16
    %v10399 = vrot.slane %v10397, 5
    %v10400 = vsel %vm3081, %v10395, %v10399
    %v10401 = vshrl.u32 %v9704, 16
    %v10403 = vrot.slane %v10401, 4
    %v10404 = vor.u32 %v10403, %v10399
    %v10405 = vrot.slane %v10404, 4
    %v10407 = vshll.u32 %v9705, 16
    %v10409 = vrot.slane %v10407, 5
    %v10410 = vsel %vm3081, %v10405, %v10409
    %v10412 = vshrl.u32 %v9706, 16
    %v10414 = vrot.slane %v10412, 4
    %v10415 = vshll.u32 %v9706, 16
    %v10417 = vrot.slane %v10415, 5
    %v10418 = vor.u32 %v10414, %v10417
    %v10419 = vrot.slane %v10418, 4
    %v10421 = vshll.u32 %v9707, 16
    %v10423 = vrot.slane %v10421, 5
    %v10424 = vsel %vm3081, %v10419, %v10423
    %v10425 = vshrl.u32 %v9707, 16
    %v10427 = vrot.slane %v10425, 4
    %v10428 = vor.u32 %v10427, %v10423
    %v10429 = vrot.slane %v10428, 4
    %v10431 = vshll.u32 %v9708, 16
    %v10433 = vrot.slane %v10431, 5
    %v10434 = vsel %vm3081, %v10429, %v10433
    %v10436 = vshrl.u32 %v9709, 16
    %v10438 = vrot.slane %v10436, 4
    %v10439 = vshll.u32 %v9709, 16
    %v10441 = vrot.slane %v10439, 5
    %v10442 = vor.u32 %v10438, %v10441
    %v10443 = vrot.slane %v10442, 4
    %v10445 = vshll.u32 %v9710, 16
    %v10447 = vrot.slane %v10445, 5
    %v10448 = vsel %vm3081, %v10443, %v10447
    %v10449 = vshrl.u32 %v9710, 16
    %v10451 = vrot.slane %v10449, 4
    %v10452 = vor.u32 %v10451, %v10447
    %v10453 = vrot.slane %v10452, 4
    %v10455 = vshll.u32 %v9711, 16
    %v10457 = vrot.slane %v10455, 5
    %v10458 = vsel %vm3081, %v10453, %v10457
    %v10460 = vshrl.u32 %v9712, 16
    %v10462 = vrot.slane %v10460, 4
    %v10463 = vshll.u32 %v9712, 16
    %v10465 = vrot.slane %v10463, 5
    %v10466 = vor.u32 %v10462, %v10465
    %v10467 = vrot.slane %v10466, 4
    %v10469 = vshll.u32 %v9713, 16
    %v10471 = vrot.slane %v10469, 5
    %v10472 = vsel %vm3081, %v10467, %v10471
    %v10473 = vshrl.u32 %v9713, 16
    %v10475 = vrot.slane %v10473, 4
    %v10476 = vor.u32 %v10475, %v10471
    %v10477 = vrot.slane %v10476, 4
    %v10479 = vshll.u32 %v9714, 16
    %v10481 = vrot.slane %v10479, 5
    %v10482 = vsel %vm3081, %v10477, %v10481
    %s10483 = scalar_lea.vmem [#allocation3], 224
    %v10484 = vld [vmem:[%s10483] sm:$0xf]
    %v10485 = vld [vmem:[%s10483 + $0x4] sm:$0xf]
    %v10486 = vld [vmem:[%s10483 + $0x8] sm:$0xf]
    %v10487 = vld [vmem:[%s10483 + $0xc] sm:$0xf]
    %v10488 = vld [vmem:[%s10483 + $0x10] sm:$0xf]
    %v10489 = vld [vmem:[%s10483 + $0x14] sm:$0xf]
    %v10490 = vld [vmem:[%s10483 + $0x18] sm:$0xf]
    %v10491 = vld [vmem:[%s10483 + $0x1c] sm:$0xf]
    %v10492 = vunpack.c.l.b16 %v9728
    %v10493 = vunpack.c.l.b16 %v9738
    %v10494 = vunpack.c.l.b16 %v9752
    %v10495 = vunpack.c.l.b16 %v9762
    %v10496 = vunpack.c.l.b16 %v9776
    %v10497 = vunpack.c.l.b16 %v9786
    %v10498 = vunpack.c.l.b16 %v9800
    %v10499 = vunpack.c.l.b16 %v9810
    %v10500 = vunpack.c.l.b16 %v9824
    %v10501 = vunpack.c.l.b16 %v9834
    %v10502 = vunpack.c.l.b16 %v9848
    %v10503 = vunpack.c.l.b16 %v9858
    %v10504 = vunpack.c.l.b16 %v9872
    %v10505 = vunpack.c.l.b16 %v9882
    %v10506 = vunpack.c.l.b16 %v9896
    %v10507 = vunpack.c.l.b16 %v9906
    %v10508 = vunpack.c.l.b16 %v9920
    %v10509 = vunpack.c.l.b16 %v9930
    %v10510 = vunpack.c.l.b16 %v9944
    %v10511 = vunpack.c.l.b16 %v9954
    %v10512 = vunpack.c.l.b16 %v9968
    %v10513 = vunpack.c.l.b16 %v9978
    %v10514 = vunpack.c.l.b16 %v9992
    %v10515 = vunpack.c.l.b16 %v10002
    %v10516 = vunpack.c.l.b16 %v10016
    %v10517 = vunpack.c.l.b16 %v10026
    %v10518 = vunpack.c.l.b16 %v10040
    %v10519 = vunpack.c.l.b16 %v10050
    %v10520 = vunpack.c.l.b16 %v10064
    %v10521 = vunpack.c.l.b16 %v10074
    %v10522 = vunpack.c.l.b16 %v10088
    %v10523 = vunpack.c.l.b16 %v10098
    %v10524 = vunpack.c.l.b16 %v10112
    %v10525 = vunpack.c.l.b16 %v10122
    %v10526 = vunpack.c.l.b16 %v10136
    %v10527 = vunpack.c.l.b16 %v10146
    %v10528 = vunpack.c.l.b16 %v10160
    %v10529 = vunpack.c.l.b16 %v10170
    %v10530 = vunpack.c.l.b16 %v10184
    %v10531 = vunpack.c.l.b16 %v10194
    %v10532 = vunpack.c.l.b16 %v10208
    %v10533 = vunpack.c.l.b16 %v10218
    %v10534 = vunpack.c.l.b16 %v10232
    %v10535 = vunpack.c.l.b16 %v10242
    %v10536 = vunpack.c.l.b16 %v10256
    %v10537 = vunpack.c.l.b16 %v10266
    %v10538 = vunpack.c.l.b16 %v10280
    %v10539 = vunpack.c.l.b16 %v10290
    %v10540 = vunpack.c.l.b16 %v10304
    %v10541 = vunpack.c.l.b16 %v10314
    %v10542 = vunpack.c.l.b16 %v10328
    %v10543 = vunpack.c.l.b16 %v10338
    %v10544 = vunpack.c.l.b16 %v10352
    %v10545 = vunpack.c.l.b16 %v10362
    %v10546 = vunpack.c.l.b16 %v10376
    %v10547 = vunpack.c.l.b16 %v10386
    %v10548 = vunpack.c.l.b16 %v10400
    %v10549 = vunpack.c.l.b16 %v10410
    %v10550 = vunpack.c.l.b16 %v10424
    %v10551 = vunpack.c.l.b16 %v10434
    %v10552 = vunpack.c.l.b16 %v10448
    %v10553 = vunpack.c.l.b16 %v10458
    %v10554 = vunpack.c.l.b16 %v10472
    %v10555 = vunpack.c.l.b16 %v10482
    %v10556 = vpack.c.b16 %v10493, %v10492
    %v10557 = vpack.c.b16 %v10495, %v10494
    %v10558 = vpack.c.b16 %v10497, %v10496
    %v10559 = vpack.c.b16 %v10499, %v10498
    %v10560 = vpack.c.b16 %v10501, %v10500
    %v10561 = vpack.c.b16 %v10503, %v10502
    %v10562 = vpack.c.b16 %v10505, %v10504
    %v10563 = vpack.c.b16 %v10507, %v10506
    %v10564 = vpack.c.b16 %v10509, %v10508
    %v10565 = vpack.c.b16 %v10511, %v10510
    %v10566 = vpack.c.b16 %v10513, %v10512
    %v10567 = vpack.c.b16 %v10515, %v10514
    %v10568 = vpack.c.b16 %v10517, %v10516
    %v10569 = vpack.c.b16 %v10519, %v10518
    %v10570 = vpack.c.b16 %v10521, %v10520
    %v10571 = vpack.c.b16 %v10523, %v10522
    %v10572 = vpack.c.b16 %v10525, %v10524
    %v10573 = vpack.c.b16 %v10527, %v10526
    %v10574 = vpack.c.b16 %v10529, %v10528
    %v10575 = vpack.c.b16 %v10531, %v10530
    %v10576 = vpack.c.b16 %v10533, %v10532
    %v10577 = vpack.c.b16 %v10535, %v10534
    %v10578 = vpack.c.b16 %v10537, %v10536
    %v10579 = vpack.c.b16 %v10539, %v10538
    %v10580 = vpack.c.b16 %v10541, %v10540
    %v10581 = vpack.c.b16 %v10543, %v10542
    %v10582 = vpack.c.b16 %v10545, %v10544
    %v10583 = vpack.c.b16 %v10547, %v10546
    %v10584 = vpack.c.b16 %v10549, %v10548
    %v10585 = vpack.c.b16 %v10551, %v10550
    %v10586 = vpack.c.b16 %v10553, %v10552
    %v10587 = vpack.c.b16 %v10555, %v10554
    %v10596 = vunpack.c.l.b16 %v10484
    %v10597 = vunpack.c.l.b16 %v10485
    %v10598 = vunpack.c.l.b16 %v10486
    %v10599 = vunpack.c.l.b16 %v10487
    %v10600 = vunpack.c.l.b16 %v10488
    %v10601 = vunpack.c.l.b16 %v10489
    %v10602 = vunpack.c.l.b16 %v10490
    %v10603 = vunpack.c.l.b16 %v10491
    %v10604 = vpack.c.b16 %v10597, %v10596
    %v10605 = vpack.c.b16 %v10599, %v10598
    %v10606 = vpack.c.b16 %v10601, %v10600
    %v10607 = vpack.c.b16 %v10603, %v10602
    %v10613 = vsel %vm792, %v10556, 0
    %v10616 = vsel %vm792, %v10557, 0
    %v10619 = vsel %vm792, %v10558, 0
    %v10622 = vsel %vm792, %v10559, 0
    %v10625 = vsel %vm792, %v10560, 0
    %v10628 = vsel %vm792, %v10561, 0
    %v10631 = vsel %vm792, %v10562, 0
    %v10634 = vsel %vm792, %v10563, 0
    %v10637 = vsel %vm792, %v10564, 0
    %v10640 = vsel %vm792, %v10565, 0
    %v10643 = vsel %vm792, %v10566, 0
    %v10646 = vsel %vm792, %v10567, 0
    %v10649 = vsel %vm792, %v10568, 0
    %v10652 = vsel %vm792, %v10569, 0
    %v10655 = vsel %vm792, %v10570, 0
    %v10658 = vsel %vm792, %v10571, 0
    %v10661 = vsel %vm792, %v10572, 0
    %v10664 = vsel %vm792, %v10573, 0
    %v10667 = vsel %vm792, %v10574, 0
    %v10670 = vsel %vm792, %v10575, 0
    %v10673 = vsel %vm792, %v10576, 0
    %v10676 = vsel %vm792, %v10577, 0
    %v10679 = vsel %vm792, %v10578, 0
    %v10682 = vsel %vm792, %v10579, 0
    %v10685 = vsel %vm792, %v10580, 0
    %v10688 = vsel %vm792, %v10581, 0
    %v10691 = vsel %vm792, %v10582, 0
    %v10694 = vsel %vm792, %v10583, 0
    %v10697 = vsel %vm792, %v10584, 0
    %v10700 = vsel %vm792, %v10585, 0
    %v10703 = vsel %vm792, %v10586, 0
    %v10706 = vsel %vm792, %v10587, 0
    %10708 = vmatprep.subr.bf16.mxu0 0
    %10709 = vmatpush1.bf16.msra.mxu0 0
    %10710 = vmatprep.subr.bf16.mxu0 0
    %10711 = vmatpush1.bf16.msra.mxu0 0
    %10712 = vmatprep.subr.bf16.mxu0 0
    %10713 = vmatpush1.bf16.msra.mxu0 0
    %10714 = vmatprep.subr.bf16.mxu0 0
    %10715 = vmatpush1.bf16.msra.mxu0 0
    %10716 = vmatprep.subr.bf16.mxu0 0
    %10717 = vmatpush1.bf16.msra.mxu0 %v10607
    %10718 = vmatprep.subr.bf16.mxu0 0
    %10719 = vmatpush1.bf16.msra.mxu0 %v10606
    %10720 = vmatprep.subr.bf16.mxu0 0
    %10721 = vmatpush1.bf16.msra.mxu0 %v10605
    %10722 = vmatprep.subr.bf16.mxu0 0
    %10723 = vmatpush1.bf16.msra.mxu0 %v10604
    %10724 = vmatprep.subr.bf16.mxu0 0
    %10725 = vmatpush2.bf16.msra.mxu0 0
    %10726 = vmatprep.subr.bf16.mxu0 0
    %10727 = vmatpush2.bf16.msra.mxu0 0
    %10728 = vmatprep.subr.bf16.mxu0 0
    %10729 = vmatpush2.bf16.msra.mxu0 0
    %10730 = vmatprep.subr.bf16.mxu0 0
    %10731 = vmatpush2.bf16.msra.mxu0 0
    %10732 = vmatprep.subr.bf16.mxu0 0
    %10733 = vmatpush2.bf16.msra.mxu0 0
    %10734 = vmatprep.subr.bf16.mxu0 0
    %10735 = vmatpush2.bf16.msra.mxu0 0
    %10736 = vmatprep.subr.bf16.mxu0 0
    %10737 = vmatpush2.bf16.msra.mxu0 0
    %10738 = vmatprep.subr.bf16.mxu0 0
    %10739 = vmatpush2.bf16.msra.mxu0 0
    %10740 = vmatprep.mubr.bf16.mxu0 0
    %10741 = vmatmul.mubr.bf16.gmra.mxu0 %v10613
    %v10742 = vpop.f32.mrf.mxu0
    %v10743 = vadd.f32 0.0, %v10742
    %v10744 = vpop.f32.mrf.mxu0
    %v10745 = vpop.f32.mrf.mxu0
    %v10746 = vadd.f32 0.0, %v10745
    %v10747 = vpop.f32.mrf.mxu0
    %10748 = vmatprep.mubr.bf16.mxu0 0
    %10749 = vmatmul.mubr.bf16.gmra.mxu0 %v10616
    %v10750 = vpop.f32.mrf.mxu0
    %v10751 = vadd.f32 0.0, %v10750
    %v10752 = vpop.f32.mrf.mxu0
    %v10753 = vpop.f32.mrf.mxu0
    %v10754 = vadd.f32 0.0, %v10753
    %v10755 = vpop.f32.mrf.mxu0
    %10756 = vmatprep.mubr.bf16.mxu0 0
    %10757 = vmatmul.mubr.bf16.gmra.mxu0 %v10619
    %v10758 = vpop.f32.mrf.mxu0
    %v10759 = vadd.f32 0.0, %v10758
    %v10760 = vpop.f32.mrf.mxu0
    %v10761 = vpop.f32.mrf.mxu0
    %v10762 = vadd.f32 0.0, %v10761
    %v10763 = vpop.f32.mrf.mxu0
    %10764 = vmatprep.mubr.bf16.mxu0 0
    %10765 = vmatmul.mubr.bf16.gmra.mxu0 %v10622
    %v10766 = vpop.f32.mrf.mxu0
    %v10767 = vadd.f32 0.0, %v10766
    %v10768 = vpop.f32.mrf.mxu0
    %v10769 = vpop.f32.mrf.mxu0
    %v10770 = vadd.f32 0.0, %v10769
    %v10771 = vpop.f32.mrf.mxu0
    %10772 = vmatprep.mubr.bf16.mxu0 0
    %10773 = vmatmul.mubr.bf16.gmra.mxu0 %v10625
    %v10774 = vpop.f32.mrf.mxu0
    %v10775 = vadd.f32 0.0, %v10774
    %v10776 = vpop.f32.mrf.mxu0
    %v10777 = vpop.f32.mrf.mxu0
    %v10778 = vadd.f32 0.0, %v10777
    %v10779 = vpop.f32.mrf.mxu0
    %10780 = vmatprep.mubr.bf16.mxu0 0
    %10781 = vmatmul.mubr.bf16.gmra.mxu0 %v10628
    %v10782 = vpop.f32.mrf.mxu0
    %v10783 = vadd.f32 0.0, %v10782
    %v10784 = vpop.f32.mrf.mxu0
    %v10785 = vpop.f32.mrf.mxu0
    %v10786 = vadd.f32 0.0, %v10785
    %v10787 = vpop.f32.mrf.mxu0
    %10788 = vmatprep.mubr.bf16.mxu0 0
    %10789 = vmatmul.mubr.bf16.gmra.mxu0 %v10631
    %v10790 = vpop.f32.mrf.mxu0
    %v10791 = vadd.f32 0.0, %v10790
    %v10792 = vpop.f32.mrf.mxu0
    %v10793 = vpop.f32.mrf.mxu0
    %v10794 = vadd.f32 0.0, %v10793
    %v10795 = vpop.f32.mrf.mxu0
    %10796 = vmatprep.mubr.bf16.mxu0 0
    %10797 = vmatmul.mubr.bf16.gmra.mxu0 %v10634
    %v10798 = vpop.f32.mrf.mxu0
    %v10799 = vadd.f32 0.0, %v10798
    %v10800 = vpop.f32.mrf.mxu0
    %v10801 = vpop.f32.mrf.mxu0
    %v10802 = vadd.f32 0.0, %v10801
    %v10803 = vpop.f32.mrf.mxu0
    %10804 = vmatprep.mubr.bf16.mxu0 0
    %10805 = vmatmul.mubr.bf16.gmra.mxu0 %v10637
    %v10806 = vpop.f32.mrf.mxu0
    %v10807 = vadd.f32 0.0, %v10806
    %v10808 = vpop.f32.mrf.mxu0
    %v10809 = vpop.f32.mrf.mxu0
    %v10810 = vadd.f32 0.0, %v10809
    %v10811 = vpop.f32.mrf.mxu0
    %10812 = vmatprep.mubr.bf16.mxu0 0
    %10813 = vmatmul.mubr.bf16.gmra.mxu0 %v10640
    %v10814 = vpop.f32.mrf.mxu0
    %v10815 = vadd.f32 0.0, %v10814
    %v10816 = vpop.f32.mrf.mxu0
    %v10817 = vpop.f32.mrf.mxu0
    %v10818 = vadd.f32 0.0, %v10817
    %v10819 = vpop.f32.mrf.mxu0
    %10820 = vmatprep.mubr.bf16.mxu0 0
    %10821 = vmatmul.mubr.bf16.gmra.mxu0 %v10643
    %v10822 = vpop.f32.mrf.mxu0
    %v10823 = vadd.f32 0.0, %v10822
    %v10824 = vpop.f32.mrf.mxu0
    %v10825 = vpop.f32.mrf.mxu0
    %v10826 = vadd.f32 0.0, %v10825
    %v10827 = vpop.f32.mrf.mxu0
    %10828 = vmatprep.mubr.bf16.mxu0 0
    %10829 = vmatmul.mubr.bf16.gmra.mxu0 %v10646
    %v10830 = vpop.f32.mrf.mxu0
    %v10831 = vadd.f32 0.0, %v10830
    %v10832 = vpop.f32.mrf.mxu0
    %v10833 = vpop.f32.mrf.mxu0
    %v10834 = vadd.f32 0.0, %v10833
    %v10835 = vpop.f32.mrf.mxu0
    %10836 = vmatprep.mubr.bf16.mxu0 0
    %10837 = vmatmul.mubr.bf16.gmra.mxu0 %v10649
    %v10838 = vpop.f32.mrf.mxu0
    %v10839 = vadd.f32 0.0, %v10838
    %v10840 = vpop.f32.mrf.mxu0
    %v10841 = vpop.f32.mrf.mxu0
    %v10842 = vadd.f32 0.0, %v10841
    %v10843 = vpop.f32.mrf.mxu0
    %10844 = vmatprep.mubr.bf16.mxu0 0
    %10845 = vmatmul.mubr.bf16.gmra.mxu0 %v10652
    %v10846 = vpop.f32.mrf.mxu0
    %v10847 = vadd.f32 0.0, %v10846
    %v10848 = vpop.f32.mrf.mxu0
    %v10849 = vpop.f32.mrf.mxu0
    %v10850 = vadd.f32 0.0, %v10849
    %v10851 = vpop.f32.mrf.mxu0
    %10852 = vmatprep.mubr.bf16.mxu0 0
    %10853 = vmatmul.mubr.bf16.gmra.mxu0 %v10655
    %v10854 = vpop.f32.mrf.mxu0
    %v10855 = vadd.f32 0.0, %v10854
    %v10856 = vpop.f32.mrf.mxu0
    %v10857 = vpop.f32.mrf.mxu0
    %v10858 = vadd.f32 0.0, %v10857
    %v10859 = vpop.f32.mrf.mxu0
    %10860 = vmatprep.mubr.bf16.mxu0 0
    %10861 = vmatmul.mubr.bf16.gmra.mxu0 %v10658
    %v10862 = vpop.f32.mrf.mxu0
    %v10863 = vadd.f32 0.0, %v10862
    %v10864 = vpop.f32.mrf.mxu0
    %v10865 = vpop.f32.mrf.mxu0
    %v10866 = vadd.f32 0.0, %v10865
    %v10867 = vpop.f32.mrf.mxu0
    %10868 = vmatprep.mubr.bf16.mxu0 0
    %10869 = vmatmul.mubr.bf16.gmra.mxu0 %v10661
    %v10870 = vpop.f32.mrf.mxu0
    %v10871 = vadd.f32 0.0, %v10870
    %v10872 = vpop.f32.mrf.mxu0
    %v10873 = vpop.f32.mrf.mxu0
    %v10874 = vadd.f32 0.0, %v10873
    %v10875 = vpop.f32.mrf.mxu0
    %10876 = vmatprep.mubr.bf16.mxu0 0
    %10877 = vmatmul.mubr.bf16.gmra.mxu0 %v10664
    %v10878 = vpop.f32.mrf.mxu0
    %v10879 = vadd.f32 0.0, %v10878
    %v10880 = vpop.f32.mrf.mxu0
    %v10881 = vpop.f32.mrf.mxu0
    %v10882 = vadd.f32 0.0, %v10881
    %v10883 = vpop.f32.mrf.mxu0
    %10884 = vmatprep.mubr.bf16.mxu0 0
    %10885 = vmatmul.mubr.bf16.gmra.mxu0 %v10667
    %v10886 = vpop.f32.mrf.mxu0
    %v10887 = vadd.f32 0.0, %v10886
    %v10888 = vpop.f32.mrf.mxu0
    %v10889 = vpop.f32.mrf.mxu0
    %v10890 = vadd.f32 0.0, %v10889
    %v10891 = vpop.f32.mrf.mxu0
    %10892 = vmatprep.mubr.bf16.mxu0 0
    %10893 = vmatmul.mubr.bf16.gmra.mxu0 %v10670
    %v10894 = vpop.f32.mrf.mxu0
    %v10895 = vadd.f32 0.0, %v10894
    %v10896 = vpop.f32.mrf.mxu0
    %v10897 = vpop.f32.mrf.mxu0
    %v10898 = vadd.f32 0.0, %v10897
    %v10899 = vpop.f32.mrf.mxu0
    %10900 = vmatprep.mubr.bf16.mxu0 0
    %10901 = vmatmul.mubr.bf16.gmra.mxu0 %v10673
    %v10902 = vpop.f32.mrf.mxu0
    %v10903 = vadd.f32 0.0, %v10902
    %v10904 = vpop.f32.mrf.mxu0
    %v10905 = vpop.f32.mrf.mxu0
    %v10906 = vadd.f32 0.0, %v10905
    %v10907 = vpop.f32.mrf.mxu0
    %10908 = vmatprep.mubr.bf16.mxu0 0
    %10909 = vmatmul.mubr.bf16.gmra.mxu0 %v10676
    %v10910 = vpop.f32.mrf.mxu0
    %v10911 = vadd.f32 0.0, %v10910
    %v10912 = vpop.f32.mrf.mxu0
    %v10913 = vpop.f32.mrf.mxu0
    %v10914 = vadd.f32 0.0, %v10913
    %v10915 = vpop.f32.mrf.mxu0
    %10916 = vmatprep.mubr.bf16.mxu0 0
    %10917 = vmatmul.mubr.bf16.gmra.mxu0 %v10679
    %v10918 = vpop.f32.mrf.mxu0
    %v10919 = vadd.f32 0.0, %v10918
    %v10920 = vpop.f32.mrf.mxu0
    %v10921 = vpop.f32.mrf.mxu0
    %v10922 = vadd.f32 0.0, %v10921
    %v10923 = vpop.f32.mrf.mxu0
    %10924 = vmatprep.mubr.bf16.mxu0 0
    %10925 = vmatmul.mubr.bf16.gmra.mxu0 %v10682
    %v10926 = vpop.f32.mrf.mxu0
    %v10927 = vadd.f32 0.0, %v10926
    %v10928 = vpop.f32.mrf.mxu0
    %v10929 = vpop.f32.mrf.mxu0
    %v10930 = vadd.f32 0.0, %v10929
    %v10931 = vpop.f32.mrf.mxu0
    %10932 = vmatprep.mubr.bf16.mxu0 0
    %10933 = vmatmul.mubr.bf16.gmra.mxu0 %v10685
    %v10934 = vpop.f32.mrf.mxu0
    %v10935 = vadd.f32 0.0, %v10934
    %v10936 = vpop.f32.mrf.mxu0
    %v10937 = vpop.f32.mrf.mxu0
    %v10938 = vadd.f32 0.0, %v10937
    %v10939 = vpop.f32.mrf.mxu0
    %10940 = vmatprep.mubr.bf16.mxu0 0
    %10941 = vmatmul.mubr.bf16.gmra.mxu0 %v10688
    %v10942 = vpop.f32.mrf.mxu0
    %v10943 = vadd.f32 0.0, %v10942
    %v10944 = vpop.f32.mrf.mxu0
    %v10945 = vpop.f32.mrf.mxu0
    %v10946 = vadd.f32 0.0, %v10945
    %v10947 = vpop.f32.mrf.mxu0
    %10948 = vmatprep.mubr.bf16.mxu0 0
    %10949 = vmatmul.mubr.bf16.gmra.mxu0 %v10691
    %v10950 = vpop.f32.mrf.mxu0
    %v10951 = vadd.f32 0.0, %v10950
    %v10952 = vpop.f32.mrf.mxu0
    %v10953 = vpop.f32.mrf.mxu0
    %v10954 = vadd.f32 0.0, %v10953
    %v10955 = vpop.f32.mrf.mxu0
    %10956 = vmatprep.mubr.bf16.mxu0 0
    %10957 = vmatmul.mubr.bf16.gmra.mxu0 %v10694
    %v10958 = vpop.f32.mrf.mxu0
    %v10959 = vadd.f32 0.0, %v10958
    %v10960 = vpop.f32.mrf.mxu0
    %v10961 = vpop.f32.mrf.mxu0
    %v10962 = vadd.f32 0.0, %v10961
    %v10963 = vpop.f32.mrf.mxu0
    %10964 = vmatprep.mubr.bf16.mxu0 0
    %10965 = vmatmul.mubr.bf16.gmra.mxu0 %v10697
    %v10966 = vpop.f32.mrf.mxu0
    %v10967 = vadd.f32 0.0, %v10966
    %v10968 = vpop.f32.mrf.mxu0
    %v10969 = vpop.f32.mrf.mxu0
    %v10970 = vadd.f32 0.0, %v10969
    %v10971 = vpop.f32.mrf.mxu0
    %10972 = vmatprep.mubr.bf16.mxu0 0
    %10973 = vmatmul.mubr.bf16.gmra.mxu0 %v10700
    %v10974 = vpop.f32.mrf.mxu0
    %v10975 = vadd.f32 0.0, %v10974
    %v10976 = vpop.f32.mrf.mxu0
    %v10977 = vpop.f32.mrf.mxu0
    %v10978 = vadd.f32 0.0, %v10977
    %v10979 = vpop.f32.mrf.mxu0
    %10980 = vmatprep.mubr.bf16.mxu0 0
    %10981 = vmatmul.mubr.bf16.gmra.mxu0 %v10703
    %v10982 = vpop.f32.mrf.mxu0
    %v10983 = vadd.f32 0.0, %v10982
    %v10984 = vpop.f32.mrf.mxu0
    %v10985 = vpop.f32.mrf.mxu0
    %v10986 = vadd.f32 0.0, %v10985
    %v10987 = vpop.f32.mrf.mxu0
    %10988 = vmatprep.mubr.bf16.mxu0 0
    %10989 = vmatmul.mubr.bf16.gmra.mxu0 %v10706
    %v10990 = vpop.f32.mrf.mxu0
    %v10991 = vadd.f32 0.0, %v10990
    %v10992 = vpop.f32.mrf.mxu0
    %v10993 = vpop.f32.mrf.mxu0
    %v10994 = vadd.f32 0.0, %v10993
    %v10995 = vpop.f32.mrf.mxu0
    %10996 = vdwg.mxu0
    %v10997 = vadd.f32 %v9555, %v10743
    %v10998 = vadd.f32 %v9556, %v10746
    %v10999 = vadd.f32 %v9557, %v10751
    %v11000 = vadd.f32 %v9558, %v10754
    %v11001 = vadd.f32 %v9559, %v10759
    %v11002 = vadd.f32 %v9560, %v10762
    %v11003 = vadd.f32 %v9561, %v10767
    %v11004 = vadd.f32 %v9562, %v10770
    %v11005 = vadd.f32 %v9563, %v10775
    %v11006 = vadd.f32 %v9564, %v10778
    %v11007 = vadd.f32 %v9565, %v10783
    %v11008 = vadd.f32 %v9566, %v10786
    %v11009 = vadd.f32 %v9567, %v10791
    %v11010 = vadd.f32 %v9568, %v10794
    %v11011 = vadd.f32 %v9569, %v10799
    %v11012 = vadd.f32 %v9570, %v10802
    %v11013 = vadd.f32 %v9571, %v10807
    %v11014 = vadd.f32 %v9572, %v10810
    %v11015 = vadd.f32 %v9573, %v10815
    %v11016 = vadd.f32 %v9574, %v10818
    %v11017 = vadd.f32 %v9575, %v10823
    %v11018 = vadd.f32 %v9576, %v10826
    %v11019 = vadd.f32 %v9577, %v10831
    %v11020 = vadd.f32 %v9578, %v10834
    %v11021 = vadd.f32 %v9579, %v10839
    %v11022 = vadd.f32 %v9580, %v10842
    %v11023 = vadd.f32 %v9581, %v10847
    %v11024 = vadd.f32 %v9582, %v10850
    %v11025 = vadd.f32 %v9583, %v10855
    %v11026 = vadd.f32 %v9584, %v10858
    %v11027 = vadd.f32 %v9585, %v10863
    %v11028 = vadd.f32 %v9586, %v10866
    %v11029 = vadd.f32 %v9587, %v10871
    %v11030 = vadd.f32 %v9588, %v10874
    %v11031 = vadd.f32 %v9589, %v10879
    %v11032 = vadd.f32 %v9590, %v10882
    %v11033 = vadd.f32 %v9591, %v10887
    %v11034 = vadd.f32 %v9592, %v10890
    %v11035 = vadd.f32 %v9593, %v10895
    %v11036 = vadd.f32 %v9594, %v10898
    %v11037 = vadd.f32 %v9595, %v10903
    %v11038 = vadd.f32 %v9596, %v10906
    %v11039 = vadd.f32 %v9597, %v10911
    %v11040 = vadd.f32 %v9598, %v10914
    %v11041 = vadd.f32 %v9599, %v10919
    %v11042 = vadd.f32 %v9600, %v10922
    %v11043 = vadd.f32 %v9601, %v10927
    %v11044 = vadd.f32 %v9602, %v10930
    %v11045 = vadd.f32 %v9603, %v10935
    %v11046 = vadd.f32 %v9604, %v10938
    %v11047 = vadd.f32 %v9605, %v10943
    %v11048 = vadd.f32 %v9606, %v10946
    %v11049 = vadd.f32 %v9607, %v10951
    %v11050 = vadd.f32 %v9608, %v10954
    %v11051 = vadd.f32 %v9609, %v10959
    %v11052 = vadd.f32 %v9610, %v10962
    %v11053 = vadd.f32 %v9611, %v10967
    %v11054 = vadd.f32 %v9612, %v10970
    %v11055 = vadd.f32 %v9613, %v10975
    %v11056 = vadd.f32 %v9614, %v10978
    %v11057 = vadd.f32 %v9615, %v10983
    %v11058 = vadd.f32 %v9616, %v10986
    %v11059 = vadd.f32 %v9617, %v10991
    %v11060 = vadd.f32 %v9618, %v10994
    %v11061 = vld [vmem:[%s8912] sm:$0xe]
    %v11062 = vld [vmem:[%s8912 + $0xc] sm:$0xe]
    %v11063 = vld [vmem:[%s8912 + $0x18] sm:$0xe]
    %v11064 = vld [vmem:[%s8912 + $0x24] sm:$0xe]
    %v11065 = vld [vmem:[%s8912 + $0x30] sm:$0xe]
    %v11066 = vld [vmem:[%s8912 + $0x3c] sm:$0xe]
    %v11067 = vld [vmem:[%s8912 + $0x48] sm:$0xe]
    %v11068 = vld [vmem:[%s8912 + $0x54] sm:$0xe]
    %v11069 = vld [vmem:[%s8912 + $0x60] sm:$0xe]
    %v11070 = vld [vmem:[%s8912 + $0x6c] sm:$0xe]
    %v11071 = vld [vmem:[%s8912 + $0x78] sm:$0xe]
    %v11072 = vld [vmem:[%s8912 + $0x84] sm:$0xe]
    %v11073 = vld [vmem:[%s8912 + $0x90] sm:$0xe]
    %v11074 = vld [vmem:[%s8912 + $0x9c] sm:$0xe]
    %v11075 = vld [vmem:[%s8912 + $0xa8] sm:$0xe]
    %v11076 = vld [vmem:[%s8912 + $0xb4] sm:$0xe]
    %v11077 = vld [vmem:[%s8912 + $0xd8] sm:$0xe]
    %v11078 = vld [vmem:[%s8912 + $0xe4] sm:$0xe]
    %v11079 = vld [vmem:[%s8912 + $0xf0] sm:$0xe]
    %v11080 = vld [vmem:[%s8912 + $0xfc] sm:$0xe]
    %v11081 = vld [vmem:[%s8912 + $0x108] sm:$0xe]
    %v11082 = vld [vmem:[%s8912 + $0x114] sm:$0xe]
    %v11083 = vld [vmem:[%s8912 + $0x120] sm:$0xe]
    %v11084 = vld [vmem:[%s8912 + $0x12c] sm:$0xe]
    %v11085 = vld [vmem:[%s8912 + $0x138] sm:$0xe]
    %v11086 = vld [vmem:[%s8912 + $0x144] sm:$0xe]
    %v11087 = vld [vmem:[%s8912 + $0x150] sm:$0xe]
    %v11088 = vld [vmem:[%s8912 + $0x15c] sm:$0xe]
    %v11089 = vld [vmem:[%s8912 + $0x168] sm:$0xe]
    %v11090 = vld [vmem:[%s8912 + $0x174] sm:$0xe]
    %v11091 = vld [vmem:[%s8912 + $0x180] sm:$0xe]
    %v11092 = vld [vmem:[%s8912 + $0x18c] sm:$0xe]
    %v11189 = vrot.slane %v11061, 5
    %v11190 = vrot.slane %v11189, 4
    %v11191 = vrot.slane %v9620, 5
    %v11192 = vsel %vm5031, %v11190, %v11191
    %v11193 = vrot.slane %v11191, 4
    %v11194 = vrot.slane %v9621, 5
    %v11195 = vsel %vm5031, %v11193, %v11194
    %v11196 = vrot.slane %v11062, 5
    %v11197 = vrot.slane %v11196, 4
    %v11198 = vrot.slane %v9623, 5
    %v11199 = vsel %vm5031, %v11197, %v11198
    %v11200 = vrot.slane %v11198, 4
    %v11201 = vrot.slane %v9624, 5
    %v11202 = vsel %vm5031, %v11200, %v11201
    %v11203 = vrot.slane %v11063, 5
    %v11204 = vrot.slane %v11203, 4
    %v11205 = vrot.slane %v9626, 5
    %v11206 = vsel %vm5031, %v11204, %v11205
    %v11207 = vrot.slane %v11205, 4
    %v11208 = vrot.slane %v9627, 5
    %v11209 = vsel %vm5031, %v11207, %v11208
    %v11210 = vrot.slane %v11064, 5
    %v11211 = vrot.slane %v11210, 4
    %v11212 = vrot.slane %v9629, 5
    %v11213 = vsel %vm5031, %v11211, %v11212
    %v11214 = vrot.slane %v11212, 4
    %v11215 = vrot.slane %v9630, 5
    %v11216 = vsel %vm5031, %v11214, %v11215
    %v11217 = vrot.slane %v11065, 5
    %v11218 = vrot.slane %v11217, 4
    %v11219 = vrot.slane %v9632, 5
    %v11220 = vsel %vm5031, %v11218, %v11219
    %v11221 = vrot.slane %v11219, 4
    %v11222 = vrot.slane %v9633, 5
    %v11223 = vsel %vm5031, %v11221, %v11222
    %v11224 = vrot.slane %v11066, 5
    %v11225 = vrot.slane %v11224, 4
    %v11226 = vrot.slane %v9635, 5
    %v11227 = vsel %vm5031, %v11225, %v11226
    %v11228 = vrot.slane %v11226, 4
    %v11229 = vrot.slane %v9636, 5
    %v11230 = vsel %vm5031, %v11228, %v11229
    %v11231 = vrot.slane %v11067, 5
    %v11232 = vrot.slane %v11231, 4
    %v11233 = vrot.slane %v9638, 5
    %v11234 = vsel %vm5031, %v11232, %v11233
    %v11235 = vrot.slane %v11233, 4
    %v11236 = vrot.slane %v9639, 5
    %v11237 = vsel %vm5031, %v11235, %v11236
    %v11238 = vrot.slane %v11068, 5
    %v11239 = vrot.slane %v11238, 4
    %v11240 = vrot.slane %v9641, 5
    %v11241 = vsel %vm5031, %v11239, %v11240
    %v11242 = vrot.slane %v11240, 4
    %v11243 = vrot.slane %v9642, 5
    %v11244 = vsel %vm5031, %v11242, %v11243
    %v11245 = vrot.slane %v11069, 5
    %v11246 = vrot.slane %v11245, 4
    %v11247 = vrot.slane %v9644, 5
    %v11248 = vsel %vm5031, %v11246, %v11247
    %v11249 = vrot.slane %v11247, 4
    %v11250 = vrot.slane %v9645, 5
    %v11251 = vsel %vm5031, %v11249, %v11250
    %v11252 = vrot.slane %v11070, 5
    %v11253 = vrot.slane %v11252, 4
    %v11254 = vrot.slane %v9647, 5
    %v11255 = vsel %vm5031, %v11253, %v11254
    %v11256 = vrot.slane %v11254, 4
    %v11257 = vrot.slane %v9648, 5
    %v11258 = vsel %vm5031, %v11256, %v11257
    %v11259 = vrot.slane %v11071, 5
    %v11260 = vrot.slane %v11259, 4
    %v11261 = vrot.slane %v9650, 5
    %v11262 = vsel %vm5031, %v11260, %v11261
    %v11263 = vrot.slane %v11261, 4
    %v11264 = vrot.slane %v9651, 5
    %v11265 = vsel %vm5031, %v11263, %v11264
    %v11266 = vrot.slane %v11072, 5
    %v11267 = vrot.slane %v11266, 4
    %v11268 = vrot.slane %v9653, 5
    %v11269 = vsel %vm5031, %v11267, %v11268
    %v11270 = vrot.slane %v11268, 4
    %v11271 = vrot.slane %v9654, 5
    %v11272 = vsel %vm5031, %v11270, %v11271
    %v11273 = vrot.slane %v11073, 5
    %v11274 = vrot.slane %v11273, 4
    %v11275 = vrot.slane %v9656, 5
    %v11276 = vsel %vm5031, %v11274, %v11275
    %v11277 = vrot.slane %v11275, 4
    %v11278 = vrot.slane %v9657, 5
    %v11279 = vsel %vm5031, %v11277, %v11278
    %v11280 = vrot.slane %v11074, 5
    %v11281 = vrot.slane %v11280, 4
    %v11282 = vrot.slane %v9659, 5
    %v11283 = vsel %vm5031, %v11281, %v11282
    %v11284 = vrot.slane %v11282, 4
    %v11285 = vrot.slane %v9660, 5
    %v11286 = vsel %vm5031, %v11284, %v11285
    %v11287 = vrot.slane %v11075, 5
    %v11288 = vrot.slane %v11287, 4
    %v11289 = vrot.slane %v9662, 5
    %v11290 = vsel %vm5031, %v11288, %v11289
    %v11291 = vrot.slane %v11289, 4
    %v11292 = vrot.slane %v9663, 5
    %v11293 = vsel %vm5031, %v11291, %v11292
    %v11294 = vrot.slane %v11076, 5
    %v11295 = vrot.slane %v11294, 4
    %v11296 = vrot.slane %v9665, 5
    %v11297 = vsel %vm5031, %v11295, %v11296
    %v11298 = vrot.slane %v11296, 4
    %v11299 = vrot.slane %v9666, 5
    %v11300 = vsel %vm5031, %v11298, %v11299
    %v11301 = vrot.slane %v11077, 5
    %v11302 = vrot.slane %v11301, 4
    %v11303 = vrot.slane %v9668, 5
    %v11304 = vsel %vm5031, %v11302, %v11303
    %v11305 = vrot.slane %v11303, 4
    %v11306 = vrot.slane %v9669, 5
    %v11307 = vsel %vm5031, %v11305, %v11306
    %v11308 = vrot.slane %v11078, 5
    %v11309 = vrot.slane %v11308, 4
    %v11310 = vrot.slane %v9671, 5
    %v11311 = vsel %vm5031, %v11309, %v11310
    %v11312 = vrot.slane %v11310, 4
    %v11313 = vrot.slane %v9672, 5
    %v11314 = vsel %vm5031, %v11312, %v11313
    %v11315 = vrot.slane %v11079, 5
    %v11316 = vrot.slane %v11315, 4
    %v11317 = vrot.slane %v9674, 5
    %v11318 = vsel %vm5031, %v11316, %v11317
    %v11319 = vrot.slane %v11317, 4
    %v11320 = vrot.slane %v9675, 5
    %v11321 = vsel %vm5031, %v11319, %v11320
    %v11322 = vrot.slane %v11080, 5
    %v11323 = vrot.slane %v11322, 4
    %v11324 = vrot.slane %v9677, 5
    %v11325 = vsel %vm5031, %v11323, %v11324
    %v11326 = vrot.slane %v11324, 4
    %v11327 = vrot.slane %v9678, 5
    %v11328 = vsel %vm5031, %v11326, %v11327
    %v11329 = vrot.slane %v11081, 5
    %v11330 = vrot.slane %v11329, 4
    %v11331 = vrot.slane %v9680, 5
    %v11332 = vsel %vm5031, %v11330, %v11331
    %v11333 = vrot.slane %v11331, 4
    %v11334 = vrot.slane %v9681, 5
    %v11335 = vsel %vm5031, %v11333, %v11334
    %v11336 = vrot.slane %v11082, 5
    %v11337 = vrot.slane %v11336, 4
    %v11338 = vrot.slane %v9683, 5
    %v11339 = vsel %vm5031, %v11337, %v11338
    %v11340 = vrot.slane %v11338, 4
    %v11341 = vrot.slane %v9684, 5
    %v11342 = vsel %vm5031, %v11340, %v11341
    %v11343 = vrot.slane %v11083, 5
    %v11344 = vrot.slane %v11343, 4
    %v11345 = vrot.slane %v9686, 5
    %v11346 = vsel %vm5031, %v11344, %v11345
    %v11347 = vrot.slane %v11345, 4
    %v11348 = vrot.slane %v9687, 5
    %v11349 = vsel %vm5031, %v11347, %v11348
    %v11350 = vrot.slane %v11084, 5
    %v11351 = vrot.slane %v11350, 4
    %v11352 = vrot.slane %v9689, 5
    %v11353 = vsel %vm5031, %v11351, %v11352
    %v11354 = vrot.slane %v11352, 4
    %v11355 = vrot.slane %v9690, 5
    %v11356 = vsel %vm5031, %v11354, %v11355
    %v11357 = vrot.slane %v11085, 5
    %v11358 = vrot.slane %v11357, 4
    %v11359 = vrot.slane %v9692, 5
    %v11360 = vsel %vm5031, %v11358, %v11359
    %v11361 = vrot.slane %v11359, 4
    %v11362 = vrot.slane %v9693, 5
    %v11363 = vsel %vm5031, %v11361, %v11362
    %v11364 = vrot.slane %v11086, 5
    %v11365 = vrot.slane %v11364, 4
    %v11366 = vrot.slane %v9695, 5
    %v11367 = vsel %vm5031, %v11365, %v11366
    %v11368 = vrot.slane %v11366, 4
    %v11369 = vrot.slane %v9696, 5
    %v11370 = vsel %vm5031, %v11368, %v11369
    %v11371 = vrot.slane %v11087, 5
    %v11372 = vrot.slane %v11371, 4
    %v11373 = vrot.slane %v9698, 5
    %v11374 = vsel %vm5031, %v11372, %v11373
    %v11375 = vrot.slane %v11373, 4
    %v11376 = vrot.slane %v9699, 5
    %v11377 = vsel %vm5031, %v11375, %v11376
    %v11378 = vrot.slane %v11088, 5
    %v11379 = vrot.slane %v11378, 4
    %v11380 = vrot.slane %v9701, 5
    %v11381 = vsel %vm5031, %v11379, %v11380
    %v11382 = vrot.slane %v11380, 4
    %v11383 = vrot.slane %v9702, 5
    %v11384 = vsel %vm5031, %v11382, %v11383
    %v11385 = vrot.slane %v11089, 5
    %v11386 = vrot.slane %v11385, 4
    %v11387 = vrot.slane %v9704, 5
    %v11388 = vsel %vm5031, %v11386, %v11387
    %v11389 = vrot.slane %v11387, 4
    %v11390 = vrot.slane %v9705, 5
    %v11391 = vsel %vm5031, %v11389, %v11390
    %v11392 = vrot.slane %v11090, 5
    %v11393 = vrot.slane %v11392, 4
    %v11394 = vrot.slane %v9707, 5
    %v11395 = vsel %vm5031, %v11393, %v11394
    %v11396 = vrot.slane %v11394, 4
    %v11397 = vrot.slane %v9708, 5
    %v11398 = vsel %vm5031, %v11396, %v11397
    %v11399 = vrot.slane %v11091, 5
    %v11400 = vrot.slane %v11399, 4
    %v11401 = vrot.slane %v9710, 5
    %v11402 = vsel %vm5031, %v11400, %v11401
    %v11403 = vrot.slane %v11401, 4
    %v11404 = vrot.slane %v9711, 5
    %v11405 = vsel %vm5031, %v11403, %v11404
    %v11406 = vrot.slane %v11092, 5
    %v11407 = vrot.slane %v11406, 4
    %v11408 = vrot.slane %v9713, 5
    %v11409 = vsel %vm5031, %v11407, %v11408
    %v11410 = vrot.slane %v11408, 4
    %v11411 = vrot.slane %v9714, 5
    %v11412 = vsel %vm5031, %v11410, %v11411
    %s11413 = scalar_lea.vmem [#allocation3], 256
    %v11414 = vld [vmem:[%s11413] sm:$0xf]
    %v11415 = vld [vmem:[%s11413 + $0x4] sm:$0xf]
    %v11416 = vld [vmem:[%s11413 + $0x8] sm:$0xf]
    %v11417 = vld [vmem:[%s11413 + $0xc] sm:$0xf]
    %v11418 = vld [vmem:[%s11413 + $0x10] sm:$0xf]
    %v11419 = vld [vmem:[%s11413 + $0x14] sm:$0xf]
    %v11420 = vld [vmem:[%s11413 + $0x18] sm:$0xf]
    %v11421 = vld [vmem:[%s11413 + $0x1c] sm:$0xf]
    %v11422 = vunpack.c.l.b16 %v11192
    %v11423 = vunpack.c.l.b16 %v11195
    %v11424 = vunpack.c.l.b16 %v11199
    %v11425 = vunpack.c.l.b16 %v11202
    %v11426 = vunpack.c.l.b16 %v11206
    %v11427 = vunpack.c.l.b16 %v11209
    %v11428 = vunpack.c.l.b16 %v11213
    %v11429 = vunpack.c.l.b16 %v11216
    %v11430 = vunpack.c.l.b16 %v11220
    %v11431 = vunpack.c.l.b16 %v11223
    %v11432 = vunpack.c.l.b16 %v11227
    %v11433 = vunpack.c.l.b16 %v11230
    %v11434 = vunpack.c.l.b16 %v11234
    %v11435 = vunpack.c.l.b16 %v11237
    %v11436 = vunpack.c.l.b16 %v11241
    %v11437 = vunpack.c.l.b16 %v11244
    %v11438 = vunpack.c.l.b16 %v11248
    %v11439 = vunpack.c.l.b16 %v11251
    %v11440 = vunpack.c.l.b16 %v11255
    %v11441 = vunpack.c.l.b16 %v11258
    %v11442 = vunpack.c.l.b16 %v11262
    %v11443 = vunpack.c.l.b16 %v11265
    %v11444 = vunpack.c.l.b16 %v11269
    %v11445 = vunpack.c.l.b16 %v11272
    %v11446 = vunpack.c.l.b16 %v11276
    %v11447 = vunpack.c.l.b16 %v11279
    %v11448 = vunpack.c.l.b16 %v11283
    %v11449 = vunpack.c.l.b16 %v11286
    %v11450 = vunpack.c.l.b16 %v11290
    %v11451 = vunpack.c.l.b16 %v11293
    %v11452 = vunpack.c.l.b16 %v11297
    %v11453 = vunpack.c.l.b16 %v11300
    %v11454 = vunpack.c.l.b16 %v11304
    %v11455 = vunpack.c.l.b16 %v11307
    %v11456 = vunpack.c.l.b16 %v11311
    %v11457 = vunpack.c.l.b16 %v11314
    %v11458 = vunpack.c.l.b16 %v11318
    %v11459 = vunpack.c.l.b16 %v11321
    %v11460 = vunpack.c.l.b16 %v11325
    %v11461 = vunpack.c.l.b16 %v11328
    %v11462 = vunpack.c.l.b16 %v11332
    %v11463 = vunpack.c.l.b16 %v11335
    %v11464 = vunpack.c.l.b16 %v11339
    %v11465 = vunpack.c.l.b16 %v11342
    %v11466 = vunpack.c.l.b16 %v11346
    %v11467 = vunpack.c.l.b16 %v11349
    %v11468 = vunpack.c.l.b16 %v11353
    %v11469 = vunpack.c.l.b16 %v11356
    %v11470 = vunpack.c.l.b16 %v11360
    %v11471 = vunpack.c.l.b16 %v11363
    %v11472 = vunpack.c.l.b16 %v11367
    %v11473 = vunpack.c.l.b16 %v11370
    %v11474 = vunpack.c.l.b16 %v11374
    %v11475 = vunpack.c.l.b16 %v11377
    %v11476 = vunpack.c.l.b16 %v11381
    %v11477 = vunpack.c.l.b16 %v11384
    %v11478 = vunpack.c.l.b16 %v11388
    %v11479 = vunpack.c.l.b16 %v11391
    %v11480 = vunpack.c.l.b16 %v11395
    %v11481 = vunpack.c.l.b16 %v11398
    %v11482 = vunpack.c.l.b16 %v11402
    %v11483 = vunpack.c.l.b16 %v11405
    %v11484 = vunpack.c.l.b16 %v11409
    %v11485 = vunpack.c.l.b16 %v11412
    %v11486 = vpack.c.b16 %v11423, %v11422
    %v11487 = vpack.c.b16 %v11425, %v11424
    %v11488 = vpack.c.b16 %v11427, %v11426
    %v11489 = vpack.c.b16 %v11429, %v11428
    %v11490 = vpack.c.b16 %v11431, %v11430
    %v11491 = vpack.c.b16 %v11433, %v11432
    %v11492 = vpack.c.b16 %v11435, %v11434
    %v11493 = vpack.c.b16 %v11437, %v11436
    %v11494 = vpack.c.b16 %v11439, %v11438
    %v11495 = vpack.c.b16 %v11441, %v11440
    %v11496 = vpack.c.b16 %v11443, %v11442
    %v11497 = vpack.c.b16 %v11445, %v11444
    %v11498 = vpack.c.b16 %v11447, %v11446
    %v11499 = vpack.c.b16 %v11449, %v11448
    %v11500 = vpack.c.b16 %v11451, %v11450
    %v11501 = vpack.c.b16 %v11453, %v11452
    %v11502 = vpack.c.b16 %v11455, %v11454
    %v11503 = vpack.c.b16 %v11457, %v11456
    %v11504 = vpack.c.b16 %v11459, %v11458
    %v11505 = vpack.c.b16 %v11461, %v11460
    %v11506 = vpack.c.b16 %v11463, %v11462
    %v11507 = vpack.c.b16 %v11465, %v11464
    %v11508 = vpack.c.b16 %v11467, %v11466
    %v11509 = vpack.c.b16 %v11469, %v11468
    %v11510 = vpack.c.b16 %v11471, %v11470
    %v11511 = vpack.c.b16 %v11473, %v11472
    %v11512 = vpack.c.b16 %v11475, %v11474
    %v11513 = vpack.c.b16 %v11477, %v11476
    %v11514 = vpack.c.b16 %v11479, %v11478
    %v11515 = vpack.c.b16 %v11481, %v11480
    %v11516 = vpack.c.b16 %v11483, %v11482
    %v11517 = vpack.c.b16 %v11485, %v11484
    %v11526 = vunpack.c.l.b16 %v11414
    %v11527 = vunpack.c.l.b16 %v11415
    %v11528 = vunpack.c.l.b16 %v11416
    %v11529 = vunpack.c.l.b16 %v11417
    %v11530 = vunpack.c.l.b16 %v11418
    %v11531 = vunpack.c.l.b16 %v11419
    %v11532 = vunpack.c.l.b16 %v11420
    %v11533 = vunpack.c.l.b16 %v11421
    %v11534 = vpack.c.b16 %v11527, %v11526
    %v11535 = vpack.c.b16 %v11529, %v11528
    %v11536 = vpack.c.b16 %v11531, %v11530
    %v11537 = vpack.c.b16 %v11533, %v11532
    %v11543 = vsel %vm792, %v11486, 0
    %v11546 = vsel %vm792, %v11487, 0
    %v11549 = vsel %vm792, %v11488, 0
    %v11552 = vsel %vm792, %v11489, 0
    %v11555 = vsel %vm792, %v11490, 0
    %v11558 = vsel %vm792, %v11491, 0
    %v11561 = vsel %vm792, %v11492, 0
    %v11564 = vsel %vm792, %v11493, 0
    %v11567 = vsel %vm792, %v11494, 0
    %v11570 = vsel %vm792, %v11495, 0
    %v11573 = vsel %vm792, %v11496, 0
    %v11576 = vsel %vm792, %v11497, 0
    %v11579 = vsel %vm792, %v11498, 0
    %v11582 = vsel %vm792, %v11499, 0
    %v11585 = vsel %vm792, %v11500, 0
    %v11588 = vsel %vm792, %v11501, 0
    %v11591 = vsel %vm792, %v11502, 0
    %v11594 = vsel %vm792, %v11503, 0
    %v11597 = vsel %vm792, %v11504, 0
    %v11600 = vsel %vm792, %v11505, 0
    %v11603 = vsel %vm792, %v11506, 0
    %v11606 = vsel %vm792, %v11507, 0
    %v11609 = vsel %vm792, %v11508, 0
    %v11612 = vsel %vm792, %v11509, 0
    %v11615 = vsel %vm792, %v11510, 0
    %v11618 = vsel %vm792, %v11511, 0
    %v11621 = vsel %vm792, %v11512, 0
    %v11624 = vsel %vm792, %v11513, 0
    %v11627 = vsel %vm792, %v11514, 0
    %v11630 = vsel %vm792, %v11515, 0
    %v11633 = vsel %vm792, %v11516, 0
    %v11636 = vsel %vm792, %v11517, 0
    %11638 = vmatprep.subr.bf16.mxu0 0
    %11639 = vmatpush1.bf16.msra.mxu0 0
    %11640 = vmatprep.subr.bf16.mxu0 0
    %11641 = vmatpush1.bf16.msra.mxu0 0
    %11642 = vmatprep.subr.bf16.mxu0 0
    %11643 = vmatpush1.bf16.msra.mxu0 0
    %11644 = vmatprep.subr.bf16.mxu0 0
    %11645 = vmatpush1.bf16.msra.mxu0 0
    %11646 = vmatprep.subr.bf16.mxu0 0
    %11647 = vmatpush1.bf16.msra.mxu0 %v11537
    %11648 = vmatprep.subr.bf16.mxu0 0
    %11649 = vmatpush1.bf16.msra.mxu0 %v11536
    %11650 = vmatprep.subr.bf16.mxu0 0
    %11651 = vmatpush1.bf16.msra.mxu0 %v11535
    %11652 = vmatprep.subr.bf16.mxu0 0
    %11653 = vmatpush1.bf16.msra.mxu0 %v11534
    %11654 = vmatprep.subr.bf16.mxu0 0
    %11655 = vmatpush2.bf16.msra.mxu0 0
    %11656 = vmatprep.subr.bf16.mxu0 0
    %11657 = vmatpush2.bf16.msra.mxu0 0
    %11658 = vmatprep.subr.bf16.mxu0 0
    %11659 = vmatpush2.bf16.msra.mxu0 0
    %11660 = vmatprep.subr.bf16.mxu0 0
    %11661 = vmatpush2.bf16.msra.mxu0 0
    %11662 = vmatprep.subr.bf16.mxu0 0
    %11663 = vmatpush2.bf16.msra.mxu0 0
    %11664 = vmatprep.subr.bf16.mxu0 0
    %11665 = vmatpush2.bf16.msra.mxu0 0
    %11666 = vmatprep.subr.bf16.mxu0 0
    %11667 = vmatpush2.bf16.msra.mxu0 0
    %11668 = vmatprep.subr.bf16.mxu0 0
    %11669 = vmatpush2.bf16.msra.mxu0 0
    %11670 = vmatprep.mubr.bf16.mxu0 0
    %11671 = vmatmul.mubr.bf16.gmra.mxu0 %v11543
    %v11672 = vpop.f32.mrf.mxu0
    %v11673 = vadd.f32 0.0, %v11672
    %v11674 = vpop.f32.mrf.mxu0
    %v11675 = vpop.f32.mrf.mxu0
    %v11676 = vadd.f32 0.0, %v11675
    %v11677 = vpop.f32.mrf.mxu0
    %11678 = vmatprep.mubr.bf16.mxu0 0
    %11679 = vmatmul.mubr.bf16.gmra.mxu0 %v11546
    %v11680 = vpop.f32.mrf.mxu0
    %v11681 = vadd.f32 0.0, %v11680
    %v11682 = vpop.f32.mrf.mxu0
    %v11683 = vpop.f32.mrf.mxu0
    %v11684 = vadd.f32 0.0, %v11683
    %v11685 = vpop.f32.mrf.mxu0
    %11686 = vmatprep.mubr.bf16.mxu0 0
    %11687 = vmatmul.mubr.bf16.gmra.mxu0 %v11549
    %v11688 = vpop.f32.mrf.mxu0
    %v11689 = vadd.f32 0.0, %v11688
    %v11690 = vpop.f32.mrf.mxu0
    %v11691 = vpop.f32.mrf.mxu0
    %v11692 = vadd.f32 0.0, %v11691
    %v11693 = vpop.f32.mrf.mxu0
    %11694 = vmatprep.mubr.bf16.mxu0 0
    %11695 = vmatmul.mubr.bf16.gmra.mxu0 %v11552
    %v11696 = vpop.f32.mrf.mxu0
    %v11697 = vadd.f32 0.0, %v11696
    %v11698 = vpop.f32.mrf.mxu0
    %v11699 = vpop.f32.mrf.mxu0
    %v11700 = vadd.f32 0.0, %v11699
    %v11701 = vpop.f32.mrf.mxu0
    %11702 = vmatprep.mubr.bf16.mxu0 0
    %11703 = vmatmul.mubr.bf16.gmra.mxu0 %v11555
    %v11704 = vpop.f32.mrf.mxu0
    %v11705 = vadd.f32 0.0, %v11704
    %v11706 = vpop.f32.mrf.mxu0
    %v11707 = vpop.f32.mrf.mxu0
    %v11708 = vadd.f32 0.0, %v11707
    %v11709 = vpop.f32.mrf.mxu0
    %11710 = vmatprep.mubr.bf16.mxu0 0
    %11711 = vmatmul.mubr.bf16.gmra.mxu0 %v11558
    %v11712 = vpop.f32.mrf.mxu0
    %v11713 = vadd.f32 0.0, %v11712
    %v11714 = vpop.f32.mrf.mxu0
    %v11715 = vpop.f32.mrf.mxu0
    %v11716 = vadd.f32 0.0, %v11715
    %v11717 = vpop.f32.mrf.mxu0
    %11718 = vmatprep.mubr.bf16.mxu0 0
    %11719 = vmatmul.mubr.bf16.gmra.mxu0 %v11561
    %v11720 = vpop.f32.mrf.mxu0
    %v11721 = vadd.f32 0.0, %v11720
    %v11722 = vpop.f32.mrf.mxu0
    %v11723 = vpop.f32.mrf.mxu0
    %v11724 = vadd.f32 0.0, %v11723
    %v11725 = vpop.f32.mrf.mxu0
    %11726 = vmatprep.mubr.bf16.mxu0 0
    %11727 = vmatmul.mubr.bf16.gmra.mxu0 %v11564
    %v11728 = vpop.f32.mrf.mxu0
    %v11729 = vadd.f32 0.0, %v11728
    %v11730 = vpop.f32.mrf.mxu0
    %v11731 = vpop.f32.mrf.mxu0
    %v11732 = vadd.f32 0.0, %v11731
    %v11733 = vpop.f32.mrf.mxu0
    %11734 = vmatprep.mubr.bf16.mxu0 0
    %11735 = vmatmul.mubr.bf16.gmra.mxu0 %v11567
    %v11736 = vpop.f32.mrf.mxu0
    %v11737 = vadd.f32 0.0, %v11736
    %v11738 = vpop.f32.mrf.mxu0
    %v11739 = vpop.f32.mrf.mxu0
    %v11740 = vadd.f32 0.0, %v11739
    %v11741 = vpop.f32.mrf.mxu0
    %11742 = vmatprep.mubr.bf16.mxu0 0
    %11743 = vmatmul.mubr.bf16.gmra.mxu0 %v11570
    %v11744 = vpop.f32.mrf.mxu0
    %v11745 = vadd.f32 0.0, %v11744
    %v11746 = vpop.f32.mrf.mxu0
    %v11747 = vpop.f32.mrf.mxu0
    %v11748 = vadd.f32 0.0, %v11747
    %v11749 = vpop.f32.mrf.mxu0
    %11750 = vmatprep.mubr.bf16.mxu0 0
    %11751 = vmatmul.mubr.bf16.gmra.mxu0 %v11573
    %v11752 = vpop.f32.mrf.mxu0
    %v11753 = vadd.f32 0.0, %v11752
    %v11754 = vpop.f32.mrf.mxu0
    %v11755 = vpop.f32.mrf.mxu0
    %v11756 = vadd.f32 0.0, %v11755
    %v11757 = vpop.f32.mrf.mxu0
    %11758 = vmatprep.mubr.bf16.mxu0 0
    %11759 = vmatmul.mubr.bf16.gmra.mxu0 %v11576
    %v11760 = vpop.f32.mrf.mxu0
    %v11761 = vadd.f32 0.0, %v11760
    %v11762 = vpop.f32.mrf.mxu0
    %v11763 = vpop.f32.mrf.mxu0
    %v11764 = vadd.f32 0.0, %v11763
    %v11765 = vpop.f32.mrf.mxu0
    %11766 = vmatprep.mubr.bf16.mxu0 0
    %11767 = vmatmul.mubr.bf16.gmra.mxu0 %v11579
    %v11768 = vpop.f32.mrf.mxu0
    %v11769 = vadd.f32 0.0, %v11768
    %v11770 = vpop.f32.mrf.mxu0
    %v11771 = vpop.f32.mrf.mxu0
    %v11772 = vadd.f32 0.0, %v11771
    %v11773 = vpop.f32.mrf.mxu0
    %11774 = vmatprep.mubr.bf16.mxu0 0
    %11775 = vmatmul.mubr.bf16.gmra.mxu0 %v11582
    %v11776 = vpop.f32.mrf.mxu0
    %v11777 = vadd.f32 0.0, %v11776
    %v11778 = vpop.f32.mrf.mxu0
    %v11779 = vpop.f32.mrf.mxu0
    %v11780 = vadd.f32 0.0, %v11779
    %v11781 = vpop.f32.mrf.mxu0
    %11782 = vmatprep.mubr.bf16.mxu0 0
    %11783 = vmatmul.mubr.bf16.gmra.mxu0 %v11585
    %v11784 = vpop.f32.mrf.mxu0
    %v11785 = vadd.f32 0.0, %v11784
    %v11786 = vpop.f32.mrf.mxu0
    %v11787 = vpop.f32.mrf.mxu0
    %v11788 = vadd.f32 0.0, %v11787
    %v11789 = vpop.f32.mrf.mxu0
    %11790 = vmatprep.mubr.bf16.mxu0 0
    %11791 = vmatmul.mubr.bf16.gmra.mxu0 %v11588
    %v11792 = vpop.f32.mrf.mxu0
    %v11793 = vadd.f32 0.0, %v11792
    %v11794 = vpop.f32.mrf.mxu0
    %v11795 = vpop.f32.mrf.mxu0
    %v11796 = vadd.f32 0.0, %v11795
    %v11797 = vpop.f32.mrf.mxu0
    %11798 = vmatprep.mubr.bf16.mxu0 0
    %11799 = vmatmul.mubr.bf16.gmra.mxu0 %v11591
    %v11800 = vpop.f32.mrf.mxu0
    %v11801 = vadd.f32 0.0, %v11800
    %v11802 = vpop.f32.mrf.mxu0
    %v11803 = vpop.f32.mrf.mxu0
    %v11804 = vadd.f32 0.0, %v11803
    %v11805 = vpop.f32.mrf.mxu0
    %11806 = vmatprep.mubr.bf16.mxu0 0
    %11807 = vmatmul.mubr.bf16.gmra.mxu0 %v11594
    %v11808 = vpop.f32.mrf.mxu0
    %v11809 = vadd.f32 0.0, %v11808
    %v11810 = vpop.f32.mrf.mxu0
    %v11811 = vpop.f32.mrf.mxu0
    %v11812 = vadd.f32 0.0, %v11811
    %v11813 = vpop.f32.mrf.mxu0
    %11814 = vmatprep.mubr.bf16.mxu0 0
    %11815 = vmatmul.mubr.bf16.gmra.mxu0 %v11597
    %v11816 = vpop.f32.mrf.mxu0
    %v11817 = vadd.f32 0.0, %v11816
    %v11818 = vpop.f32.mrf.mxu0
    %v11819 = vpop.f32.mrf.mxu0
    %v11820 = vadd.f32 0.0, %v11819
    %v11821 = vpop.f32.mrf.mxu0
    %11822 = vmatprep.mubr.bf16.mxu0 0
    %11823 = vmatmul.mubr.bf16.gmra.mxu0 %v11600
    %v11824 = vpop.f32.mrf.mxu0
    %v11825 = vadd.f32 0.0, %v11824
    %v11826 = vpop.f32.mrf.mxu0
    %v11827 = vpop.f32.mrf.mxu0
    %v11828 = vadd.f32 0.0, %v11827
    %v11829 = vpop.f32.mrf.mxu0
    %11830 = vmatprep.mubr.bf16.mxu0 0
    %11831 = vmatmul.mubr.bf16.gmra.mxu0 %v11603
    %v11832 = vpop.f32.mrf.mxu0
    %v11833 = vadd.f32 0.0, %v11832
    %v11834 = vpop.f32.mrf.mxu0
    %v11835 = vpop.f32.mrf.mxu0
    %v11836 = vadd.f32 0.0, %v11835
    %v11837 = vpop.f32.mrf.mxu0
    %11838 = vmatprep.mubr.bf16.mxu0 0
    %11839 = vmatmul.mubr.bf16.gmra.mxu0 %v11606
    %v11840 = vpop.f32.mrf.mxu0
    %v11841 = vadd.f32 0.0, %v11840
    %v11842 = vpop.f32.mrf.mxu0
    %v11843 = vpop.f32.mrf.mxu0
    %v11844 = vadd.f32 0.0, %v11843
    %v11845 = vpop.f32.mrf.mxu0
    %11846 = vmatprep.mubr.bf16.mxu0 0
    %11847 = vmatmul.mubr.bf16.gmra.mxu0 %v11609
    %v11848 = vpop.f32.mrf.mxu0
    %v11849 = vadd.f32 0.0, %v11848
    %v11850 = vpop.f32.mrf.mxu0
    %v11851 = vpop.f32.mrf.mxu0
    %v11852 = vadd.f32 0.0, %v11851
    %v11853 = vpop.f32.mrf.mxu0
    %11854 = vmatprep.mubr.bf16.mxu0 0
    %11855 = vmatmul.mubr.bf16.gmra.mxu0 %v11612
    %v11856 = vpop.f32.mrf.mxu0
    %v11857 = vadd.f32 0.0, %v11856
    %v11858 = vpop.f32.mrf.mxu0
    %v11859 = vpop.f32.mrf.mxu0
    %v11860 = vadd.f32 0.0, %v11859
    %v11861 = vpop.f32.mrf.mxu0
    %11862 = vmatprep.mubr.bf16.mxu0 0
    %11863 = vmatmul.mubr.bf16.gmra.mxu0 %v11615
    %v11864 = vpop.f32.mrf.mxu0
    %v11865 = vadd.f32 0.0, %v11864
    %v11866 = vpop.f32.mrf.mxu0
    %v11867 = vpop.f32.mrf.mxu0
    %v11868 = vadd.f32 0.0, %v11867
    %v11869 = vpop.f32.mrf.mxu0
    %11870 = vmatprep.mubr.bf16.mxu0 0
    %11871 = vmatmul.mubr.bf16.gmra.mxu0 %v11618
    %v11872 = vpop.f32.mrf.mxu0
    %v11873 = vadd.f32 0.0, %v11872
    %v11874 = vpop.f32.mrf.mxu0
    %v11875 = vpop.f32.mrf.mxu0
    %v11876 = vadd.f32 0.0, %v11875
    %v11877 = vpop.f32.mrf.mxu0
    %11878 = vmatprep.mubr.bf16.mxu0 0
    %11879 = vmatmul.mubr.bf16.gmra.mxu0 %v11621
    %v11880 = vpop.f32.mrf.mxu0
    %v11881 = vadd.f32 0.0, %v11880
    %v11882 = vpop.f32.mrf.mxu0
    %v11883 = vpop.f32.mrf.mxu0
    %v11884 = vadd.f32 0.0, %v11883
    %v11885 = vpop.f32.mrf.mxu0
    %11886 = vmatprep.mubr.bf16.mxu0 0
    %11887 = vmatmul.mubr.bf16.gmra.mxu0 %v11624
    %v11888 = vpop.f32.mrf.mxu0
    %v11889 = vadd.f32 0.0, %v11888
    %v11890 = vpop.f32.mrf.mxu0
    %v11891 = vpop.f32.mrf.mxu0
    %v11892 = vadd.f32 0.0, %v11891
    %v11893 = vpop.f32.mrf.mxu0
    %11894 = vmatprep.mubr.bf16.mxu0 0
    %11895 = vmatmul.mubr.bf16.gmra.mxu0 %v11627
    %v11896 = vpop.f32.mrf.mxu0
    %v11897 = vadd.f32 0.0, %v11896
    %v11898 = vpop.f32.mrf.mxu0
    %v11899 = vpop.f32.mrf.mxu0
    %v11900 = vadd.f32 0.0, %v11899
    %v11901 = vpop.f32.mrf.mxu0
    %11902 = vmatprep.mubr.bf16.mxu0 0
    %11903 = vmatmul.mubr.bf16.gmra.mxu0 %v11630
    %v11904 = vpop.f32.mrf.mxu0
    %v11905 = vadd.f32 0.0, %v11904
    %v11906 = vpop.f32.mrf.mxu0
    %v11907 = vpop.f32.mrf.mxu0
    %v11908 = vadd.f32 0.0, %v11907
    %v11909 = vpop.f32.mrf.mxu0
    %11910 = vmatprep.mubr.bf16.mxu0 0
    %11911 = vmatmul.mubr.bf16.gmra.mxu0 %v11633
    %v11912 = vpop.f32.mrf.mxu0
    %v11913 = vadd.f32 0.0, %v11912
    %v11914 = vpop.f32.mrf.mxu0
    %v11915 = vpop.f32.mrf.mxu0
    %v11916 = vadd.f32 0.0, %v11915
    %v11917 = vpop.f32.mrf.mxu0
    %11918 = vmatprep.mubr.bf16.mxu0 0
    %11919 = vmatmul.mubr.bf16.gmra.mxu0 %v11636
    %v11920 = vpop.f32.mrf.mxu0
    %v11921 = vadd.f32 0.0, %v11920
    %v11922 = vpop.f32.mrf.mxu0
    %v11923 = vpop.f32.mrf.mxu0
    %v11924 = vadd.f32 0.0, %v11923
    %v11925 = vpop.f32.mrf.mxu0
    %11926 = vdwg.mxu0
    %v11927 = vadd.f32 %v10997, %v11673
    %v11928 = vadd.f32 %v10998, %v11676
    %v11929 = vadd.f32 %v10999, %v11681
    %v11930 = vadd.f32 %v11000, %v11684
    %v11931 = vadd.f32 %v11001, %v11689
    %v11932 = vadd.f32 %v11002, %v11692
    %v11933 = vadd.f32 %v11003, %v11697
    %v11934 = vadd.f32 %v11004, %v11700
    %v11935 = vadd.f32 %v11005, %v11705
    %v11936 = vadd.f32 %v11006, %v11708
    %v11937 = vadd.f32 %v11007, %v11713
    %v11938 = vadd.f32 %v11008, %v11716
    %v11939 = vadd.f32 %v11009, %v11721
    %v11940 = vadd.f32 %v11010, %v11724
    %v11941 = vadd.f32 %v11011, %v11729
    %v11942 = vadd.f32 %v11012, %v11732
    %v11943 = vadd.f32 %v11013, %v11737
    %v11944 = vadd.f32 %v11014, %v11740
    %v11945 = vadd.f32 %v11015, %v11745
    %v11946 = vadd.f32 %v11016, %v11748
    %v11947 = vadd.f32 %v11017, %v11753
    %v11948 = vadd.f32 %v11018, %v11756
    %v11949 = vadd.f32 %v11019, %v11761
    %v11950 = vadd.f32 %v11020, %v11764
    %v11951 = vadd.f32 %v11021, %v11769
    %v11952 = vadd.f32 %v11022, %v11772
    %v11953 = vadd.f32 %v11023, %v11777
    %v11954 = vadd.f32 %v11024, %v11780
    %v11955 = vadd.f32 %v11025, %v11785
    %v11956 = vadd.f32 %v11026, %v11788
    %v11957 = vadd.f32 %v11027, %v11793
    %v11958 = vadd.f32 %v11028, %v11796
    %v11959 = vadd.f32 %v11029, %v11801
    %v11960 = vadd.f32 %v11030, %v11804
    %v11961 = vadd.f32 %v11031, %v11809
    %v11962 = vadd.f32 %v11032, %v11812
    %v11963 = vadd.f32 %v11033, %v11817
    %v11964 = vadd.f32 %v11034, %v11820
    %v11965 = vadd.f32 %v11035, %v11825
    %v11966 = vadd.f32 %v11036, %v11828
    %v11967 = vadd.f32 %v11037, %v11833
    %v11968 = vadd.f32 %v11038, %v11836
    %v11969 = vadd.f32 %v11039, %v11841
    %v11970 = vadd.f32 %v11040, %v11844
    %v11971 = vadd.f32 %v11041, %v11849
    %v11972 = vadd.f32 %v11042, %v11852
    %v11973 = vadd.f32 %v11043, %v11857
    %v11974 = vadd.f32 %v11044, %v11860
    %v11975 = vadd.f32 %v11045, %v11865
    %v11976 = vadd.f32 %v11046, %v11868
    %v11977 = vadd.f32 %v11047, %v11873
    %v11978 = vadd.f32 %v11048, %v11876
    %v11979 = vadd.f32 %v11049, %v11881
    %v11980 = vadd.f32 %v11050, %v11884
    %v11981 = vadd.f32 %v11051, %v11889
    %v11982 = vadd.f32 %v11052, %v11892
    %v11983 = vadd.f32 %v11053, %v11897
    %v11984 = vadd.f32 %v11054, %v11900
    %v11985 = vadd.f32 %v11055, %v11905
    %v11986 = vadd.f32 %v11056, %v11908
    %v11987 = vadd.f32 %v11057, %v11913
    %v11988 = vadd.f32 %v11058, %v11916
    %v11989 = vadd.f32 %v11059, %v11921
    %v11990 = vadd.f32 %v11060, %v11924
    %v11991 = vsel %vm792, %v11927, 0.0
    %v11992 = vsel %vm792, %v11928, 0.0
    %v11993 = vadd.f32 %v11991, %v11992
    %v11994 = vsel %vm792, %v11929, 0.0
    %v11995 = vadd.f32 %v11993, %v11994
    %v11996 = vsel %vm792, %v11930, 0.0
    %v11997 = vadd.f32 %v11995, %v11996
    %v11998 = vsel %vm792, %v11931, 0.0
    %v11999 = vadd.f32 %v11997, %v11998
    %v12000 = vsel %vm792, %v11932, 0.0
    %v12001 = vadd.f32 %v11999, %v12000
    %v12002 = vsel %vm792, %v11933, 0.0
    %v12003 = vadd.f32 %v12001, %v12002
    %v12004 = vsel %vm792, %v11934, 0.0
    %v12005 = vadd.f32 %v12003, %v12004
    %v12006 = vsel %vm792, %v11935, 0.0
    %v12007 = vadd.f32 %v12005, %v12006
    %v12008 = vsel %vm792, %v11936, 0.0
    %v12009 = vadd.f32 %v12007, %v12008
    %v12010 = vsel %vm792, %v11937, 0.0
    %v12011 = vadd.f32 %v12009, %v12010
    %v12012 = vsel %vm792, %v11938, 0.0
    %v12013 = vadd.f32 %v12011, %v12012
    %v12014 = vsel %vm792, %v11939, 0.0
    %v12015 = vadd.f32 %v12013, %v12014
    %v12016 = vsel %vm792, %v11940, 0.0
    %v12017 = vadd.f32 %v12015, %v12016
    %v12018 = vsel %vm792, %v11941, 0.0
    %v12019 = vadd.f32 %v12017, %v12018
    %v12020 = vsel %vm792, %v11942, 0.0
    %v12021 = vadd.f32 %v12019, %v12020
    %v12022 = vsel %vm792, %v11943, 0.0
    %v12023 = vadd.f32 %v12021, %v12022
    %v12024 = vsel %vm792, %v11944, 0.0
    %v12025 = vadd.f32 %v12023, %v12024
    %v12026 = vsel %vm792, %v11945, 0.0
    %v12027 = vadd.f32 %v12025, %v12026
    %v12028 = vsel %vm792, %v11946, 0.0
    %v12029 = vadd.f32 %v12027, %v12028
    %v12030 = vsel %vm792, %v11947, 0.0
    %v12031 = vadd.f32 %v12029, %v12030
    %v12032 = vsel %vm792, %v11948, 0.0
    %v12033 = vadd.f32 %v12031, %v12032
    %v12034 = vsel %vm792, %v11949, 0.0
    %v12035 = vadd.f32 %v12033, %v12034
    %v12036 = vsel %vm792, %v11950, 0.0
    %v12037 = vadd.f32 %v12035, %v12036
    %v12038 = vsel %vm792, %v11951, 0.0
    %v12039 = vadd.f32 %v12037, %v12038
    %v12040 = vsel %vm792, %v11952, 0.0
    %v12041 = vadd.f32 %v12039, %v12040
    %v12042 = vsel %vm792, %v11953, 0.0
    %v12043 = vadd.f32 %v12041, %v12042
    %v12044 = vsel %vm792, %v11954, 0.0
    %v12045 = vadd.f32 %v12043, %v12044
    %v12046 = vsel %vm792, %v11955, 0.0
    %v12047 = vadd.f32 %v12045, %v12046
    %v12048 = vsel %vm792, %v11956, 0.0
    %v12049 = vadd.f32 %v12047, %v12048
    %v12050 = vsel %vm792, %v11957, 0.0
    %v12051 = vadd.f32 %v12049, %v12050
    %v12052 = vsel %vm792, %v11958, 0.0
    %v12053 = vadd.f32 %v12051, %v12052
    %v12054 = vsel %vm792, %v11959, 0.0
    %v12055 = vadd.f32 %v12053, %v12054
    %v12056 = vsel %vm792, %v11960, 0.0
    %v12057 = vadd.f32 %v12055, %v12056
    %v12058 = vsel %vm792, %v11961, 0.0
    %v12059 = vadd.f32 %v12057, %v12058
    %v12060 = vsel %vm792, %v11962, 0.0
    %v12061 = vadd.f32 %v12059, %v12060
    %v12062 = vsel %vm792, %v11963, 0.0
    %v12063 = vadd.f32 %v12061, %v12062
    %v12064 = vsel %vm792, %v11964, 0.0
    %v12065 = vadd.f32 %v12063, %v12064
    %v12066 = vsel %vm792, %v11965, 0.0
    %v12067 = vadd.f32 %v12065, %v12066
    %v12068 = vsel %vm792, %v11966, 0.0
    %v12069 = vadd.f32 %v12067, %v12068
    %v12070 = vsel %vm792, %v11967, 0.0
    %v12071 = vadd.f32 %v12069, %v12070
    %v12072 = vsel %vm792, %v11968, 0.0
    %v12073 = vadd.f32 %v12071, %v12072
    %v12074 = vsel %vm792, %v11969, 0.0
    %v12075 = vadd.f32 %v12073, %v12074
    %v12076 = vsel %vm792, %v11970, 0.0
    %v12077 = vadd.f32 %v12075, %v12076
    %v12078 = vsel %vm792, %v11971, 0.0
    %v12079 = vadd.f32 %v12077, %v12078
    %v12080 = vsel %vm792, %v11972, 0.0
    %v12081 = vadd.f32 %v12079, %v12080
    %v12082 = vsel %vm792, %v11973, 0.0
    %v12083 = vadd.f32 %v12081, %v12082
    %v12084 = vsel %vm792, %v11974, 0.0
    %v12085 = vadd.f32 %v12083, %v12084
    %v12086 = vsel %vm792, %v11975, 0.0
    %v12087 = vadd.f32 %v12085, %v12086
    %v12088 = vsel %vm792, %v11976, 0.0
    %v12089 = vadd.f32 %v12087, %v12088
    %v12090 = vsel %vm792, %v11977, 0.0
    %v12091 = vadd.f32 %v12089, %v12090
    %v12092 = vsel %vm792, %v11978, 0.0
    %v12093 = vadd.f32 %v12091, %v12092
    %v12094 = vsel %vm792, %v11979, 0.0
    %v12095 = vadd.f32 %v12093, %v12094
    %v12096 = vsel %vm792, %v11980, 0.0
    %v12097 = vadd.f32 %v12095, %v12096
    %v12098 = vsel %vm792, %v11981, 0.0
    %v12099 = vadd.f32 %v12097, %v12098
    %v12100 = vsel %vm792, %v11982, 0.0
    %v12101 = vadd.f32 %v12099, %v12100
    %v12102 = vsel %vm792, %v11983, 0.0
    %v12103 = vadd.f32 %v12101, %v12102
    %v12104 = vsel %vm792, %v11984, 0.0
    %v12105 = vadd.f32 %v12103, %v12104
    %v12106 = vsel %vm792, %v11985, 0.0
    %v12107 = vadd.f32 %v12105, %v12106
    %v12108 = vsel %vm792, %v11986, 0.0
    %v12109 = vadd.f32 %v12107, %v12108
    %v12110 = vsel %vm792, %v11987, 0.0
    %v12111 = vadd.f32 %v12109, %v12110
    %v12112 = vsel %vm792, %v11988, 0.0
    %v12113 = vadd.f32 %v12111, %v12112
    %v12114 = vsel %vm792, %v11989, 0.0
    %v12115 = vadd.f32 %v12113, %v12114
    %v12116 = vsel %vm792, %v11990, 0.0
    %v12117 = vadd.f32 %v12115, %v12116
    %v12118 = vrot.slane %v12117, 4
    %v12119 = vadd.f32 %v12117, %v12118
    %v12120 = vrot.slane %v12119, 2
    %v12121 = vadd.f32 %v12119, %v12120
    %v12122 = vrot.slane %v12121, 1
    %v12123 = vadd.f32 %v12121, %v12122
    %v12124 = vmul.f32 %v11927, %v11927
    %v12125 = vmul.f32 %v11928, %v11928
    %v12126 = vmul.f32 %v11929, %v11929
    %v12127 = vmul.f32 %v11930, %v11930
    %v12128 = vmul.f32 %v11931, %v11931
    %v12129 = vmul.f32 %v11932, %v11932
    %v12130 = vmul.f32 %v11933, %v11933
    %v12131 = vmul.f32 %v11934, %v11934
    %v12132 = vmul.f32 %v11935, %v11935
    %v12133 = vmul.f32 %v11936, %v11936
    %v12134 = vmul.f32 %v11937, %v11937
    %v12135 = vmul.f32 %v11938, %v11938
    %v12136 = vmul.f32 %v11939, %v11939
    %v12137 = vmul.f32 %v11940, %v11940
    %v12138 = vmul.f32 %v11941, %v11941
    %v12139 = vmul.f32 %v11942, %v11942
    %v12140 = vmul.f32 %v11943, %v11943
    %v12141 = vmul.f32 %v11944, %v11944
    %v12142 = vmul.f32 %v11945, %v11945
    %v12143 = vmul.f32 %v11946, %v11946
    %v12144 = vmul.f32 %v11947, %v11947
    %v12145 = vmul.f32 %v11948, %v11948
    %v12146 = vmul.f32 %v11949, %v11949
    %v12147 = vmul.f32 %v11950, %v11950
    %v12148 = vmul.f32 %v11951, %v11951
    %v12149 = vmul.f32 %v11952, %v11952
    %v12150 = vmul.f32 %v11953, %v11953
    %v12151 = vmul.f32 %v11954, %v11954
    %v12152 = vmul.f32 %v11955, %v11955
    %v12153 = vmul.f32 %v11956, %v11956
    %v12154 = vmul.f32 %v11957, %v11957
    %v12155 = vmul.f32 %v11958, %v11958
    %v12156 = vmul.f32 %v11959, %v11959
    %v12157 = vmul.f32 %v11960, %v11960
    %v12158 = vmul.f32 %v11961, %v11961
    %v12159 = vmul.f32 %v11962, %v11962
    %v12160 = vmul.f32 %v11963, %v11963
    %v12161 = vmul.f32 %v11964, %v11964
    %v12162 = vmul.f32 %v11965, %v11965
    %v12163 = vmul.f32 %v11966, %v11966
    %v12164 = vmul.f32 %v11967, %v11967
    %v12165 = vmul.f32 %v11968, %v11968
    %v12166 = vmul.f32 %v11969, %v11969
    %v12167 = vmul.f32 %v11970, %v11970
    %v12168 = vmul.f32 %v11971, %v11971
    %v12169 = vmul.f32 %v11972, %v11972
    %v12170 = vmul.f32 %v11973, %v11973
    %v12171 = vmul.f32 %v11974, %v11974
    %v12172 = vmul.f32 %v11975, %v11975
    %v12173 = vmul.f32 %v11976, %v11976
    %v12174 = vmul.f32 %v11977, %v11977
    %v12175 = vmul.f32 %v11978, %v11978
    %v12176 = vmul.f32 %v11979, %v11979
    %v12177 = vmul.f32 %v11980, %v11980
    %v12178 = vmul.f32 %v11981, %v11981
    %v12179 = vmul.f32 %v11982, %v11982
    %v12180 = vmul.f32 %v11983, %v11983
    %v12181 = vmul.f32 %v11984, %v11984
    %v12182 = vmul.f32 %v11985, %v11985
    %v12183 = vmul.f32 %v11986, %v11986
    %v12184 = vmul.f32 %v11987, %v11987
    %v12185 = vmul.f32 %v11988, %v11988
    %v12186 = vmul.f32 %v11989, %v11989
    %v12187 = vmul.f32 %v11990, %v11990
    %v12188 = vsel %vm792, %v12124, 0.0
    %v12189 = vsel %vm792, %v12125, 0.0
    %v12190 = vadd.f32 %v12188, %v12189
    %v12191 = vsel %vm792, %v12126, 0.0
    %v12192 = vadd.f32 %v12190, %v12191
    %v12193 = vsel %vm792, %v12127, 0.0
    %v12194 = vadd.f32 %v12192, %v12193
    %v12195 = vsel %vm792, %v12128, 0.0
    %v12196 = vadd.f32 %v12194, %v12195
    %v12197 = vsel %vm792, %v12129, 0.0
    %v12198 = vadd.f32 %v12196, %v12197
    %v12199 = vsel %vm792, %v12130, 0.0
    %v12200 = vadd.f32 %v12198, %v12199
    %v12201 = vsel %vm792, %v12131, 0.0
    %v12202 = vadd.f32 %v12200, %v12201
    %v12203 = vsel %vm792, %v12132, 0.0
    %v12204 = vadd.f32 %v12202, %v12203
    %v12205 = vsel %vm792, %v12133, 0.0
    %v12206 = vadd.f32 %v12204, %v12205
    %v12207 = vsel %vm792, %v12134, 0.0
    %v12208 = vadd.f32 %v12206, %v12207
    %v12209 = vsel %vm792, %v12135, 0.0
    %v12210 = vadd.f32 %v12208, %v12209
    %v12211 = vsel %vm792, %v12136, 0.0
    %v12212 = vadd.f32 %v12210, %v12211
    %v12213 = vsel %vm792, %v12137, 0.0
    %v12214 = vadd.f32 %v12212, %v12213
    %v12215 = vsel %vm792, %v12138, 0.0
    %v12216 = vadd.f32 %v12214, %v12215
    %v12217 = vsel %vm792, %v12139, 0.0
    %v12218 = vadd.f32 %v12216, %v12217
    %v12219 = vsel %vm792, %v12140, 0.0
    %v12220 = vadd.f32 %v12218, %v12219
    %v12221 = vsel %vm792, %v12141, 0.0
    %v12222 = vadd.f32 %v12220, %v12221
    %v12223 = vsel %vm792, %v12142, 0.0
    %v12224 = vadd.f32 %v12222, %v12223
    %v12225 = vsel %vm792, %v12143, 0.0
    %v12226 = vadd.f32 %v12224, %v12225
    %v12227 = vsel %vm792, %v12144, 0.0
    %v12228 = vadd.f32 %v12226, %v12227
    %v12229 = vsel %vm792, %v12145, 0.0
    %v12230 = vadd.f32 %v12228, %v12229
    %v12231 = vsel %vm792, %v12146, 0.0
    %v12232 = vadd.f32 %v12230, %v12231
    %v12233 = vsel %vm792, %v12147, 0.0
    %v12234 = vadd.f32 %v12232, %v12233
    %v12235 = vsel %vm792, %v12148, 0.0
    %v12236 = vadd.f32 %v12234, %v12235
    %v12237 = vsel %vm792, %v12149, 0.0
    %v12238 = vadd.f32 %v12236, %v12237
    %v12239 = vsel %vm792, %v12150, 0.0
    %v12240 = vadd.f32 %v12238, %v12239
    %v12241 = vsel %vm792, %v12151, 0.0
    %v12242 = vadd.f32 %v12240, %v12241
    %v12243 = vsel %vm792, %v12152, 0.0
    %v12244 = vadd.f32 %v12242, %v12243
    %v12245 = vsel %vm792, %v12153, 0.0
    %v12246 = vadd.f32 %v12244, %v12245
    %v12247 = vsel %vm792, %v12154, 0.0
    %v12248 = vadd.f32 %v12246, %v12247
    %v12249 = vsel %vm792, %v12155, 0.0
    %v12250 = vadd.f32 %v12248, %v12249
    %v12251 = vsel %vm792, %v12156, 0.0
    %v12252 = vadd.f32 %v12250, %v12251
    %v12253 = vsel %vm792, %v12157, 0.0
    %v12254 = vadd.f32 %v12252, %v12253
    %v12255 = vsel %vm792, %v12158, 0.0
    %v12256 = vadd.f32 %v12254, %v12255
    %v12257 = vsel %vm792, %v12159, 0.0
    %v12258 = vadd.f32 %v12256, %v12257
    %v12259 = vsel %vm792, %v12160, 0.0
    %v12260 = vadd.f32 %v12258, %v12259
    %v12261 = vsel %vm792, %v12161, 0.0
    %v12262 = vadd.f32 %v12260, %v12261
    %v12263 = vsel %vm792, %v12162, 0.0
    %v12264 = vadd.f32 %v12262, %v12263
    %v12265 = vsel %vm792, %v12163, 0.0
    %v12266 = vadd.f32 %v12264, %v12265
    %v12267 = vsel %vm792, %v12164, 0.0
    %v12268 = vadd.f32 %v12266, %v12267
    %v12269 = vsel %vm792, %v12165, 0.0
    %v12270 = vadd.f32 %v12268, %v12269
    %v12271 = vsel %vm792, %v12166, 0.0
    %v12272 = vadd.f32 %v12270, %v12271
    %v12273 = vsel %vm792, %v12167, 0.0
    %v12274 = vadd.f32 %v12272, %v12273
    %v12275 = vsel %vm792, %v12168, 0.0
    %v12276 = vadd.f32 %v12274, %v12275
    %v12277 = vsel %vm792, %v12169, 0.0
    %v12278 = vadd.f32 %v12276, %v12277
    %v12279 = vsel %vm792, %v12170, 0.0
    %v12280 = vadd.f32 %v12278, %v12279
    %v12281 = vsel %vm792, %v12171, 0.0
    %v12282 = vadd.f32 %v12280, %v12281
    %v12283 = vsel %vm792, %v12172, 0.0
    %v12284 = vadd.f32 %v12282, %v12283
    %v12285 = vsel %vm792, %v12173, 0.0
    %v12286 = vadd.f32 %v12284, %v12285
    %v12287 = vsel %vm792, %v12174, 0.0
    %v12288 = vadd.f32 %v12286, %v12287
    %v12289 = vsel %vm792, %v12175, 0.0
    %v12290 = vadd.f32 %v12288, %v12289
    %v12291 = vsel %vm792, %v12176, 0.0
    %v12292 = vadd.f32 %v12290, %v12291
    %v12293 = vsel %vm792, %v12177, 0.0
    %v12294 = vadd.f32 %v12292, %v12293
    %v12295 = vsel %vm792, %v12178, 0.0
    %v12296 = vadd.f32 %v12294, %v12295
    %v12297 = vsel %vm792, %v12179, 0.0
    %v12298 = vadd.f32 %v12296, %v12297
    %v12299 = vsel %vm792, %v12180, 0.0
    %v12300 = vadd.f32 %v12298, %v12299
    %v12301 = vsel %vm792, %v12181, 0.0
    %v12302 = vadd.f32 %v12300, %v12301
    %v12303 = vsel %vm792, %v12182, 0.0
    %v12304 = vadd.f32 %v12302, %v12303
    %v12305 = vsel %vm792, %v12183, 0.0
    %v12306 = vadd.f32 %v12304, %v12305
    %v12307 = vsel %vm792, %v12184, 0.0
    %v12308 = vadd.f32 %v12306, %v12307
    %v12309 = vsel %vm792, %v12185, 0.0
    %v12310 = vadd.f32 %v12308, %v12309
    %v12311 = vsel %vm792, %v12186, 0.0
    %v12312 = vadd.f32 %v12310, %v12311
    %v12313 = vsel %vm792, %v12187, 0.0
    %v12314 = vadd.f32 %v12312, %v12313
    %v12315 = vrot.slane %v12314, 4
    %v12316 = vadd.f32 %v12314, %v12315
    %v12317 = vrot.slane %v12316, 2
    %v12318 = vadd.f32 %v12316, %v12317
    %v12319 = vrot.slane %v12318, 1
    %v12320 = vadd.f32 %v12318, %v12319
    %v12321 = vmul.f32 %v12123, 0.001953125
    %v12322 = vmul.f32 %v12320, 0.001953125
    %v12323 = vmul.f32 %v12321, %v12321
    %v12324 = vsub.f32 %v12322, %v12323
    %v12325 = vadd.f32 %v12324, 1e-05
    %v12326 = vrsqrt.pop %v12325
    %v12327 = vld [vmem:[%s4 + $0x2] sm:$0x1]
    %v12328 = vld [vmem:[%s4 + $0x3] sm:$0x1]
    %v12329 = vmul.f32 %v12327, %v12326
    %v12330 = vlaneseq
    %v12331 = vshrl.u32 %v12330, 7
    %v12332 = vsub.s32 0, %v12331
    %v12333 = vrot.slane %v12329, %v12332
    %v12334 = vmul.f32 %v11927, %v12333
    %v12335 = vmul.f32 %v11928, %v12333
    %v12336 = vmul.f32 %v11929, %v12333
    %v12337 = vmul.f32 %v11930, %v12333
    %v12338 = vmul.f32 %v11931, %v12333
    %v12339 = vmul.f32 %v11932, %v12333
    %v12340 = vmul.f32 %v11933, %v12333
    %v12341 = vmul.f32 %v11934, %v12333
    %v12342 = vmul.f32 %v11935, %v12333
    %v12343 = vmul.f32 %v11936, %v12333
    %v12344 = vmul.f32 %v11937, %v12333
    %v12345 = vmul.f32 %v11938, %v12333
    %v12346 = vmul.f32 %v11939, %v12333
    %v12347 = vmul.f32 %v11940, %v12333
    %v12348 = vmul.f32 %v11941, %v12333
    %v12349 = vmul.f32 %v11942, %v12333
    %v12350 = vmul.f32 %v11943, %v12333
    %v12351 = vmul.f32 %v11944, %v12333
    %v12352 = vmul.f32 %v11945, %v12333
    %v12353 = vmul.f32 %v11946, %v12333
    %v12354 = vmul.f32 %v11947, %v12333
    %v12355 = vmul.f32 %v11948, %v12333
    %v12356 = vmul.f32 %v11949, %v12333
    %v12357 = vmul.f32 %v11950, %v12333
    %v12358 = vmul.f32 %v11951, %v12333
    %v12359 = vmul.f32 %v11952, %v12333
    %v12360 = vmul.f32 %v11953, %v12333
    %v12361 = vmul.f32 %v11954, %v12333
    %v12362 = vmul.f32 %v11955, %v12333
    %v12363 = vmul.f32 %v11956, %v12333
    %v12364 = vmul.f32 %v11957, %v12333
    %v12365 = vmul.f32 %v11958, %v12333
    %v12366 = vmul.f32 %v11959, %v12333
    %v12367 = vmul.f32 %v11960, %v12333
    %v12368 = vmul.f32 %v11961, %v12333
    %v12369 = vmul.f32 %v11962, %v12333
    %v12370 = vmul.f32 %v11963, %v12333
    %v12371 = vmul.f32 %v11964, %v12333
    %v12372 = vmul.f32 %v11965, %v12333
    %v12373 = vmul.f32 %v11966, %v12333
    %v12374 = vmul.f32 %v11967, %v12333
    %v12375 = vmul.f32 %v11968, %v12333
    %v12376 = vmul.f32 %v11969, %v12333
    %v12377 = vmul.f32 %v11970, %v12333
    %v12378 = vmul.f32 %v11971, %v12333
    %v12379 = vmul.f32 %v11972, %v12333
    %v12380 = vmul.f32 %v11973, %v12333
    %v12381 = vmul.f32 %v11974, %v12333
    %v12382 = vmul.f32 %v11975, %v12333
    %v12383 = vmul.f32 %v11976, %v12333
    %v12384 = vmul.f32 %v11977, %v12333
    %v12385 = vmul.f32 %v11978, %v12333
    %v12386 = vmul.f32 %v11979, %v12333
    %v12387 = vmul.f32 %v11980, %v12333
    %v12388 = vmul.f32 %v11981, %v12333
    %v12389 = vmul.f32 %v11982, %v12333
    %v12390 = vmul.f32 %v11983, %v12333
    %v12391 = vmul.f32 %v11984, %v12333
    %v12392 = vmul.f32 %v11985, %v12333
    %v12393 = vmul.f32 %v11986, %v12333
    %v12394 = vmul.f32 %v11987, %v12333
    %v12395 = vmul.f32 %v11988, %v12333
    %v12396 = vmul.f32 %v11989, %v12333
    %v12397 = vmul.f32 %v11990, %v12333
    %v12398 = vmul.f32 %v12321, %v12329
    %v12399 = vsub.f32 %v12328, %v12398
    %v12400 = vlaneseq
    %v12401 = vshrl.u32 %v12400, 7
    %v12402 = vsub.s32 0, %v12401
    %v12403 = vrot.slane %v12399, %v12402
    %v12404 = vadd.f32 %v12334, %v12403
    %v12405 = vadd.f32 %v12335, %v12403
    %v12406 = vadd.f32 %v12336, %v12403
    %v12407 = vadd.f32 %v12337, %v12403
    %v12408 = vadd.f32 %v12338, %v12403
    %v12409 = vadd.f32 %v12339, %v12403
    %v12410 = vadd.f32 %v12340, %v12403
    %v12411 = vadd.f32 %v12341, %v12403
    %v12412 = vadd.f32 %v12342, %v12403
    %v12413 = vadd.f32 %v12343, %v12403
    %v12414 = vadd.f32 %v12344, %v12403
    %v12415 = vadd.f32 %v12345, %v12403
    %v12416 = vadd.f32 %v12346, %v12403
    %v12417 = vadd.f32 %v12347, %v12403
    %v12418 = vadd.f32 %v12348, %v12403
    %v12419 = vadd.f32 %v12349, %v12403
    %v12420 = vadd.f32 %v12350, %v12403
    %v12421 = vadd.f32 %v12351, %v12403
    %v12422 = vadd.f32 %v12352, %v12403
    %v12423 = vadd.f32 %v12353, %v12403
    %v12424 = vadd.f32 %v12354, %v12403
    %v12425 = vadd.f32 %v12355, %v12403
    %v12426 = vadd.f32 %v12356, %v12403
    %v12427 = vadd.f32 %v12357, %v12403
    %v12428 = vadd.f32 %v12358, %v12403
    %v12429 = vadd.f32 %v12359, %v12403
    %v12430 = vadd.f32 %v12360, %v12403
    %v12431 = vadd.f32 %v12361, %v12403
    %v12432 = vadd.f32 %v12362, %v12403
    %v12433 = vadd.f32 %v12363, %v12403
    %v12434 = vadd.f32 %v12364, %v12403
    %v12435 = vadd.f32 %v12365, %v12403
    %v12436 = vadd.f32 %v12366, %v12403
    %v12437 = vadd.f32 %v12367, %v12403
    %v12438 = vadd.f32 %v12368, %v12403
    %v12439 = vadd.f32 %v12369, %v12403
    %v12440 = vadd.f32 %v12370, %v12403
    %v12441 = vadd.f32 %v12371, %v12403
    %v12442 = vadd.f32 %v12372, %v12403
    %v12443 = vadd.f32 %v12373, %v12403
    %v12444 = vadd.f32 %v12374, %v12403
    %v12445 = vadd.f32 %v12375, %v12403
    %v12446 = vadd.f32 %v12376, %v12403
    %v12447 = vadd.f32 %v12377, %v12403
    %v12448 = vadd.f32 %v12378, %v12403
    %v12449 = vadd.f32 %v12379, %v12403
    %v12450 = vadd.f32 %v12380, %v12403
    %v12451 = vadd.f32 %v12381, %v12403
    %v12452 = vadd.f32 %v12382, %v12403
    %v12453 = vadd.f32 %v12383, %v12403
    %v12454 = vadd.f32 %v12384, %v12403
    %v12455 = vadd.f32 %v12385, %v12403
    %v12456 = vadd.f32 %v12386, %v12403
    %v12457 = vadd.f32 %v12387, %v12403
    %v12458 = vadd.f32 %v12388, %v12403
    %v12459 = vadd.f32 %v12389, %v12403
    %v12460 = vadd.f32 %v12390, %v12403
    %v12461 = vadd.f32 %v12391, %v12403
    %v12462 = vadd.f32 %v12392, %v12403
    %v12463 = vadd.f32 %v12393, %v12403
    %v12464 = vadd.f32 %v12394, %v12403
    %v12465 = vadd.f32 %v12395, %v12403
    %v12466 = vadd.f32 %v12396, %v12403
    %v12467 = vadd.f32 %v12397, %v12403
    %v12468 = vmax.f32 %v12404, 0.0
    %v12469 = vmax.f32 %v12405, 0.0
    %v12470 = vmax.f32 %v12406, 0.0
    %v12471 = vmax.f32 %v12407, 0.0
    %v12472 = vmax.f32 %v12408, 0.0
    %v12473 = vmax.f32 %v12409, 0.0
    %v12474 = vmax.f32 %v12410, 0.0
    %v12475 = vmax.f32 %v12411, 0.0
    %v12476 = vmax.f32 %v12412, 0.0
    %v12477 = vmax.f32 %v12413, 0.0
    %v12478 = vmax.f32 %v12414, 0.0
    %v12479 = vmax.f32 %v12415, 0.0
    %v12480 = vmax.f32 %v12416, 0.0
    %v12481 = vmax.f32 %v12417, 0.0
    %v12482 = vmax.f32 %v12418, 0.0
    %v12483 = vmax.f32 %v12419, 0.0
    %v12484 = vmax.f32 %v12420, 0.0
    %v12485 = vmax.f32 %v12421, 0.0
    %v12486 = vmax.f32 %v12422, 0.0
    %v12487 = vmax.f32 %v12423, 0.0
    %v12488 = vmax.f32 %v12424, 0.0
    %v12489 = vmax.f32 %v12425, 0.0
    %v12490 = vmax.f32 %v12426, 0.0
    %v12491 = vmax.f32 %v12427, 0.0
    %v12492 = vmax.f32 %v12428, 0.0
    %v12493 = vmax.f32 %v12429, 0.0
    %v12494 = vmax.f32 %v12430, 0.0
    %v12495 = vmax.f32 %v12431, 0.0
    %v12496 = vmax.f32 %v12432, 0.0
    %v12497 = vmax.f32 %v12433, 0.0
    %v12498 = vmax.f32 %v12434, 0.0
    %v12499 = vmax.f32 %v12435, 0.0
    %v12500 = vmax.f32 %v12436, 0.0
    %v12501 = vmax.f32 %v12437, 0.0
    %v12502 = vmax.f32 %v12438, 0.0
    %v12503 = vmax.f32 %v12439, 0.0
    %v12504 = vmax.f32 %v12440, 0.0
    %v12505 = vmax.f32 %v12441, 0.0
    %v12506 = vmax.f32 %v12442, 0.0
    %v12507 = vmax.f32 %v12443, 0.0
    %v12508 = vmax.f32 %v12444, 0.0
    %v12509 = vmax.f32 %v12445, 0.0
    %v12510 = vmax.f32 %v12446, 0.0
    %v12511 = vmax.f32 %v12447, 0.0
    %v12512 = vmax.f32 %v12448, 0.0
    %v12513 = vmax.f32 %v12449, 0.0
    %v12514 = vmax.f32 %v12450, 0.0
    %v12515 = vmax.f32 %v12451, 0.0
    %v12516 = vmax.f32 %v12452, 0.0
    %v12517 = vmax.f32 %v12453, 0.0
    %v12518 = vmax.f32 %v12454, 0.0
    %v12519 = vmax.f32 %v12455, 0.0
    %v12520 = vmax.f32 %v12456, 0.0
    %v12521 = vmax.f32 %v12457, 0.0
    %v12522 = vmax.f32 %v12458, 0.0
    %v12523 = vmax.f32 %v12459, 0.0
    %v12524 = vmax.f32 %v12460, 0.0
    %v12525 = vmax.f32 %v12461, 0.0
    %v12526 = vmax.f32 %v12462, 0.0
    %v12527 = vmax.f32 %v12463, 0.0
    %v12528 = vmax.f32 %v12464, 0.0
    %v12529 = vmax.f32 %v12465, 0.0
    %v12530 = vmax.f32 %v12466, 0.0
    %v12531 = vmax.f32 %v12467, 0.0
    %v12532 = vpack.c.bf16 %v12469, %v12468
    %v12533 = vpack.c.bf16 %v12471, %v12470
    %v12534 = vpack.c.bf16 %v12473, %v12472
    %v12535 = vpack.c.bf16 %v12475, %v12474
    %v12536 = vpack.c.bf16 %v12477, %v12476
    %v12537 = vpack.c.bf16 %v12479, %v12478
    %v12538 = vpack.c.bf16 %v12481, %v12480
    %v12539 = vpack.c.bf16 %v12483, %v12482
    %v12540 = vpack.c.bf16 %v12485, %v12484
    %v12541 = vpack.c.bf16 %v12487, %v12486
    %v12542 = vpack.c.bf16 %v12489, %v12488
    %v12543 = vpack.c.bf16 %v12491, %v12490
    %v12544 = vpack.c.bf16 %v12493, %v12492
    %v12545 = vpack.c.bf16 %v12495, %v12494
    %v12546 = vpack.c.bf16 %v12497, %v12496
    %v12547 = vpack.c.bf16 %v12499, %v12498
    %v12548 = vpack.c.bf16 %v12501, %v12500
    %v12549 = vpack.c.bf16 %v12503, %v12502
    %v12550 = vpack.c.bf16 %v12505, %v12504
    %v12551 = vpack.c.bf16 %v12507, %v12506
    %v12552 = vpack.c.bf16 %v12509, %v12508
    %v12553 = vpack.c.bf16 %v12511, %v12510
    %v12554 = vpack.c.bf16 %v12513, %v12512
    %v12555 = vpack.c.bf16 %v12515, %v12514
    %v12556 = vpack.c.bf16 %v12517, %v12516
    %v12557 = vpack.c.bf16 %v12519, %v12518
    %v12558 = vpack.c.bf16 %v12521, %v12520
    %v12559 = vpack.c.bf16 %v12523, %v12522
    %v12560 = vpack.c.bf16 %v12525, %v12524
    %v12561 = vpack.c.bf16 %v12527, %v12526
    %v12562 = vpack.c.bf16 %v12529, %v12528
    %v12563 = vpack.c.bf16 %v12531, %v12530
    %v12564 = vld [vmem:[%s3] sm:$0xf]
    %v12565 = vld [vmem:[%s3 + $0x4] sm:$0xf]
    %v12566 = vld [vmem:[%s3 + $0x8] sm:$0xf]
    %v12567 = vld [vmem:[%s3 + $0xc] sm:$0xf]
    %v12568 = vld [vmem:[%s3 + $0x10] sm:$0xf]
    %v12569 = vld [vmem:[%s3 + $0x14] sm:$0xf]
    %v12570 = vld [vmem:[%s3 + $0x18] sm:$0xf]
    %v12571 = vld [vmem:[%s3 + $0x1c] sm:$0xf]
    %v12580 = vunpack.c.l.b16 %v12564
    %v12581 = vunpack.c.l.b16 %v12565
    %v12582 = vunpack.c.l.b16 %v12566
    %v12583 = vunpack.c.l.b16 %v12567
    %v12584 = vunpack.c.l.b16 %v12568
    %v12585 = vunpack.c.l.b16 %v12569
    %v12586 = vunpack.c.l.b16 %v12570
    %v12587 = vunpack.c.l.b16 %v12571
    %v12588 = vpack.c.b16 %v12581, %v12580
    %v12589 = vpack.c.b16 %v12583, %v12582
    %v12590 = vpack.c.b16 %v12585, %v12584
    %v12591 = vpack.c.b16 %v12587, %v12586
    %v12597 = vsel %vm792, %v12532, 0
    %v12600 = vsel %vm792, %v12533, 0
    %v12603 = vsel %vm792, %v12534, 0
    %v12606 = vsel %vm792, %v12535, 0
    %v12609 = vsel %vm792, %v12536, 0
    %v12612 = vsel %vm792, %v12537, 0
    %v12615 = vsel %vm792, %v12538, 0
    %v12618 = vsel %vm792, %v12539, 0
    %v12621 = vsel %vm792, %v12540, 0
    %v12624 = vsel %vm792, %v12541, 0
    %v12627 = vsel %vm792, %v12542, 0
    %v12630 = vsel %vm792, %v12543, 0
    %v12633 = vsel %vm792, %v12544, 0
    %v12636 = vsel %vm792, %v12545, 0
    %v12639 = vsel %vm792, %v12546, 0
    %v12642 = vsel %vm792, %v12547, 0
    %v12645 = vsel %vm792, %v12548, 0
    %v12648 = vsel %vm792, %v12549, 0
    %v12651 = vsel %vm792, %v12550, 0
    %v12654 = vsel %vm792, %v12551, 0
    %v12657 = vsel %vm792, %v12552, 0
    %v12660 = vsel %vm792, %v12553, 0
    %v12663 = vsel %vm792, %v12554, 0
    %v12666 = vsel %vm792, %v12555, 0
    %v12669 = vsel %vm792, %v12556, 0
    %v12672 = vsel %vm792, %v12557, 0
    %v12675 = vsel %vm792, %v12558, 0
    %v12678 = vsel %vm792, %v12559, 0
    %v12681 = vsel %vm792, %v12560, 0
    %v12684 = vsel %vm792, %v12561, 0
    %v12687 = vsel %vm792, %v12562, 0
    %v12690 = vsel %vm792, %v12563, 0
    %12692 = vmatprep.subr.bf16.mxu0 0
    %12693 = vmatpush1.bf16.msra.mxu0 0
    %12694 = vmatprep.subr.bf16.mxu0 0
    %12695 = vmatpush1.bf16.msra.mxu0 0
    %12696 = vmatprep.subr.bf16.mxu0 0
    %12697 = vmatpush1.bf16.msra.mxu0 0
    %12698 = vmatprep.subr.bf16.mxu0 0
    %12699 = vmatpush1.bf16.msra.mxu0 0
    %12700 = vmatprep.subr.bf16.mxu0 0
    %12701 = vmatpush1.bf16.msra.mxu0 %v12591
    %12702 = vmatprep.subr.bf16.mxu0 0
    %12703 = vmatpush1.bf16.msra.mxu0 %v12590
    %12704 = vmatprep.subr.bf16.mxu0 0
    %12705 = vmatpush1.bf16.msra.mxu0 %v12589
    %12706 = vmatprep.subr.bf16.mxu0 0
    %12707 = vmatpush1.bf16.msra.mxu0 %v12588
    %12708 = vmatprep.subr.bf16.mxu0 0
    %12709 = vmatpush2.bf16.msra.mxu0 0
    %12710 = vmatprep.subr.bf16.mxu0 0
    %12711 = vmatpush2.bf16.msra.mxu0 0
    %12712 = vmatprep.subr.bf16.mxu0 0
    %12713 = vmatpush2.bf16.msra.mxu0 0
    %12714 = vmatprep.subr.bf16.mxu0 0
    %12715 = vmatpush2.bf16.msra.mxu0 0
    %12716 = vmatprep.subr.bf16.mxu0 0
    %12717 = vmatpush2.bf16.msra.mxu0 0
    %12718 = vmatprep.subr.bf16.mxu0 0
    %12719 = vmatpush2.bf16.msra.mxu0 0
    %12720 = vmatprep.subr.bf16.mxu0 0
    %12721 = vmatpush2.bf16.msra.mxu0 0
    %12722 = vmatprep.subr.bf16.mxu0 0
    %12723 = vmatpush2.bf16.msra.mxu0 0
    %12724 = vmatprep.mubr.bf16.mxu0 0
    %12725 = vmatmul.mubr.bf16.gmra.mxu0 %v12597
    %v12726 = vpop.f32.mrf.mxu0
    %v12727 = vadd.f32 0.0, %v12726
    %v12728 = vpop.f32.mrf.mxu0
    %v12729 = vpop.f32.mrf.mxu0
    %v12730 = vadd.f32 0.0, %v12729
    %v12731 = vpop.f32.mrf.mxu0
    %12732 = vmatprep.mubr.bf16.mxu0 0
    %12733 = vmatmul.mubr.bf16.gmra.mxu0 %v12600
    %v12734 = vpop.f32.mrf.mxu0
    %v12735 = vadd.f32 0.0, %v12734
    %v12736 = vpop.f32.mrf.mxu0
    %v12737 = vpop.f32.mrf.mxu0
    %v12738 = vadd.f32 0.0, %v12737
    %v12739 = vpop.f32.mrf.mxu0
    %12740 = vmatprep.mubr.bf16.mxu0 0
    %12741 = vmatmul.mubr.bf16.gmra.mxu0 %v12603
    %v12742 = vpop.f32.mrf.mxu0
    %v12743 = vadd.f32 0.0, %v12742
    %v12744 = vpop.f32.mrf.mxu0
    %v12745 = vpop.f32.mrf.mxu0
    %v12746 = vadd.f32 0.0, %v12745
    %v12747 = vpop.f32.mrf.mxu0
    %12748 = vmatprep.mubr.bf16.mxu0 0
    %12749 = vmatmul.mubr.bf16.gmra.mxu0 %v12606
    %v12750 = vpop.f32.mrf.mxu0
    %v12751 = vadd.f32 0.0, %v12750
    %v12752 = vpop.f32.mrf.mxu0
    %v12753 = vpop.f32.mrf.mxu0
    %v12754 = vadd.f32 0.0, %v12753
    %v12755 = vpop.f32.mrf.mxu0
    %12756 = vmatprep.mubr.bf16.mxu0 0
    %12757 = vmatmul.mubr.bf16.gmra.mxu0 %v12609
    %v12758 = vpop.f32.mrf.mxu0
    %v12759 = vadd.f32 0.0, %v12758
    %v12760 = vpop.f32.mrf.mxu0
    %v12761 = vpop.f32.mrf.mxu0
    %v12762 = vadd.f32 0.0, %v12761
    %v12763 = vpop.f32.mrf.mxu0
    %12764 = vmatprep.mubr.bf16.mxu0 0
    %12765 = vmatmul.mubr.bf16.gmra.mxu0 %v12612
    %v12766 = vpop.f32.mrf.mxu0
    %v12767 = vadd.f32 0.0, %v12766
    %v12768 = vpop.f32.mrf.mxu0
    %v12769 = vpop.f32.mrf.mxu0
    %v12770 = vadd.f32 0.0, %v12769
    %v12771 = vpop.f32.mrf.mxu0
    %12772 = vmatprep.mubr.bf16.mxu0 0
    %12773 = vmatmul.mubr.bf16.gmra.mxu0 %v12615
    %v12774 = vpop.f32.mrf.mxu0
    %v12775 = vadd.f32 0.0, %v12774
    %v12776 = vpop.f32.mrf.mxu0
    %v12777 = vpop.f32.mrf.mxu0
    %v12778 = vadd.f32 0.0, %v12777
    %v12779 = vpop.f32.mrf.mxu0
    %12780 = vmatprep.mubr.bf16.mxu0 0
    %12781 = vmatmul.mubr.bf16.gmra.mxu0 %v12618
    %v12782 = vpop.f32.mrf.mxu0
    %v12783 = vadd.f32 0.0, %v12782
    %v12784 = vpop.f32.mrf.mxu0
    %v12785 = vpop.f32.mrf.mxu0
    %v12786 = vadd.f32 0.0, %v12785
    %v12787 = vpop.f32.mrf.mxu0
    %12788 = vmatprep.mubr.bf16.mxu0 0
    %12789 = vmatmul.mubr.bf16.gmra.mxu0 %v12621
    %v12790 = vpop.f32.mrf.mxu0
    %v12791 = vadd.f32 0.0, %v12790
    %v12792 = vpop.f32.mrf.mxu0
    %v12793 = vpop.f32.mrf.mxu0
    %v12794 = vadd.f32 0.0, %v12793
    %v12795 = vpop.f32.mrf.mxu0
    %12796 = vmatprep.mubr.bf16.mxu0 0
    %12797 = vmatmul.mubr.bf16.gmra.mxu0 %v12624
    %v12798 = vpop.f32.mrf.mxu0
    %v12799 = vadd.f32 0.0, %v12798
    %v12800 = vpop.f32.mrf.mxu0
    %v12801 = vpop.f32.mrf.mxu0
    %v12802 = vadd.f32 0.0, %v12801
    %v12803 = vpop.f32.mrf.mxu0
    %12804 = vmatprep.mubr.bf16.mxu0 0
    %12805 = vmatmul.mubr.bf16.gmra.mxu0 %v12627
    %v12806 = vpop.f32.mrf.mxu0
    %v12807 = vadd.f32 0.0, %v12806
    %v12808 = vpop.f32.mrf.mxu0
    %v12809 = vpop.f32.mrf.mxu0
    %v12810 = vadd.f32 0.0, %v12809
    %v12811 = vpop.f32.mrf.mxu0
    %12812 = vmatprep.mubr.bf16.mxu0 0
    %12813 = vmatmul.mubr.bf16.gmra.mxu0 %v12630
    %v12814 = vpop.f32.mrf.mxu0
    %v12815 = vadd.f32 0.0, %v12814
    %v12816 = vpop.f32.mrf.mxu0
    %v12817 = vpop.f32.mrf.mxu0
    %v12818 = vadd.f32 0.0, %v12817
    %v12819 = vpop.f32.mrf.mxu0
    %12820 = vmatprep.mubr.bf16.mxu0 0
    %12821 = vmatmul.mubr.bf16.gmra.mxu0 %v12633
    %v12822 = vpop.f32.mrf.mxu0
    %v12823 = vadd.f32 0.0, %v12822
    %v12824 = vpop.f32.mrf.mxu0
    %v12825 = vpop.f32.mrf.mxu0
    %v12826 = vadd.f32 0.0, %v12825
    %v12827 = vpop.f32.mrf.mxu0
    %12828 = vmatprep.mubr.bf16.mxu0 0
    %12829 = vmatmul.mubr.bf16.gmra.mxu0 %v12636
    %v12830 = vpop.f32.mrf.mxu0
    %v12831 = vadd.f32 0.0, %v12830
    %v12832 = vpop.f32.mrf.mxu0
    %v12833 = vpop.f32.mrf.mxu0
    %v12834 = vadd.f32 0.0, %v12833
    %v12835 = vpop.f32.mrf.mxu0
    %12836 = vmatprep.mubr.bf16.mxu0 0
    %12837 = vmatmul.mubr.bf16.gmra.mxu0 %v12639
    %v12838 = vpop.f32.mrf.mxu0
    %v12839 = vadd.f32 0.0, %v12838
    %v12840 = vpop.f32.mrf.mxu0
    %v12841 = vpop.f32.mrf.mxu0
    %v12842 = vadd.f32 0.0, %v12841
    %v12843 = vpop.f32.mrf.mxu0
    %12844 = vmatprep.mubr.bf16.mxu0 0
    %12845 = vmatmul.mubr.bf16.gmra.mxu0 %v12642
    %v12846 = vpop.f32.mrf.mxu0
    %v12847 = vadd.f32 0.0, %v12846
    %v12848 = vpop.f32.mrf.mxu0
    %v12849 = vpop.f32.mrf.mxu0
    %v12850 = vadd.f32 0.0, %v12849
    %v12851 = vpop.f32.mrf.mxu0
    %12852 = vmatprep.mubr.bf16.mxu0 0
    %12853 = vmatmul.mubr.bf16.gmra.mxu0 %v12645
    %v12854 = vpop.f32.mrf.mxu0
    %v12855 = vadd.f32 0.0, %v12854
    %v12856 = vpop.f32.mrf.mxu0
    %v12857 = vpop.f32.mrf.mxu0
    %v12858 = vadd.f32 0.0, %v12857
    %v12859 = vpop.f32.mrf.mxu0
    %12860 = vmatprep.mubr.bf16.mxu0 0
    %12861 = vmatmul.mubr.bf16.gmra.mxu0 %v12648
    %v12862 = vpop.f32.mrf.mxu0
    %v12863 = vadd.f32 0.0, %v12862
    %v12864 = vpop.f32.mrf.mxu0
    %v12865 = vpop.f32.mrf.mxu0
    %v12866 = vadd.f32 0.0, %v12865
    %v12867 = vpop.f32.mrf.mxu0
    %12868 = vmatprep.mubr.bf16.mxu0 0
    %12869 = vmatmul.mubr.bf16.gmra.mxu0 %v12651
    %v12870 = vpop.f32.mrf.mxu0
    %v12871 = vadd.f32 0.0, %v12870
    %v12872 = vpop.f32.mrf.mxu0
    %v12873 = vpop.f32.mrf.mxu0
    %v12874 = vadd.f32 0.0, %v12873
    %v12875 = vpop.f32.mrf.mxu0
    %12876 = vmatprep.mubr.bf16.mxu0 0
    %12877 = vmatmul.mubr.bf16.gmra.mxu0 %v12654
    %v12878 = vpop.f32.mrf.mxu0
    %v12879 = vadd.f32 0.0, %v12878
    %v12880 = vpop.f32.mrf.mxu0
    %v12881 = vpop.f32.mrf.mxu0
    %v12882 = vadd.f32 0.0, %v12881
    %v12883 = vpop.f32.mrf.mxu0
    %12884 = vmatprep.mubr.bf16.mxu0 0
    %12885 = vmatmul.mubr.bf16.gmra.mxu0 %v12657
    %v12886 = vpop.f32.mrf.mxu0
    %v12887 = vadd.f32 0.0, %v12886
    %v12888 = vpop.f32.mrf.mxu0
    %v12889 = vpop.f32.mrf.mxu0
    %v12890 = vadd.f32 0.0, %v12889
    %v12891 = vpop.f32.mrf.mxu0
    %12892 = vmatprep.mubr.bf16.mxu0 0
    %12893 = vmatmul.mubr.bf16.gmra.mxu0 %v12660
    %v12894 = vpop.f32.mrf.mxu0
    %v12895 = vadd.f32 0.0, %v12894
    %v12896 = vpop.f32.mrf.mxu0
    %v12897 = vpop.f32.mrf.mxu0
    %v12898 = vadd.f32 0.0, %v12897
    %v12899 = vpop.f32.mrf.mxu0
    %12900 = vmatprep.mubr.bf16.mxu0 0
    %12901 = vmatmul.mubr.bf16.gmra.mxu0 %v12663
    %v12902 = vpop.f32.mrf.mxu0
    %v12903 = vadd.f32 0.0, %v12902
    %v12904 = vpop.f32.mrf.mxu0
    %v12905 = vpop.f32.mrf.mxu0
    %v12906 = vadd.f32 0.0, %v12905
    %v12907 = vpop.f32.mrf.mxu0
    %12908 = vmatprep.mubr.bf16.mxu0 0
    %12909 = vmatmul.mubr.bf16.gmra.mxu0 %v12666
    %v12910 = vpop.f32.mrf.mxu0
    %v12911 = vadd.f32 0.0, %v12910
    %v12912 = vpop.f32.mrf.mxu0
    %v12913 = vpop.f32.mrf.mxu0
    %v12914 = vadd.f32 0.0, %v12913
    %v12915 = vpop.f32.mrf.mxu0
    %12916 = vmatprep.mubr.bf16.mxu0 0
    %12917 = vmatmul.mubr.bf16.gmra.mxu0 %v12669
    %v12918 = vpop.f32.mrf.mxu0
    %v12919 = vadd.f32 0.0, %v12918
    %v12920 = vpop.f32.mrf.mxu0
    %v12921 = vpop.f32.mrf.mxu0
    %v12922 = vadd.f32 0.0, %v12921
    %v12923 = vpop.f32.mrf.mxu0
    %12924 = vmatprep.mubr.bf16.mxu0 0
    %12925 = vmatmul.mubr.bf16.gmra.mxu0 %v12672
    %v12926 = vpop.f32.mrf.mxu0
    %v12927 = vadd.f32 0.0, %v12926
    %v12928 = vpop.f32.mrf.mxu0
    %v12929 = vpop.f32.mrf.mxu0
    %v12930 = vadd.f32 0.0, %v12929
    %v12931 = vpop.f32.mrf.mxu0
    %12932 = vmatprep.mubr.bf16.mxu0 0
    %12933 = vmatmul.mubr.bf16.gmra.mxu0 %v12675
    %v12934 = vpop.f32.mrf.mxu0
    %v12935 = vadd.f32 0.0, %v12934
    %v12936 = vpop.f32.mrf.mxu0
    %v12937 = vpop.f32.mrf.mxu0
    %v12938 = vadd.f32 0.0, %v12937
    %v12939 = vpop.f32.mrf.mxu0
    %12940 = vmatprep.mubr.bf16.mxu0 0
    %12941 = vmatmul.mubr.bf16.gmra.mxu0 %v12678
    %v12942 = vpop.f32.mrf.mxu0
    %v12943 = vadd.f32 0.0, %v12942
    %v12944 = vpop.f32.mrf.mxu0
    %v12945 = vpop.f32.mrf.mxu0
    %v12946 = vadd.f32 0.0, %v12945
    %v12947 = vpop.f32.mrf.mxu0
    %12948 = vmatprep.mubr.bf16.mxu0 0
    %12949 = vmatmul.mubr.bf16.gmra.mxu0 %v12681
    %v12950 = vpop.f32.mrf.mxu0
    %v12951 = vadd.f32 0.0, %v12950
    %v12952 = vpop.f32.mrf.mxu0
    %v12953 = vpop.f32.mrf.mxu0
    %v12954 = vadd.f32 0.0, %v12953
    %v12955 = vpop.f32.mrf.mxu0
    %12956 = vmatprep.mubr.bf16.mxu0 0
    %12957 = vmatmul.mubr.bf16.gmra.mxu0 %v12684
    %v12958 = vpop.f32.mrf.mxu0
    %v12959 = vadd.f32 0.0, %v12958
    %v12960 = vpop.f32.mrf.mxu0
    %v12961 = vpop.f32.mrf.mxu0
    %v12962 = vadd.f32 0.0, %v12961
    %v12963 = vpop.f32.mrf.mxu0
    %12964 = vmatprep.mubr.bf16.mxu0 0
    %12965 = vmatmul.mubr.bf16.gmra.mxu0 %v12687
    %v12966 = vpop.f32.mrf.mxu0
    %v12967 = vadd.f32 0.0, %v12966
    %v12968 = vpop.f32.mrf.mxu0
    %v12969 = vpop.f32.mrf.mxu0
    %v12970 = vadd.f32 0.0, %v12969
    %v12971 = vpop.f32.mrf.mxu0
    %12972 = vmatprep.mubr.bf16.mxu0 0
    %12973 = vmatmul.mubr.bf16.gmra.mxu0 %v12690
    %v12974 = vpop.f32.mrf.mxu0
    %v12975 = vadd.f32 0.0, %v12974
    %v12976 = vpop.f32.mrf.mxu0
    %v12977 = vpop.f32.mrf.mxu0
    %v12978 = vadd.f32 0.0, %v12977
    %v12979 = vpop.f32.mrf.mxu0
    %12980 = vdwg.mxu0
    %v12981 = vadd.f32 %v12727, %v12730
    %v12982 = vadd.f32 %v12981, %v12735
    %v12983 = vadd.f32 %v12982, %v12738
    %v12984 = vadd.f32 %v12983, %v12743
    %v12985 = vadd.f32 %v12984, %v12746
    %v12986 = vadd.f32 %v12985, %v12751
    %v12987 = vadd.f32 %v12986, %v12754
    %v12988 = vadd.f32 %v12987, %v12759
    %v12989 = vadd.f32 %v12988, %v12762
    %v12990 = vadd.f32 %v12989, %v12767
    %v12991 = vadd.f32 %v12990, %v12770
    %v12992 = vadd.f32 %v12991, %v12775
    %v12993 = vadd.f32 %v12992, %v12778
    %v12994 = vadd.f32 %v12993, %v12783
    %v12995 = vadd.f32 %v12994, %v12786
    %v12996 = vadd.f32 %v12995, %v12791
    %v12997 = vadd.f32 %v12996, %v12794
    %v12998 = vadd.f32 %v12997, %v12799
    %v12999 = vadd.f32 %v12998, %v12802
    %v13000 = vadd.f32 %v12999, %v12807
    %v13001 = vadd.f32 %v13000, %v12810
    %v13002 = vadd.f32 %v13001, %v12815
    %v13003 = vadd.f32 %v13002, %v12818
    %v13004 = vadd.f32 %v13003, %v12823
    %v13005 = vadd.f32 %v13004, %v12826
    %v13006 = vadd.f32 %v13005, %v12831
    %v13007 = vadd.f32 %v13006, %v12834
    %v13008 = vadd.f32 %v13007, %v12839
    %v13009 = vadd.f32 %v13008, %v12842
    %v13010 = vadd.f32 %v13009, %v12847
    %v13011 = vadd.f32 %v13010, %v12850
    %v13012 = vadd.f32 %v13011, %v12855
    %v13013 = vadd.f32 %v13012, %v12858
    %v13014 = vadd.f32 %v13013, %v12863
    %v13015 = vadd.f32 %v13014, %v12866
    %v13016 = vadd.f32 %v13015, %v12871
    %v13017 = vadd.f32 %v13016, %v12874
    %v13018 = vadd.f32 %v13017, %v12879
    %v13019 = vadd.f32 %v13018, %v12882
    %v13020 = vadd.f32 %v13019, %v12887
    %v13021 = vadd.f32 %v13020, %v12890
    %v13022 = vadd.f32 %v13021, %v12895
    %v13023 = vadd.f32 %v13022, %v12898
    %v13024 = vadd.f32 %v13023, %v12903
    %v13025 = vadd.f32 %v13024, %v12906
    %v13026 = vadd.f32 %v13025, %v12911
    %v13027 = vadd.f32 %v13026, %v12914
    %v13028 = vadd.f32 %v13027, %v12919
    %v13029 = vadd.f32 %v13028, %v12922
    %v13030 = vadd.f32 %v13029, %v12927
    %v13031 = vadd.f32 %v13030, %v12930
    %v13032 = vadd.f32 %v13031, %v12935
    %v13033 = vadd.f32 %v13032, %v12938
    %v13034 = vadd.f32 %v13033, %v12943
    %v13035 = vadd.f32 %v13034, %v12946
    %v13036 = vadd.f32 %v13035, %v12951
    %v13037 = vadd.f32 %v13036, %v12954
    %v13038 = vadd.f32 %v13037, %v12959
    %v13039 = vadd.f32 %v13038, %v12962
    %v13040 = vadd.f32 %v13039, %v12967
    %v13041 = vadd.f32 %v13040, %v12970
    %v13042 = vadd.f32 %v13041, %v12975
    %v13043 = vadd.f32 %v13042, %v12978
    %v13044 = vrot.slane %v13043, 4
    %v13045 = vadd.f32 %v13043, %v13044
    %v13046 = vrot.slane %v13045, 2
    %v13047 = vadd.f32 %v13045, %v13046
    %v13048 = vrot.slane %v13047, 1
    %v13049 = vadd.f32 %v13047, %v13048
    %v13050 = vmul.f32 %v12727, %v12727
    %v13051 = vmul.f32 %v12730, %v12730
    %v13052 = vmul.f32 %v12735, %v12735
    %v13053 = vmul.f32 %v12738, %v12738
    %v13054 = vmul.f32 %v12743, %v12743
    %v13055 = vmul.f32 %v12746, %v12746
    %v13056 = vmul.f32 %v12751, %v12751
    %v13057 = vmul.f32 %v12754, %v12754
    %v13058 = vmul.f32 %v12759, %v12759
    %v13059 = vmul.f32 %v12762, %v12762
    %v13060 = vmul.f32 %v12767, %v12767
    %v13061 = vmul.f32 %v12770, %v12770
    %v13062 = vmul.f32 %v12775, %v12775
    %v13063 = vmul.f32 %v12778, %v12778
    %v13064 = vmul.f32 %v12783, %v12783
    %v13065 = vmul.f32 %v12786, %v12786
    %v13066 = vmul.f32 %v12791, %v12791
    %v13067 = vmul.f32 %v12794, %v12794
    %v13068 = vmul.f32 %v12799, %v12799
    %v13069 = vmul.f32 %v12802, %v12802
    %v13070 = vmul.f32 %v12807, %v12807
    %v13071 = vmul.f32 %v12810, %v12810
    %v13072 = vmul.f32 %v12815, %v12815
    %v13073 = vmul.f32 %v12818, %v12818
    %v13074 = vmul.f32 %v12823, %v12823
    %v13075 = vmul.f32 %v12826, %v12826
    %v13076 = vmul.f32 %v12831, %v12831
    %v13077 = vmul.f32 %v12834, %v12834
    %v13078 = vmul.f32 %v12839, %v12839
    %v13079 = vmul.f32 %v12842, %v12842
    %v13080 = vmul.f32 %v12847, %v12847
    %v13081 = vmul.f32 %v12850, %v12850
    %v13082 = vmul.f32 %v12855, %v12855
    %v13083 = vmul.f32 %v12858, %v12858
    %v13084 = vmul.f32 %v12863, %v12863
    %v13085 = vmul.f32 %v12866, %v12866
    %v13086 = vmul.f32 %v12871, %v12871
    %v13087 = vmul.f32 %v12874, %v12874
    %v13088 = vmul.f32 %v12879, %v12879
    %v13089 = vmul.f32 %v12882, %v12882
    %v13090 = vmul.f32 %v12887, %v12887
    %v13091 = vmul.f32 %v12890, %v12890
    %v13092 = vmul.f32 %v12895, %v12895
    %v13093 = vmul.f32 %v12898, %v12898
    %v13094 = vmul.f32 %v12903, %v12903
    %v13095 = vmul.f32 %v12906, %v12906
    %v13096 = vmul.f32 %v12911, %v12911
    %v13097 = vmul.f32 %v12914, %v12914
    %v13098 = vmul.f32 %v12919, %v12919
    %v13099 = vmul.f32 %v12922, %v12922
    %v13100 = vmul.f32 %v12927, %v12927
    %v13101 = vmul.f32 %v12930, %v12930
    %v13102 = vmul.f32 %v12935, %v12935
    %v13103 = vmul.f32 %v12938, %v12938
    %v13104 = vmul.f32 %v12943, %v12943
    %v13105 = vmul.f32 %v12946, %v12946
    %v13106 = vmul.f32 %v12951, %v12951
    %v13107 = vmul.f32 %v12954, %v12954
    %v13108 = vmul.f32 %v12959, %v12959
    %v13109 = vmul.f32 %v12962, %v12962
    %v13110 = vmul.f32 %v12967, %v12967
    %v13111 = vmul.f32 %v12970, %v12970
    %v13112 = vmul.f32 %v12975, %v12975
    %v13113 = vmul.f32 %v12978, %v12978
    %v13114 = vadd.f32 %v13050, %v13051
    %v13115 = vadd.f32 %v13114, %v13052
    %v13116 = vadd.f32 %v13115, %v13053
    %v13117 = vadd.f32 %v13116, %v13054
    %v13118 = vadd.f32 %v13117, %v13055
    %v13119 = vadd.f32 %v13118, %v13056
    %v13120 = vadd.f32 %v13119, %v13057
    %v13121 = vadd.f32 %v13120, %v13058
    %v13122 = vadd.f32 %v13121, %v13059
    %v13123 = vadd.f32 %v13122, %v13060
    %v13124 = vadd.f32 %v13123, %v13061
    %v13125 = vadd.f32 %v13124, %v13062
    %v13126 = vadd.f32 %v13125, %v13063
    %v13127 = vadd.f32 %v13126, %v13064
    %v13128 = vadd.f32 %v13127, %v13065
    %v13129 = vadd.f32 %v13128, %v13066
    %v13130 = vadd.f32 %v13129, %v13067
    %v13131 = vadd.f32 %v13130, %v13068
    %v13132 = vadd.f32 %v13131, %v13069
    %v13133 = vadd.f32 %v13132, %v13070
    %v13134 = vadd.f32 %v13133, %v13071
    %v13135 = vadd.f32 %v13134, %v13072
    %v13136 = vadd.f32 %v13135, %v13073
    %v13137 = vadd.f32 %v13136, %v13074
    %v13138 = vadd.f32 %v13137, %v13075
    %v13139 = vadd.f32 %v13138, %v13076
    %v13140 = vadd.f32 %v13139, %v13077
    %v13141 = vadd.f32 %v13140, %v13078
    %v13142 = vadd.f32 %v13141, %v13079
    %v13143 = vadd.f32 %v13142, %v13080
    %v13144 = vadd.f32 %v13143, %v13081
    %v13145 = vadd.f32 %v13144, %v13082
    %v13146 = vadd.f32 %v13145, %v13083
    %v13147 = vadd.f32 %v13146, %v13084
    %v13148 = vadd.f32 %v13147, %v13085
    %v13149 = vadd.f32 %v13148, %v13086
    %v13150 = vadd.f32 %v13149, %v13087
    %v13151 = vadd.f32 %v13150, %v13088
    %v13152 = vadd.f32 %v13151, %v13089
    %v13153 = vadd.f32 %v13152, %v13090
    %v13154 = vadd.f32 %v13153, %v13091
    %v13155 = vadd.f32 %v13154, %v13092
    %v13156 = vadd.f32 %v13155, %v13093
    %v13157 = vadd.f32 %v13156, %v13094
    %v13158 = vadd.f32 %v13157, %v13095
    %v13159 = vadd.f32 %v13158, %v13096
    %v13160 = vadd.f32 %v13159, %v13097
    %v13161 = vadd.f32 %v13160, %v13098
    %v13162 = vadd.f32 %v13161, %v13099
    %v13163 = vadd.f32 %v13162, %v13100
    %v13164 = vadd.f32 %v13163, %v13101
    %v13165 = vadd.f32 %v13164, %v13102
    %v13166 = vadd.f32 %v13165, %v13103
    %v13167 = vadd.f32 %v13166, %v13104
    %v13168 = vadd.f32 %v13167, %v13105
    %v13169 = vadd.f32 %v13168, %v13106
    %v13170 = vadd.f32 %v13169, %v13107
    %v13171 = vadd.f32 %v13170, %v13108
    %v13172 = vadd.f32 %v13171, %v13109
    %v13173 = vadd.f32 %v13172, %v13110
    %v13174 = vadd.f32 %v13173, %v13111
    %v13175 = vadd.f32 %v13174, %v13112
    %v13176 = vadd.f32 %v13175, %v13113
    %v13177 = vrot.slane %v13176, 4
    %v13178 = vadd.f32 %v13176, %v13177
    %v13179 = vrot.slane %v13178, 2
    %v13180 = vadd.f32 %v13178, %v13179
    %v13181 = vrot.slane %v13180, 1
    %v13182 = vadd.f32 %v13180, %v13181
    %v13183 = vmul.f32 %v13049, 0.001953125
    %v13184 = vmul.f32 %v13182, 0.001953125
    %v13185 = vmul.f32 %v13183, %v13183
    %v13186 = vsub.f32 %v13184, %v13185
    %v13187 = vadd.f32 %v13186, 1e-05
    %v13188 = vrsqrt.pop %v13187
    %v13189 = vld [vmem:[%s4 + $0x4] sm:$0x1]
    %v13190 = vld [vmem:[%s4 + $0x5] sm:$0x1]
    %v13191 = vmul.f32 %v13189, %v13188
    %v13192 = vlaneseq
    %v13193 = vshrl.u32 %v13192, 7
    %v13194 = vsub.s32 0, %v13193
    %v13195 = vrot.slane %v13191, %v13194
    %v13196 = vmul.f32 %v12727, %v13195
    %v13197 = vmul.f32 %v12730, %v13195
    %v13198 = vmul.f32 %v12735, %v13195
    %v13199 = vmul.f32 %v12738, %v13195
    %v13200 = vmul.f32 %v12743, %v13195
    %v13201 = vmul.f32 %v12746, %v13195
    %v13202 = vmul.f32 %v12751, %v13195
    %v13203 = vmul.f32 %v12754, %v13195
    %v13204 = vmul.f32 %v12759, %v13195
    %v13205 = vmul.f32 %v12762, %v13195
    %v13206 = vmul.f32 %v12767, %v13195
    %v13207 = vmul.f32 %v12770, %v13195
    %v13208 = vmul.f32 %v12775, %v13195
    %v13209 = vmul.f32 %v12778, %v13195
    %v13210 = vmul.f32 %v12783, %v13195
    %v13211 = vmul.f32 %v12786, %v13195
    %v13212 = vmul.f32 %v12791, %v13195
    %v13213 = vmul.f32 %v12794, %v13195
    %v13214 = vmul.f32 %v12799, %v13195
    %v13215 = vmul.f32 %v12802, %v13195
    %v13216 = vmul.f32 %v12807, %v13195
    %v13217 = vmul.f32 %v12810, %v13195
    %v13218 = vmul.f32 %v12815, %v13195
    %v13219 = vmul.f32 %v12818, %v13195
    %v13220 = vmul.f32 %v12823, %v13195
    %v13221 = vmul.f32 %v12826, %v13195
    %v13222 = vmul.f32 %v12831, %v13195
    %v13223 = vmul.f32 %v12834, %v13195
    %v13224 = vmul.f32 %v12839, %v13195
    %v13225 = vmul.f32 %v12842, %v13195
    %v13226 = vmul.f32 %v12847, %v13195
    %v13227 = vmul.f32 %v12850, %v13195
    %v13228 = vmul.f32 %v12855, %v13195
    %v13229 = vmul.f32 %v12858, %v13195
    %v13230 = vmul.f32 %v12863, %v13195
    %v13231 = vmul.f32 %v12866, %v13195
    %v13232 = vmul.f32 %v12871, %v13195
    %v13233 = vmul.f32 %v12874, %v13195
    %v13234 = vmul.f32 %v12879, %v13195
    %v13235 = vmul.f32 %v12882, %v13195
    %v13236 = vmul.f32 %v12887, %v13195
    %v13237 = vmul.f32 %v12890, %v13195
    %v13238 = vmul.f32 %v12895, %v13195
    %v13239 = vmul.f32 %v12898, %v13195
    %v13240 = vmul.f32 %v12903, %v13195
    %v13241 = vmul.f32 %v12906, %v13195
    %v13242 = vmul.f32 %v12911, %v13195
    %v13243 = vmul.f32 %v12914, %v13195
    %v13244 = vmul.f32 %v12919, %v13195
    %v13245 = vmul.f32 %v12922, %v13195
    %v13246 = vmul.f32 %v12927, %v13195
    %v13247 = vmul.f32 %v12930, %v13195
    %v13248 = vmul.f32 %v12935, %v13195
    %v13249 = vmul.f32 %v12938, %v13195
    %v13250 = vmul.f32 %v12943, %v13195
    %v13251 = vmul.f32 %v12946, %v13195
    %v13252 = vmul.f32 %v12951, %v13195
    %v13253 = vmul.f32 %v12954, %v13195
    %v13254 = vmul.f32 %v12959, %v13195
    %v13255 = vmul.f32 %v12962, %v13195
    %v13256 = vmul.f32 %v12967, %v13195
    %v13257 = vmul.f32 %v12970, %v13195
    %v13258 = vmul.f32 %v12975, %v13195
    %v13259 = vmul.f32 %v12978, %v13195
    %v13260 = vmul.f32 %v13183, %v13191
    %v13261 = vsub.f32 %v13190, %v13260
    %v13262 = vlaneseq
    %v13263 = vshrl.u32 %v13262, 7
    %v13264 = vsub.s32 0, %v13263
    %v13265 = vrot.slane %v13261, %v13264
    %v13266 = vadd.f32 %v13196, %v13265
    %v13267 = vadd.f32 %v13197, %v13265
    %v13268 = vadd.f32 %v13198, %v13265
    %v13269 = vadd.f32 %v13199, %v13265
    %v13270 = vadd.f32 %v13200, %v13265
    %v13271 = vadd.f32 %v13201, %v13265
    %v13272 = vadd.f32 %v13202, %v13265
    %v13273 = vadd.f32 %v13203, %v13265
    %v13274 = vadd.f32 %v13204, %v13265
    %v13275 = vadd.f32 %v13205, %v13265
    %v13276 = vadd.f32 %v13206, %v13265
    %v13277 = vadd.f32 %v13207, %v13265
    %v13278 = vadd.f32 %v13208, %v13265
    %v13279 = vadd.f32 %v13209, %v13265
    %v13280 = vadd.f32 %v13210, %v13265
    %v13281 = vadd.f32 %v13211, %v13265
    %v13282 = vadd.f32 %v13212, %v13265
    %v13283 = vadd.f32 %v13213, %v13265
    %v13284 = vadd.f32 %v13214, %v13265
    %v13285 = vadd.f32 %v13215, %v13265
    %v13286 = vadd.f32 %v13216, %v13265
    %v13287 = vadd.f32 %v13217, %v13265
    %v13288 = vadd.f32 %v13218, %v13265
    %v13289 = vadd.f32 %v13219, %v13265
    %v13290 = vadd.f32 %v13220, %v13265
    %v13291 = vadd.f32 %v13221, %v13265
    %v13292 = vadd.f32 %v13222, %v13265
    %v13293 = vadd.f32 %v13223, %v13265
    %v13294 = vadd.f32 %v13224, %v13265
    %v13295 = vadd.f32 %v13225, %v13265
    %v13296 = vadd.f32 %v13226, %v13265
    %v13297 = vadd.f32 %v13227, %v13265
    %v13298 = vadd.f32 %v13228, %v13265
    %v13299 = vadd.f32 %v13229, %v13265
    %v13300 = vadd.f32 %v13230, %v13265
    %v13301 = vadd.f32 %v13231, %v13265
    %v13302 = vadd.f32 %v13232, %v13265
    %v13303 = vadd.f32 %v13233, %v13265
    %v13304 = vadd.f32 %v13234, %v13265
    %v13305 = vadd.f32 %v13235, %v13265
    %v13306 = vadd.f32 %v13236, %v13265
    %v13307 = vadd.f32 %v13237, %v13265
    %v13308 = vadd.f32 %v13238, %v13265
    %v13309 = vadd.f32 %v13239, %v13265
    %v13310 = vadd.f32 %v13240, %v13265
    %v13311 = vadd.f32 %v13241, %v13265
    %v13312 = vadd.f32 %v13242, %v13265
    %v13313 = vadd.f32 %v13243, %v13265
    %v13314 = vadd.f32 %v13244, %v13265
    %v13315 = vadd.f32 %v13245, %v13265
    %v13316 = vadd.f32 %v13246, %v13265
    %v13317 = vadd.f32 %v13247, %v13265
    %v13318 = vadd.f32 %v13248, %v13265
    %v13319 = vadd.f32 %v13249, %v13265
    %v13320 = vadd.f32 %v13250, %v13265
    %v13321 = vadd.f32 %v13251, %v13265
    %v13322 = vadd.f32 %v13252, %v13265
    %v13323 = vadd.f32 %v13253, %v13265
    %v13324 = vadd.f32 %v13254, %v13265
    %v13325 = vadd.f32 %v13255, %v13265
    %v13326 = vadd.f32 %v13256, %v13265
    %v13327 = vadd.f32 %v13257, %v13265
    %v13328 = vadd.f32 %v13258, %v13265
    %v13329 = vadd.f32 %v13259, %v13265
    %v13330 = vld [vmem:[#allocation6] sm:$0xff]
    %v13331 = vld [vmem:[#allocation6 + $0x8] sm:$0xff]
    %v13332 = vld [vmem:[#allocation6 + $0x10] sm:$0xff]
    %v13333 = vld [vmem:[#allocation6 + $0x18] sm:$0xff]
    %v13334 = vld [vmem:[#allocation6 + $0x20] sm:$0xff]
    %v13335 = vld [vmem:[#allocation6 + $0x28] sm:$0xff]
    %v13336 = vld [vmem:[#allocation6 + $0x30] sm:$0xff]
    %v13337 = vld [vmem:[#allocation6 + $0x38] sm:$0xff]
    %v13338 = vld [vmem:[#allocation6 + $0x40] sm:$0xff]
    %v13339 = vld [vmem:[#allocation6 + $0x48] sm:$0xff]
    %v13340 = vld [vmem:[#allocation6 + $0x50] sm:$0xff]
    %v13341 = vld [vmem:[#allocation6 + $0x58] sm:$0xff]
    %v13342 = vld [vmem:[#allocation6 + $0x60] sm:$0xff]
    %v13343 = vld [vmem:[#allocation6 + $0x68] sm:$0xff]
    %v13344 = vld [vmem:[#allocation6 + $0x70] sm:$0xff]
    %v13345 = vld [vmem:[#allocation6 + $0x78] sm:$0xff]
    %v13346 = vld [vmem:[#allocation6 + $0x80] sm:$0xff]
    %v13347 = vld [vmem:[#allocation6 + $0x88] sm:$0xff]
    %v13348 = vld [vmem:[#allocation6 + $0x90] sm:$0xff]
    %v13349 = vld [vmem:[#allocation6 + $0x98] sm:$0xff]
    %v13350 = vld [vmem:[#allocation6 + $0xa0] sm:$0xff]
    %v13351 = vld [vmem:[#allocation6 + $0xa8] sm:$0xff]
    %v13352 = vld [vmem:[#allocation6 + $0xb0] sm:$0xff]
    %v13353 = vld [vmem:[#allocation6 + $0xb8] sm:$0xff]
    %v13354 = vld [vmem:[#allocation6 + $0xc0] sm:$0xff]
    %v13355 = vld [vmem:[#allocation6 + $0xc8] sm:$0xff]
    %v13356 = vld [vmem:[#allocation6 + $0xd0] sm:$0xff]
    %v13357 = vld [vmem:[#allocation6 + $0xd8] sm:$0xff]
    %v13358 = vld [vmem:[#allocation6 + $0xe0] sm:$0xff]
    %v13359 = vld [vmem:[#allocation6 + $0xe8] sm:$0xff]
    %v13360 = vld [vmem:[#allocation6 + $0xf0] sm:$0xff]
    %v13361 = vld [vmem:[#allocation6 + $0xf8] sm:$0xff]
    %v13362 = vld [vmem:[#allocation6 + $0x100] sm:$0xff]
    %v13363 = vld [vmem:[#allocation6 + $0x108] sm:$0xff]
    %v13364 = vld [vmem:[#allocation6 + $0x110] sm:$0xff]
    %v13365 = vld [vmem:[#allocation6 + $0x118] sm:$0xff]
    %v13366 = vld [vmem:[#allocation6 + $0x120] sm:$0xff]
    %v13367 = vld [vmem:[#allocation6 + $0x128] sm:$0xff]
    %v13368 = vld [vmem:[#allocation6 + $0x130] sm:$0xff]
    %v13369 = vld [vmem:[#allocation6 + $0x138] sm:$0xff]
    %v13370 = vld [vmem:[#allocation6 + $0x140] sm:$0xff]
    %v13371 = vld [vmem:[#allocation6 + $0x148] sm:$0xff]
    %v13372 = vld [vmem:[#allocation6 + $0x150] sm:$0xff]
    %v13373 = vld [vmem:[#allocation6 + $0x158] sm:$0xff]
    %v13374 = vld [vmem:[#allocation6 + $0x160] sm:$0xff]
    %v13375 = vld [vmem:[#allocation6 + $0x168] sm:$0xff]
    %v13376 = vld [vmem:[#allocation6 + $0x170] sm:$0xff]
    %v13377 = vld [vmem:[#allocation6 + $0x178] sm:$0xff]
    %v13378 = vld [vmem:[#allocation6 + $0x180] sm:$0xff]
    %v13379 = vld [vmem:[#allocation6 + $0x188] sm:$0xff]
    %v13380 = vld [vmem:[#allocation6 + $0x190] sm:$0xff]
    %v13381 = vld [vmem:[#allocation6 + $0x198] sm:$0xff]
    %v13382 = vld [vmem:[#allocation6 + $0x1a0] sm:$0xff]
    %v13383 = vld [vmem:[#allocation6 + $0x1a8] sm:$0xff]
    %v13384 = vld [vmem:[#allocation6 + $0x1b0] sm:$0xff]
    %v13385 = vld [vmem:[#allocation6 + $0x1b8] sm:$0xff]
    %v13386 = vld [vmem:[#allocation6 + $0x1c0] sm:$0xff]
    %v13387 = vld [vmem:[#allocation6 + $0x1c8] sm:$0xff]
    %v13388 = vld [vmem:[#allocation6 + $0x1d0] sm:$0xff]
    %v13389 = vld [vmem:[#allocation6 + $0x1d8] sm:$0xff]
    %v13390 = vld [vmem:[#allocation6 + $0x1e0] sm:$0xff]
    %v13391 = vld [vmem:[#allocation6 + $0x1e8] sm:$0xff]
    %v13392 = vld [vmem:[#allocation6 + $0x1f0] sm:$0xff]
    %v13393 = vld [vmem:[#allocation6 + $0x1f8] sm:$0xff]
    %v13394 = vadd.f32 %v13266, %v13330
    %v13395 = vadd.f32 %v13267, %v13331
    %v13396 = vadd.f32 %v13268, %v13332
    %v13397 = vadd.f32 %v13269, %v13333
    %v13398 = vadd.f32 %v13270, %v13334
    %v13399 = vadd.f32 %v13271, %v13335
    %v13400 = vadd.f32 %v13272, %v13336
    %v13401 = vadd.f32 %v13273, %v13337
    %v13402 = vadd.f32 %v13274, %v13338
    %v13403 = vadd.f32 %v13275, %v13339
    %v13404 = vadd.f32 %v13276, %v13340
    %v13405 = vadd.f32 %v13277, %v13341
    %v13406 = vadd.f32 %v13278, %v13342
    %v13407 = vadd.f32 %v13279, %v13343
    %v13408 = vadd.f32 %v13280, %v13344
    %v13409 = vadd.f32 %v13281, %v13345
    %v13410 = vadd.f32 %v13282, %v13346
    %v13411 = vadd.f32 %v13283, %v13347
    %v13412 = vadd.f32 %v13284, %v13348
    %v13413 = vadd.f32 %v13285, %v13349
    %v13414 = vadd.f32 %v13286, %v13350
    %v13415 = vadd.f32 %v13287, %v13351
    %v13416 = vadd.f32 %v13288, %v13352
    %v13417 = vadd.f32 %v13289, %v13353
    %v13418 = vadd.f32 %v13290, %v13354
    %v13419 = vadd.f32 %v13291, %v13355
    %v13420 = vadd.f32 %v13292, %v13356
    %v13421 = vadd.f32 %v13293, %v13357
    %v13422 = vadd.f32 %v13294, %v13358
    %v13423 = vadd.f32 %v13295, %v13359
    %v13424 = vadd.f32 %v13296, %v13360
    %v13425 = vadd.f32 %v13297, %v13361
    %v13426 = vadd.f32 %v13298, %v13362
    %v13427 = vadd.f32 %v13299, %v13363
    %v13428 = vadd.f32 %v13300, %v13364
    %v13429 = vadd.f32 %v13301, %v13365
    %v13430 = vadd.f32 %v13302, %v13366
    %v13431 = vadd.f32 %v13303, %v13367
    %v13432 = vadd.f32 %v13304, %v13368
    %v13433 = vadd.f32 %v13305, %v13369
    %v13434 = vadd.f32 %v13306, %v13370
    %v13435 = vadd.f32 %v13307, %v13371
    %v13436 = vadd.f32 %v13308, %v13372
    %v13437 = vadd.f32 %v13309, %v13373
    %v13438 = vadd.f32 %v13310, %v13374
    %v13439 = vadd.f32 %v13311, %v13375
    %v13440 = vadd.f32 %v13312, %v13376
    %v13441 = vadd.f32 %v13313, %v13377
    %v13442 = vadd.f32 %v13314, %v13378
    %v13443 = vadd.f32 %v13315, %v13379
    %v13444 = vadd.f32 %v13316, %v13380
    %v13445 = vadd.f32 %v13317, %v13381
    %v13446 = vadd.f32 %v13318, %v13382
    %v13447 = vadd.f32 %v13319, %v13383
    %v13448 = vadd.f32 %v13320, %v13384
    %v13449 = vadd.f32 %v13321, %v13385
    %v13450 = vadd.f32 %v13322, %v13386
    %v13451 = vadd.f32 %v13323, %v13387
    %v13452 = vadd.f32 %v13324, %v13388
    %v13453 = vadd.f32 %v13325, %v13389
    %v13454 = vadd.f32 %v13326, %v13390
    %v13455 = vadd.f32 %v13327, %v13391
    %v13456 = vadd.f32 %v13328, %v13392
    %v13457 = vadd.f32 %v13329, %v13393
    %v13458 = vmax.f32 %v13394, 0.0
    %v13459 = vmax.f32 %v13395, 0.0
    %v13460 = vmax.f32 %v13396, 0.0
    %v13461 = vmax.f32 %v13397, 0.0
    %v13462 = vmax.f32 %v13398, 0.0
    %v13463 = vmax.f32 %v13399, 0.0
    %v13464 = vmax.f32 %v13400, 0.0
    %v13465 = vmax.f32 %v13401, 0.0
    %v13466 = vmax.f32 %v13402, 0.0
    %v13467 = vmax.f32 %v13403, 0.0
    %v13468 = vmax.f32 %v13404, 0.0
    %v13469 = vmax.f32 %v13405, 0.0
    %v13470 = vmax.f32 %v13406, 0.0
    %v13471 = vmax.f32 %v13407, 0.0
    %v13472 = vmax.f32 %v13408, 0.0
    %v13473 = vmax.f32 %v13409, 0.0
    %v13474 = vmax.f32 %v13410, 0.0
    %v13475 = vmax.f32 %v13411, 0.0
    %v13476 = vmax.f32 %v13412, 0.0
    %v13477 = vmax.f32 %v13413, 0.0
    %v13478 = vmax.f32 %v13414, 0.0
    %v13479 = vmax.f32 %v13415, 0.0
    %v13480 = vmax.f32 %v13416, 0.0
    %v13481 = vmax.f32 %v13417, 0.0
    %v13482 = vmax.f32 %v13418, 0.0
    %v13483 = vmax.f32 %v13419, 0.0
    %v13484 = vmax.f32 %v13420, 0.0
    %v13485 = vmax.f32 %v13421, 0.0
    %v13486 = vmax.f32 %v13422, 0.0
    %v13487 = vmax.f32 %v13423, 0.0
    %v13488 = vmax.f32 %v13424, 0.0
    %v13489 = vmax.f32 %v13425, 0.0
    %v13490 = vmax.f32 %v13426, 0.0
    %v13491 = vmax.f32 %v13427, 0.0
    %v13492 = vmax.f32 %v13428, 0.0
    %v13493 = vmax.f32 %v13429, 0.0
    %v13494 = vmax.f32 %v13430, 0.0
    %v13495 = vmax.f32 %v13431, 0.0
    %v13496 = vmax.f32 %v13432, 0.0
    %v13497 = vmax.f32 %v13433, 0.0
    %v13498 = vmax.f32 %v13434, 0.0
    %v13499 = vmax.f32 %v13435, 0.0
    %v13500 = vmax.f32 %v13436, 0.0
    %v13501 = vmax.f32 %v13437, 0.0
    %v13502 = vmax.f32 %v13438, 0.0
    %v13503 = vmax.f32 %v13439, 0.0
    %v13504 = vmax.f32 %v13440, 0.0
    %v13505 = vmax.f32 %v13441, 0.0
    %v13506 = vmax.f32 %v13442, 0.0
    %v13507 = vmax.f32 %v13443, 0.0
    %v13508 = vmax.f32 %v13444, 0.0
    %v13509 = vmax.f32 %v13445, 0.0
    %v13510 = vmax.f32 %v13446, 0.0
    %v13511 = vmax.f32 %v13447, 0.0
    %v13512 = vmax.f32 %v13448, 0.0
    %v13513 = vmax.f32 %v13449, 0.0
    %v13514 = vmax.f32 %v13450, 0.0
    %v13515 = vmax.f32 %v13451, 0.0
    %v13516 = vmax.f32 %v13452, 0.0
    %v13517 = vmax.f32 %v13453, 0.0
    %v13518 = vmax.f32 %v13454, 0.0
    %v13519 = vmax.f32 %v13455, 0.0
    %v13520 = vmax.f32 %v13456, 0.0
    %v13521 = vmax.f32 %v13457, 0.0
    %13522 = vst [vmem:[#allocation6] sm:$0xff] %v13458
    %13523 = vst [vmem:[#allocation6 + $0x8] sm:$0xff] %v13459
    %13524 = vst [vmem:[#allocation6 + $0x10] sm:$0xff] %v13460
    %13525 = vst [vmem:[#allocation6 + $0x18] sm:$0xff] %v13461
    %13526 = vst [vmem:[#allocation6 + $0x20] sm:$0xff] %v13462
    %13527 = vst [vmem:[#allocation6 + $0x28] sm:$0xff] %v13463
    %13528 = vst [vmem:[#allocation6 + $0x30] sm:$0xff] %v13464
    %13529 = vst [vmem:[#allocation6 + $0x38] sm:$0xff] %v13465
    %13530 = vst [vmem:[#allocation6 + $0x40] sm:$0xff] %v13466
    %13531 = vst [vmem:[#allocation6 + $0x48] sm:$0xff] %v13467
    %13532 = vst [vmem:[#allocation6 + $0x50] sm:$0xff] %v13468
    %13533 = vst [vmem:[#allocation6 + $0x58] sm:$0xff] %v13469
    %13534 = vst [vmem:[#allocation6 + $0x60] sm:$0xff] %v13470
    %13535 = vst [vmem:[#allocation6 + $0x68] sm:$0xff] %v13471
    %13536 = vst [vmem:[#allocation6 + $0x70] sm:$0xff] %v13472
    %13537 = vst [vmem:[#allocation6 + $0x78] sm:$0xff] %v13473
    %13538 = vst [vmem:[#allocation6 + $0x80] sm:$0xff] %v13474
    %13539 = vst [vmem:[#allocation6 + $0x88] sm:$0xff] %v13475
    %13540 = vst [vmem:[#allocation6 + $0x90] sm:$0xff] %v13476
    %13541 = vst [vmem:[#allocation6 + $0x98] sm:$0xff] %v13477
    %13542 = vst [vmem:[#allocation6 + $0xa0] sm:$0xff] %v13478
    %13543 = vst [vmem:[#allocation6 + $0xa8] sm:$0xff] %v13479
    %13544 = vst [vmem:[#allocation6 + $0xb0] sm:$0xff] %v13480
    %13545 = vst [vmem:[#allocation6 + $0xb8] sm:$0xff] %v13481
    %13546 = vst [vmem:[#allocation6 + $0xc0] sm:$0xff] %v13482
    %13547 = vst [vmem:[#allocation6 + $0xc8] sm:$0xff] %v13483
    %13548 = vst [vmem:[#allocation6 + $0xd0] sm:$0xff] %v13484
    %13549 = vst [vmem:[#allocation6 + $0xd8] sm:$0xff] %v13485
    %13550 = vst [vmem:[#allocation6 + $0xe0] sm:$0xff] %v13486
    %13551 = vst [vmem:[#allocation6 + $0xe8] sm:$0xff] %v13487
    %13552 = vst [vmem:[#allocation6 + $0xf0] sm:$0xff] %v13488
    %13553 = vst [vmem:[#allocation6 + $0xf8] sm:$0xff] %v13489
    %13554 = vst [vmem:[#allocation6 + $0x100] sm:$0xff] %v13490
    %13555 = vst [vmem:[#allocation6 + $0x108] sm:$0xff] %v13491
    %13556 = vst [vmem:[#allocation6 + $0x110] sm:$0xff] %v13492
    %13557 = vst [vmem:[#allocation6 + $0x118] sm:$0xff] %v13493
    %13558 = vst [vmem:[#allocation6 + $0x120] sm:$0xff] %v13494
    %13559 = vst [vmem:[#allocation6 + $0x128] sm:$0xff] %v13495
    %13560 = vst [vmem:[#allocation6 + $0x130] sm:$0xff] %v13496
    %13561 = vst [vmem:[#allocation6 + $0x138] sm:$0xff] %v13497
    %13562 = vst [vmem:[#allocation6 + $0x140] sm:$0xff] %v13498
    %13563 = vst [vmem:[#allocation6 + $0x148] sm:$0xff] %v13499
    %13564 = vst [vmem:[#allocation6 + $0x150] sm:$0xff] %v13500
    %13565 = vst [vmem:[#allocation6 + $0x158] sm:$0xff] %v13501
    %13566 = vst [vmem:[#allocation6 + $0x160] sm:$0xff] %v13502
    %13567 = vst [vmem:[#allocation6 + $0x168] sm:$0xff] %v13503
    %13568 = vst [vmem:[#allocation6 + $0x170] sm:$0xff] %v13504
    %13569 = vst [vmem:[#allocation6 + $0x178] sm:$0xff] %v13505
    %13570 = vst [vmem:[#allocation6 + $0x180] sm:$0xff] %v13506
    %13571 = vst [vmem:[#allocation6 + $0x188] sm:$0xff] %v13507
    %13572 = vst [vmem:[#allocation6 + $0x190] sm:$0xff] %v13508
    %13573 = vst [vmem:[#allocation6 + $0x198] sm:$0xff] %v13509
    %13574 = vst [vmem:[#allocation6 + $0x1a0] sm:$0xff] %v13510
    %13575 = vst [vmem:[#allocation6 + $0x1a8] sm:$0xff] %v13511
    %13576 = vst [vmem:[#allocation6 + $0x1b0] sm:$0xff] %v13512
    %13577 = vst [vmem:[#allocation6 + $0x1b8] sm:$0xff] %v13513
    %13578 = vst [vmem:[#allocation6 + $0x1c0] sm:$0xff] %v13514
    %13579 = vst [vmem:[#allocation6 + $0x1c8] sm:$0xff] %v13515
    %13580 = vst [vmem:[#allocation6 + $0x1d0] sm:$0xff] %v13516
    %13581 = vst [vmem:[#allocation6 + $0x1d8] sm:$0xff] %v13517
    %13582 = vst [vmem:[#allocation6 + $0x1e0] sm:$0xff] %v13518
    %13583 = vst [vmem:[#allocation6 + $0x1e8] sm:$0xff] %v13519
    %13584 = vst [vmem:[#allocation6 + $0x1f0] sm:$0xff] %v13520
    %13585 = vst [vmem:[#allocation6 + $0x1f8] sm:$0xff] %v13521
    // Predicated region
    $region26: #{tpu_custom_call.1} parent=1 // pred_check
      _
    $region27: #{tpu_custom_call.1} parent=1 // pred_check_branch
      %13587 = sbr.rel (0) target = $region29
    $region28: #{tpu_custom_call.1} parent=1 // pred_region
      %s13589 = ssub.s32 8192, 8192
      %13590 = vsyncadd [#allocation5], %s13589
      %s13591 = sshll.u32 [#allocation6], 4
      %s13592 = int_to_ptr.vmem [resolvable:$true] %s13591
      %13597 = dma.vmem_to_hbm [thread:$0]  %s13592, 8192, %s5, [#allocation5], 128, 128, 8
    $region29: #{tpu_custom_call.1} parent=1 // pred_fallthru
      _
    // Predicated region
    $region30: #{tpu_custom_call.1} parent=1 // pred_check
      _
    $region31: #{tpu_custom_call.1} parent=1 // pred_check_branch
      %13599 = sbr.rel (0) target = $region33
    $region32: #{tpu_custom_call.1} parent=1 // pred_region
      %13600 = dma.done [#allocation5], 8192
    $region33: #{tpu_custom_call.1} parent=1 // pred_fallthru
      _
    %13601 = vsyncpa [#allocation4], 1
    %13602 = vsyncpa [#allocation5], 1

</llo_original>
